<compile_context>
chip_gen: v7x
topology: tpu7x:2x2x1
jax: 0.10.0
libtpu: 0.0.40
codegen_flags: <defaults>
</compile_context>

<pallas_src>
import functools

import jax
import jax.numpy as jnp
from jax.experimental import pallas as pl
from jax.experimental.pallas import tpu as pltpu

# Layer sizes of the autoencoder (PyTorch spec).
ENC_DIMS = [28 * 28, 128, 64, 12, 3]
DEC_DIMS = [3, 12, 64, 128, 28 * 28]


def _autoencoder_kernel(x_ref,
                        # encoder params (W pre-transposed to (in, out), b as (1, out))
                        we1, be1, we2, be2, we3, be3, we4, be4,
                        # decoder params
                        wd1, bd1, wd2, bd2, wd3, bd3, wd4, bd4,
                        # outputs
                        enc_ref, dec_ref,
                        *, final_act_dtype):
    """Full autoencoder forward for one batch tile (all weights VMEM-resident)."""

    def dense(h, w_ref, b_ref):
        w = w_ref[...]
        # bf16 MXU matmul (activation cast to the weights' dtype), f32 accumulation;
        # bias adds and the hidden tanh activations stay in f32 (safe on v5e: no bf16 VPU/EUP).
        return jnp.dot(h.astype(w.dtype), w,
                       preferred_element_type=jnp.float32) + b_ref[...]

    x = x_ref[...]

    # ---- encoder: (Linear + Tanh) x3, then Linear (no activation) ----
    h = jnp.tanh(dense(x, we1, be1))
    h = jnp.tanh(dense(h, we2, be2))
    h = jnp.tanh(dense(h, we3, be3))
    encoded = dense(h, we4, be4)
    enc_ref[...] = encoded.astype(enc_ref.dtype)

    # ---- decoder: (Linear + Tanh) x3, then Linear + Sigmoid ----
    d = jnp.tanh(dense(encoded, wd1, bd1))
    d = jnp.tanh(dense(d, wd2, bd2))
    d = jnp.tanh(dense(d, wd3, bd3))
    logits = dense(d, wd4, bd4)                            # f32, (tile, 784)

    # sigmoid(x) == 0.5 * tanh(x/2) + 0.5 : one EUP transcendental + cheap VPU scale/add.
    # On v6e/v7x the wrapper selects a bf16 tanh (bf16 EUP path, ~2x f32 throughput over the
    # 784-wide dominant transcendental); on v5e the wrapper keeps this in f32.
    t = jnp.tanh((0.5 * logits).astype(final_act_dtype))
    dec_ref[...] = (t * 0.5 + 0.5).astype(dec_ref.dtype)


def _replicated_spec(shape):
    # Whole-array block, same block index for every batch-grid step (weights stay resident).
    ndim = len(shape)
    return pl.BlockSpec(shape, lambda i: (0,) * ndim)


def _supports_bf16_eup():
    """True on TPU generations with a bf16 EUP/VPU path (v6e, v7x); False otherwise."""
    try:
        kind = jax.devices()[0].device_kind.lower()
    except Exception:
        return False
    return any(tag in kind for tag in ("v6", "v7", "7x"))


def _choose_batch_tile(B):
    # Grow the tile only while keeping >= 8 grid steps (>= 4 per v7x TensorCore).
    # 512+ wide tiles reach ~85% of the HBM roofline; each grid step costs ~0.35 us overhead.
    # All candidates are multiples of 16, satisfying the bf16 sublane tiling constraint.
    for tile in (1024, 512):
        if pl.cdiv(B, tile) >= 8:
            return tile
    return 256


@functools.partial(jax.jit,
                   static_argnames=("batch_tile", "io_dtype", "bf16_final_act"))
def autoencoder_forward(x, params, *, batch_tile=None, io_dtype=jnp.bfloat16,
                        bf16_final_act=False):
    """x: (B, 784) float32.  params: flat list [We1,be1,...,Wd4,bd4] (W as (in,out), b as (1,out)).

    Returns (encoded: f32 (B, 3), decoded: bf16 (B, 784))."""
    B, D_in = x.shape
    assert D_in == ENC_DIMS[0]
    d_enc = ENC_DIMS[-1]
    d_dec = DEC_DIMS[-1]

    if batch_tile is None:
        batch_tile = _choose_batch_tile(B)

    # HBM-facing operands (x + weights) in bf16; biases stay f32.
    ws = [w.astype(io_dtype) for w in params[0::2]]
    bs = [b.astype(jnp.float32) for b in params[1::2]]
    flat_params = []
    for w, b in zip(ws, bs):
        flat_params += [w, b]

    # Batch padding: cdiv grid handles arbitrary B; when multi-step, round the step count up
    # to an even number so the "parallel" axis splits evenly across v7x's 2 TensorCores.
    n_tiles = pl.cdiv(B, batch_tile)
    if n_tiles > 1 and n_tiles % 2:
        n_tiles += 1
    B_pad = n_tiles * batch_tile
    x_p = x.astype(io_dtype)
    if B_pad != B:
        x_p = jnp.pad(x_p, ((0, B_pad - B), (0, 0)))   # zero rows, sliced off below

    in_specs = [pl.BlockSpec((batch_tile, D_in), lambda i: (i, 0))]
    in_specs += [_replicated_spec(p.shape) for p in flat_params]
    out_specs = [
        pl.BlockSpec((batch_tile, d_enc), lambda i: (i, 0)),
        # Last dim 784 == full array dim -> legal block; only the final vreg per row-store
        # is masked, which is cheaper than carrying 112 padded columns through tanh + HBM.
        pl.BlockSpec((batch_tile, d_dec), lambda i: (i, 0)),
    ]
    out_shape = (
        jax.ShapeDtypeStruct((B_pad, d_enc), jnp.float32),   # 3 cols: keep full precision
        jax.ShapeDtypeStruct((B_pad, d_dec), io_dtype),      # bf16: halves dominant HBM write
    )

    # Advisory cost estimate (kept consistent with bf16 output / un-padded last layer).
    enc_macs = sum(a * b for a, b in zip(ENC_DIMS[:-1], ENC_DIMS[1:]))
    dec_macs = sum(a * b for a, b in zip(DEC_DIMS[:-1], DEC_DIMS[1:]))
    n_tanh = sum(ENC_DIMS[1:-1]) + sum(DEC_DIMS[1:-1]) + d_dec   # hidden tanh + final sigmoid
    io_bytes = jnp.dtype(io_dtype).itemsize
    param_bytes = sum(p.size * p.dtype.itemsize for p in flat_params)
    cost = pl.CostEstimate(
        flops=2 * B_pad * (enc_macs + dec_macs),
        transcendentals=B_pad * n_tanh,
        bytes_accessed=B_pad * (D_in * io_bytes + d_enc * 4 + d_dec * io_bytes) + param_bytes,
    )

    # VMEM limit from the actual tile footprint (double-buffered I/O tiles + resident params +
    # generous room for f32 intermediates), clamped to [32, 48] MiB: ample headroom on v7x's
    # 64 MiB physical VMEM while never below the safe default scoped limit.
    io_tile_bytes = batch_tile * (D_in * io_bytes + d_dec * io_bytes + d_enc * 4)
    est = 2 * io_tile_bytes + 2 * param_bytes + 6 * batch_tile * D_in * 4
    vmem_limit = max(int(est * 1.5), 32 * 1024 * 1024)
    vmem_limit = min(vmem_limit, 48 * 1024 * 1024)

    final_act_dtype = io_dtype if bf16_final_act else jnp.float32
    kernel = functools.partial(_autoencoder_kernel, final_act_dtype=final_act_dtype)

    encoded, decoded = pl.pallas_call(
        kernel,
        out_shape=out_shape,
        grid_spec=pltpu.PrefetchScalarGridSpec(
            num_scalar_prefetch=0,
            grid=(n_tiles,),
            in_specs=in_specs,
            out_specs=out_specs,
        ),
        compiler_params=pltpu.CompilerParams(
            dimension_semantics=("parallel",),
            vmem_limit_bytes=vmem_limit,
        ),
        cost_estimate=cost,
    )(x_p, *flat_params)

    # Slice off the zero batch-padding rows.
    return encoded[:B], decoded[:B]


def init_params(key):
    """Init mimicking torch.nn.Linear's U(-1/sqrt(fan_in), 1/sqrt(fan_in)).

    Weights are returned already transposed to (in_features, out_features);
    biases are (1, out_features).
    """
    params = []
    for dims in (ENC_DIMS, DEC_DIMS):
        for fan_in, fan_out in zip(dims[:-1], dims[1:]):
            key, kw, kb = jax.random.split(key, 3)
            bound = 1.0 / jnp.sqrt(jnp.float32(fan_in))
            w = jax.random.uniform(kw, (fan_in, fan_out), jnp.float32,
                                   minval=-bound, maxval=bound)
            b = jax.random.uniform(kb, (1, fan_out), jnp.float32,
                                   minval=-bound, maxval=bound)
            params += [w, b]
    return params


def reference_forward(x, params):
    """Pure-JAX f32 reference of the same forward pass (sanity check)."""
    ws = params[0::2]
    bs = params[1::2]
    h = x
    for i in range(3):
        h = jnp.tanh(h @ ws[i] + bs[i])
    encoded = h @ ws[3] + bs[3]
    d = encoded
    for i in range(4, 7):
        d = jnp.tanh(d @ ws[i] + bs[i])
    decoded = jax.nn.sigmoid(d @ ws[7] + bs[7])
    return encoded, decoded


if __name__ == "__main__":
    key = jax.random.PRNGKey(0)
    kx, kp = jax.random.split(key)

    # Modest MNIST-like batch, deliberately not a multiple of the tile to exercise the
    # cdiv / zero-pad path: 1000 rows -> adaptive tile 256 -> 4 grid steps (even, so both
    # v7x TensorCores get work and each still pipelines).
    B = 1000
    x = jax.random.uniform(kx, (B, 28 * 28), jnp.float32)  # MNIST-like pixels in [0, 1)

    params = init_params(kp)

    encoded, decoded = autoencoder_forward(
        x, params, bf16_final_act=_supports_bf16_eup())
    jax.block_until_ready((encoded, decoded))

    # Sanity check against the pure-JAX f32 reference (bf16 I/O -> loosened tolerances).
    enc_ref, dec_ref = reference_forward(x, params)
    assert encoded.shape == (B, 3) and decoded.shape == (B, 28 * 28)
    assert jnp.allclose(encoded, enc_ref, atol=5e-2, rtol=5e-2)
    assert jnp.allclose(decoded.astype(jnp.float32), dec_ref, atol=5e-2, rtol=5e-2)

    print("KERNEL_OK")
</pallas_src>

<mosaic_0001>
module attributes {stable_mosaic.version = 11 : i64} {
  func.func @_autoencoder_kernel(%arg0: i32, %arg1: memref<256x784xbf16, #tpu.memory_space<vmem>>, %arg2: memref<784x128xbf16, #tpu.memory_space<vmem>>, %arg3: memref<1x128xf32, #tpu.memory_space<vmem>>, %arg4: memref<128x64xbf16, #tpu.memory_space<vmem>>, %arg5: memref<1x64xf32, #tpu.memory_space<vmem>>, %arg6: memref<64x12xbf16, #tpu.memory_space<vmem>>, %arg7: memref<1x12xf32, #tpu.memory_space<vmem>>, %arg8: memref<12x3xbf16, #tpu.memory_space<vmem>>, %arg9: memref<1x3xf32, #tpu.memory_space<vmem>>, %arg10: memref<3x12xbf16, #tpu.memory_space<vmem>>, %arg11: memref<1x12xf32, #tpu.memory_space<vmem>>, %arg12: memref<12x64xbf16, #tpu.memory_space<vmem>>, %arg13: memref<1x64xf32, #tpu.memory_space<vmem>>, %arg14: memref<64x128xbf16, #tpu.memory_space<vmem>>, %arg15: memref<1x128xf32, #tpu.memory_space<vmem>>, %arg16: memref<128x784xbf16, #tpu.memory_space<vmem>>, %arg17: memref<1x784xf32, #tpu.memory_space<vmem>>, %arg18: memref<256x3xf32, #tpu.memory_space<vmem>>, %arg19: memref<256x784xbf16, #tpu.memory_space<vmem>>) attributes {dimension_semantics = [#tpu.dimension_semantics<parallel>], iteration_bounds = array<i64: 4>, scalar_prefetch = 0 : i64, scratch_operands = 0 : i64, tpu.core_type = #tpu.core_type<tc>, window_params = [{transform_indices = @transform_0, window_bounds = array<i64: 256, 784>}, {pipeline_mode = #tpu.pipeline_mode<synchronous>, transform_indices = @transform_1, window_bounds = array<i64: 784, 128>}, {pipeline_mode = #tpu.pipeline_mode<synchronous>, transform_indices = @transform_2, window_bounds = array<i64: 1, 128>}, {pipeline_mode = #tpu.pipeline_mode<synchronous>, transform_indices = @transform_3, window_bounds = array<i64: 128, 64>}, {pipeline_mode = #tpu.pipeline_mode<synchronous>, transform_indices = @transform_4, window_bounds = array<i64: 1, 64>}, {pipeline_mode = #tpu.pipeline_mode<synchronous>, transform_indices = @transform_5, window_bounds = array<i64: 64, 12>}, {pipeline_mode = #tpu.pipeline_mode<synchronous>, transform_indices = @transform_6, window_bounds = array<i64: 1, 12>}, {pipeline_mode = #tpu.pipeline_mode<synchronous>, transform_indices = @transform_7, window_bounds = array<i64: 12, 3>}, {pipeline_mode = #tpu.pipeline_mode<synchronous>, transform_indices = @transform_8, window_bounds = array<i64: 1, 3>}, {pipeline_mode = #tpu.pipeline_mode<synchronous>, transform_indices = @transform_9, window_bounds = array<i64: 3, 12>}, {pipeline_mode = #tpu.pipeline_mode<synchronous>, transform_indices = @transform_10, window_bounds = array<i64: 1, 12>}, {pipeline_mode = #tpu.pipeline_mode<synchronous>, transform_indices = @transform_11, window_bounds = array<i64: 12, 64>}, {pipeline_mode = #tpu.pipeline_mode<synchronous>, transform_indices = @transform_12, window_bounds = array<i64: 1, 64>}, {pipeline_mode = #tpu.pipeline_mode<synchronous>, transform_indices = @transform_13, window_bounds = array<i64: 64, 128>}, {pipeline_mode = #tpu.pipeline_mode<synchronous>, transform_indices = @transform_14, window_bounds = array<i64: 1, 128>}, {pipeline_mode = #tpu.pipeline_mode<synchronous>, transform_indices = @transform_15, window_bounds = array<i64: 128, 784>}, {pipeline_mode = #tpu.pipeline_mode<synchronous>, transform_indices = @transform_16, window_bounds = array<i64: 1, 784>}, {transform_indices = @transform_17, window_bounds = array<i64: 256, 3>}, {transform_indices = @transform_18, window_bounds = array<i64: 256, 784>}]} {
    %c0 = arith.constant 0 : index
    %c0_0 = arith.constant 0 : index
    %0 = vector.load %arg1[%c0, %c0_0] : memref<256x784xbf16, #tpu.memory_space<vmem>>, vector<256x784xbf16>
    %c0_1 = arith.constant 0 : index
    %c0_2 = arith.constant 0 : index
    %1 = vector.load %arg2[%c0_1, %c0_2] : memref<784x128xbf16, #tpu.memory_space<vmem>>, vector<784x128xbf16>
    %cst = arith.constant dense<0.000000e+00> : vector<256x128xf32>
    %2 = tpu.matmul %0, %1, %cst {dimension_numbers = #tpu.dot_dimension_numbers<[1], [0], [0], [1], [0, 0, 1, 1], [], []>} : vector<256x784xbf16>, vector<784x128xbf16>, vector<256x128xf32> -> vector<256x128xf32>
    %c0_3 = arith.constant 0 : index
    %c0_4 = arith.constant 0 : index
    %3 = vector.load %arg3[%c0_3, %c0_4] : memref<1x128xf32, #tpu.memory_space<vmem>>, vector<1x128xf32>
    %4 = vector.broadcast %3 : vector<1x128xf32> to vector<256x128xf32>
    %5 = arith.addf %2, %4 : vector<256x128xf32>
    %6 = math.tanh %5 : vector<256x128xf32>
    %c0_5 = arith.constant 0 : index
    %c0_6 = arith.constant 0 : index
    %7 = vector.load %arg4[%c0_5, %c0_6] : memref<128x64xbf16, #tpu.memory_space<vmem>>, vector<128x64xbf16>
    %8 = arith.truncf %6 : vector<256x128xf32> to vector<256x128xbf16>
    %cst_7 = arith.constant dense<0.000000e+00> : vector<256x64xf32>
    %9 = tpu.matmul %8, %7, %cst_7 {dimension_numbers = #tpu.dot_dimension_numbers<[1], [0], [0], [1], [0, 0, 1, 1], [], []>} : vector<256x128xbf16>, vector<128x64xbf16>, vector<256x64xf32> -> vector<256x64xf32>
    %c0_8 = arith.constant 0 : index
    %c0_9 = arith.constant 0 : index
    %10 = vector.load %arg5[%c0_8, %c0_9] : memref<1x64xf32, #tpu.memory_space<vmem>>, vector<1x64xf32>
    %11 = vector.broadcast %10 : vector<1x64xf32> to vector<256x64xf32>
    %12 = arith.addf %9, %11 : vector<256x64xf32>
    %13 = math.tanh %12 : vector<256x64xf32>
    %c0_10 = arith.constant 0 : index
    %c0_11 = arith.constant 0 : index
    %14 = vector.load %arg6[%c0_10, %c0_11] : memref<64x12xbf16, #tpu.memory_space<vmem>>, vector<64x12xbf16>
    %15 = arith.truncf %13 : vector<256x64xf32> to vector<256x64xbf16>
    %cst_12 = arith.constant dense<0.000000e+00> : vector<256x12xf32>
    %16 = tpu.matmul %15, %14, %cst_12 {dimension_numbers = #tpu.dot_dimension_numbers<[1], [0], [0], [1], [0, 0, 1, 1], [], []>} : vector<256x64xbf16>, vector<64x12xbf16>, vector<256x12xf32> -> vector<256x12xf32>
    %c0_13 = arith.constant 0 : index
    %c0_14 = arith.constant 0 : index
    %17 = vector.load %arg7[%c0_13, %c0_14] : memref<1x12xf32, #tpu.memory_space<vmem>>, vector<1x12xf32>
    %18 = vector.broadcast %17 : vector<1x12xf32> to vector<256x12xf32>
    %19 = arith.addf %16, %18 : vector<256x12xf32>
    %20 = math.tanh %19 : vector<256x12xf32>
    %c0_15 = arith.constant 0 : index
    %c0_16 = arith.constant 0 : index
    %21 = vector.load %arg8[%c0_15, %c0_16] : memref<12x3xbf16, #tpu.memory_space<vmem>>, vector<12x3xbf16>
    %22 = arith.truncf %20 : vector<256x12xf32> to vector<256x12xbf16>
    %cst_17 = arith.constant dense<0.000000e+00> : vector<256x3xf32>
    %23 = tpu.matmul %22, %21, %cst_17 {dimension_numbers = #tpu.dot_dimension_numbers<[1], [0], [0], [1], [0, 0, 1, 1], [], []>} : vector<256x12xbf16>, vector<12x3xbf16>, vector<256x3xf32> -> vector<256x3xf32>
    %c0_18 = arith.constant 0 : index
    %c0_19 = arith.constant 0 : index
    %24 = vector.load %arg9[%c0_18, %c0_19] : memref<1x3xf32, #tpu.memory_space<vmem>>, vector<1x3xf32>
    %25 = vector.broadcast %24 : vector<1x3xf32> to vector<256x3xf32>
    %26 = arith.addf %23, %25 : vector<256x3xf32>
    %c0_20 = arith.constant 0 : index
    %c0_21 = arith.constant 0 : index
    %27 = vector.load %arg18[%c0_20, %c0_21] : memref<256x3xf32, #tpu.memory_space<vmem>>, vector<256x3xf32>
    tpu.vector_store %arg18[%c0_20, %c0_21], %26 {strides = array<i32>} : memref<256x3xf32, #tpu.memory_space<vmem>>, vector<256x3xf32>,
    %c0_22 = arith.constant 0 : index
    %c0_23 = arith.constant 0 : index
    %28 = vector.load %arg10[%c0_22, %c0_23] : memref<3x12xbf16, #tpu.memory_space<vmem>>, vector<3x12xbf16>
    %29 = arith.truncf %26 : vector<256x3xf32> to vector<256x3xbf16>
    %cst_24 = arith.constant dense<0.000000e+00> : vector<256x12xf32>
    %30 = tpu.matmul %29, %28, %cst_24 {dimension_numbers = #tpu.dot_dimension_numbers<[1], [0], [0], [1], [0, 0, 1, 1], [], []>} : vector<256x3xbf16>, vector<3x12xbf16>, vector<256x12xf32> -> vector<256x12xf32>
    %c0_25 = arith.constant 0 : index
    %c0_26 = arith.constant 0 : index
    %31 = vector.load %arg11[%c0_25, %c0_26] : memref<1x12xf32, #tpu.memory_space<vmem>>, vector<1x12xf32>
    %32 = vector.broadcast %31 : vector<1x12xf32> to vector<256x12xf32>
    %33 = arith.addf %30, %32 : vector<256x12xf32>
    %34 = math.tanh %33 : vector<256x12xf32>
    %c0_27 = arith.constant 0 : index
    %c0_28 = arith.constant 0 : index
    %35 = vector.load %arg12[%c0_27, %c0_28] : memref<12x64xbf16, #tpu.memory_space<vmem>>, vector<12x64xbf16>
    %36 = arith.truncf %34 : vector<256x12xf32> to vector<256x12xbf16>
    %cst_29 = arith.constant dense<0.000000e+00> : vector<256x64xf32>
    %37 = tpu.matmul %36, %35, %cst_29 {dimension_numbers = #tpu.dot_dimension_numbers<[1], [0], [0], [1], [0, 0, 1, 1], [], []>} : vector<256x12xbf16>, vector<12x64xbf16>, vector<256x64xf32> -> vector<256x64xf32>
    %c0_30 = arith.constant 0 : index
    %c0_31 = arith.constant 0 : index
    %38 = vector.load %arg13[%c0_30, %c0_31] : memref<1x64xf32, #tpu.memory_space<vmem>>, vector<1x64xf32>
    %39 = vector.broadcast %38 : vector<1x64xf32> to vector<256x64xf32>
    %40 = arith.addf %37, %39 : vector<256x64xf32>
    %41 = math.tanh %40 : vector<256x64xf32>
    %c0_32 = arith.constant 0 : index
    %c0_33 = arith.constant 0 : index
    %42 = vector.load %arg14[%c0_32, %c0_33] : memref<64x128xbf16, #tpu.memory_space<vmem>>, vector<64x128xbf16>
    %43 = arith.truncf %41 : vector<256x64xf32> to vector<256x64xbf16>
    %cst_34 = arith.constant dense<0.000000e+00> : vector<256x128xf32>
    %44 = tpu.matmul %43, %42, %cst_34 {dimension_numbers = #tpu.dot_dimension_numbers<[1], [0], [0], [1], [0, 0, 1, 1], [], []>} : vector<256x64xbf16>, vector<64x128xbf16>, vector<256x128xf32> -> vector<256x128xf32>
    %c0_35 = arith.constant 0 : index
    %c0_36 = arith.constant 0 : index
    %45 = vector.load %arg15[%c0_35, %c0_36] : memref<1x128xf32, #tpu.memory_space<vmem>>, vector<1x128xf32>
    %46 = vector.broadcast %45 : vector<1x128xf32> to vector<256x128xf32>
    %47 = arith.addf %44, %46 : vector<256x128xf32>
    %48 = math.tanh %47 : vector<256x128xf32>
    %c0_37 = arith.constant 0 : index
    %c0_38 = arith.constant 0 : index
    %49 = vector.load %arg16[%c0_37, %c0_38] : memref<128x784xbf16, #tpu.memory_space<vmem>>, vector<128x784xbf16>
    %50 = arith.truncf %48 : vector<256x128xf32> to vector<256x128xbf16>
    %cst_39 = arith.constant dense<0.000000e+00> : vector<256x784xf32>
    %51 = tpu.matmul %50, %49, %cst_39 {dimension_numbers = #tpu.dot_dimension_numbers<[1], [0], [0], [1], [0, 0, 1, 1], [], []>} : vector<256x128xbf16>, vector<128x784xbf16>, vector<256x784xf32> -> vector<256x784xf32>
    %c0_40 = arith.constant 0 : index
    %c0_41 = arith.constant 0 : index
    %52 = vector.load %arg17[%c0_40, %c0_41] : memref<1x784xf32, #tpu.memory_space<vmem>>, vector<1x784xf32>
    %53 = vector.broadcast %52 : vector<1x784xf32> to vector<256x784xf32>
    %54 = arith.addf %51, %53 : vector<256x784xf32>
    %cst_42 = arith.constant 5.000000e-01 : f32
    %55 = vector.broadcast %cst_42 : f32 to vector<256x784xf32>
    %56 = arith.mulf %55, %54 : vector<256x784xf32>
    %57 = math.tanh %56 : vector<256x784xf32>
    %cst_43 = arith.constant 5.000000e-01 : f32
    %58 = vector.broadcast %cst_43 : f32 to vector<256x784xf32>
    %59 = arith.mulf %57, %58 : vector<256x784xf32>
    %cst_44 = arith.constant 5.000000e-01 : f32
    %60 = vector.broadcast %cst_44 : f32 to vector<256x784xf32>
    %61 = arith.addf %59, %60 : vector<256x784xf32>
    %62 = arith.truncf %61 : vector<256x784xf32> to vector<256x784xbf16>
    %c0_45 = arith.constant 0 : index
    %c0_46 = arith.constant 0 : index
    %63 = vector.load %arg19[%c0_45, %c0_46] : memref<256x784xbf16, #tpu.memory_space<vmem>>, vector<256x784xbf16>
    tpu.vector_store %arg19[%c0_45, %c0_46], %62 {strides = array<i32>} : memref<256x784xbf16, #tpu.memory_space<vmem>>, vector<256x784xbf16>,
    return
  }
  func.func @transform_0(%arg0: i32) -> (i32, i32) {
    %c0_i32 = arith.constant 0 : i32
    %c0_i32_0 = arith.constant 0 : i32
    return %arg0, %c0_i32 : i32, i32
  }
  func.func @transform_1(%arg0: i32) -> (i32, i32) {
    %c0_i32 = arith.constant 0 : i32
    %c0_i32_0 = arith.constant 0 : i32
    %c0_i32_1 = arith.constant 0 : i32
    return %c0_i32, %c0_i32_0 : i32, i32
  }
  func.func @transform_2(%arg0: i32) -> (i32, i32) {
    %c0_i32 = arith.constant 0 : i32
    %c0_i32_0 = arith.constant 0 : i32
    %c0_i32_1 = arith.constant 0 : i32
    return %c0_i32, %c0_i32_0 : i32, i32
  }
  func.func @transform_3(%arg0: i32) -> (i32, i32) {
    %c0_i32 = arith.constant 0 : i32
    %c0_i32_0 = arith.constant 0 : i32
    %c0_i32_1 = arith.constant 0 : i32
    return %c0_i32, %c0_i32_0 : i32, i32
  }
  func.func @transform_4(%arg0: i32) -> (i32, i32) {
    %c0_i32 = arith.constant 0 : i32
    %c0_i32_0 = arith.constant 0 : i32
    %c0_i32_1 = arith.constant 0 : i32
    return %c0_i32, %c0_i32_0 : i32, i32
  }
  func.func @transform_5(%arg0: i32) -> (i32, i32) {
    %c0_i32 = arith.constant 0 : i32
    %c0_i32_0 = arith.constant 0 : i32
    %c0_i32_1 = arith.constant 0 : i32
    return %c0_i32, %c0_i32_0 : i32, i32
  }
  func.func @transform_6(%arg0: i32) -> (i32, i32) {
    %c0_i32 = arith.constant 0 : i32
    %c0_i32_0 = arith.constant 0 : i32
    %c0_i32_1 = arith.constant 0 : i32
    return %c0_i32, %c0_i32_0 : i32, i32
  }
  func.func @transform_7(%arg0: i32) -> (i32, i32) {
    %c0_i32 = arith.constant 0 : i32
    %c0_i32_0 = arith.constant 0 : i32
    %c0_i32_1 = arith.constant 0 : i32
    return %c0_i32, %c0_i32_0 : i32, i32
  }
  func.func @transform_8(%arg0: i32) -> (i32, i32) {
    %c0_i32 = arith.constant 0 : i32
    %c0_i32_0 = arith.constant 0 : i32
    %c0_i32_1 = arith.constant 0 : i32
    return %c0_i32, %c0_i32_0 : i32, i32
  }
  func.func @transform_9(%arg0: i32) -> (i32, i32) {
    %c0_i32 = arith.constant 0 : i32
    %c0_i32_0 = arith.constant 0 : i32
    %c0_i32_1 = arith.constant 0 : i32
    return %c0_i32, %c0_i32_0 : i32, i32
  }
  func.func @transform_10(%arg0: i32) -> (i32, i32) {
    %c0_i32 = arith.constant 0 : i32
    %c0_i32_0 = arith.constant 0 : i32
    %c0_i32_1 = arith.constant 0 : i32
    return %c0_i32, %c0_i32_0 : i32, i32
  }
  func.func @transform_11(%arg0: i32) -> (i32, i32) {
    %c0_i32 = arith.constant 0 : i32
    %c0_i32_0 = arith.constant 0 : i32
    %c0_i32_1 = arith.constant 0 : i32
    return %c0_i32, %c0_i32_0 : i32, i32
  }
  func.func @transform_12(%arg0: i32) -> (i32, i32) {
    %c0_i32 = arith.constant 0 : i32
    %c0_i32_0 = arith.constant 0 : i32
    %c0_i32_1 = arith.constant 0 : i32
    return %c0_i32, %c0_i32_0 : i32, i32
  }
  func.func @transform_13(%arg0: i32) -> (i32, i32) {
    %c0_i32 = arith.constant 0 : i32
    %c0_i32_0 = arith.constant 0 : i32
    %c0_i32_1 = arith.constant 0 : i32
    return %c0_i32, %c0_i32_0 : i32, i32
  }
  func.func @transform_14(%arg0: i32) -> (i32, i32) {
    %c0_i32 = arith.constant 0 : i32
    %c0_i32_0 = arith.constant 0 : i32
    %c0_i32_1 = arith.constant 0 : i32
    return %c0_i32, %c0_i32_0 : i32, i32
  }
  func.func @transform_15(%arg0: i32) -> (i32, i32) {
    %c0_i32 = arith.constant 0 : i32
    %c0_i32_0 = arith.constant 0 : i32
    %c0_i32_1 = arith.constant 0 : i32
    return %c0_i32, %c0_i32_0 : i32, i32
  }
  func.func @transform_16(%arg0: i32) -> (i32, i32) {
    %c0_i32 = arith.constant 0 : i32
    %c0_i32_0 = arith.constant 0 : i32
    %c0_i32_1 = arith.constant 0 : i32
    return %c0_i32, %c0_i32_0 : i32, i32
  }
  func.func @transform_17(%arg0: i32) -> (i32, i32) {
    %c0_i32 = arith.constant 0 : i32
    %c0_i32_0 = arith.constant 0 : i32
    return %arg0, %c0_i32 : i32, i32
  }
  func.func @transform_18(%arg0: i32) -> (i32, i32) {
    %c0_i32 = arith.constant 0 : i32
    %c0_i32_0 = arith.constant 0 : i32
    return %arg0, %c0_i32 : i32, i32
  }
}

</mosaic_0001>

<llo_original>
// kernel: autoencoder_forward.1
$region0: #{autoencoder_forward.1}
  #allocation0 [shape = 'u32[]', space=smem, size = 0x4, offset = 0x4, fixed_abs, tag = 'smem constant byte address 0x4 - core index']
  #allocation1 [shape = 'u32[144,128]{1,0:T(1,128)}', space=vmem, size = 0x12000, scoped, tag = 'internal scratch']
  %s0 = inlined_call_operand.vmem [shape: bf16[1024,784], index: 0, kind: input, shape index: {}]
  %s1 = inlined_call_operand.vmem [shape: bf16[784,128], index: 1, kind: input, shape index: {}]
  %s2 = inlined_call_operand.vmem [shape: f32[1,128], index: 2, kind: input, shape index: {}]
  %s3 = inlined_call_operand.vmem [shape: bf16[128,64], index: 3, kind: input, shape index: {}]
  %s4 = inlined_call_operand.vmem [shape: f32[1,64], index: 4, kind: input, shape index: {}]
  %s5 = inlined_call_operand.vmem [shape: bf16[64,12], index: 5, kind: input, shape index: {}]
  %s6 = inlined_call_operand.vmem [shape: f32[1,12], index: 6, kind: input, shape index: {}]
  %s7 = inlined_call_operand.vmem [shape: bf16[12,3], index: 7, kind: input, shape index: {}]
  %s8 = inlined_call_operand.vmem [shape: f32[1,3], index: 8, kind: input, shape index: {}]
  %s9 = inlined_call_operand.vmem [shape: bf16[3,12], index: 9, kind: input, shape index: {}]
  %s10 = inlined_call_operand.vmem [shape: f32[1,12], index: 10, kind: input, shape index: {}]
  %s11 = inlined_call_operand.vmem [shape: bf16[12,64], index: 11, kind: input, shape index: {}]
  %s12 = inlined_call_operand.vmem [shape: f32[1,64], index: 12, kind: input, shape index: {}]
  %s13 = inlined_call_operand.vmem [shape: bf16[64,128], index: 13, kind: input, shape index: {}]
  %s14 = inlined_call_operand.vmem [shape: f32[1,128], index: 14, kind: input, shape index: {}]
  %s15 = inlined_call_operand.vmem [shape: bf16[128,784], index: 15, kind: input, shape index: {}]
  %s16 = inlined_call_operand.vmem [shape: f32[1,784], index: 16, kind: input, shape index: {}]
  %s17 = inlined_call_operand.vmem [shape: f32[1024,3], index: 17, kind: output, shape index: {0}]
  %s18 = inlined_call_operand.vmem [shape: bf16[1024,784], index: 18, kind: output, shape index: {1}]
  %19 = xla_tuple %s17, %s18
  %s20 = sld [smem:[#allocation0]]
  $region109: #{autoencoder_forward.1} parent=0
    _
  %s22 = ssub.s32 1, %s20
  %s23 = scalar_select 0, %s22, %s20
  loop: start=0, step=1, limit=6
  $region2: #{autoencoder_forward.1} parent=0 // loop_pre_header
    _
  $region3: #{autoencoder_forward.1} parent=0 // loop_header
    %s25 = sphi 0, %s29
    %p26 = scmp.ge.s32.totalorder %s25, 6
    %s35 = sphi 0, %s37
    %s38 = sphi 0, %s35
    %s39 = sphi 0, %s38
    %s55 = sphi 0, %s39
    %s59 = sphi 0, %s59
    %s61 = sphi 0, %s59
    %s62 = sphi 0, %s61
    %s76 = sphi 0, %s62
    %s80 = sphi 0, %s80
    %s82 = sphi 0, %s80
    %s83 = sphi 0, %s82
    %s97 = sphi 0, %s83
    %s101 = sphi 0, %s101
    %s103 = sphi 0, %s101
    %s104 = sphi 0, %s103
    %s118 = sphi 0, %s104
    %s122 = sphi 0, %s122
    %s124 = sphi 0, %s122
    %s125 = sphi 0, %s124
    %s139 = sphi 0, %s125
    %s143 = sphi 0, %s143
    %s145 = sphi 0, %s143
    %s146 = sphi 0, %s145
    %s160 = sphi 0, %s146
    %s164 = sphi 0, %s164
    %s166 = sphi 0, %s164
    %s167 = sphi 0, %s166
    %s181 = sphi 0, %s167
    %s185 = sphi 0, %s185
    %s187 = sphi 0, %s185
    %s188 = sphi 0, %s187
    %s202 = sphi 0, %s188
    %s206 = sphi 0, %s206
    %s208 = sphi 0, %s206
    %s209 = sphi 0, %s208
    %s223 = sphi 0, %s209
    %s227 = sphi 0, %s227
    %s229 = sphi 0, %s227
    %s230 = sphi 0, %s229
    %s244 = sphi 0, %s230
    %s248 = sphi 0, %s248
    %s250 = sphi 0, %s248
    %s251 = sphi 0, %s250
    %s265 = sphi 0, %s251
    %s269 = sphi 0, %s269
    %s271 = sphi 0, %s269
    %s272 = sphi 0, %s271
    %s286 = sphi 0, %s272
    %s290 = sphi 0, %s290
    %s292 = sphi 0, %s290
    %s293 = sphi 0, %s292
    %s307 = sphi 0, %s293
    %s311 = sphi 0, %s311
    %s313 = sphi 0, %s311
    %s314 = sphi 0, %s313
    %s328 = sphi 0, %s314
    %s332 = sphi 0, %s332
    %s334 = sphi 0, %s332
    %s335 = sphi 0, %s334
    %s349 = sphi 0, %s335
    %s353 = sphi 0, %s353
    %s355 = sphi 0, %s353
    %s356 = sphi 0, %s355
    %s370 = sphi 0, %s356
    %s374 = sphi 0, %s374
    %s376 = sphi 0, %s374
    %s377 = sphi 0, %s376
    %s391 = sphi 0, %s377
    %s397 = sphi 0, %s399
    %s400 = sphi 0, %s397
    %s401 = sphi 0, %s400
    %s417 = sphi 0, %s401
    %s423 = sphi 0, %s425
    %s426 = sphi 0, %s423
    %s427 = sphi 0, %s426
    %s443 = sphi 0, %s427
  $region4: #{autoencoder_forward.1} parent=0 // loop_header_branch
    %28 = sbr.rel (%p26) target = $region8
  $region5: #{autoencoder_forward.1} parent=0 // loop_body
    %s30 = ssub.s32 %s25, 1
    %s31 = ssub.s32 %s25, 2
    %s32 = sadd.s32 %s25, 1
    %s33 = ssub.s32 %s25, %s32
    %p34 = scmp.eq.s32.totalorder %s33, 0
    %s36 = sadd.s32 %s35, 1
    %s37 = scalar_select %p34, %s35, %s36
    %p40 = pneg %p34
    %p41 = scmp.eq.s32.totalorder %s25, 3
    %p42 = por %p40, %p41
    %p43 = scmp.ne.s32.totalorder %s35, %s38
    %p44 = scmp.eq.s32.totalorder %s25, 0
    %p45 = por %p43, %p44
    %p46 = scmp.ne.s32.totalorder %s35, %s38
    %p47 = scmp.eq.s32.totalorder %s30, 3
    %p48 = por %p46, %p47
    %p49 = scmp.ne.s32.totalorder %s38, %s39
    %p50 = scmp.eq.s32.totalorder %s30, 0
    %p51 = por %p49, %p50
    %p52 = scmp.ne.s32.totalorder %s38, %s39
    %p53 = scmp.eq.s32.totalorder %s31, 3
    %p54 = por %p52, %p53
    %p56 = scmp.ne.s32.totalorder %s39, %s55
    %p57 = scmp.eq.s32.totalorder %s31, 0
    %p58 = por %p56, %p57
    %s60 = sadd.s32 %s59, 1
    %p63 = scmp.eq.s32.totalorder %s25, 3
    %p64 = scmp.ne.s32.totalorder %s59, %s61
    %p65 = scmp.eq.s32.totalorder %s25, 0
    %p66 = por %p64, %p65
    %p67 = scmp.ne.s32.totalorder %s59, %s61
    %p68 = scmp.eq.s32.totalorder %s30, 3
    %p69 = por %p67, %p68
    %p70 = scmp.ne.s32.totalorder %s61, %s62
    %p71 = scmp.eq.s32.totalorder %s30, 0
    %p72 = por %p70, %p71
    %p73 = scmp.ne.s32.totalorder %s61, %s62
    %p74 = scmp.eq.s32.totalorder %s31, 3
    %p75 = por %p73, %p74
    %p77 = scmp.ne.s32.totalorder %s62, %s76
    %p78 = scmp.eq.s32.totalorder %s31, 0
    %p79 = por %p77, %p78
    %s81 = sadd.s32 %s80, 1
    %p84 = scmp.eq.s32.totalorder %s25, 3
    %p85 = scmp.ne.s32.totalorder %s80, %s82
    %p86 = scmp.eq.s32.totalorder %s25, 0
    %p87 = por %p85, %p86
    %p88 = scmp.ne.s32.totalorder %s80, %s82
    %p89 = scmp.eq.s32.totalorder %s30, 3
    %p90 = por %p88, %p89
    %p91 = scmp.ne.s32.totalorder %s82, %s83
    %p92 = scmp.eq.s32.totalorder %s30, 0
    %p93 = por %p91, %p92
    %p94 = scmp.ne.s32.totalorder %s82, %s83
    %p95 = scmp.eq.s32.totalorder %s31, 3
    %p96 = por %p94, %p95
    %p98 = scmp.ne.s32.totalorder %s83, %s97
    %p99 = scmp.eq.s32.totalorder %s31, 0
    %p100 = por %p98, %p99
    %s102 = sadd.s32 %s101, 1
    %p105 = scmp.eq.s32.totalorder %s25, 3
    %p106 = scmp.ne.s32.totalorder %s101, %s103
    %p107 = scmp.eq.s32.totalorder %s25, 0
    %p108 = por %p106, %p107
    %p109 = scmp.ne.s32.totalorder %s101, %s103
    %p110 = scmp.eq.s32.totalorder %s30, 3
    %p111 = por %p109, %p110
    %p112 = scmp.ne.s32.totalorder %s103, %s104
    %p113 = scmp.eq.s32.totalorder %s30, 0
    %p114 = por %p112, %p113
    %p115 = scmp.ne.s32.totalorder %s103, %s104
    %p116 = scmp.eq.s32.totalorder %s31, 3
    %p117 = por %p115, %p116
    %p119 = scmp.ne.s32.totalorder %s104, %s118
    %p120 = scmp.eq.s32.totalorder %s31, 0
    %p121 = por %p119, %p120
    %s123 = sadd.s32 %s122, 1
    %p126 = scmp.eq.s32.totalorder %s25, 3
    %p127 = scmp.ne.s32.totalorder %s122, %s124
    %p128 = scmp.eq.s32.totalorder %s25, 0
    %p129 = por %p127, %p128
    %p130 = scmp.ne.s32.totalorder %s122, %s124
    %p131 = scmp.eq.s32.totalorder %s30, 3
    %p132 = por %p130, %p131
    %p133 = scmp.ne.s32.totalorder %s124, %s125
    %p134 = scmp.eq.s32.totalorder %s30, 0
    %p135 = por %p133, %p134
    %p136 = scmp.ne.s32.totalorder %s124, %s125
    %p137 = scmp.eq.s32.totalorder %s31, 3
    %p138 = por %p136, %p137
    %p140 = scmp.ne.s32.totalorder %s125, %s139
    %p141 = scmp.eq.s32.totalorder %s31, 0
    %p142 = por %p140, %p141
    %s144 = sadd.s32 %s143, 1
    %p147 = scmp.eq.s32.totalorder %s25, 3
    %p148 = scmp.ne.s32.totalorder %s143, %s145
    %p149 = scmp.eq.s32.totalorder %s25, 0
    %p150 = por %p148, %p149
    %p151 = scmp.ne.s32.totalorder %s143, %s145
    %p152 = scmp.eq.s32.totalorder %s30, 3
    %p153 = por %p151, %p152
    %p154 = scmp.ne.s32.totalorder %s145, %s146
    %p155 = scmp.eq.s32.totalorder %s30, 0
    %p156 = por %p154, %p155
    %p157 = scmp.ne.s32.totalorder %s145, %s146
    %p158 = scmp.eq.s32.totalorder %s31, 3
    %p159 = por %p157, %p158
    %p161 = scmp.ne.s32.totalorder %s146, %s160
    %p162 = scmp.eq.s32.totalorder %s31, 0
    %p163 = por %p161, %p162
    %s165 = sadd.s32 %s164, 1
    %p168 = scmp.eq.s32.totalorder %s25, 3
    %p169 = scmp.ne.s32.totalorder %s164, %s166
    %p170 = scmp.eq.s32.totalorder %s25, 0
    %p171 = por %p169, %p170
    %p172 = scmp.ne.s32.totalorder %s164, %s166
    %p173 = scmp.eq.s32.totalorder %s30, 3
    %p174 = por %p172, %p173
    %p175 = scmp.ne.s32.totalorder %s166, %s167
    %p176 = scmp.eq.s32.totalorder %s30, 0
    %p177 = por %p175, %p176
    %p178 = scmp.ne.s32.totalorder %s166, %s167
    %p179 = scmp.eq.s32.totalorder %s31, 3
    %p180 = por %p178, %p179
    %p182 = scmp.ne.s32.totalorder %s167, %s181
    %p183 = scmp.eq.s32.totalorder %s31, 0
    %p184 = por %p182, %p183
    %s186 = sadd.s32 %s185, 1
    %p189 = scmp.eq.s32.totalorder %s25, 3
    %p190 = scmp.ne.s32.totalorder %s185, %s187
    %p191 = scmp.eq.s32.totalorder %s25, 0
    %p192 = por %p190, %p191
    %p193 = scmp.ne.s32.totalorder %s185, %s187
    %p194 = scmp.eq.s32.totalorder %s30, 3
    %p195 = por %p193, %p194
    %p196 = scmp.ne.s32.totalorder %s187, %s188
    %p197 = scmp.eq.s32.totalorder %s30, 0
    %p198 = por %p196, %p197
    %p199 = scmp.ne.s32.totalorder %s187, %s188
    %p200 = scmp.eq.s32.totalorder %s31, 3
    %p201 = por %p199, %p200
    %p203 = scmp.ne.s32.totalorder %s188, %s202
    %p204 = scmp.eq.s32.totalorder %s31, 0
    %p205 = por %p203, %p204
    %s207 = sadd.s32 %s206, 1
    %p210 = scmp.eq.s32.totalorder %s25, 3
    %p211 = scmp.ne.s32.totalorder %s206, %s208
    %p212 = scmp.eq.s32.totalorder %s25, 0
    %p213 = por %p211, %p212
    %p214 = scmp.ne.s32.totalorder %s206, %s208
    %p215 = scmp.eq.s32.totalorder %s30, 3
    %p216 = por %p214, %p215
    %p217 = scmp.ne.s32.totalorder %s208, %s209
    %p218 = scmp.eq.s32.totalorder %s30, 0
    %p219 = por %p217, %p218
    %p220 = scmp.ne.s32.totalorder %s208, %s209
    %p221 = scmp.eq.s32.totalorder %s31, 3
    %p222 = por %p220, %p221
    %p224 = scmp.ne.s32.totalorder %s209, %s223
    %p225 = scmp.eq.s32.totalorder %s31, 0
    %p226 = por %p224, %p225
    %s228 = sadd.s32 %s227, 1
    %p231 = scmp.eq.s32.totalorder %s25, 3
    %p232 = scmp.ne.s32.totalorder %s227, %s229
    %p233 = scmp.eq.s32.totalorder %s25, 0
    %p234 = por %p232, %p233
    %p235 = scmp.ne.s32.totalorder %s227, %s229
    %p236 = scmp.eq.s32.totalorder %s30, 3
    %p237 = por %p235, %p236
    %p238 = scmp.ne.s32.totalorder %s229, %s230
    %p239 = scmp.eq.s32.totalorder %s30, 0
    %p240 = por %p238, %p239
    %p241 = scmp.ne.s32.totalorder %s229, %s230
    %p242 = scmp.eq.s32.totalorder %s31, 3
    %p243 = por %p241, %p242
    %p245 = scmp.ne.s32.totalorder %s230, %s244
    %p246 = scmp.eq.s32.totalorder %s31, 0
    %p247 = por %p245, %p246
    %s249 = sadd.s32 %s248, 1
    %p252 = scmp.eq.s32.totalorder %s25, 3
    %p253 = scmp.ne.s32.totalorder %s248, %s250
    %p254 = scmp.eq.s32.totalorder %s25, 0
    %p255 = por %p253, %p254
    %p256 = scmp.ne.s32.totalorder %s248, %s250
    %p257 = scmp.eq.s32.totalorder %s30, 3
    %p258 = por %p256, %p257
    %p259 = scmp.ne.s32.totalorder %s250, %s251
    %p260 = scmp.eq.s32.totalorder %s30, 0
    %p261 = por %p259, %p260
    %p262 = scmp.ne.s32.totalorder %s250, %s251
    %p263 = scmp.eq.s32.totalorder %s31, 3
    %p264 = por %p262, %p263
    %p266 = scmp.ne.s32.totalorder %s251, %s265
    %p267 = scmp.eq.s32.totalorder %s31, 0
    %p268 = por %p266, %p267
    %s270 = sadd.s32 %s269, 1
    %p273 = scmp.eq.s32.totalorder %s25, 3
    %p274 = scmp.ne.s32.totalorder %s269, %s271
    %p275 = scmp.eq.s32.totalorder %s25, 0
    %p276 = por %p274, %p275
    %p277 = scmp.ne.s32.totalorder %s269, %s271
    %p278 = scmp.eq.s32.totalorder %s30, 3
    %p279 = por %p277, %p278
    %p280 = scmp.ne.s32.totalorder %s271, %s272
    %p281 = scmp.eq.s32.totalorder %s30, 0
    %p282 = por %p280, %p281
    %p283 = scmp.ne.s32.totalorder %s271, %s272
    %p284 = scmp.eq.s32.totalorder %s31, 3
    %p285 = por %p283, %p284
    %p287 = scmp.ne.s32.totalorder %s272, %s286
    %p288 = scmp.eq.s32.totalorder %s31, 0
    %p289 = por %p287, %p288
    %s291 = sadd.s32 %s290, 1
    %p294 = scmp.eq.s32.totalorder %s25, 3
    %p295 = scmp.ne.s32.totalorder %s290, %s292
    %p296 = scmp.eq.s32.totalorder %s25, 0
    %p297 = por %p295, %p296
    %p298 = scmp.ne.s32.totalorder %s290, %s292
    %p299 = scmp.eq.s32.totalorder %s30, 3
    %p300 = por %p298, %p299
    %p301 = scmp.ne.s32.totalorder %s292, %s293
    %p302 = scmp.eq.s32.totalorder %s30, 0
    %p303 = por %p301, %p302
    %p304 = scmp.ne.s32.totalorder %s292, %s293
    %p305 = scmp.eq.s32.totalorder %s31, 3
    %p306 = por %p304, %p305
    %p308 = scmp.ne.s32.totalorder %s293, %s307
    %p309 = scmp.eq.s32.totalorder %s31, 0
    %p310 = por %p308, %p309
    %s312 = sadd.s32 %s311, 1
    %p315 = scmp.eq.s32.totalorder %s25, 3
    %p316 = scmp.ne.s32.totalorder %s311, %s313
    %p317 = scmp.eq.s32.totalorder %s25, 0
    %p318 = por %p316, %p317
    %p319 = scmp.ne.s32.totalorder %s311, %s313
    %p320 = scmp.eq.s32.totalorder %s30, 3
    %p321 = por %p319, %p320
    %p322 = scmp.ne.s32.totalorder %s313, %s314
    %p323 = scmp.eq.s32.totalorder %s30, 0
    %p324 = por %p322, %p323
    %p325 = scmp.ne.s32.totalorder %s313, %s314
    %p326 = scmp.eq.s32.totalorder %s31, 3
    %p327 = por %p325, %p326
    %p329 = scmp.ne.s32.totalorder %s314, %s328
    %p330 = scmp.eq.s32.totalorder %s31, 0
    %p331 = por %p329, %p330
    %s333 = sadd.s32 %s332, 1
    %p336 = scmp.eq.s32.totalorder %s25, 3
    %p337 = scmp.ne.s32.totalorder %s332, %s334
    %p338 = scmp.eq.s32.totalorder %s25, 0
    %p339 = por %p337, %p338
    %p340 = scmp.ne.s32.totalorder %s332, %s334
    %p341 = scmp.eq.s32.totalorder %s30, 3
    %p342 = por %p340, %p341
    %p343 = scmp.ne.s32.totalorder %s334, %s335
    %p344 = scmp.eq.s32.totalorder %s30, 0
    %p345 = por %p343, %p344
    %p346 = scmp.ne.s32.totalorder %s334, %s335
    %p347 = scmp.eq.s32.totalorder %s31, 3
    %p348 = por %p346, %p347
    %p350 = scmp.ne.s32.totalorder %s335, %s349
    %p351 = scmp.eq.s32.totalorder %s31, 0
    %p352 = por %p350, %p351
    %s354 = sadd.s32 %s353, 1
    %p357 = scmp.eq.s32.totalorder %s25, 3
    %p358 = scmp.ne.s32.totalorder %s353, %s355
    %p359 = scmp.eq.s32.totalorder %s25, 0
    %p360 = por %p358, %p359
    %p361 = scmp.ne.s32.totalorder %s353, %s355
    %p362 = scmp.eq.s32.totalorder %s30, 3
    %p363 = por %p361, %p362
    %p364 = scmp.ne.s32.totalorder %s355, %s356
    %p365 = scmp.eq.s32.totalorder %s30, 0
    %p366 = por %p364, %p365
    %p367 = scmp.ne.s32.totalorder %s355, %s356
    %p368 = scmp.eq.s32.totalorder %s31, 3
    %p369 = por %p367, %p368
    %p371 = scmp.ne.s32.totalorder %s356, %s370
    %p372 = scmp.eq.s32.totalorder %s31, 0
    %p373 = por %p371, %p372
    %s375 = sadd.s32 %s374, 1
    %p378 = scmp.eq.s32.totalorder %s25, 3
    %p379 = scmp.ne.s32.totalorder %s374, %s376
    %p380 = scmp.eq.s32.totalorder %s25, 0
    %p381 = por %p379, %p380
    %p382 = scmp.ne.s32.totalorder %s374, %s376
    %p383 = scmp.eq.s32.totalorder %s30, 3
    %p384 = por %p382, %p383
    %p385 = scmp.ne.s32.totalorder %s376, %s377
    %p386 = scmp.eq.s32.totalorder %s30, 0
    %p387 = por %p385, %p386
    %p388 = scmp.ne.s32.totalorder %s376, %s377
    %p389 = scmp.eq.s32.totalorder %s31, 3
    %p390 = por %p388, %p389
    %p392 = scmp.ne.s32.totalorder %s377, %s391
    %p393 = scmp.eq.s32.totalorder %s31, 0
    %p394 = por %p392, %p393
    %s395 = ssub.s32 %s25, %s32
    %p396 = scmp.eq.s32.totalorder %s395, 0
    %s398 = sadd.s32 %s397, 1
    %s399 = scalar_select %p396, %s397, %s398
    %p402 = pneg %p396
    %p403 = scmp.eq.s32.totalorder %s25, 3
    %p404 = por %p402, %p403
    %p405 = scmp.ne.s32.totalorder %s397, %s400
    %p406 = scmp.eq.s32.totalorder %s25, 0
    %p407 = por %p405, %p406
    %p408 = scmp.ne.s32.totalorder %s397, %s400
    %p409 = scmp.eq.s32.totalorder %s30, 3
    %p410 = por %p408, %p409
    %p411 = scmp.ne.s32.totalorder %s400, %s401
    %p412 = scmp.eq.s32.totalorder %s30, 0
    %p413 = por %p411, %p412
    %p414 = scmp.ne.s32.totalorder %s400, %s401
    %p415 = scmp.eq.s32.totalorder %s31, 3
    %p416 = por %p414, %p415
    %p418 = scmp.ne.s32.totalorder %s401, %s417
    %p419 = scmp.eq.s32.totalorder %s31, 0
    %p420 = por %p418, %p419
    %s421 = ssub.s32 %s25, %s32
    %p422 = scmp.eq.s32.totalorder %s421, 0
    %s424 = sadd.s32 %s423, 1
    %s425 = scalar_select %p422, %s423, %s424
    %p428 = pneg %p422
    %p429 = scmp.eq.s32.totalorder %s25, 3
    %p430 = por %p428, %p429
    %p431 = scmp.ne.s32.totalorder %s423, %s426
    %p432 = scmp.eq.s32.totalorder %s25, 0
    %p433 = por %p431, %p432
    %p434 = scmp.ne.s32.totalorder %s423, %s426
    %p435 = scmp.eq.s32.totalorder %s30, 3
    %p436 = por %p434, %p435
    %p437 = scmp.ne.s32.totalorder %s426, %s427
    %p438 = scmp.eq.s32.totalorder %s30, 0
    %p439 = por %p437, %p438
    %p440 = scmp.ne.s32.totalorder %s426, %s427
    %p441 = scmp.eq.s32.totalorder %s31, 3
    %p442 = por %p440, %p441
    %p444 = scmp.ne.s32.totalorder %s427, %s443
    %p445 = scmp.eq.s32.totalorder %s31, 0
    %p446 = por %p444, %p445
    %p447 = scmp.le.s32.totalorder 1, %s25
    %p448 = scmp.lt.s32.totalorder %s25, 5
    %p449 = pnand %p447, %p448
    %p450 = pneg %p449
    // Predicated region
    $region9: #{autoencoder_forward.1} parent=5 // pred_check
      _
    $region10: #{autoencoder_forward.1} parent=5 // pred_check_branch
      %452 = sbr.rel (%p449) target = $region12
    $region11: #{autoencoder_forward.1} parent=5 // pred_region
      %s453 = ssub.s32 %s25, 1
      // Predicated region
      $region13: #{autoencoder_forward.1} parent=11 // pred_check
        %p454 = pneg %p72
      $region14: #{autoencoder_forward.1} parent=11 // pred_check_branch
        %456 = sbr.rel (%p454) target = $region16
      $region15: #{autoencoder_forward.1} parent=11 // pred_region
        _
      $region16: #{autoencoder_forward.1} parent=11 // pred_fallthru
        _
      // Predicated region
      $region17: #{autoencoder_forward.1} parent=11 // pred_check
        %p457 = pneg %p93
      $region18: #{autoencoder_forward.1} parent=11 // pred_check_branch
        %459 = sbr.rel (%p457) target = $region20
      $region19: #{autoencoder_forward.1} parent=11 // pred_region
        _
      $region20: #{autoencoder_forward.1} parent=11 // pred_fallthru
        _
      // Predicated region
      $region21: #{autoencoder_forward.1} parent=11 // pred_check
        %p460 = pneg %p114
      $region22: #{autoencoder_forward.1} parent=11 // pred_check_branch
        %462 = sbr.rel (%p460) target = $region24
      $region23: #{autoencoder_forward.1} parent=11 // pred_region
        _
      $region24: #{autoencoder_forward.1} parent=11 // pred_fallthru
        _
      // Predicated region
      $region25: #{autoencoder_forward.1} parent=11 // pred_check
        %p463 = pneg %p135
      $region26: #{autoencoder_forward.1} parent=11 // pred_check_branch
        %465 = sbr.rel (%p463) target = $region28
      $region27: #{autoencoder_forward.1} parent=11 // pred_region
        _
      $region28: #{autoencoder_forward.1} parent=11 // pred_fallthru
        _
      // Predicated region
      $region29: #{autoencoder_forward.1} parent=11 // pred_check
        %p466 = pneg %p156
      $region30: #{autoencoder_forward.1} parent=11 // pred_check_branch
        %468 = sbr.rel (%p466) target = $region32
      $region31: #{autoencoder_forward.1} parent=11 // pred_region
        _
      $region32: #{autoencoder_forward.1} parent=11 // pred_fallthru
        _
      // Predicated region
      $region33: #{autoencoder_forward.1} parent=11 // pred_check
        %p469 = pneg %p177
      $region34: #{autoencoder_forward.1} parent=11 // pred_check_branch
        %471 = sbr.rel (%p469) target = $region36
      $region35: #{autoencoder_forward.1} parent=11 // pred_region
        _
      $region36: #{autoencoder_forward.1} parent=11 // pred_fallthru
        _
      // Predicated region
      $region37: #{autoencoder_forward.1} parent=11 // pred_check
        %p472 = pneg %p198
      $region38: #{autoencoder_forward.1} parent=11 // pred_check_branch
        %474 = sbr.rel (%p472) target = $region40
      $region39: #{autoencoder_forward.1} parent=11 // pred_region
        _
      $region40: #{autoencoder_forward.1} parent=11 // pred_fallthru
        _
      // Predicated region
      $region41: #{autoencoder_forward.1} parent=11 // pred_check
        %p475 = pneg %p219
      $region42: #{autoencoder_forward.1} parent=11 // pred_check_branch
        %477 = sbr.rel (%p475) target = $region44
      $region43: #{autoencoder_forward.1} parent=11 // pred_region
        _
      $region44: #{autoencoder_forward.1} parent=11 // pred_fallthru
        _
      // Predicated region
      $region45: #{autoencoder_forward.1} parent=11 // pred_check
        %p478 = pneg %p240
      $region46: #{autoencoder_forward.1} parent=11 // pred_check_branch
        %480 = sbr.rel (%p478) target = $region48
      $region47: #{autoencoder_forward.1} parent=11 // pred_region
        _
      $region48: #{autoencoder_forward.1} parent=11 // pred_fallthru
        _
      // Predicated region
      $region49: #{autoencoder_forward.1} parent=11 // pred_check
        %p481 = pneg %p261
      $region50: #{autoencoder_forward.1} parent=11 // pred_check_branch
        %483 = sbr.rel (%p481) target = $region52
      $region51: #{autoencoder_forward.1} parent=11 // pred_region
        _
      $region52: #{autoencoder_forward.1} parent=11 // pred_fallthru
        _
      // Predicated region
      $region53: #{autoencoder_forward.1} parent=11 // pred_check
        %p484 = pneg %p282
      $region54: #{autoencoder_forward.1} parent=11 // pred_check_branch
        %486 = sbr.rel (%p484) target = $region56
      $region55: #{autoencoder_forward.1} parent=11 // pred_region
        _
      $region56: #{autoencoder_forward.1} parent=11 // pred_fallthru
        _
      // Predicated region
      $region57: #{autoencoder_forward.1} parent=11 // pred_check
        %p487 = pneg %p303
      $region58: #{autoencoder_forward.1} parent=11 // pred_check_branch
        %489 = sbr.rel (%p487) target = $region60
      $region59: #{autoencoder_forward.1} parent=11 // pred_region
        _
      $region60: #{autoencoder_forward.1} parent=11 // pred_fallthru
        _
      // Predicated region
      $region61: #{autoencoder_forward.1} parent=11 // pred_check
        %p490 = pneg %p324
      $region62: #{autoencoder_forward.1} parent=11 // pred_check_branch
        %492 = sbr.rel (%p490) target = $region64
      $region63: #{autoencoder_forward.1} parent=11 // pred_region
        _
      $region64: #{autoencoder_forward.1} parent=11 // pred_fallthru
        _
      // Predicated region
      $region65: #{autoencoder_forward.1} parent=11 // pred_check
        %p493 = pneg %p345
      $region66: #{autoencoder_forward.1} parent=11 // pred_check_branch
        %495 = sbr.rel (%p493) target = $region68
      $region67: #{autoencoder_forward.1} parent=11 // pred_region
        _
      $region68: #{autoencoder_forward.1} parent=11 // pred_fallthru
        _
      // Predicated region
      $region69: #{autoencoder_forward.1} parent=11 // pred_check
        %p496 = pneg %p366
      $region70: #{autoencoder_forward.1} parent=11 // pred_check_branch
        %498 = sbr.rel (%p496) target = $region72
      $region71: #{autoencoder_forward.1} parent=11 // pred_region
        _
      $region72: #{autoencoder_forward.1} parent=11 // pred_fallthru
        _
      // Predicated region
      $region73: #{autoencoder_forward.1} parent=11 // pred_check
        %p499 = pneg %p387
      $region74: #{autoencoder_forward.1} parent=11 // pred_check_branch
        %501 = sbr.rel (%p499) target = $region76
      $region75: #{autoencoder_forward.1} parent=11 // pred_region
        _
      $region76: #{autoencoder_forward.1} parent=11 // pred_fallthru
        _
    $region12: #{autoencoder_forward.1} parent=5 // pred_fallthru
      _
    %p502 = scmp.lt.s32.totalorder %s25, 4
    // Predicated region
    $region77: #{autoencoder_forward.1} parent=5 // pred_check
      %p503 = pneg %p502
    $region78: #{autoencoder_forward.1} parent=5 // pred_check_branch
      %505 = sbr.rel (%p503) target = $region80
    $region79: #{autoencoder_forward.1} parent=5 // pred_region
      // Predicated region
      $region81: #{autoencoder_forward.1} parent=79 // pred_check
        %p506 = pneg %p45
      $region82: #{autoencoder_forward.1} parent=79 // pred_check_branch
        %508 = sbr.rel (%p506) target = $region84
      $region83: #{autoencoder_forward.1} parent=79 // pred_region
        %s509 = smul.u32 32, %s25
        %p510 = scmp.lt.s32.totalorder %s509, 127
        %s511 = scalar_select %p510, %s509, 127
        %s512 = smul.addr %s511, 7
        %s513 = smul.addr %s512, 4
        %s514 = scalar_lea.vmem %s0, %s513
        %s515 = smul.u32 32, %s25
      $region84: #{autoencoder_forward.1} parent=79 // pred_fallthru
        _
    $region80: #{autoencoder_forward.1} parent=5 // pred_fallthru
      _
    %p516 = scmp.le.s32.totalorder 1, %s25
    %p517 = scmp.lt.s32.totalorder %s25, 5
    %p518 = pnand %p516, %p517
    %p519 = pneg %p518
    // Predicated region
    $region85: #{autoencoder_forward.1} parent=5 // pred_check
      _
    $region86: #{autoencoder_forward.1} parent=5 // pred_check_branch
      %521 = sbr.rel (%p518) target = $region88
    $region87: #{autoencoder_forward.1} parent=5 // pred_region
      %s522 = ssub.s32 %s25, 1
      %s523 = smul.u32 32, %s30
      %p524 = scmp.lt.s32.totalorder %s523, 127
      %s525 = scalar_select %p524, %s523, 127
      %s526 = smul.addr %s525, 7
      %s527 = smul.addr %s526, 4
      %s528 = scalar_lea.vmem %s0, %s527
      %p529 = pneg %p51
      %p530 = pneg %p48
      %p531 = pneg %p72
      %p532 = pneg %p69
      %p533 = pneg %p93
      %p534 = pneg %p90
      %p535 = pneg %p114
      %p536 = pneg %p111
      %p537 = pneg %p135
      %p538 = pneg %p132
      %p539 = pneg %p156
      %p540 = pneg %p153
      %p541 = pneg %p177
      %p542 = pneg %p174
      %p543 = pneg %p198
      %p544 = pneg %p195
      %p545 = pneg %p219
      %p546 = pneg %p216
      %p547 = pneg %p240
      %p548 = pneg %p237
      %p549 = pneg %p261
      %p550 = pneg %p258
      %p551 = pneg %p282
      %p552 = pneg %p279
      %p553 = pneg %p303
      %p554 = pneg %p300
      %p555 = pneg %p324
      %p556 = pneg %p321
      %p557 = pneg %p345
      %p558 = pneg %p342
      %p559 = pneg %p366
      %p560 = pneg %p363
      %p561 = pneg %p387
      %p562 = pneg %p384
      %p563 = pneg %p413
      %p564 = pneg %p410
      %s565 = smul.u32 32, %s30
      %p566 = scmp.lt.s32.totalorder %s565, 127
      %s567 = scalar_select %p566, %s565, 127
      %s568 = smul.addr %s567, 8
      %s569 = scalar_lea.vmem %s17, %s568
      %p570 = pneg %p439
      %p571 = pneg %p436
      %s572 = smul.u32 32, %s30
      %p573 = scmp.lt.s32.totalorder %s572, 127
      %s574 = scalar_select %p573, %s572, 127
      %s575 = smul.addr %s574, 7
      %s576 = smul.addr %s575, 4
      %s577 = scalar_lea.vmem %s18, %s576
      %s578 = smul.u32 32, %s30
      %p579 = scmp.lt.s32.totalorder %s578, 127
      %s580 = scalar_select %p579, %s578, 127
      %s581 = smul.addr %s580, 7
      %s582 = smul.addr %s581, 4
      %s583 = scalar_lea.vmem %s0, %s582
      %s584 = smul.u32 32, %s30
      %s585 = smul.u32 32, %s30
      %p586 = scmp.lt.s32.totalorder %s585, 127
      %s587 = scalar_select %p586, %s585, 127
      %s588 = smul.addr %s587, 8
      %s589 = scalar_lea.vmem %s17, %s588
      %s590 = smul.u32 32, %s30
      %s591 = smul.u32 32, %s30
      %p592 = scmp.lt.s32.totalorder %s591, 127
      %s593 = scalar_select %p592, %s591, 127
      %s594 = smul.addr %s593, 7
      %s595 = smul.addr %s594, 4
      %s596 = scalar_lea.vmem %s18, %s595
      %s597 = smul.u32 32, %s30
      %v599 = vld [vmem:[%s583] sm:$0xff]
      %v600 = vld [vmem:[%s583 + $0x8] sm:$0xff]
      %v601 = vld [vmem:[%s583 + $0x10] sm:$0xff]
      %v602 = vld [vmem:[%s583 + $0x18] sm:$0xf]
      %v603 = vld [vmem:[%s583 + $0x1c] sm:$0xff]
      %v604 = vld [vmem:[%s583 + $0x24] sm:$0xff]
      %v605 = vld [vmem:[%s583 + $0x2c] sm:$0xff]
      %v606 = vld [vmem:[%s583 + $0x34] sm:$0xf]
      %v607 = vld [vmem:[%s583 + $0x38] sm:$0xff]
      %v608 = vld [vmem:[%s583 + $0x40] sm:$0xff]
      %v609 = vld [vmem:[%s583 + $0x48] sm:$0xff]
      %v610 = vld [vmem:[%s583 + $0x50] sm:$0xf]
      %v611 = vld [vmem:[%s583 + $0x54] sm:$0xff]
      %v612 = vld [vmem:[%s583 + $0x5c] sm:$0xff]
      %v613 = vld [vmem:[%s583 + $0x64] sm:$0xff]
      %v614 = vld [vmem:[%s583 + $0x6c] sm:$0xf]
      %v615 = vld [vmem:[%s583 + $0x70] sm:$0xff]
      %v616 = vld [vmem:[%s583 + $0x78] sm:$0xff]
      %v617 = vld [vmem:[%s583 + $0x80] sm:$0xff]
      %v618 = vld [vmem:[%s583 + $0x88] sm:$0xf]
      %v619 = vld [vmem:[%s583 + $0x8c] sm:$0xff]
      %v620 = vld [vmem:[%s583 + $0x94] sm:$0xff]
      %v621 = vld [vmem:[%s583 + $0x9c] sm:$0xff]
      %v622 = vld [vmem:[%s583 + $0xa4] sm:$0xf]
      %v623 = vld [vmem:[%s583 + $0xa8] sm:$0xff]
      %v624 = vld [vmem:[%s583 + $0xb0] sm:$0xff]
      %v625 = vld [vmem:[%s583 + $0xb8] sm:$0xff]
      %v626 = vld [vmem:[%s583 + $0xc0] sm:$0xf]
      %v627 = vld [vmem:[%s583 + $0xc4] sm:$0xff]
      %v628 = vld [vmem:[%s583 + $0xcc] sm:$0xff]
      %v629 = vld [vmem:[%s583 + $0xd4] sm:$0xff]
      %v630 = vld [vmem:[%s583 + $0xdc] sm:$0xf]
      %v631 = vld [vmem:[%s583 + $0xe0] sm:$0xff]
      %v632 = vld [vmem:[%s583 + $0xe8] sm:$0xff]
      %v633 = vld [vmem:[%s583 + $0xf0] sm:$0xff]
      %v634 = vld [vmem:[%s583 + $0xf8] sm:$0xf]
      %v635 = vld [vmem:[%s583 + $0xfc] sm:$0xff]
      %v636 = vld [vmem:[%s583 + $0x104] sm:$0xff]
      %v637 = vld [vmem:[%s583 + $0x10c] sm:$0xff]
      %v638 = vld [vmem:[%s583 + $0x114] sm:$0xf]
      %v639 = vld [vmem:[%s583 + $0x118] sm:$0xff]
      %v640 = vld [vmem:[%s583 + $0x120] sm:$0xff]
      %v641 = vld [vmem:[%s583 + $0x128] sm:$0xff]
      %v642 = vld [vmem:[%s583 + $0x130] sm:$0xf]
      %v643 = vld [vmem:[%s583 + $0x134] sm:$0xff]
      %v644 = vld [vmem:[%s583 + $0x13c] sm:$0xff]
      %v645 = vld [vmem:[%s583 + $0x144] sm:$0xff]
      %v646 = vld [vmem:[%s583 + $0x14c] sm:$0xf]
      %v647 = vld [vmem:[%s583 + $0x150] sm:$0xff]
      %v648 = vld [vmem:[%s583 + $0x158] sm:$0xff]
      %v649 = vld [vmem:[%s583 + $0x160] sm:$0xff]
      %v650 = vld [vmem:[%s583 + $0x168] sm:$0xf]
      %v651 = vld [vmem:[%s583 + $0x16c] sm:$0xff]
      %v652 = vld [vmem:[%s583 + $0x174] sm:$0xff]
      %v653 = vld [vmem:[%s583 + $0x17c] sm:$0xff]
      %v654 = vld [vmem:[%s583 + $0x184] sm:$0xf]
      %v655 = vld [vmem:[%s583 + $0x188] sm:$0xff]
      %v656 = vld [vmem:[%s583 + $0x190] sm:$0xff]
      %v657 = vld [vmem:[%s583 + $0x198] sm:$0xff]
      %v658 = vld [vmem:[%s583 + $0x1a0] sm:$0xf]
      %v659 = vld [vmem:[%s583 + $0x1a4] sm:$0xff]
      %v660 = vld [vmem:[%s583 + $0x1ac] sm:$0xff]
      %v661 = vld [vmem:[%s583 + $0x1b4] sm:$0xff]
      %v662 = vld [vmem:[%s583 + $0x1bc] sm:$0xf]
      %v663 = vld [vmem:[%s583 + $0x1c0] sm:$0xff]
      %v664 = vld [vmem:[%s583 + $0x1c8] sm:$0xff]
      %v665 = vld [vmem:[%s583 + $0x1d0] sm:$0xff]
      %v666 = vld [vmem:[%s583 + $0x1d8] sm:$0xf]
      %v667 = vld [vmem:[%s583 + $0x1dc] sm:$0xff]
      %v668 = vld [vmem:[%s583 + $0x1e4] sm:$0xff]
      %v669 = vld [vmem:[%s583 + $0x1ec] sm:$0xff]
      %v670 = vld [vmem:[%s583 + $0x1f4] sm:$0xf]
      %v671 = vld [vmem:[%s583 + $0x1f8] sm:$0xff]
      %v672 = vld [vmem:[%s583 + $0x200] sm:$0xff]
      %v673 = vld [vmem:[%s583 + $0x208] sm:$0xff]
      %v674 = vld [vmem:[%s583 + $0x210] sm:$0xf]
      %v675 = vld [vmem:[%s583 + $0x214] sm:$0xff]
      %v676 = vld [vmem:[%s583 + $0x21c] sm:$0xff]
      %v677 = vld [vmem:[%s583 + $0x224] sm:$0xff]
      %v678 = vld [vmem:[%s583 + $0x22c] sm:$0xf]
      %v679 = vld [vmem:[%s583 + $0x230] sm:$0xff]
      %v680 = vld [vmem:[%s583 + $0x238] sm:$0xff]
      %v681 = vld [vmem:[%s583 + $0x240] sm:$0xff]
      %v682 = vld [vmem:[%s583 + $0x248] sm:$0xf]
      %v683 = vld [vmem:[%s583 + $0x24c] sm:$0xff]
      %v684 = vld [vmem:[%s583 + $0x254] sm:$0xff]
      %v685 = vld [vmem:[%s583 + $0x25c] sm:$0xff]
      %v686 = vld [vmem:[%s583 + $0x264] sm:$0xf]
      %v687 = vld [vmem:[%s583 + $0x268] sm:$0xff]
      %v688 = vld [vmem:[%s583 + $0x270] sm:$0xff]
      %v689 = vld [vmem:[%s583 + $0x278] sm:$0xff]
      %v690 = vld [vmem:[%s583 + $0x280] sm:$0xf]
      %v691 = vld [vmem:[%s583 + $0x284] sm:$0xff]
      %v692 = vld [vmem:[%s583 + $0x28c] sm:$0xff]
      %v693 = vld [vmem:[%s583 + $0x294] sm:$0xff]
      %v694 = vld [vmem:[%s583 + $0x29c] sm:$0xf]
      %v695 = vld [vmem:[%s583 + $0x2a0] sm:$0xff]
      %v696 = vld [vmem:[%s583 + $0x2a8] sm:$0xff]
      %v697 = vld [vmem:[%s583 + $0x2b0] sm:$0xff]
      %v698 = vld [vmem:[%s583 + $0x2b8] sm:$0xf]
      %v699 = vld [vmem:[%s583 + $0x2bc] sm:$0xff]
      %v700 = vld [vmem:[%s583 + $0x2c4] sm:$0xff]
      %v701 = vld [vmem:[%s583 + $0x2cc] sm:$0xff]
      %v702 = vld [vmem:[%s583 + $0x2d4] sm:$0xf]
      %v703 = vld [vmem:[%s583 + $0x2d8] sm:$0xff]
      %v704 = vld [vmem:[%s583 + $0x2e0] sm:$0xff]
      %v705 = vld [vmem:[%s583 + $0x2e8] sm:$0xff]
      %v706 = vld [vmem:[%s583 + $0x2f0] sm:$0xf]
      %v707 = vld [vmem:[%s583 + $0x2f4] sm:$0xff]
      %v708 = vld [vmem:[%s583 + $0x2fc] sm:$0xff]
      %v709 = vld [vmem:[%s583 + $0x304] sm:$0xff]
      %v710 = vld [vmem:[%s583 + $0x30c] sm:$0xf]
      %v711 = vld [vmem:[%s583 + $0x310] sm:$0xff]
      %v712 = vld [vmem:[%s583 + $0x318] sm:$0xff]
      %v713 = vld [vmem:[%s583 + $0x320] sm:$0xff]
      %v714 = vld [vmem:[%s583 + $0x328] sm:$0xf]
      %v715 = vld [vmem:[%s583 + $0x32c] sm:$0xff]
      %v716 = vld [vmem:[%s583 + $0x334] sm:$0xff]
      %v717 = vld [vmem:[%s583 + $0x33c] sm:$0xff]
      %v718 = vld [vmem:[%s583 + $0x344] sm:$0xf]
      %v719 = vld [vmem:[%s583 + $0x348] sm:$0xff]
      %v720 = vld [vmem:[%s583 + $0x350] sm:$0xff]
      %v721 = vld [vmem:[%s583 + $0x358] sm:$0xff]
      %v722 = vld [vmem:[%s583 + $0x360] sm:$0xf]
      %v723 = vld [vmem:[%s583 + $0x364] sm:$0xff]
      %v724 = vld [vmem:[%s583 + $0x36c] sm:$0xff]
      %v725 = vld [vmem:[%s583 + $0x374] sm:$0xff]
      %v726 = vld [vmem:[%s583 + $0x37c] sm:$0xf]
      %v727 = vld [vmem:[%s1] sm:$0xf]
      %v728 = vld [vmem:[%s1 + $0x4] sm:$0xf]
      %v729 = vld [vmem:[%s1 + $0x8] sm:$0xf]
      %v730 = vld [vmem:[%s1 + $0xc] sm:$0xf]
      %v731 = vld [vmem:[%s1 + $0x10] sm:$0xf]
      %v732 = vld [vmem:[%s1 + $0x14] sm:$0xf]
      %v733 = vld [vmem:[%s1 + $0x18] sm:$0xf]
      %v734 = vld [vmem:[%s1 + $0x1c] sm:$0xf]
      %v735 = vld [vmem:[%s1 + $0x20] sm:$0xf]
      %v736 = vld [vmem:[%s1 + $0x24] sm:$0xf]
      %v737 = vld [vmem:[%s1 + $0x28] sm:$0xf]
      %v738 = vld [vmem:[%s1 + $0x2c] sm:$0xf]
      %v739 = vld [vmem:[%s1 + $0x30] sm:$0xf]
      %v740 = vld [vmem:[%s1 + $0x34] sm:$0xf]
      %v741 = vld [vmem:[%s1 + $0x38] sm:$0xf]
      %v742 = vld [vmem:[%s1 + $0x3c] sm:$0xf]
      %v743 = vld [vmem:[%s1 + $0x40] sm:$0xf]
      %v744 = vld [vmem:[%s1 + $0x44] sm:$0xf]
      %v745 = vld [vmem:[%s1 + $0x48] sm:$0xf]
      %v746 = vld [vmem:[%s1 + $0x4c] sm:$0xf]
      %v747 = vld [vmem:[%s1 + $0x50] sm:$0xf]
      %v748 = vld [vmem:[%s1 + $0x54] sm:$0xf]
      %v749 = vld [vmem:[%s1 + $0x58] sm:$0xf]
      %v750 = vld [vmem:[%s1 + $0x5c] sm:$0xf]
      %v751 = vld [vmem:[%s1 + $0x60] sm:$0xf]
      %v752 = vld [vmem:[%s1 + $0x64] sm:$0xf]
      %v753 = vld [vmem:[%s1 + $0x68] sm:$0xf]
      %v754 = vld [vmem:[%s1 + $0x6c] sm:$0xf]
      %v755 = vld [vmem:[%s1 + $0x70] sm:$0xf]
      %v756 = vld [vmem:[%s1 + $0x74] sm:$0xf]
      %v757 = vld [vmem:[%s1 + $0x78] sm:$0xf]
      %v758 = vld [vmem:[%s1 + $0x7c] sm:$0xf]
      %v759 = vld [vmem:[%s1 + $0x80] sm:$0xf]
      %v760 = vld [vmem:[%s1 + $0x84] sm:$0xf]
      %v761 = vld [vmem:[%s1 + $0x88] sm:$0xf]
      %v762 = vld [vmem:[%s1 + $0x8c] sm:$0xf]
      %v763 = vld [vmem:[%s1 + $0x90] sm:$0xf]
      %v764 = vld [vmem:[%s1 + $0x94] sm:$0xf]
      %v765 = vld [vmem:[%s1 + $0x98] sm:$0xf]
      %v766 = vld [vmem:[%s1 + $0x9c] sm:$0xf]
      %v767 = vld [vmem:[%s1 + $0xa0] sm:$0xf]
      %v768 = vld [vmem:[%s1 + $0xa4] sm:$0xf]
      %v769 = vld [vmem:[%s1 + $0xa8] sm:$0xf]
      %v770 = vld [vmem:[%s1 + $0xac] sm:$0xf]
      %v771 = vld [vmem:[%s1 + $0xb0] sm:$0xf]
      %v772 = vld [vmem:[%s1 + $0xb4] sm:$0xf]
      %v773 = vld [vmem:[%s1 + $0xb8] sm:$0xf]
      %v774 = vld [vmem:[%s1 + $0xbc] sm:$0xf]
      %v775 = vld [vmem:[%s1 + $0xc0] sm:$0xf]
      %v776 = vld [vmem:[%s1 + $0xc4] sm:$0xf]
      %v777 = vld [vmem:[%s1 + $0xc8] sm:$0xf]
      %v778 = vld [vmem:[%s1 + $0xcc] sm:$0xf]
      %v779 = vld [vmem:[%s1 + $0xd0] sm:$0xf]
      %v780 = vld [vmem:[%s1 + $0xd4] sm:$0xf]
      %v781 = vld [vmem:[%s1 + $0xd8] sm:$0xf]
      %v782 = vld [vmem:[%s1 + $0xdc] sm:$0xf]
      %v783 = vld [vmem:[%s1 + $0xe0] sm:$0xf]
      %v784 = vld [vmem:[%s1 + $0xe4] sm:$0xf]
      %v785 = vld [vmem:[%s1 + $0xe8] sm:$0xf]
      %v786 = vld [vmem:[%s1 + $0xec] sm:$0xf]
      %v787 = vld [vmem:[%s1 + $0xf0] sm:$0xf]
      %v788 = vld [vmem:[%s1 + $0xf4] sm:$0xf]
      %v789 = vld [vmem:[%s1 + $0xf8] sm:$0xf]
      %v790 = vld [vmem:[%s1 + $0xfc] sm:$0xf]
      %v791 = vld [vmem:[%s1 + $0x100] sm:$0xf]
      %v792 = vld [vmem:[%s1 + $0x104] sm:$0xf]
      %v793 = vld [vmem:[%s1 + $0x108] sm:$0xf]
      %v794 = vld [vmem:[%s1 + $0x10c] sm:$0xf]
      %v795 = vld [vmem:[%s1 + $0x110] sm:$0xf]
      %v796 = vld [vmem:[%s1 + $0x114] sm:$0xf]
      %v797 = vld [vmem:[%s1 + $0x118] sm:$0xf]
      %v798 = vld [vmem:[%s1 + $0x11c] sm:$0xf]
      %v799 = vld [vmem:[%s1 + $0x120] sm:$0xf]
      %v800 = vld [vmem:[%s1 + $0x124] sm:$0xf]
      %v801 = vld [vmem:[%s1 + $0x128] sm:$0xf]
      %v802 = vld [vmem:[%s1 + $0x12c] sm:$0xf]
      %v803 = vld [vmem:[%s1 + $0x130] sm:$0xf]
      %v804 = vld [vmem:[%s1 + $0x134] sm:$0xf]
      %v805 = vld [vmem:[%s1 + $0x138] sm:$0xf]
      %v806 = vld [vmem:[%s1 + $0x13c] sm:$0xf]
      %v807 = vld [vmem:[%s1 + $0x140] sm:$0xf]
      %v808 = vld [vmem:[%s1 + $0x144] sm:$0xf]
      %v809 = vld [vmem:[%s1 + $0x148] sm:$0xf]
      %v810 = vld [vmem:[%s1 + $0x14c] sm:$0xf]
      %v811 = vld [vmem:[%s1 + $0x150] sm:$0xf]
      %v812 = vld [vmem:[%s1 + $0x154] sm:$0xf]
      %v813 = vld [vmem:[%s1 + $0x158] sm:$0xf]
      %v814 = vld [vmem:[%s1 + $0x15c] sm:$0xf]
      %v815 = vld [vmem:[%s1 + $0x160] sm:$0xf]
      %v816 = vld [vmem:[%s1 + $0x164] sm:$0xf]
      %v817 = vld [vmem:[%s1 + $0x168] sm:$0xf]
      %v818 = vld [vmem:[%s1 + $0x16c] sm:$0xf]
      %v819 = vld [vmem:[%s1 + $0x170] sm:$0xf]
      %v820 = vld [vmem:[%s1 + $0x174] sm:$0xf]
      %v821 = vld [vmem:[%s1 + $0x178] sm:$0xf]
      %v822 = vld [vmem:[%s1 + $0x17c] sm:$0xf]
      %v823 = vld [vmem:[%s1 + $0x180] sm:$0xf]
      %v824 = vld [vmem:[%s1 + $0x184] sm:$0xf]
      %v825 = vld [vmem:[%s2] sm:$0x1]
      %v827 = vlaneseq
      %v828 = vshrl.u32 %v827, 7
      %v829 = vsub.s32 0, %v828
      %v830 = vrot.slane %v825, %v829
      %v960 = vunpack.c.l.b16 %v599
      %v961 = vunpack.c.h.b16 %v599
      %v962 = vunpack.c.l.b16 %v600
      %v963 = vunpack.c.h.b16 %v600
      %v964 = vunpack.c.l.b16 %v601
      %v965 = vunpack.c.h.b16 %v601
      %v966 = vunpack.c.l.b16 %v602
      %v967 = vunpack.c.l.b16 %v603
      %v968 = vunpack.c.h.b16 %v603
      %v969 = vunpack.c.l.b16 %v604
      %v970 = vunpack.c.h.b16 %v604
      %v971 = vunpack.c.l.b16 %v605
      %v972 = vunpack.c.h.b16 %v605
      %v973 = vunpack.c.l.b16 %v606
      %v974 = vunpack.c.l.b16 %v607
      %v975 = vunpack.c.h.b16 %v607
      %v976 = vunpack.c.l.b16 %v608
      %v977 = vunpack.c.h.b16 %v608
      %v978 = vunpack.c.l.b16 %v609
      %v979 = vunpack.c.h.b16 %v609
      %v980 = vunpack.c.l.b16 %v610
      %v981 = vunpack.c.l.b16 %v611
      %v982 = vunpack.c.h.b16 %v611
      %v983 = vunpack.c.l.b16 %v612
      %v984 = vunpack.c.h.b16 %v612
      %v985 = vunpack.c.l.b16 %v613
      %v986 = vunpack.c.h.b16 %v613
      %v987 = vunpack.c.l.b16 %v614
      %v988 = vunpack.c.l.b16 %v615
      %v989 = vunpack.c.h.b16 %v615
      %v990 = vunpack.c.l.b16 %v616
      %v991 = vunpack.c.h.b16 %v616
      %v992 = vunpack.c.l.b16 %v617
      %v993 = vunpack.c.h.b16 %v617
      %v994 = vunpack.c.l.b16 %v618
      %v995 = vunpack.c.l.b16 %v619
      %v996 = vunpack.c.h.b16 %v619
      %v997 = vunpack.c.l.b16 %v620
      %v998 = vunpack.c.h.b16 %v620
      %v999 = vunpack.c.l.b16 %v621
      %v1000 = vunpack.c.h.b16 %v621
      %v1001 = vunpack.c.l.b16 %v622
      %v1002 = vunpack.c.l.b16 %v623
      %v1003 = vunpack.c.h.b16 %v623
      %v1004 = vunpack.c.l.b16 %v624
      %v1005 = vunpack.c.h.b16 %v624
      %v1006 = vunpack.c.l.b16 %v625
      %v1007 = vunpack.c.h.b16 %v625
      %v1008 = vunpack.c.l.b16 %v626
      %v1009 = vunpack.c.l.b16 %v627
      %v1010 = vunpack.c.h.b16 %v627
      %v1011 = vunpack.c.l.b16 %v628
      %v1012 = vunpack.c.h.b16 %v628
      %v1013 = vunpack.c.l.b16 %v629
      %v1014 = vunpack.c.h.b16 %v629
      %v1015 = vunpack.c.l.b16 %v630
      %v1016 = vunpack.c.l.b16 %v631
      %v1017 = vunpack.c.h.b16 %v631
      %v1018 = vunpack.c.l.b16 %v632
      %v1019 = vunpack.c.h.b16 %v632
      %v1020 = vunpack.c.l.b16 %v633
      %v1021 = vunpack.c.h.b16 %v633
      %v1022 = vunpack.c.l.b16 %v634
      %v1023 = vunpack.c.l.b16 %v635
      %v1024 = vunpack.c.h.b16 %v635
      %v1025 = vunpack.c.l.b16 %v636
      %v1026 = vunpack.c.h.b16 %v636
      %v1027 = vunpack.c.l.b16 %v637
      %v1028 = vunpack.c.h.b16 %v637
      %v1029 = vunpack.c.l.b16 %v638
      %v1030 = vunpack.c.l.b16 %v639
      %v1031 = vunpack.c.h.b16 %v639
      %v1032 = vunpack.c.l.b16 %v640
      %v1033 = vunpack.c.h.b16 %v640
      %v1034 = vunpack.c.l.b16 %v641
      %v1035 = vunpack.c.h.b16 %v641
      %v1036 = vunpack.c.l.b16 %v642
      %v1037 = vunpack.c.l.b16 %v643
      %v1038 = vunpack.c.h.b16 %v643
      %v1039 = vunpack.c.l.b16 %v644
      %v1040 = vunpack.c.h.b16 %v644
      %v1041 = vunpack.c.l.b16 %v645
      %v1042 = vunpack.c.h.b16 %v645
      %v1043 = vunpack.c.l.b16 %v646
      %v1044 = vunpack.c.l.b16 %v647
      %v1045 = vunpack.c.h.b16 %v647
      %v1046 = vunpack.c.l.b16 %v648
      %v1047 = vunpack.c.h.b16 %v648
      %v1048 = vunpack.c.l.b16 %v649
      %v1049 = vunpack.c.h.b16 %v649
      %v1050 = vunpack.c.l.b16 %v650
      %v1051 = vunpack.c.l.b16 %v651
      %v1052 = vunpack.c.h.b16 %v651
      %v1053 = vunpack.c.l.b16 %v652
      %v1054 = vunpack.c.h.b16 %v652
      %v1055 = vunpack.c.l.b16 %v653
      %v1056 = vunpack.c.h.b16 %v653
      %v1057 = vunpack.c.l.b16 %v654
      %v1058 = vunpack.c.l.b16 %v655
      %v1059 = vunpack.c.h.b16 %v655
      %v1060 = vunpack.c.l.b16 %v656
      %v1061 = vunpack.c.h.b16 %v656
      %v1062 = vunpack.c.l.b16 %v657
      %v1063 = vunpack.c.h.b16 %v657
      %v1064 = vunpack.c.l.b16 %v658
      %v1065 = vunpack.c.l.b16 %v659
      %v1066 = vunpack.c.h.b16 %v659
      %v1067 = vunpack.c.l.b16 %v660
      %v1068 = vunpack.c.h.b16 %v660
      %v1069 = vunpack.c.l.b16 %v661
      %v1070 = vunpack.c.h.b16 %v661
      %v1071 = vunpack.c.l.b16 %v662
      %v1072 = vunpack.c.l.b16 %v663
      %v1073 = vunpack.c.h.b16 %v663
      %v1074 = vunpack.c.l.b16 %v664
      %v1075 = vunpack.c.h.b16 %v664
      %v1076 = vunpack.c.l.b16 %v665
      %v1077 = vunpack.c.h.b16 %v665
      %v1078 = vunpack.c.l.b16 %v666
      %v1079 = vunpack.c.l.b16 %v667
      %v1080 = vunpack.c.h.b16 %v667
      %v1081 = vunpack.c.l.b16 %v668
      %v1082 = vunpack.c.h.b16 %v668
      %v1083 = vunpack.c.l.b16 %v669
      %v1084 = vunpack.c.h.b16 %v669
      %v1085 = vunpack.c.l.b16 %v670
      %v1086 = vunpack.c.l.b16 %v671
      %v1087 = vunpack.c.h.b16 %v671
      %v1088 = vunpack.c.l.b16 %v672
      %v1089 = vunpack.c.h.b16 %v672
      %v1090 = vunpack.c.l.b16 %v673
      %v1091 = vunpack.c.h.b16 %v673
      %v1092 = vunpack.c.l.b16 %v674
      %v1093 = vunpack.c.l.b16 %v675
      %v1094 = vunpack.c.h.b16 %v675
      %v1095 = vunpack.c.l.b16 %v676
      %v1096 = vunpack.c.h.b16 %v676
      %v1097 = vunpack.c.l.b16 %v677
      %v1098 = vunpack.c.h.b16 %v677
      %v1099 = vunpack.c.l.b16 %v678
      %v1100 = vunpack.c.l.b16 %v679
      %v1101 = vunpack.c.h.b16 %v679
      %v1102 = vunpack.c.l.b16 %v680
      %v1103 = vunpack.c.h.b16 %v680
      %v1104 = vunpack.c.l.b16 %v681
      %v1105 = vunpack.c.h.b16 %v681
      %v1106 = vunpack.c.l.b16 %v682
      %v1107 = vunpack.c.l.b16 %v683
      %v1108 = vunpack.c.h.b16 %v683
      %v1109 = vunpack.c.l.b16 %v684
      %v1110 = vunpack.c.h.b16 %v684
      %v1111 = vunpack.c.l.b16 %v685
      %v1112 = vunpack.c.h.b16 %v685
      %v1113 = vunpack.c.l.b16 %v686
      %v1114 = vunpack.c.l.b16 %v687
      %v1115 = vunpack.c.h.b16 %v687
      %v1116 = vunpack.c.l.b16 %v688
      %v1117 = vunpack.c.h.b16 %v688
      %v1118 = vunpack.c.l.b16 %v689
      %v1119 = vunpack.c.h.b16 %v689
      %v1120 = vunpack.c.l.b16 %v690
      %v1121 = vunpack.c.l.b16 %v691
      %v1122 = vunpack.c.h.b16 %v691
      %v1123 = vunpack.c.l.b16 %v692
      %v1124 = vunpack.c.h.b16 %v692
      %v1125 = vunpack.c.l.b16 %v693
      %v1126 = vunpack.c.h.b16 %v693
      %v1127 = vunpack.c.l.b16 %v694
      %v1128 = vunpack.c.l.b16 %v695
      %v1129 = vunpack.c.h.b16 %v695
      %v1130 = vunpack.c.l.b16 %v696
      %v1131 = vunpack.c.h.b16 %v696
      %v1132 = vunpack.c.l.b16 %v697
      %v1133 = vunpack.c.h.b16 %v697
      %v1134 = vunpack.c.l.b16 %v698
      %v1135 = vunpack.c.l.b16 %v699
      %v1136 = vunpack.c.h.b16 %v699
      %v1137 = vunpack.c.l.b16 %v700
      %v1138 = vunpack.c.h.b16 %v700
      %v1139 = vunpack.c.l.b16 %v701
      %v1140 = vunpack.c.h.b16 %v701
      %v1141 = vunpack.c.l.b16 %v702
      %v1142 = vunpack.c.l.b16 %v703
      %v1143 = vunpack.c.h.b16 %v703
      %v1144 = vunpack.c.l.b16 %v704
      %v1145 = vunpack.c.h.b16 %v704
      %v1146 = vunpack.c.l.b16 %v705
      %v1147 = vunpack.c.h.b16 %v705
      %v1148 = vunpack.c.l.b16 %v706
      %v1149 = vunpack.c.l.b16 %v707
      %v1150 = vunpack.c.h.b16 %v707
      %v1151 = vunpack.c.l.b16 %v708
      %v1152 = vunpack.c.h.b16 %v708
      %v1153 = vunpack.c.l.b16 %v709
      %v1154 = vunpack.c.h.b16 %v709
      %v1155 = vunpack.c.l.b16 %v710
      %v1156 = vunpack.c.l.b16 %v711
      %v1157 = vunpack.c.h.b16 %v711
      %v1158 = vunpack.c.l.b16 %v712
      %v1159 = vunpack.c.h.b16 %v712
      %v1160 = vunpack.c.l.b16 %v713
      %v1161 = vunpack.c.h.b16 %v713
      %v1162 = vunpack.c.l.b16 %v714
      %v1163 = vunpack.c.l.b16 %v715
      %v1164 = vunpack.c.h.b16 %v715
      %v1165 = vunpack.c.l.b16 %v716
      %v1166 = vunpack.c.h.b16 %v716
      %v1167 = vunpack.c.l.b16 %v717
      %v1168 = vunpack.c.h.b16 %v717
      %v1169 = vunpack.c.l.b16 %v718
      %v1170 = vunpack.c.l.b16 %v719
      %v1171 = vunpack.c.h.b16 %v719
      %v1172 = vunpack.c.l.b16 %v720
      %v1173 = vunpack.c.h.b16 %v720
      %v1174 = vunpack.c.l.b16 %v721
      %v1175 = vunpack.c.h.b16 %v721
      %v1176 = vunpack.c.l.b16 %v722
      %v1177 = vunpack.c.l.b16 %v723
      %v1178 = vunpack.c.h.b16 %v723
      %v1179 = vunpack.c.l.b16 %v724
      %v1180 = vunpack.c.h.b16 %v724
      %v1181 = vunpack.c.l.b16 %v725
      %v1182 = vunpack.c.h.b16 %v725
      %v1183 = vunpack.c.l.b16 %v726
      %v1184 = vpack.c.b16 %v967, %v960
      %v1185 = vpack.c.b16 %v968, %v961
      %v1186 = vpack.c.b16 %v969, %v962
      %v1187 = vpack.c.b16 %v970, %v963
      %v1188 = vpack.c.b16 %v971, %v964
      %v1189 = vpack.c.b16 %v972, %v965
      %v1190 = vpack.c.b16 %v973, %v966
      %v1191 = vpack.c.b16 %v981, %v974
      %v1192 = vpack.c.b16 %v982, %v975
      %v1193 = vpack.c.b16 %v983, %v976
      %v1194 = vpack.c.b16 %v984, %v977
      %v1195 = vpack.c.b16 %v985, %v978
      %v1196 = vpack.c.b16 %v986, %v979
      %v1197 = vpack.c.b16 %v987, %v980
      %v1198 = vpack.c.b16 %v995, %v988
      %v1199 = vpack.c.b16 %v996, %v989
      %v1200 = vpack.c.b16 %v997, %v990
      %v1201 = vpack.c.b16 %v998, %v991
      %v1202 = vpack.c.b16 %v999, %v992
      %v1203 = vpack.c.b16 %v1000, %v993
      %v1204 = vpack.c.b16 %v1001, %v994
      %v1205 = vpack.c.b16 %v1009, %v1002
      %v1206 = vpack.c.b16 %v1010, %v1003
      %v1207 = vpack.c.b16 %v1011, %v1004
      %v1208 = vpack.c.b16 %v1012, %v1005
      %v1209 = vpack.c.b16 %v1013, %v1006
      %v1210 = vpack.c.b16 %v1014, %v1007
      %v1211 = vpack.c.b16 %v1015, %v1008
      %v1212 = vpack.c.b16 %v1023, %v1016
      %v1213 = vpack.c.b16 %v1024, %v1017
      %v1214 = vpack.c.b16 %v1025, %v1018
      %v1215 = vpack.c.b16 %v1026, %v1019
      %v1216 = vpack.c.b16 %v1027, %v1020
      %v1217 = vpack.c.b16 %v1028, %v1021
      %v1218 = vpack.c.b16 %v1029, %v1022
      %v1219 = vpack.c.b16 %v1037, %v1030
      %v1220 = vpack.c.b16 %v1038, %v1031
      %v1221 = vpack.c.b16 %v1039, %v1032
      %v1222 = vpack.c.b16 %v1040, %v1033
      %v1223 = vpack.c.b16 %v1041, %v1034
      %v1224 = vpack.c.b16 %v1042, %v1035
      %v1225 = vpack.c.b16 %v1043, %v1036
      %v1226 = vpack.c.b16 %v1051, %v1044
      %v1227 = vpack.c.b16 %v1052, %v1045
      %v1228 = vpack.c.b16 %v1053, %v1046
      %v1229 = vpack.c.b16 %v1054, %v1047
      %v1230 = vpack.c.b16 %v1055, %v1048
      %v1231 = vpack.c.b16 %v1056, %v1049
      %v1232 = vpack.c.b16 %v1057, %v1050
      %v1233 = vpack.c.b16 %v1065, %v1058
      %v1234 = vpack.c.b16 %v1066, %v1059
      %v1235 = vpack.c.b16 %v1067, %v1060
      %v1236 = vpack.c.b16 %v1068, %v1061
      %v1237 = vpack.c.b16 %v1069, %v1062
      %v1238 = vpack.c.b16 %v1070, %v1063
      %v1239 = vpack.c.b16 %v1071, %v1064
      %v1240 = vpack.c.b16 %v1079, %v1072
      %v1241 = vpack.c.b16 %v1080, %v1073
      %v1242 = vpack.c.b16 %v1081, %v1074
      %v1243 = vpack.c.b16 %v1082, %v1075
      %v1244 = vpack.c.b16 %v1083, %v1076
      %v1245 = vpack.c.b16 %v1084, %v1077
      %v1246 = vpack.c.b16 %v1085, %v1078
      %v1247 = vpack.c.b16 %v1093, %v1086
      %v1248 = vpack.c.b16 %v1094, %v1087
      %v1249 = vpack.c.b16 %v1095, %v1088
      %v1250 = vpack.c.b16 %v1096, %v1089
      %v1251 = vpack.c.b16 %v1097, %v1090
      %v1252 = vpack.c.b16 %v1098, %v1091
      %v1253 = vpack.c.b16 %v1099, %v1092
      %v1254 = vpack.c.b16 %v1107, %v1100
      %v1255 = vpack.c.b16 %v1108, %v1101
      %v1256 = vpack.c.b16 %v1109, %v1102
      %v1257 = vpack.c.b16 %v1110, %v1103
      %v1258 = vpack.c.b16 %v1111, %v1104
      %v1259 = vpack.c.b16 %v1112, %v1105
      %v1260 = vpack.c.b16 %v1113, %v1106
      %v1261 = vpack.c.b16 %v1121, %v1114
      %v1262 = vpack.c.b16 %v1122, %v1115
      %v1263 = vpack.c.b16 %v1123, %v1116
      %v1264 = vpack.c.b16 %v1124, %v1117
      %v1265 = vpack.c.b16 %v1125, %v1118
      %v1266 = vpack.c.b16 %v1126, %v1119
      %v1267 = vpack.c.b16 %v1127, %v1120
      %v1268 = vpack.c.b16 %v1135, %v1128
      %v1269 = vpack.c.b16 %v1136, %v1129
      %v1270 = vpack.c.b16 %v1137, %v1130
      %v1271 = vpack.c.b16 %v1138, %v1131
      %v1272 = vpack.c.b16 %v1139, %v1132
      %v1273 = vpack.c.b16 %v1140, %v1133
      %v1274 = vpack.c.b16 %v1141, %v1134
      %v1275 = vpack.c.b16 %v1149, %v1142
      %v1276 = vpack.c.b16 %v1150, %v1143
      %v1277 = vpack.c.b16 %v1151, %v1144
      %v1278 = vpack.c.b16 %v1152, %v1145
      %v1279 = vpack.c.b16 %v1153, %v1146
      %v1280 = vpack.c.b16 %v1154, %v1147
      %v1281 = vpack.c.b16 %v1155, %v1148
      %v1282 = vpack.c.b16 %v1163, %v1156
      %v1283 = vpack.c.b16 %v1164, %v1157
      %v1284 = vpack.c.b16 %v1165, %v1158
      %v1285 = vpack.c.b16 %v1166, %v1159
      %v1286 = vpack.c.b16 %v1167, %v1160
      %v1287 = vpack.c.b16 %v1168, %v1161
      %v1288 = vpack.c.b16 %v1169, %v1162
      %v1289 = vpack.c.b16 %v1177, %v1170
      %v1290 = vpack.c.b16 %v1178, %v1171
      %v1291 = vpack.c.b16 %v1179, %v1172
      %v1292 = vpack.c.b16 %v1180, %v1173
      %v1293 = vpack.c.b16 %v1181, %v1174
      %v1294 = vpack.c.b16 %v1182, %v1175
      %v1295 = vpack.c.b16 %v1183, %v1176
      %v1490 = vunpack.c.l.b16 %v727
      %v1491 = vunpack.c.l.b16 %v728
      %v1492 = vunpack.c.l.b16 %v729
      %v1493 = vunpack.c.l.b16 %v730
      %v1494 = vunpack.c.l.b16 %v731
      %v1495 = vunpack.c.l.b16 %v732
      %v1496 = vunpack.c.l.b16 %v733
      %v1497 = vunpack.c.l.b16 %v734
      %v1498 = vunpack.c.l.b16 %v735
      %v1499 = vunpack.c.l.b16 %v736
      %v1500 = vunpack.c.l.b16 %v737
      %v1501 = vunpack.c.l.b16 %v738
      %v1502 = vunpack.c.l.b16 %v739
      %v1503 = vunpack.c.l.b16 %v740
      %v1504 = vunpack.c.l.b16 %v741
      %v1505 = vunpack.c.l.b16 %v742
      %v1506 = vunpack.c.l.b16 %v743
      %v1507 = vunpack.c.l.b16 %v744
      %v1508 = vunpack.c.l.b16 %v745
      %v1509 = vunpack.c.l.b16 %v746
      %v1510 = vunpack.c.l.b16 %v747
      %v1511 = vunpack.c.l.b16 %v748
      %v1512 = vunpack.c.l.b16 %v749
      %v1513 = vunpack.c.l.b16 %v750
      %v1514 = vunpack.c.l.b16 %v751
      %v1515 = vunpack.c.l.b16 %v752
      %v1516 = vunpack.c.l.b16 %v753
      %v1517 = vunpack.c.l.b16 %v754
      %v1518 = vunpack.c.l.b16 %v755
      %v1519 = vunpack.c.l.b16 %v756
      %v1520 = vunpack.c.l.b16 %v757
      %v1521 = vunpack.c.l.b16 %v758
      %v1522 = vunpack.c.l.b16 %v759
      %v1523 = vunpack.c.l.b16 %v760
      %v1524 = vunpack.c.l.b16 %v761
      %v1525 = vunpack.c.l.b16 %v762
      %v1526 = vunpack.c.l.b16 %v763
      %v1527 = vunpack.c.l.b16 %v764
      %v1528 = vunpack.c.l.b16 %v765
      %v1529 = vunpack.c.l.b16 %v766
      %v1530 = vunpack.c.l.b16 %v767
      %v1531 = vunpack.c.l.b16 %v768
      %v1532 = vunpack.c.l.b16 %v769
      %v1533 = vunpack.c.l.b16 %v770
      %v1534 = vunpack.c.l.b16 %v771
      %v1535 = vunpack.c.l.b16 %v772
      %v1536 = vunpack.c.l.b16 %v773
      %v1537 = vunpack.c.l.b16 %v774
      %v1538 = vunpack.c.l.b16 %v775
      %v1539 = vunpack.c.l.b16 %v776
      %v1540 = vunpack.c.l.b16 %v777
      %v1541 = vunpack.c.l.b16 %v778
      %v1542 = vunpack.c.l.b16 %v779
      %v1543 = vunpack.c.l.b16 %v780
      %v1544 = vunpack.c.l.b16 %v781
      %v1545 = vunpack.c.l.b16 %v782
      %v1546 = vunpack.c.l.b16 %v783
      %v1547 = vunpack.c.l.b16 %v784
      %v1548 = vunpack.c.l.b16 %v785
      %v1549 = vunpack.c.l.b16 %v786
      %v1550 = vunpack.c.l.b16 %v787
      %v1551 = vunpack.c.l.b16 %v788
      %v1552 = vunpack.c.l.b16 %v789
      %v1553 = vunpack.c.l.b16 %v790
      %v1554 = vunpack.c.l.b16 %v791
      %v1555 = vunpack.c.l.b16 %v792
      %v1556 = vunpack.c.l.b16 %v793
      %v1557 = vunpack.c.l.b16 %v794
      %v1558 = vunpack.c.l.b16 %v795
      %v1559 = vunpack.c.l.b16 %v796
      %v1560 = vunpack.c.l.b16 %v797
      %v1561 = vunpack.c.l.b16 %v798
      %v1562 = vunpack.c.l.b16 %v799
      %v1563 = vunpack.c.l.b16 %v800
      %v1564 = vunpack.c.l.b16 %v801
      %v1565 = vunpack.c.l.b16 %v802
      %v1566 = vunpack.c.l.b16 %v803
      %v1567 = vunpack.c.l.b16 %v804
      %v1568 = vunpack.c.l.b16 %v805
      %v1569 = vunpack.c.l.b16 %v806
      %v1570 = vunpack.c.l.b16 %v807
      %v1571 = vunpack.c.l.b16 %v808
      %v1572 = vunpack.c.l.b16 %v809
      %v1573 = vunpack.c.l.b16 %v810
      %v1574 = vunpack.c.l.b16 %v811
      %v1575 = vunpack.c.l.b16 %v812
      %v1576 = vunpack.c.l.b16 %v813
      %v1577 = vunpack.c.l.b16 %v814
      %v1578 = vunpack.c.l.b16 %v815
      %v1579 = vunpack.c.l.b16 %v816
      %v1580 = vunpack.c.l.b16 %v817
      %v1581 = vunpack.c.l.b16 %v818
      %v1582 = vunpack.c.l.b16 %v819
      %v1583 = vunpack.c.l.b16 %v820
      %v1584 = vunpack.c.l.b16 %v821
      %v1585 = vunpack.c.l.b16 %v822
      %v1586 = vunpack.c.l.b16 %v823
      %v1587 = vunpack.c.l.b16 %v824
      %v1588 = vpack.c.b16 %v1491, %v1490
      %v1589 = vpack.c.b16 %v1493, %v1492
      %v1590 = vpack.c.b16 %v1495, %v1494
      %v1591 = vpack.c.b16 %v1497, %v1496
      %v1592 = vpack.c.b16 %v1499, %v1498
      %v1593 = vpack.c.b16 %v1501, %v1500
      %v1594 = vpack.c.b16 %v1503, %v1502
      %v1595 = vpack.c.b16 %v1505, %v1504
      %v1596 = vpack.c.b16 %v1507, %v1506
      %v1597 = vpack.c.b16 %v1509, %v1508
      %v1598 = vpack.c.b16 %v1511, %v1510
      %v1599 = vpack.c.b16 %v1513, %v1512
      %v1600 = vpack.c.b16 %v1515, %v1514
      %v1601 = vpack.c.b16 %v1517, %v1516
      %v1602 = vpack.c.b16 %v1519, %v1518
      %v1603 = vpack.c.b16 %v1521, %v1520
      %v1604 = vpack.c.b16 %v1523, %v1522
      %v1605 = vpack.c.b16 %v1525, %v1524
      %v1606 = vpack.c.b16 %v1527, %v1526
      %v1607 = vpack.c.b16 %v1529, %v1528
      %v1608 = vpack.c.b16 %v1531, %v1530
      %v1609 = vpack.c.b16 %v1533, %v1532
      %v1610 = vpack.c.b16 %v1535, %v1534
      %v1611 = vpack.c.b16 %v1537, %v1536
      %v1612 = vpack.c.b16 %v1539, %v1538
      %v1613 = vpack.c.b16 %v1541, %v1540
      %v1614 = vpack.c.b16 %v1543, %v1542
      %v1615 = vpack.c.b16 %v1545, %v1544
      %v1616 = vpack.c.b16 %v1547, %v1546
      %v1617 = vpack.c.b16 %v1549, %v1548
      %v1618 = vpack.c.b16 %v1551, %v1550
      %v1619 = vpack.c.b16 %v1553, %v1552
      %v1620 = vpack.c.b16 %v1555, %v1554
      %v1621 = vpack.c.b16 %v1557, %v1556
      %v1622 = vpack.c.b16 %v1559, %v1558
      %v1623 = vpack.c.b16 %v1561, %v1560
      %v1624 = vpack.c.b16 %v1563, %v1562
      %v1625 = vpack.c.b16 %v1565, %v1564
      %v1626 = vpack.c.b16 %v1567, %v1566
      %v1627 = vpack.c.b16 %v1569, %v1568
      %v1628 = vpack.c.b16 %v1571, %v1570
      %v1629 = vpack.c.b16 %v1573, %v1572
      %v1630 = vpack.c.b16 %v1575, %v1574
      %v1631 = vpack.c.b16 %v1577, %v1576
      %v1632 = vpack.c.b16 %v1579, %v1578
      %v1633 = vpack.c.b16 %v1581, %v1580
      %v1634 = vpack.c.b16 %v1583, %v1582
      %v1635 = vpack.c.b16 %v1585, %v1584
      %v1636 = vpack.c.b16 %v1587, %v1586
      %vm1686 = vcmask 130048
      %v1688 = vsel %vm1686, %v1190, 0
      %v1691 = vsel %vm1686, %v1197, 0
      %v1694 = vsel %vm1686, %v1204, 0
      %v1697 = vsel %vm1686, %v1211, 0
      %v1700 = vsel %vm1686, %v1218, 0
      %v1703 = vsel %vm1686, %v1225, 0
      %v1706 = vsel %vm1686, %v1232, 0
      %v1709 = vsel %vm1686, %v1239, 0
      %v1712 = vsel %vm1686, %v1246, 0
      %v1715 = vsel %vm1686, %v1253, 0
      %v1718 = vsel %vm1686, %v1260, 0
      %v1721 = vsel %vm1686, %v1267, 0
      %v1724 = vsel %vm1686, %v1274, 0
      %v1727 = vsel %vm1686, %v1281, 0
      %v1730 = vsel %vm1686, %v1288, 0
      %v1733 = vsel %vm1686, %v1295, 0
      %1735 = vmatprep.subr.bf16.mxu0 0
      %1736 = vmatpush1.bf16.msra.mxu0 %v1588
      %1737 = vmatprep.subr.bf16.mxu0 0
      %1738 = vmatpush1.bf16.msra.mxu0 %v1589
      %1739 = vmatprep.subr.bf16.mxu0 0
      %1740 = vmatpush1.bf16.msra.mxu0 %v1590
      %1741 = vmatprep.subr.bf16.mxu0 0
      %1742 = vmatpush1.bf16.msra.mxu0 %v1591
      %1743 = vmatprep.subr.bf16.mxu0 0
      %1744 = vmatpush1.bf16.msra.mxu0 %v1592
      %1745 = vmatprep.subr.bf16.mxu0 0
      %1746 = vmatpush1.bf16.msra.mxu0 %v1593
      %1747 = vmatprep.subr.bf16.mxu0 0
      %1748 = vmatpush1.bf16.msra.mxu0 %v1594
      %1749 = vmatprep.subr.bf16.mxu0 0
      %1750 = vmatpush1.bf16.msra.mxu0 %v1595
      %1751 = vmatprep.subr.bf16.mxu0 0
      %1752 = vmatpush1.bf16.msra.mxu0 %v1596
      %1753 = vmatprep.subr.bf16.mxu0 0
      %1754 = vmatpush1.bf16.msra.mxu0 %v1597
      %1755 = vmatprep.subr.bf16.mxu0 0
      %1756 = vmatpush1.bf16.msra.mxu0 %v1598
      %1757 = vmatprep.subr.bf16.mxu0 0
      %1758 = vmatpush1.bf16.msra.mxu0 %v1599
      %1759 = vmatprep.subr.bf16.mxu0 0
      %1760 = vmatpush1.bf16.msra.mxu0 %v1600
      %1761 = vmatprep.subr.bf16.mxu0 0
      %1762 = vmatpush1.bf16.msra.mxu0 %v1601
      %1763 = vmatprep.subr.bf16.mxu0 0
      %1764 = vmatpush1.bf16.msra.mxu0 %v1602
      %1765 = vmatprep.subr.bf16.mxu0 0
      %1766 = vmatpush1.bf16.msra.mxu0 %v1603
      %1767 = vmatprep.mubr.bf16.mxu0 %v1185
      %1768 = vmatmul.mubr.bf16.gmra.mrb[0].mxu0 %v1184
      %v1769 = vpop.f32.mrb[0].mxu0
      %v1770 = vadd.f32 %v830, %v1769
      %v1771 = vpop.f32.mrb[0].mxu0
      %v1772 = vpop.f32.mrb[0].mxu0
      %v1773 = vadd.f32 %v830, %v1772
      %v1774 = vpop.f32.mrb[0].mxu0
      %1775 = vmatprep.mubr.bf16.mxu0 %v1192
      %1776 = vmatmul.mubr.bf16.gmra.mrb[0].mxu0 %v1191
      %v1777 = vpop.f32.mrb[0].mxu0
      %v1778 = vadd.f32 %v830, %v1777
      %v1779 = vpop.f32.mrb[0].mxu0
      %v1780 = vpop.f32.mrb[0].mxu0
      %v1781 = vadd.f32 %v830, %v1780
      %v1782 = vpop.f32.mrb[0].mxu0
      %1783 = vmatprep.mubr.bf16.mxu0 %v1199
      %1784 = vmatmul.mubr.bf16.gmra.mrb[0].mxu0 %v1198
      %v1785 = vpop.f32.mrb[0].mxu0
      %v1786 = vadd.f32 %v830, %v1785
      %v1787 = vpop.f32.mrb[0].mxu0
      %v1788 = vpop.f32.mrb[0].mxu0
      %v1789 = vadd.f32 %v830, %v1788
      %v1790 = vpop.f32.mrb[0].mxu0
      %1791 = vmatprep.mubr.bf16.mxu0 %v1206
      %1792 = vmatmul.mubr.bf16.gmra.mrb[0].mxu0 %v1205
      %v1793 = vpop.f32.mrb[0].mxu0
      %v1794 = vadd.f32 %v830, %v1793
      %v1795 = vpop.f32.mrb[0].mxu0
      %v1796 = vpop.f32.mrb[0].mxu0
      %v1797 = vadd.f32 %v830, %v1796
      %v1798 = vpop.f32.mrb[0].mxu0
      %1799 = vmatprep.mubr.bf16.mxu0 %v1213
      %1800 = vmatmul.mubr.bf16.gmra.mrb[0].mxu0 %v1212
      %v1801 = vpop.f32.mrb[0].mxu0
      %v1802 = vadd.f32 %v830, %v1801
      %v1803 = vpop.f32.mrb[0].mxu0
      %v1804 = vpop.f32.mrb[0].mxu0
      %v1805 = vadd.f32 %v830, %v1804
      %v1806 = vpop.f32.mrb[0].mxu0
      %1807 = vmatprep.mubr.bf16.mxu0 %v1220
      %1808 = vmatmul.mubr.bf16.gmra.mrb[0].mxu0 %v1219
      %v1809 = vpop.f32.mrb[0].mxu0
      %v1810 = vadd.f32 %v830, %v1809
      %v1811 = vpop.f32.mrb[0].mxu0
      %v1812 = vpop.f32.mrb[0].mxu0
      %v1813 = vadd.f32 %v830, %v1812
      %v1814 = vpop.f32.mrb[0].mxu0
      %1815 = vmatprep.mubr.bf16.mxu0 %v1227
      %1816 = vmatmul.mubr.bf16.gmra.mrb[0].mxu0 %v1226
      %v1817 = vpop.f32.mrb[0].mxu0
      %v1818 = vadd.f32 %v830, %v1817
      %v1819 = vpop.f32.mrb[0].mxu0
      %v1820 = vpop.f32.mrb[0].mxu0
      %v1821 = vadd.f32 %v830, %v1820
      %v1822 = vpop.f32.mrb[0].mxu0
      %1823 = vmatprep.mubr.bf16.mxu0 %v1234
      %1824 = vmatmul.mubr.bf16.gmra.mrb[0].mxu0 %v1233
      %v1825 = vpop.f32.mrb[0].mxu0
      %v1826 = vadd.f32 %v830, %v1825
      %v1827 = vpop.f32.mrb[0].mxu0
      %v1828 = vpop.f32.mrb[0].mxu0
      %v1829 = vadd.f32 %v830, %v1828
      %v1830 = vpop.f32.mrb[0].mxu0
      %1831 = vmatprep.mubr.bf16.mxu0 %v1241
      %1832 = vmatmul.mubr.bf16.gmra.mrb[0].mxu0 %v1240
      %v1833 = vpop.f32.mrb[0].mxu0
      %v1834 = vadd.f32 %v830, %v1833
      %v1835 = vpop.f32.mrb[0].mxu0
      %v1836 = vpop.f32.mrb[0].mxu0
      %v1837 = vadd.f32 %v830, %v1836
      %v1838 = vpop.f32.mrb[0].mxu0
      %1839 = vmatprep.mubr.bf16.mxu0 %v1248
      %1840 = vmatmul.mubr.bf16.gmra.mrb[0].mxu0 %v1247
      %v1841 = vpop.f32.mrb[0].mxu0
      %v1842 = vadd.f32 %v830, %v1841
      %v1843 = vpop.f32.mrb[0].mxu0
      %v1844 = vpop.f32.mrb[0].mxu0
      %v1845 = vadd.f32 %v830, %v1844
      %v1846 = vpop.f32.mrb[0].mxu0
      %1847 = vmatprep.mubr.bf16.mxu0 %v1255
      %1848 = vmatmul.mubr.bf16.gmra.mrb[0].mxu0 %v1254
      %v1849 = vpop.f32.mrb[0].mxu0
      %v1850 = vadd.f32 %v830, %v1849
      %v1851 = vpop.f32.mrb[0].mxu0
      %v1852 = vpop.f32.mrb[0].mxu0
      %v1853 = vadd.f32 %v830, %v1852
      %v1854 = vpop.f32.mrb[0].mxu0
      %1855 = vmatprep.mubr.bf16.mxu0 %v1262
      %1856 = vmatmul.mubr.bf16.gmra.mrb[0].mxu0 %v1261
      %v1857 = vpop.f32.mrb[0].mxu0
      %v1858 = vadd.f32 %v830, %v1857
      %v1859 = vpop.f32.mrb[0].mxu0
      %v1860 = vpop.f32.mrb[0].mxu0
      %v1861 = vadd.f32 %v830, %v1860
      %v1862 = vpop.f32.mrb[0].mxu0
      %1863 = vmatprep.mubr.bf16.mxu0 %v1269
      %1864 = vmatmul.mubr.bf16.gmra.mrb[0].mxu0 %v1268
      %v1865 = vpop.f32.mrb[0].mxu0
      %v1866 = vadd.f32 %v830, %v1865
      %v1867 = vpop.f32.mrb[0].mxu0
      %v1868 = vpop.f32.mrb[0].mxu0
      %v1869 = vadd.f32 %v830, %v1868
      %v1870 = vpop.f32.mrb[0].mxu0
      %1871 = vmatprep.mubr.bf16.mxu0 %v1276
      %1872 = vmatmul.mubr.bf16.gmra.mrb[0].mxu0 %v1275
      %v1873 = vpop.f32.mrb[0].mxu0
      %v1874 = vadd.f32 %v830, %v1873
      %v1875 = vpop.f32.mrb[0].mxu0
      %v1876 = vpop.f32.mrb[0].mxu0
      %v1877 = vadd.f32 %v830, %v1876
      %v1878 = vpop.f32.mrb[0].mxu0
      %1879 = vmatprep.mubr.bf16.mxu0 %v1283
      %1880 = vmatmul.mubr.bf16.gmra.mrb[0].mxu0 %v1282
      %v1881 = vpop.f32.mrb[0].mxu0
      %v1882 = vadd.f32 %v830, %v1881
      %v1883 = vpop.f32.mrb[0].mxu0
      %v1884 = vpop.f32.mrb[0].mxu0
      %v1885 = vadd.f32 %v830, %v1884
      %v1886 = vpop.f32.mrb[0].mxu0
      %1887 = vmatprep.mubr.bf16.mxu0 %v1290
      %1888 = vmatmul.mubr.bf16.gmra.mrb[0].mxu0 %v1289
      %v1889 = vpop.f32.mrb[0].mxu0
      %v1890 = vadd.f32 %v830, %v1889
      %v1891 = vpop.f32.mrb[0].mxu0
      %v1892 = vpop.f32.mrb[0].mxu0
      %v1893 = vadd.f32 %v830, %v1892
      %v1894 = vpop.f32.mrb[0].mxu0
      %1895 = vdwg.mxu0
      %1896 = vmatprep.subr.bf16.mxu0 0
      %1897 = vmatpush1.bf16.msra.mxu0 %v1604
      %1898 = vmatprep.subr.bf16.mxu0 0
      %1899 = vmatpush1.bf16.msra.mxu0 %v1605
      %1900 = vmatprep.subr.bf16.mxu0 0
      %1901 = vmatpush1.bf16.msra.mxu0 %v1606
      %1902 = vmatprep.subr.bf16.mxu0 0
      %1903 = vmatpush1.bf16.msra.mxu0 %v1607
      %1904 = vmatprep.subr.bf16.mxu0 0
      %1905 = vmatpush1.bf16.msra.mxu0 %v1608
      %1906 = vmatprep.subr.bf16.mxu0 0
      %1907 = vmatpush1.bf16.msra.mxu0 %v1609
      %1908 = vmatprep.subr.bf16.mxu0 0
      %1909 = vmatpush1.bf16.msra.mxu0 %v1610
      %1910 = vmatprep.subr.bf16.mxu0 0
      %1911 = vmatpush1.bf16.msra.mxu0 %v1611
      %1912 = vmatprep.subr.bf16.mxu0 0
      %1913 = vmatpush1.bf16.msra.mxu0 %v1612
      %1914 = vmatprep.subr.bf16.mxu0 0
      %1915 = vmatpush1.bf16.msra.mxu0 %v1613
      %1916 = vmatprep.subr.bf16.mxu0 0
      %1917 = vmatpush1.bf16.msra.mxu0 %v1614
      %1918 = vmatprep.subr.bf16.mxu0 0
      %1919 = vmatpush1.bf16.msra.mxu0 %v1615
      %1920 = vmatprep.subr.bf16.mxu0 0
      %1921 = vmatpush1.bf16.msra.mxu0 %v1616
      %1922 = vmatprep.subr.bf16.mxu0 0
      %1923 = vmatpush1.bf16.msra.mxu0 %v1617
      %1924 = vmatprep.subr.bf16.mxu0 0
      %1925 = vmatpush1.bf16.msra.mxu0 %v1618
      %1926 = vmatprep.subr.bf16.mxu0 0
      %1927 = vmatpush1.bf16.msra.mxu0 %v1619
      %1928 = vmatprep.mubr.bf16.mxu0 %v1187
      %1929 = vmatmul.mubr.bf16.gmra.mrb[0].mxu0 %v1186
      %v1930 = vpop.f32.mrb[0].mxu0
      %v1931 = vadd.f32 %v1770, %v1930
      %v1932 = vpop.f32.mrb[0].mxu0
      %v1933 = vpop.f32.mrb[0].mxu0
      %v1934 = vadd.f32 %v1773, %v1933
      %v1935 = vpop.f32.mrb[0].mxu0
      %1936 = vmatprep.mubr.bf16.mxu0 %v1194
      %1937 = vmatmul.mubr.bf16.gmra.mrb[0].mxu0 %v1193
      %v1938 = vpop.f32.mrb[0].mxu0
      %v1939 = vadd.f32 %v1778, %v1938
      %v1940 = vpop.f32.mrb[0].mxu0
      %v1941 = vpop.f32.mrb[0].mxu0
      %v1942 = vadd.f32 %v1781, %v1941
      %v1943 = vpop.f32.mrb[0].mxu0
      %1944 = vmatprep.mubr.bf16.mxu0 %v1201
      %1945 = vmatmul.mubr.bf16.gmra.mrb[0].mxu0 %v1200
      %v1946 = vpop.f32.mrb[0].mxu0
      %v1947 = vadd.f32 %v1786, %v1946
      %v1948 = vpop.f32.mrb[0].mxu0
      %v1949 = vpop.f32.mrb[0].mxu0
      %v1950 = vadd.f32 %v1789, %v1949
      %v1951 = vpop.f32.mrb[0].mxu0
      %1952 = vmatprep.mubr.bf16.mxu0 %v1208
      %1953 = vmatmul.mubr.bf16.gmra.mrb[0].mxu0 %v1207
      %v1954 = vpop.f32.mrb[0].mxu0
      %v1955 = vadd.f32 %v1794, %v1954
      %v1956 = vpop.f32.mrb[0].mxu0
      %v1957 = vpop.f32.mrb[0].mxu0
      %v1958 = vadd.f32 %v1797, %v1957
      %v1959 = vpop.f32.mrb[0].mxu0
      %1960 = vmatprep.mubr.bf16.mxu0 %v1215
      %1961 = vmatmul.mubr.bf16.gmra.mrb[0].mxu0 %v1214
      %v1962 = vpop.f32.mrb[0].mxu0
      %v1963 = vadd.f32 %v1802, %v1962
      %v1964 = vpop.f32.mrb[0].mxu0
      %v1965 = vpop.f32.mrb[0].mxu0
      %v1966 = vadd.f32 %v1805, %v1965
      %v1967 = vpop.f32.mrb[0].mxu0
      %1968 = vmatprep.mubr.bf16.mxu0 %v1222
      %1969 = vmatmul.mubr.bf16.gmra.mrb[0].mxu0 %v1221
      %v1970 = vpop.f32.mrb[0].mxu0
      %v1971 = vadd.f32 %v1810, %v1970
      %v1972 = vpop.f32.mrb[0].mxu0
      %v1973 = vpop.f32.mrb[0].mxu0
      %v1974 = vadd.f32 %v1813, %v1973
      %v1975 = vpop.f32.mrb[0].mxu0
      %1976 = vmatprep.mubr.bf16.mxu0 %v1229
      %1977 = vmatmul.mubr.bf16.gmra.mrb[0].mxu0 %v1228
      %v1978 = vpop.f32.mrb[0].mxu0
      %v1979 = vadd.f32 %v1818, %v1978
      %v1980 = vpop.f32.mrb[0].mxu0
      %v1981 = vpop.f32.mrb[0].mxu0
      %v1982 = vadd.f32 %v1821, %v1981
      %v1983 = vpop.f32.mrb[0].mxu0
      %1984 = vmatprep.mubr.bf16.mxu0 %v1236
      %1985 = vmatmul.mubr.bf16.gmra.mrb[0].mxu0 %v1235
      %v1986 = vpop.f32.mrb[0].mxu0
      %v1987 = vadd.f32 %v1826, %v1986
      %v1988 = vpop.f32.mrb[0].mxu0
      %v1989 = vpop.f32.mrb[0].mxu0
      %v1990 = vadd.f32 %v1829, %v1989
      %v1991 = vpop.f32.mrb[0].mxu0
      %1992 = vmatprep.mubr.bf16.mxu0 %v1243
      %1993 = vmatmul.mubr.bf16.gmra.mrb[0].mxu0 %v1242
      %v1994 = vpop.f32.mrb[0].mxu0
      %v1995 = vadd.f32 %v1834, %v1994
      %v1996 = vpop.f32.mrb[0].mxu0
      %v1997 = vpop.f32.mrb[0].mxu0
      %v1998 = vadd.f32 %v1837, %v1997
      %v1999 = vpop.f32.mrb[0].mxu0
      %2000 = vmatprep.mubr.bf16.mxu0 %v1250
      %2001 = vmatmul.mubr.bf16.gmra.mrb[0].mxu0 %v1249
      %v2002 = vpop.f32.mrb[0].mxu0
      %v2003 = vadd.f32 %v1842, %v2002
      %v2004 = vpop.f32.mrb[0].mxu0
      %v2005 = vpop.f32.mrb[0].mxu0
      %v2006 = vadd.f32 %v1845, %v2005
      %v2007 = vpop.f32.mrb[0].mxu0
      %2008 = vmatprep.mubr.bf16.mxu0 %v1257
      %2009 = vmatmul.mubr.bf16.gmra.mrb[0].mxu0 %v1256
      %v2010 = vpop.f32.mrb[0].mxu0
      %v2011 = vadd.f32 %v1850, %v2010
      %v2012 = vpop.f32.mrb[0].mxu0
      %v2013 = vpop.f32.mrb[0].mxu0
      %v2014 = vadd.f32 %v1853, %v2013
      %v2015 = vpop.f32.mrb[0].mxu0
      %2016 = vmatprep.mubr.bf16.mxu0 %v1264
      %2017 = vmatmul.mubr.bf16.gmra.mrb[0].mxu0 %v1263
      %v2018 = vpop.f32.mrb[0].mxu0
      %v2019 = vadd.f32 %v1858, %v2018
      %v2020 = vpop.f32.mrb[0].mxu0
      %v2021 = vpop.f32.mrb[0].mxu0
      %v2022 = vadd.f32 %v1861, %v2021
      %v2023 = vpop.f32.mrb[0].mxu0
      %2024 = vmatprep.mubr.bf16.mxu0 %v1271
      %2025 = vmatmul.mubr.bf16.gmra.mrb[0].mxu0 %v1270
      %v2026 = vpop.f32.mrb[0].mxu0
      %v2027 = vadd.f32 %v1866, %v2026
      %v2028 = vpop.f32.mrb[0].mxu0
      %v2029 = vpop.f32.mrb[0].mxu0
      %v2030 = vadd.f32 %v1869, %v2029
      %v2031 = vpop.f32.mrb[0].mxu0
      %2032 = vmatprep.mubr.bf16.mxu0 %v1278
      %2033 = vmatmul.mubr.bf16.gmra.mrb[0].mxu0 %v1277
      %v2034 = vpop.f32.mrb[0].mxu0
      %v2035 = vadd.f32 %v1874, %v2034
      %v2036 = vpop.f32.mrb[0].mxu0
      %v2037 = vpop.f32.mrb[0].mxu0
      %v2038 = vadd.f32 %v1877, %v2037
      %v2039 = vpop.f32.mrb[0].mxu0
      %2040 = vmatprep.mubr.bf16.mxu0 %v1285
      %2041 = vmatmul.mubr.bf16.gmra.mrb[0].mxu0 %v1284
      %v2042 = vpop.f32.mrb[0].mxu0
      %v2043 = vadd.f32 %v1882, %v2042
      %v2044 = vpop.f32.mrb[0].mxu0
      %v2045 = vpop.f32.mrb[0].mxu0
      %v2046 = vadd.f32 %v1885, %v2045
      %v2047 = vpop.f32.mrb[0].mxu0
      %2048 = vmatprep.mubr.bf16.mxu0 %v1292
      %2049 = vmatmul.mubr.bf16.gmra.mrb[0].mxu0 %v1291
      %v2050 = vpop.f32.mrb[0].mxu0
      %v2051 = vadd.f32 %v1890, %v2050
      %v2052 = vpop.f32.mrb[0].mxu0
      %v2053 = vpop.f32.mrb[0].mxu0
      %v2054 = vadd.f32 %v1893, %v2053
      %v2055 = vpop.f32.mrb[0].mxu0
      %2056 = vdwg.mxu0
      %2057 = vmatprep.subr.bf16.mxu0 0
      %2058 = vmatpush1.bf16.msra.mxu0 %v1620
      %2059 = vmatprep.subr.bf16.mxu0 0
      %2060 = vmatpush1.bf16.msra.mxu0 %v1621
      %2061 = vmatprep.subr.bf16.mxu0 0
      %2062 = vmatpush1.bf16.msra.mxu0 %v1622
      %2063 = vmatprep.subr.bf16.mxu0 0
      %2064 = vmatpush1.bf16.msra.mxu0 %v1623
      %2065 = vmatprep.subr.bf16.mxu0 0
      %2066 = vmatpush1.bf16.msra.mxu0 %v1624
      %2067 = vmatprep.subr.bf16.mxu0 0
      %2068 = vmatpush1.bf16.msra.mxu0 %v1625
      %2069 = vmatprep.subr.bf16.mxu0 0
      %2070 = vmatpush1.bf16.msra.mxu0 %v1626
      %2071 = vmatprep.subr.bf16.mxu0 0
      %2072 = vmatpush1.bf16.msra.mxu0 %v1627
      %2073 = vmatprep.subr.bf16.mxu0 0
      %2074 = vmatpush1.bf16.msra.mxu0 %v1628
      %2075 = vmatprep.subr.bf16.mxu0 0
      %2076 = vmatpush1.bf16.msra.mxu0 %v1629
      %2077 = vmatprep.subr.bf16.mxu0 0
      %2078 = vmatpush1.bf16.msra.mxu0 %v1630
      %2079 = vmatprep.subr.bf16.mxu0 0
      %2080 = vmatpush1.bf16.msra.mxu0 %v1631
      %2081 = vmatprep.subr.bf16.mxu0 0
      %2082 = vmatpush1.bf16.msra.mxu0 %v1632
      %2083 = vmatprep.subr.bf16.mxu0 0
      %2084 = vmatpush1.bf16.msra.mxu0 %v1633
      %2085 = vmatprep.subr.bf16.mxu0 0
      %2086 = vmatpush1.bf16.msra.mxu0 %v1634
      %2087 = vmatprep.subr.bf16.mxu0 0
      %2088 = vmatpush1.bf16.msra.mxu0 %v1635
      %2089 = vmatprep.mubr.bf16.mxu0 %v1189
      %2090 = vmatmul.mubr.bf16.gmra.mrb[0].mxu0 %v1188
      %v2091 = vpop.f32.mrb[0].mxu0
      %v2092 = vadd.f32 %v1931, %v2091
      %v2093 = vpop.f32.mrb[0].mxu0
      %v2094 = vpop.f32.mrb[0].mxu0
      %v2095 = vadd.f32 %v1934, %v2094
      %v2096 = vpop.f32.mrb[0].mxu0
      %2097 = vmatprep.mubr.bf16.mxu0 %v1196
      %2098 = vmatmul.mubr.bf16.gmra.mrb[0].mxu0 %v1195
      %v2099 = vpop.f32.mrb[0].mxu0
      %v2100 = vadd.f32 %v1939, %v2099
      %v2101 = vpop.f32.mrb[0].mxu0
      %v2102 = vpop.f32.mrb[0].mxu0
      %v2103 = vadd.f32 %v1942, %v2102
      %v2104 = vpop.f32.mrb[0].mxu0
      %2105 = vmatprep.mubr.bf16.mxu0 %v1203
      %2106 = vmatmul.mubr.bf16.gmra.mrb[0].mxu0 %v1202
      %v2107 = vpop.f32.mrb[0].mxu0
      %v2108 = vadd.f32 %v1947, %v2107
      %v2109 = vpop.f32.mrb[0].mxu0
      %v2110 = vpop.f32.mrb[0].mxu0
      %v2111 = vadd.f32 %v1950, %v2110
      %v2112 = vpop.f32.mrb[0].mxu0
      %2113 = vmatprep.mubr.bf16.mxu0 %v1210
      %2114 = vmatmul.mubr.bf16.gmra.mrb[0].mxu0 %v1209
      %v2115 = vpop.f32.mrb[0].mxu0
      %v2116 = vadd.f32 %v1955, %v2115
      %v2117 = vpop.f32.mrb[0].mxu0
      %v2118 = vpop.f32.mrb[0].mxu0
      %v2119 = vadd.f32 %v1958, %v2118
      %v2120 = vpop.f32.mrb[0].mxu0
      %2121 = vmatprep.mubr.bf16.mxu0 %v1217
      %2122 = vmatmul.mubr.bf16.gmra.mrb[0].mxu0 %v1216
      %v2123 = vpop.f32.mrb[0].mxu0
      %v2124 = vadd.f32 %v1963, %v2123
      %v2125 = vpop.f32.mrb[0].mxu0
      %v2126 = vpop.f32.mrb[0].mxu0
      %v2127 = vadd.f32 %v1966, %v2126
      %v2128 = vpop.f32.mrb[0].mxu0
      %2129 = vmatprep.mubr.bf16.mxu0 %v1224
      %2130 = vmatmul.mubr.bf16.gmra.mrb[0].mxu0 %v1223
      %v2131 = vpop.f32.mrb[0].mxu0
      %v2132 = vadd.f32 %v1971, %v2131
      %v2133 = vpop.f32.mrb[0].mxu0
      %v2134 = vpop.f32.mrb[0].mxu0
      %v2135 = vadd.f32 %v1974, %v2134
      %v2136 = vpop.f32.mrb[0].mxu0
      %2137 = vmatprep.mubr.bf16.mxu0 %v1231
      %2138 = vmatmul.mubr.bf16.gmra.mrb[0].mxu0 %v1230
      %v2139 = vpop.f32.mrb[0].mxu0
      %v2140 = vadd.f32 %v1979, %v2139
      %v2141 = vpop.f32.mrb[0].mxu0
      %v2142 = vpop.f32.mrb[0].mxu0
      %v2143 = vadd.f32 %v1982, %v2142
      %v2144 = vpop.f32.mrb[0].mxu0
      %2145 = vmatprep.mubr.bf16.mxu0 %v1238
      %2146 = vmatmul.mubr.bf16.gmra.mrb[0].mxu0 %v1237
      %v2147 = vpop.f32.mrb[0].mxu0
      %v2148 = vadd.f32 %v1987, %v2147
      %v2149 = vpop.f32.mrb[0].mxu0
      %v2150 = vpop.f32.mrb[0].mxu0
      %v2151 = vadd.f32 %v1990, %v2150
      %v2152 = vpop.f32.mrb[0].mxu0
      %2153 = vmatprep.mubr.bf16.mxu0 %v1245
      %2154 = vmatmul.mubr.bf16.gmra.mrb[0].mxu0 %v1244
      %v2155 = vpop.f32.mrb[0].mxu0
      %v2156 = vadd.f32 %v1995, %v2155
      %v2157 = vpop.f32.mrb[0].mxu0
      %v2158 = vpop.f32.mrb[0].mxu0
      %v2159 = vadd.f32 %v1998, %v2158
      %v2160 = vpop.f32.mrb[0].mxu0
      %2161 = vmatprep.mubr.bf16.mxu0 %v1252
      %2162 = vmatmul.mubr.bf16.gmra.mrb[0].mxu0 %v1251
      %v2163 = vpop.f32.mrb[0].mxu0
      %v2164 = vadd.f32 %v2003, %v2163
      %v2165 = vpop.f32.mrb[0].mxu0
      %v2166 = vpop.f32.mrb[0].mxu0
      %v2167 = vadd.f32 %v2006, %v2166
      %v2168 = vpop.f32.mrb[0].mxu0
      %2169 = vmatprep.mubr.bf16.mxu0 %v1259
      %2170 = vmatmul.mubr.bf16.gmra.mrb[0].mxu0 %v1258
      %v2171 = vpop.f32.mrb[0].mxu0
      %v2172 = vadd.f32 %v2011, %v2171
      %v2173 = vpop.f32.mrb[0].mxu0
      %v2174 = vpop.f32.mrb[0].mxu0
      %v2175 = vadd.f32 %v2014, %v2174
      %v2176 = vpop.f32.mrb[0].mxu0
      %2177 = vmatprep.mubr.bf16.mxu0 %v1266
      %2178 = vmatmul.mubr.bf16.gmra.mrb[0].mxu0 %v1265
      %v2179 = vpop.f32.mrb[0].mxu0
      %v2180 = vadd.f32 %v2019, %v2179
      %v2181 = vpop.f32.mrb[0].mxu0
      %v2182 = vpop.f32.mrb[0].mxu0
      %v2183 = vadd.f32 %v2022, %v2182
      %v2184 = vpop.f32.mrb[0].mxu0
      %2185 = vmatprep.mubr.bf16.mxu0 %v1273
      %2186 = vmatmul.mubr.bf16.gmra.mrb[0].mxu0 %v1272
      %v2187 = vpop.f32.mrb[0].mxu0
      %v2188 = vadd.f32 %v2027, %v2187
      %v2189 = vpop.f32.mrb[0].mxu0
      %v2190 = vpop.f32.mrb[0].mxu0
      %v2191 = vadd.f32 %v2030, %v2190
      %v2192 = vpop.f32.mrb[0].mxu0
      %2193 = vmatprep.mubr.bf16.mxu0 %v1280
      %2194 = vmatmul.mubr.bf16.gmra.mrb[0].mxu0 %v1279
      %v2195 = vpop.f32.mrb[0].mxu0
      %v2196 = vadd.f32 %v2035, %v2195
      %v2197 = vpop.f32.mrb[0].mxu0
      %v2198 = vpop.f32.mrb[0].mxu0
      %v2199 = vadd.f32 %v2038, %v2198
      %v2200 = vpop.f32.mrb[0].mxu0
      %2201 = vmatprep.mubr.bf16.mxu0 %v1287
      %2202 = vmatmul.mubr.bf16.gmra.mrb[0].mxu0 %v1286
      %v2203 = vpop.f32.mrb[0].mxu0
      %v2204 = vadd.f32 %v2043, %v2203
      %v2205 = vpop.f32.mrb[0].mxu0
      %v2206 = vpop.f32.mrb[0].mxu0
      %v2207 = vadd.f32 %v2046, %v2206
      %v2208 = vpop.f32.mrb[0].mxu0
      %2209 = vmatprep.mubr.bf16.mxu0 %v1294
      %2210 = vmatmul.mubr.bf16.gmra.mrb[0].mxu0 %v1293
      %v2211 = vpop.f32.mrb[0].mxu0
      %v2212 = vadd.f32 %v2051, %v2211
      %v2213 = vpop.f32.mrb[0].mxu0
      %v2214 = vpop.f32.mrb[0].mxu0
      %v2215 = vadd.f32 %v2054, %v2214
      %v2216 = vpop.f32.mrb[0].mxu0
      %2217 = vdwg.mxu0
      %2218 = vmatprep.subr.bf16.mxu0 0
      %2219 = vmatpush1.bf16.msra.mxu0 %v1636
      %2220 = vmatprep.subr.bf16.mxu0 0
      %2221 = vmatpush1.bf16.msra.mxu0 0
      %2222 = vmatprep.subr.bf16.mxu0 0
      %2223 = vmatpush1.bf16.msra.mxu0 0
      %2224 = vmatprep.subr.bf16.mxu0 0
      %2225 = vmatpush1.bf16.msra.mxu0 0
      %2226 = vmatprep.subr.bf16.mxu0 0
      %2227 = vmatpush1.bf16.msra.mxu0 0
      %2228 = vmatprep.subr.bf16.mxu0 0
      %2229 = vmatpush1.bf16.msra.mxu0 0
      %2230 = vmatprep.subr.bf16.mxu0 0
      %2231 = vmatpush1.bf16.msra.mxu0 0
      %2232 = vmatprep.subr.bf16.mxu0 0
      %2233 = vmatpush1.bf16.msra.mxu0 0
      %2234 = vmatprep.subr.bf16.mxu0 0
      %2235 = vmatpush1.bf16.msra.mxu0 0
      %2236 = vmatprep.subr.bf16.mxu0 0
      %2237 = vmatpush1.bf16.msra.mxu0 0
      %2238 = vmatprep.subr.bf16.mxu0 0
      %2239 = vmatpush1.bf16.msra.mxu0 0
      %2240 = vmatprep.subr.bf16.mxu0 0
      %2241 = vmatpush1.bf16.msra.mxu0 0
      %2242 = vmatprep.subr.bf16.mxu0 0
      %2243 = vmatpush1.bf16.msra.mxu0 0
      %2244 = vmatprep.subr.bf16.mxu0 0
      %2245 = vmatpush1.bf16.msra.mxu0 0
      %2246 = vmatprep.subr.bf16.mxu0 0
      %2247 = vmatpush1.bf16.msra.mxu0 0
      %2248 = vmatprep.subr.bf16.mxu0 0
      %2249 = vmatpush1.bf16.msra.mxu0 0
      %2250 = vmatprep.mubr.bf16.mxu0 0
      %2251 = vmatmul.mubr.bf16.gmra.mrb[0].mxu0 %v1688
      %v2252 = vpop.f32.mrb[0].mxu0
      %v2253 = vadd.f32 %v2092, %v2252
      %v2254 = vpop.f32.mrb[0].mxu0
      %v2255 = vpop.f32.mrb[0].mxu0
      %v2256 = vadd.f32 %v2095, %v2255
      %v2257 = vpop.f32.mrb[0].mxu0
      %2258 = vmatprep.mubr.bf16.mxu0 0
      %2259 = vmatmul.mubr.bf16.gmra.mrb[0].mxu0 %v1691
      %v2260 = vpop.f32.mrb[0].mxu0
      %v2261 = vadd.f32 %v2100, %v2260
      %v2262 = vpop.f32.mrb[0].mxu0
      %v2263 = vpop.f32.mrb[0].mxu0
      %v2264 = vadd.f32 %v2103, %v2263
      %v2265 = vpop.f32.mrb[0].mxu0
      %2266 = vmatprep.mubr.bf16.mxu0 0
      %2267 = vmatmul.mubr.bf16.gmra.mrb[0].mxu0 %v1694
      %v2268 = vpop.f32.mrb[0].mxu0
      %v2269 = vadd.f32 %v2108, %v2268
      %v2270 = vpop.f32.mrb[0].mxu0
      %v2271 = vpop.f32.mrb[0].mxu0
      %v2272 = vadd.f32 %v2111, %v2271
      %v2273 = vpop.f32.mrb[0].mxu0
      %2274 = vmatprep.mubr.bf16.mxu0 0
      %2275 = vmatmul.mubr.bf16.gmra.mrb[0].mxu0 %v1697
      %v2276 = vpop.f32.mrb[0].mxu0
      %v2277 = vadd.f32 %v2116, %v2276
      %v2278 = vpop.f32.mrb[0].mxu0
      %v2279 = vpop.f32.mrb[0].mxu0
      %v2280 = vadd.f32 %v2119, %v2279
      %v2281 = vpop.f32.mrb[0].mxu0
      %2282 = vmatprep.mubr.bf16.mxu0 0
      %2283 = vmatmul.mubr.bf16.gmra.mrb[0].mxu0 %v1700
      %v2284 = vpop.f32.mrb[0].mxu0
      %v2285 = vadd.f32 %v2124, %v2284
      %v2286 = vpop.f32.mrb[0].mxu0
      %v2287 = vpop.f32.mrb[0].mxu0
      %v2288 = vadd.f32 %v2127, %v2287
      %v2289 = vpop.f32.mrb[0].mxu0
      %2290 = vmatprep.mubr.bf16.mxu0 0
      %2291 = vmatmul.mubr.bf16.gmra.mrb[0].mxu0 %v1703
      %v2292 = vpop.f32.mrb[0].mxu0
      %v2293 = vadd.f32 %v2132, %v2292
      %v2294 = vpop.f32.mrb[0].mxu0
      %v2295 = vpop.f32.mrb[0].mxu0
      %v2296 = vadd.f32 %v2135, %v2295
      %v2297 = vpop.f32.mrb[0].mxu0
      %2298 = vmatprep.mubr.bf16.mxu0 0
      %2299 = vmatmul.mubr.bf16.gmra.mrb[0].mxu0 %v1706
      %v2300 = vpop.f32.mrb[0].mxu0
      %v2301 = vadd.f32 %v2140, %v2300
      %v2302 = vpop.f32.mrb[0].mxu0
      %v2303 = vpop.f32.mrb[0].mxu0
      %v2304 = vadd.f32 %v2143, %v2303
      %v2305 = vpop.f32.mrb[0].mxu0
      %2306 = vmatprep.mubr.bf16.mxu0 0
      %2307 = vmatmul.mubr.bf16.gmra.mrb[0].mxu0 %v1709
      %v2308 = vpop.f32.mrb[0].mxu0
      %v2309 = vadd.f32 %v2148, %v2308
      %v2310 = vpop.f32.mrb[0].mxu0
      %v2311 = vpop.f32.mrb[0].mxu0
      %v2312 = vadd.f32 %v2151, %v2311
      %v2313 = vpop.f32.mrb[0].mxu0
      %2314 = vmatprep.mubr.bf16.mxu0 0
      %2315 = vmatmul.mubr.bf16.gmra.mrb[0].mxu0 %v1712
      %v2316 = vpop.f32.mrb[0].mxu0
      %v2317 = vadd.f32 %v2156, %v2316
      %v2318 = vpop.f32.mrb[0].mxu0
      %v2319 = vpop.f32.mrb[0].mxu0
      %v2320 = vadd.f32 %v2159, %v2319
      %v2321 = vpop.f32.mrb[0].mxu0
      %2322 = vmatprep.mubr.bf16.mxu0 0
      %2323 = vmatmul.mubr.bf16.gmra.mrb[0].mxu0 %v1715
      %v2324 = vpop.f32.mrb[0].mxu0
      %v2325 = vadd.f32 %v2164, %v2324
      %v2326 = vpop.f32.mrb[0].mxu0
      %v2327 = vpop.f32.mrb[0].mxu0
      %v2328 = vadd.f32 %v2167, %v2327
      %v2329 = vpop.f32.mrb[0].mxu0
      %2330 = vmatprep.mubr.bf16.mxu0 0
      %2331 = vmatmul.mubr.bf16.gmra.mrb[0].mxu0 %v1718
      %v2332 = vpop.f32.mrb[0].mxu0
      %v2333 = vadd.f32 %v2172, %v2332
      %v2334 = vpop.f32.mrb[0].mxu0
      %v2335 = vpop.f32.mrb[0].mxu0
      %v2336 = vadd.f32 %v2175, %v2335
      %v2337 = vpop.f32.mrb[0].mxu0
      %2338 = vmatprep.mubr.bf16.mxu0 0
      %2339 = vmatmul.mubr.bf16.gmra.mrb[0].mxu0 %v1721
      %v2340 = vpop.f32.mrb[0].mxu0
      %v2341 = vadd.f32 %v2180, %v2340
      %v2342 = vpop.f32.mrb[0].mxu0
      %v2343 = vpop.f32.mrb[0].mxu0
      %v2344 = vadd.f32 %v2183, %v2343
      %v2345 = vpop.f32.mrb[0].mxu0
      %2346 = vmatprep.mubr.bf16.mxu0 0
      %2347 = vmatmul.mubr.bf16.gmra.mrb[0].mxu0 %v1724
      %v2348 = vpop.f32.mrb[0].mxu0
      %v2349 = vadd.f32 %v2188, %v2348
      %v2350 = vpop.f32.mrb[0].mxu0
      %v2351 = vpop.f32.mrb[0].mxu0
      %v2352 = vadd.f32 %v2191, %v2351
      %v2353 = vpop.f32.mrb[0].mxu0
      %2354 = vmatprep.mubr.bf16.mxu0 0
      %2355 = vmatmul.mubr.bf16.gmra.mrb[0].mxu0 %v1727
      %v2356 = vpop.f32.mrb[0].mxu0
      %v2357 = vadd.f32 %v2196, %v2356
      %v2358 = vpop.f32.mrb[0].mxu0
      %v2359 = vpop.f32.mrb[0].mxu0
      %v2360 = vadd.f32 %v2199, %v2359
      %v2361 = vpop.f32.mrb[0].mxu0
      %2362 = vmatprep.mubr.bf16.mxu0 0
      %2363 = vmatmul.mubr.bf16.gmra.mrb[0].mxu0 %v1730
      %v2364 = vpop.f32.mrb[0].mxu0
      %v2365 = vadd.f32 %v2204, %v2364
      %v2366 = vpop.f32.mrb[0].mxu0
      %v2367 = vpop.f32.mrb[0].mxu0
      %v2368 = vadd.f32 %v2207, %v2367
      %v2369 = vpop.f32.mrb[0].mxu0
      %2370 = vmatprep.mubr.bf16.mxu0 0
      %2371 = vmatmul.mubr.bf16.gmra.mrb[0].mxu0 %v1733
      %v2372 = vpop.f32.mrb[0].mxu0
      %v2373 = vadd.f32 %v2212, %v2372
      %v2374 = vpop.f32.mrb[0].mxu0
      %v2375 = vpop.f32.mrb[0].mxu0
      %v2376 = vadd.f32 %v2215, %v2375
      %v2377 = vpop.f32.mrb[0].mxu0
      %2378 = vdwg.mxu0
      %v2379 = vtanh.pop %v2253
      %v2380 = vtanh.pop %v2256
      %v2381 = vtanh.pop %v2261
      %v2382 = vtanh.pop %v2264
      %v2383 = vtanh.pop %v2269
      %v2384 = vtanh.pop %v2272
      %v2385 = vtanh.pop %v2277
      %v2386 = vtanh.pop %v2280
      %v2387 = vtanh.pop %v2285
      %v2388 = vtanh.pop %v2288
      %v2389 = vtanh.pop %v2293
      %v2390 = vtanh.pop %v2296
      %v2391 = vtanh.pop %v2301
      %v2392 = vtanh.pop %v2304
      %v2393 = vtanh.pop %v2309
      %v2394 = vtanh.pop %v2312
      %v2395 = vtanh.pop %v2317
      %v2396 = vtanh.pop %v2320
      %v2397 = vtanh.pop %v2325
      %v2398 = vtanh.pop %v2328
      %v2399 = vtanh.pop %v2333
      %v2400 = vtanh.pop %v2336
      %v2401 = vtanh.pop %v2341
      %v2402 = vtanh.pop %v2344
      %v2403 = vtanh.pop %v2349
      %v2404 = vtanh.pop %v2352
      %v2405 = vtanh.pop %v2357
      %v2406 = vtanh.pop %v2360
      %v2407 = vtanh.pop %v2365
      %v2408 = vtanh.pop %v2368
      %v2409 = vtanh.pop %v2373
      %v2410 = vtanh.pop %v2376
      %v2411 = vld [vmem:[%s3] sm:$0xf]
      %v2412 = vld [vmem:[%s3 + $0x4] sm:$0xf]
      %v2413 = vld [vmem:[%s3 + $0x8] sm:$0xf]
      %v2414 = vld [vmem:[%s3 + $0xc] sm:$0xf]
      %v2415 = vld [vmem:[%s3 + $0x10] sm:$0xf]
      %v2416 = vld [vmem:[%s3 + $0x14] sm:$0xf]
      %v2417 = vld [vmem:[%s3 + $0x18] sm:$0xf]
      %v2418 = vld [vmem:[%s3 + $0x1c] sm:$0xf]
      %v2419 = vld [vmem:[%s3 + $0x20] sm:$0xf]
      %v2420 = vld [vmem:[%s3 + $0x24] sm:$0xf]
      %v2421 = vld [vmem:[%s3 + $0x28] sm:$0xf]
      %v2422 = vld [vmem:[%s3 + $0x2c] sm:$0xf]
      %v2423 = vld [vmem:[%s3 + $0x30] sm:$0xf]
      %v2424 = vld [vmem:[%s3 + $0x34] sm:$0xf]
      %v2425 = vld [vmem:[%s3 + $0x38] sm:$0xf]
      %v2426 = vld [vmem:[%s3 + $0x3c] sm:$0xf]
      %v2427 = vpack.c.bf16 %v2380, %v2379
      %v2428 = vpack.c.bf16 %v2382, %v2381
      %v2429 = vpack.c.bf16 %v2384, %v2383
      %v2430 = vpack.c.bf16 %v2386, %v2385
      %v2431 = vpack.c.bf16 %v2388, %v2387
      %v2432 = vpack.c.bf16 %v2390, %v2389
      %v2433 = vpack.c.bf16 %v2392, %v2391
      %v2434 = vpack.c.bf16 %v2394, %v2393
      %v2435 = vpack.c.bf16 %v2396, %v2395
      %v2436 = vpack.c.bf16 %v2398, %v2397
      %v2437 = vpack.c.bf16 %v2400, %v2399
      %v2438 = vpack.c.bf16 %v2402, %v2401
      %v2439 = vpack.c.bf16 %v2404, %v2403
      %v2440 = vpack.c.bf16 %v2406, %v2405
      %v2441 = vpack.c.bf16 %v2408, %v2407
      %v2442 = vpack.c.bf16 %v2410, %v2409
      %v2443 = vld [vmem:[%s4] sm:$0x1]
      %v2445 = vlaneseq
      %v2446 = vshrl.u32 %v2445, 7
      %v2447 = vsub.s32 0, %v2446
      %v2448 = vrot.slane %v2443, %v2447
      %v2466 = vunpack.c.l.b16 %v2411
      %v2467 = vunpack.c.l.b16 %v2412
      %v2468 = vunpack.c.l.b16 %v2413
      %v2469 = vunpack.c.l.b16 %v2414
      %v2470 = vunpack.c.l.b16 %v2415
      %v2471 = vunpack.c.l.b16 %v2416
      %v2472 = vunpack.c.l.b16 %v2417
      %v2473 = vunpack.c.l.b16 %v2418
      %v2474 = vunpack.c.l.b16 %v2419
      %v2475 = vunpack.c.l.b16 %v2420
      %v2476 = vunpack.c.l.b16 %v2421
      %v2477 = vunpack.c.l.b16 %v2422
      %v2478 = vunpack.c.l.b16 %v2423
      %v2479 = vunpack.c.l.b16 %v2424
      %v2480 = vunpack.c.l.b16 %v2425
      %v2481 = vunpack.c.l.b16 %v2426
      %v2482 = vpack.c.b16 %v2467, %v2466
      %v2483 = vpack.c.b16 %v2469, %v2468
      %v2484 = vpack.c.b16 %v2471, %v2470
      %v2485 = vpack.c.b16 %v2473, %v2472
      %v2486 = vpack.c.b16 %v2475, %v2474
      %v2487 = vpack.c.b16 %v2477, %v2476
      %v2488 = vpack.c.b16 %v2479, %v2478
      %v2489 = vpack.c.b16 %v2481, %v2480
      %2498 = vmatprep.subr.bf16.mxu0 0
      %2499 = vmatpush1.bf16.msra.mxu0 %v2482
      %2500 = vmatprep.subr.bf16.mxu0 0
      %2501 = vmatpush1.bf16.msra.mxu0 %v2483
      %2502 = vmatprep.subr.bf16.mxu0 0
      %2503 = vmatpush1.bf16.msra.mxu0 %v2484
      %2504 = vmatprep.subr.bf16.mxu0 0
      %2505 = vmatpush1.bf16.msra.mxu0 %v2485
      %2506 = vmatprep.subr.bf16.mxu0 0
      %2507 = vmatpush1.bf16.msra.mxu0 %v2486
      %2508 = vmatprep.subr.bf16.mxu0 0
      %2509 = vmatpush1.bf16.msra.mxu0 %v2487
      %2510 = vmatprep.subr.bf16.mxu0 0
      %2511 = vmatpush1.bf16.msra.mxu0 %v2488
      %2512 = vmatprep.subr.bf16.mxu0 0
      %2513 = vmatpush1.bf16.msra.mxu0 %v2489
      %2514 = vmatprep.subr.bf16.mxu0 0
      %2515 = vmatpush1.bf16.msra.mxu0 0
      %2516 = vmatprep.subr.bf16.mxu0 0
      %2517 = vmatpush1.bf16.msra.mxu0 0
      %2518 = vmatprep.subr.bf16.mxu0 0
      %2519 = vmatpush1.bf16.msra.mxu0 0
      %2520 = vmatprep.subr.bf16.mxu0 0
      %2521 = vmatpush1.bf16.msra.mxu0 0
      %2522 = vmatprep.subr.bf16.mxu0 0
      %2523 = vmatpush1.bf16.msra.mxu0 0
      %2524 = vmatprep.subr.bf16.mxu0 0
      %2525 = vmatpush1.bf16.msra.mxu0 0
      %2526 = vmatprep.subr.bf16.mxu0 0
      %2527 = vmatpush1.bf16.msra.mxu0 0
      %2528 = vmatprep.subr.bf16.mxu0 0
      %2529 = vmatpush1.bf16.msra.mxu0 0
      %2530 = vmatprep.mubr.bf16.mxu0 0
      %2531 = vmatmul.mubr.bf16.gmra.mrb[0].mxu0 %v2427
      %v2532 = vpop.f32.mrb[0].mxu0
      %v2533 = vadd.f32 %v2448, %v2532
      %v2534 = vpop.f32.mrb[0].mxu0
      %v2535 = vpop.f32.mrb[0].mxu0
      %v2536 = vadd.f32 %v2448, %v2535
      %v2537 = vpop.f32.mrb[0].mxu0
      %2538 = vmatprep.mubr.bf16.mxu0 0
      %2539 = vmatmul.mubr.bf16.gmra.mrb[0].mxu0 %v2428
      %v2540 = vpop.f32.mrb[0].mxu0
      %v2541 = vadd.f32 %v2448, %v2540
      %v2542 = vpop.f32.mrb[0].mxu0
      %v2543 = vpop.f32.mrb[0].mxu0
      %v2544 = vadd.f32 %v2448, %v2543
      %v2545 = vpop.f32.mrb[0].mxu0
      %2546 = vmatprep.mubr.bf16.mxu0 0
      %2547 = vmatmul.mubr.bf16.gmra.mrb[0].mxu0 %v2429
      %v2548 = vpop.f32.mrb[0].mxu0
      %v2549 = vadd.f32 %v2448, %v2548
      %v2550 = vpop.f32.mrb[0].mxu0
      %v2551 = vpop.f32.mrb[0].mxu0
      %v2552 = vadd.f32 %v2448, %v2551
      %v2553 = vpop.f32.mrb[0].mxu0
      %2554 = vmatprep.mubr.bf16.mxu0 0
      %2555 = vmatmul.mubr.bf16.gmra.mrb[0].mxu0 %v2430
      %v2556 = vpop.f32.mrb[0].mxu0
      %v2557 = vadd.f32 %v2448, %v2556
      %v2558 = vpop.f32.mrb[0].mxu0
      %v2559 = vpop.f32.mrb[0].mxu0
      %v2560 = vadd.f32 %v2448, %v2559
      %v2561 = vpop.f32.mrb[0].mxu0
      %2562 = vmatprep.mubr.bf16.mxu0 0
      %2563 = vmatmul.mubr.bf16.gmra.mrb[0].mxu0 %v2431
      %v2564 = vpop.f32.mrb[0].mxu0
      %v2565 = vadd.f32 %v2448, %v2564
      %v2566 = vpop.f32.mrb[0].mxu0
      %v2567 = vpop.f32.mrb[0].mxu0
      %v2568 = vadd.f32 %v2448, %v2567
      %v2569 = vpop.f32.mrb[0].mxu0
      %2570 = vmatprep.mubr.bf16.mxu0 0
      %2571 = vmatmul.mubr.bf16.gmra.mrb[0].mxu0 %v2432
      %v2572 = vpop.f32.mrb[0].mxu0
      %v2573 = vadd.f32 %v2448, %v2572
      %v2574 = vpop.f32.mrb[0].mxu0
      %v2575 = vpop.f32.mrb[0].mxu0
      %v2576 = vadd.f32 %v2448, %v2575
      %v2577 = vpop.f32.mrb[0].mxu0
      %2578 = vmatprep.mubr.bf16.mxu0 0
      %2579 = vmatmul.mubr.bf16.gmra.mrb[0].mxu0 %v2433
      %v2580 = vpop.f32.mrb[0].mxu0
      %v2581 = vadd.f32 %v2448, %v2580
      %v2582 = vpop.f32.mrb[0].mxu0
      %v2583 = vpop.f32.mrb[0].mxu0
      %v2584 = vadd.f32 %v2448, %v2583
      %v2585 = vpop.f32.mrb[0].mxu0
      %2586 = vmatprep.mubr.bf16.mxu0 0
      %2587 = vmatmul.mubr.bf16.gmra.mrb[0].mxu0 %v2434
      %v2588 = vpop.f32.mrb[0].mxu0
      %v2589 = vadd.f32 %v2448, %v2588
      %v2590 = vpop.f32.mrb[0].mxu0
      %v2591 = vpop.f32.mrb[0].mxu0
      %v2592 = vadd.f32 %v2448, %v2591
      %v2593 = vpop.f32.mrb[0].mxu0
      %2594 = vmatprep.mubr.bf16.mxu0 0
      %2595 = vmatmul.mubr.bf16.gmra.mrb[0].mxu0 %v2435
      %v2596 = vpop.f32.mrb[0].mxu0
      %v2597 = vadd.f32 %v2448, %v2596
      %v2598 = vpop.f32.mrb[0].mxu0
      %v2599 = vpop.f32.mrb[0].mxu0
      %v2600 = vadd.f32 %v2448, %v2599
      %v2601 = vpop.f32.mrb[0].mxu0
      %2602 = vmatprep.mubr.bf16.mxu0 0
      %2603 = vmatmul.mubr.bf16.gmra.mrb[0].mxu0 %v2436
      %v2604 = vpop.f32.mrb[0].mxu0
      %v2605 = vadd.f32 %v2448, %v2604
      %v2606 = vpop.f32.mrb[0].mxu0
      %v2607 = vpop.f32.mrb[0].mxu0
      %v2608 = vadd.f32 %v2448, %v2607
      %v2609 = vpop.f32.mrb[0].mxu0
      %2610 = vmatprep.mubr.bf16.mxu0 0
      %2611 = vmatmul.mubr.bf16.gmra.mrb[0].mxu0 %v2437
      %v2612 = vpop.f32.mrb[0].mxu0
      %v2613 = vadd.f32 %v2448, %v2612
      %v2614 = vpop.f32.mrb[0].mxu0
      %v2615 = vpop.f32.mrb[0].mxu0
      %v2616 = vadd.f32 %v2448, %v2615
      %v2617 = vpop.f32.mrb[0].mxu0
      %2618 = vmatprep.mubr.bf16.mxu0 0
      %2619 = vmatmul.mubr.bf16.gmra.mrb[0].mxu0 %v2438
      %v2620 = vpop.f32.mrb[0].mxu0
      %v2621 = vadd.f32 %v2448, %v2620
      %v2622 = vpop.f32.mrb[0].mxu0
      %v2623 = vpop.f32.mrb[0].mxu0
      %v2624 = vadd.f32 %v2448, %v2623
      %v2625 = vpop.f32.mrb[0].mxu0
      %2626 = vmatprep.mubr.bf16.mxu0 0
      %2627 = vmatmul.mubr.bf16.gmra.mrb[0].mxu0 %v2439
      %v2628 = vpop.f32.mrb[0].mxu0
      %v2629 = vadd.f32 %v2448, %v2628
      %v2630 = vpop.f32.mrb[0].mxu0
      %v2631 = vpop.f32.mrb[0].mxu0
      %v2632 = vadd.f32 %v2448, %v2631
      %v2633 = vpop.f32.mrb[0].mxu0
      %2634 = vmatprep.mubr.bf16.mxu0 0
      %2635 = vmatmul.mubr.bf16.gmra.mrb[0].mxu0 %v2440
      %v2636 = vpop.f32.mrb[0].mxu0
      %v2637 = vadd.f32 %v2448, %v2636
      %v2638 = vpop.f32.mrb[0].mxu0
      %v2639 = vpop.f32.mrb[0].mxu0
      %v2640 = vadd.f32 %v2448, %v2639
      %v2641 = vpop.f32.mrb[0].mxu0
      %2642 = vmatprep.mubr.bf16.mxu0 0
      %2643 = vmatmul.mubr.bf16.gmra.mrb[0].mxu0 %v2441
      %v2644 = vpop.f32.mrb[0].mxu0
      %v2645 = vadd.f32 %v2448, %v2644
      %v2646 = vpop.f32.mrb[0].mxu0
      %v2647 = vpop.f32.mrb[0].mxu0
      %v2648 = vadd.f32 %v2448, %v2647
      %v2649 = vpop.f32.mrb[0].mxu0
      %2650 = vmatprep.mubr.bf16.mxu0 0
      %2651 = vmatmul.mubr.bf16.gmra.mrb[0].mxu0 %v2442
      %v2652 = vpop.f32.mrb[0].mxu0
      %v2653 = vadd.f32 %v2448, %v2652
      %v2654 = vpop.f32.mrb[0].mxu0
      %v2655 = vpop.f32.mrb[0].mxu0
      %v2656 = vadd.f32 %v2448, %v2655
      %v2657 = vpop.f32.mrb[0].mxu0
      %2658 = vdwg.mxu0
      %v2659 = vtanh.pop %v2533
      %v2660 = vtanh.pop %v2536
      %v2661 = vtanh.pop %v2541
      %v2662 = vtanh.pop %v2544
      %v2663 = vtanh.pop %v2549
      %v2664 = vtanh.pop %v2552
      %v2665 = vtanh.pop %v2557
      %v2666 = vtanh.pop %v2560
      %v2667 = vtanh.pop %v2565
      %v2668 = vtanh.pop %v2568
      %v2669 = vtanh.pop %v2573
      %v2670 = vtanh.pop %v2576
      %v2671 = vtanh.pop %v2581
      %v2672 = vtanh.pop %v2584
      %v2673 = vtanh.pop %v2589
      %v2674 = vtanh.pop %v2592
      %v2675 = vtanh.pop %v2597
      %v2676 = vtanh.pop %v2600
      %v2677 = vtanh.pop %v2605
      %v2678 = vtanh.pop %v2608
      %v2679 = vtanh.pop %v2613
      %v2680 = vtanh.pop %v2616
      %v2681 = vtanh.pop %v2621
      %v2682 = vtanh.pop %v2624
      %v2683 = vtanh.pop %v2629
      %v2684 = vtanh.pop %v2632
      %v2685 = vtanh.pop %v2637
      %v2686 = vtanh.pop %v2640
      %v2687 = vtanh.pop %v2645
      %v2688 = vtanh.pop %v2648
      %v2689 = vtanh.pop %v2653
      %v2690 = vtanh.pop %v2656
      %v2691 = vld [vmem:[%s5] sm:$0xf]
      %v2692 = vld [vmem:[%s5 + $0x4] sm:$0xf]
      %v2693 = vld [vmem:[%s5 + $0x8] sm:$0xf]
      %v2694 = vld [vmem:[%s5 + $0xc] sm:$0xf]
      %v2695 = vld [vmem:[%s5 + $0x10] sm:$0xf]
      %v2696 = vld [vmem:[%s5 + $0x14] sm:$0xf]
      %v2697 = vld [vmem:[%s5 + $0x18] sm:$0xf]
      %v2698 = vld [vmem:[%s5 + $0x1c] sm:$0xf]
      %v2699 = vpack.c.bf16 %v2660, %v2659
      %v2700 = vpack.c.bf16 %v2662, %v2661
      %v2701 = vpack.c.bf16 %v2664, %v2663
      %v2702 = vpack.c.bf16 %v2666, %v2665
      %v2703 = vpack.c.bf16 %v2668, %v2667
      %v2704 = vpack.c.bf16 %v2670, %v2669
      %v2705 = vpack.c.bf16 %v2672, %v2671
      %v2706 = vpack.c.bf16 %v2674, %v2673
      %v2707 = vpack.c.bf16 %v2676, %v2675
      %v2708 = vpack.c.bf16 %v2678, %v2677
      %v2709 = vpack.c.bf16 %v2680, %v2679
      %v2710 = vpack.c.bf16 %v2682, %v2681
      %v2711 = vpack.c.bf16 %v2684, %v2683
      %v2712 = vpack.c.bf16 %v2686, %v2685
      %v2713 = vpack.c.bf16 %v2688, %v2687
      %v2714 = vpack.c.bf16 %v2690, %v2689
      %v2715 = vld [vmem:[%s6] sm:$0x1]
      %v2717 = vlaneseq
      %v2718 = vshrl.u32 %v2717, 7
      %v2719 = vsub.s32 0, %v2718
      %v2720 = vrot.slane %v2715, %v2719
      %v2730 = vunpack.c.l.b16 %v2691
      %v2731 = vunpack.c.l.b16 %v2692
      %v2732 = vunpack.c.l.b16 %v2693
      %v2733 = vunpack.c.l.b16 %v2694
      %v2734 = vunpack.c.l.b16 %v2695
      %v2735 = vunpack.c.l.b16 %v2696
      %v2736 = vunpack.c.l.b16 %v2697
      %v2737 = vunpack.c.l.b16 %v2698
      %v2738 = vpack.c.b16 %v2731, %v2730
      %v2739 = vpack.c.b16 %v2733, %v2732
      %v2740 = vpack.c.b16 %v2735, %v2734
      %v2741 = vpack.c.b16 %v2737, %v2736
      %vm2746 = vcmask 523264
      %v2748 = vsel %vm2746, %v2699, 0
      %v2751 = vsel %vm2746, %v2700, 0
      %v2754 = vsel %vm2746, %v2701, 0
      %v2757 = vsel %vm2746, %v2702, 0
      %v2760 = vsel %vm2746, %v2703, 0
      %v2763 = vsel %vm2746, %v2704, 0
      %v2766 = vsel %vm2746, %v2705, 0
      %v2769 = vsel %vm2746, %v2706, 0
      %v2772 = vsel %vm2746, %v2707, 0
      %v2775 = vsel %vm2746, %v2708, 0
      %v2778 = vsel %vm2746, %v2709, 0
      %v2781 = vsel %vm2746, %v2710, 0
      %v2784 = vsel %vm2746, %v2711, 0
      %v2787 = vsel %vm2746, %v2712, 0
      %v2790 = vsel %vm2746, %v2713, 0
      %v2793 = vsel %vm2746, %v2714, 0
      %2795 = vmatprep.subr.bf16.mxu0 0
      %2796 = vmatpush1.bf16.msra.mxu0 %v2738
      %2797 = vmatprep.subr.bf16.mxu0 0
      %2798 = vmatpush1.bf16.msra.mxu0 %v2739
      %2799 = vmatprep.subr.bf16.mxu0 0
      %2800 = vmatpush1.bf16.msra.mxu0 %v2740
      %2801 = vmatprep.subr.bf16.mxu0 0
      %2802 = vmatpush1.bf16.msra.mxu0 %v2741
      %2803 = vmatprep.subr.bf16.mxu0 0
      %2804 = vmatpush1.bf16.msra.mxu0 0
      %2805 = vmatprep.subr.bf16.mxu0 0
      %2806 = vmatpush1.bf16.msra.mxu0 0
      %2807 = vmatprep.subr.bf16.mxu0 0
      %2808 = vmatpush1.bf16.msra.mxu0 0
      %2809 = vmatprep.subr.bf16.mxu0 0
      %2810 = vmatpush1.bf16.msra.mxu0 0
      %2811 = vmatprep.subr.bf16.mxu0 0
      %2812 = vmatpush1.bf16.msra.mxu0 0
      %2813 = vmatprep.subr.bf16.mxu0 0
      %2814 = vmatpush1.bf16.msra.mxu0 0
      %2815 = vmatprep.subr.bf16.mxu0 0
      %2816 = vmatpush1.bf16.msra.mxu0 0
      %2817 = vmatprep.subr.bf16.mxu0 0
      %2818 = vmatpush1.bf16.msra.mxu0 0
      %2819 = vmatprep.subr.bf16.mxu0 0
      %2820 = vmatpush1.bf16.msra.mxu0 0
      %2821 = vmatprep.subr.bf16.mxu0 0
      %2822 = vmatpush1.bf16.msra.mxu0 0
      %2823 = vmatprep.subr.bf16.mxu0 0
      %2824 = vmatpush1.bf16.msra.mxu0 0
      %2825 = vmatprep.subr.bf16.mxu0 0
      %2826 = vmatpush1.bf16.msra.mxu0 0
      %2827 = vmatprep.mubr.bf16.mxu0 0
      %2828 = vmatmul.mubr.bf16.gmra.mrb[0].mxu0 %v2748
      %v2829 = vpop.f32.mrb[0].mxu0
      %v2830 = vadd.f32 %v2720, %v2829
      %v2831 = vpop.f32.mrb[0].mxu0
      %v2832 = vpop.f32.mrb[0].mxu0
      %v2833 = vadd.f32 %v2720, %v2832
      %v2834 = vpop.f32.mrb[0].mxu0
      %2835 = vmatprep.mubr.bf16.mxu0 0
      %2836 = vmatmul.mubr.bf16.gmra.mrb[0].mxu0 %v2751
      %v2837 = vpop.f32.mrb[0].mxu0
      %v2838 = vadd.f32 %v2720, %v2837
      %v2839 = vpop.f32.mrb[0].mxu0
      %v2840 = vpop.f32.mrb[0].mxu0
      %v2841 = vadd.f32 %v2720, %v2840
      %v2842 = vpop.f32.mrb[0].mxu0
      %2843 = vmatprep.mubr.bf16.mxu0 0
      %2844 = vmatmul.mubr.bf16.gmra.mrb[0].mxu0 %v2754
      %v2845 = vpop.f32.mrb[0].mxu0
      %v2846 = vadd.f32 %v2720, %v2845
      %v2847 = vpop.f32.mrb[0].mxu0
      %v2848 = vpop.f32.mrb[0].mxu0
      %v2849 = vadd.f32 %v2720, %v2848
      %v2850 = vpop.f32.mrb[0].mxu0
      %2851 = vmatprep.mubr.bf16.mxu0 0
      %2852 = vmatmul.mubr.bf16.gmra.mrb[0].mxu0 %v2757
      %v2853 = vpop.f32.mrb[0].mxu0
      %v2854 = vadd.f32 %v2720, %v2853
      %v2855 = vpop.f32.mrb[0].mxu0
      %v2856 = vpop.f32.mrb[0].mxu0
      %v2857 = vadd.f32 %v2720, %v2856
      %v2858 = vpop.f32.mrb[0].mxu0
      %2859 = vmatprep.mubr.bf16.mxu0 0
      %2860 = vmatmul.mubr.bf16.gmra.mrb[0].mxu0 %v2760
      %v2861 = vpop.f32.mrb[0].mxu0
      %v2862 = vadd.f32 %v2720, %v2861
      %v2863 = vpop.f32.mrb[0].mxu0
      %v2864 = vpop.f32.mrb[0].mxu0
      %v2865 = vadd.f32 %v2720, %v2864
      %v2866 = vpop.f32.mrb[0].mxu0
      %2867 = vmatprep.mubr.bf16.mxu0 0
      %2868 = vmatmul.mubr.bf16.gmra.mrb[0].mxu0 %v2763
      %v2869 = vpop.f32.mrb[0].mxu0
      %v2870 = vadd.f32 %v2720, %v2869
      %v2871 = vpop.f32.mrb[0].mxu0
      %v2872 = vpop.f32.mrb[0].mxu0
      %v2873 = vadd.f32 %v2720, %v2872
      %v2874 = vpop.f32.mrb[0].mxu0
      %2875 = vmatprep.mubr.bf16.mxu0 0
      %2876 = vmatmul.mubr.bf16.gmra.mrb[0].mxu0 %v2766
      %v2877 = vpop.f32.mrb[0].mxu0
      %v2878 = vadd.f32 %v2720, %v2877
      %v2879 = vpop.f32.mrb[0].mxu0
      %v2880 = vpop.f32.mrb[0].mxu0
      %v2881 = vadd.f32 %v2720, %v2880
      %v2882 = vpop.f32.mrb[0].mxu0
      %2883 = vmatprep.mubr.bf16.mxu0 0
      %2884 = vmatmul.mubr.bf16.gmra.mrb[0].mxu0 %v2769
      %v2885 = vpop.f32.mrb[0].mxu0
      %v2886 = vadd.f32 %v2720, %v2885
      %v2887 = vpop.f32.mrb[0].mxu0
      %v2888 = vpop.f32.mrb[0].mxu0
      %v2889 = vadd.f32 %v2720, %v2888
      %v2890 = vpop.f32.mrb[0].mxu0
      %2891 = vmatprep.mubr.bf16.mxu0 0
      %2892 = vmatmul.mubr.bf16.gmra.mrb[0].mxu0 %v2772
      %v2893 = vpop.f32.mrb[0].mxu0
      %v2894 = vadd.f32 %v2720, %v2893
      %v2895 = vpop.f32.mrb[0].mxu0
      %v2896 = vpop.f32.mrb[0].mxu0
      %v2897 = vadd.f32 %v2720, %v2896
      %v2898 = vpop.f32.mrb[0].mxu0
      %2899 = vmatprep.mubr.bf16.mxu0 0
      %2900 = vmatmul.mubr.bf16.gmra.mrb[0].mxu0 %v2775
      %v2901 = vpop.f32.mrb[0].mxu0
      %v2902 = vadd.f32 %v2720, %v2901
      %v2903 = vpop.f32.mrb[0].mxu0
      %v2904 = vpop.f32.mrb[0].mxu0
      %v2905 = vadd.f32 %v2720, %v2904
      %v2906 = vpop.f32.mrb[0].mxu0
      %2907 = vmatprep.mubr.bf16.mxu0 0
      %2908 = vmatmul.mubr.bf16.gmra.mrb[0].mxu0 %v2778
      %v2909 = vpop.f32.mrb[0].mxu0
      %v2910 = vadd.f32 %v2720, %v2909
      %v2911 = vpop.f32.mrb[0].mxu0
      %v2912 = vpop.f32.mrb[0].mxu0
      %v2913 = vadd.f32 %v2720, %v2912
      %v2914 = vpop.f32.mrb[0].mxu0
      %2915 = vmatprep.mubr.bf16.mxu0 0
      %2916 = vmatmul.mubr.bf16.gmra.mrb[0].mxu0 %v2781
      %v2917 = vpop.f32.mrb[0].mxu0
      %v2918 = vadd.f32 %v2720, %v2917
      %v2919 = vpop.f32.mrb[0].mxu0
      %v2920 = vpop.f32.mrb[0].mxu0
      %v2921 = vadd.f32 %v2720, %v2920
      %v2922 = vpop.f32.mrb[0].mxu0
      %2923 = vmatprep.mubr.bf16.mxu0 0
      %2924 = vmatmul.mubr.bf16.gmra.mrb[0].mxu0 %v2784
      %v2925 = vpop.f32.mrb[0].mxu0
      %v2926 = vadd.f32 %v2720, %v2925
      %v2927 = vpop.f32.mrb[0].mxu0
      %v2928 = vpop.f32.mrb[0].mxu0
      %v2929 = vadd.f32 %v2720, %v2928
      %v2930 = vpop.f32.mrb[0].mxu0
      %2931 = vmatprep.mubr.bf16.mxu0 0
      %2932 = vmatmul.mubr.bf16.gmra.mrb[0].mxu0 %v2787
      %v2933 = vpop.f32.mrb[0].mxu0
      %v2934 = vadd.f32 %v2720, %v2933
      %v2935 = vpop.f32.mrb[0].mxu0
      %v2936 = vpop.f32.mrb[0].mxu0
      %v2937 = vadd.f32 %v2720, %v2936
      %v2938 = vpop.f32.mrb[0].mxu0
      %2939 = vmatprep.mubr.bf16.mxu0 0
      %2940 = vmatmul.mubr.bf16.gmra.mrb[0].mxu0 %v2790
      %v2941 = vpop.f32.mrb[0].mxu0
      %v2942 = vadd.f32 %v2720, %v2941
      %v2943 = vpop.f32.mrb[0].mxu0
      %v2944 = vpop.f32.mrb[0].mxu0
      %v2945 = vadd.f32 %v2720, %v2944
      %v2946 = vpop.f32.mrb[0].mxu0
      %2947 = vmatprep.mubr.bf16.mxu0 0
      %2948 = vmatmul.mubr.bf16.gmra.mrb[0].mxu0 %v2793
      %v2949 = vpop.f32.mrb[0].mxu0
      %v2950 = vadd.f32 %v2720, %v2949
      %v2951 = vpop.f32.mrb[0].mxu0
      %v2952 = vpop.f32.mrb[0].mxu0
      %v2953 = vadd.f32 %v2720, %v2952
      %v2954 = vpop.f32.mrb[0].mxu0
      %2955 = vdwg.mxu0
      %v2956 = vtanh.pop %v2830
      %v2957 = vtanh.pop %v2833
      %v2958 = vtanh.pop %v2838
      %v2959 = vtanh.pop %v2841
      %v2960 = vtanh.pop %v2846
      %v2961 = vtanh.pop %v2849
      %v2962 = vtanh.pop %v2854
      %v2963 = vtanh.pop %v2857
      %v2964 = vtanh.pop %v2862
      %v2965 = vtanh.pop %v2865
      %v2966 = vtanh.pop %v2870
      %v2967 = vtanh.pop %v2873
      %v2968 = vtanh.pop %v2878
      %v2969 = vtanh.pop %v2881
      %v2970 = vtanh.pop %v2886
      %v2971 = vtanh.pop %v2889
      %v2972 = vtanh.pop %v2894
      %v2973 = vtanh.pop %v2897
      %v2974 = vtanh.pop %v2902
      %v2975 = vtanh.pop %v2905
      %v2976 = vtanh.pop %v2910
      %v2977 = vtanh.pop %v2913
      %v2978 = vtanh.pop %v2918
      %v2979 = vtanh.pop %v2921
      %v2980 = vtanh.pop %v2926
      %v2981 = vtanh.pop %v2929
      %v2982 = vtanh.pop %v2934
      %v2983 = vtanh.pop %v2937
      %v2984 = vtanh.pop %v2942
      %v2985 = vtanh.pop %v2945
      %v2986 = vtanh.pop %v2950
      %v2987 = vtanh.pop %v2953
      %v2988 = vld [vmem:[%s7] sm:$0xf]
      %v2989 = vld [vmem:[%s7 + $0x4] sm:$0x3]
      %v2990 = vpack.c.bf16 %v2957, %v2956
      %v2991 = vpack.c.bf16 %v2959, %v2958
      %v2992 = vpack.c.bf16 %v2961, %v2960
      %v2993 = vpack.c.bf16 %v2963, %v2962
      %v2994 = vpack.c.bf16 %v2965, %v2964
      %v2995 = vpack.c.bf16 %v2967, %v2966
      %v2996 = vpack.c.bf16 %v2969, %v2968
      %v2997 = vpack.c.bf16 %v2971, %v2970
      %v2998 = vpack.c.bf16 %v2973, %v2972
      %v2999 = vpack.c.bf16 %v2975, %v2974
      %v3000 = vpack.c.bf16 %v2977, %v2976
      %v3001 = vpack.c.bf16 %v2979, %v2978
      %v3002 = vpack.c.bf16 %v2981, %v2980
      %v3003 = vpack.c.bf16 %v2983, %v2982
      %v3004 = vpack.c.bf16 %v2985, %v2984
      %v3005 = vpack.c.bf16 %v2987, %v2986
      %v3006 = vld [vmem:[%s8] sm:$0x1]
      %v3008 = vlaneseq
      %v3009 = vshrl.u32 %v3008, 7
      %v3010 = vsub.s32 0, %v3009
      %v3011 = vrot.slane %v3006, %v3010
      %v3015 = vunpack.c.l.b16 %v2988
      %v3016 = vunpack.c.l.b16 %v2989
      %v3017 = vpack.c.b16 %v3016, %v3015
      %vm3018 = vcmask 97280
      %v3020 = vsel %vm3018, %v2990, 0
      %v3023 = vsel %vm3018, %v2991, 0
      %v3026 = vsel %vm3018, %v2992, 0
      %v3029 = vsel %vm3018, %v2993, 0
      %v3032 = vsel %vm3018, %v2994, 0
      %v3035 = vsel %vm3018, %v2995, 0
      %v3038 = vsel %vm3018, %v2996, 0
      %v3041 = vsel %vm3018, %v2997, 0
      %v3044 = vsel %vm3018, %v2998, 0
      %v3047 = vsel %vm3018, %v2999, 0
      %v3050 = vsel %vm3018, %v3000, 0
      %v3053 = vsel %vm3018, %v3001, 0
      %v3056 = vsel %vm3018, %v3002, 0
      %v3059 = vsel %vm3018, %v3003, 0
      %v3062 = vsel %vm3018, %v3004, 0
      %v3065 = vsel %vm3018, %v3005, 0
      %vm3067 = vcmask 1045504
      %v3069 = vsel %vm3067, %v3017, 0
      %3071 = vmatprep.subr.bf16.mxu0 0
      %3072 = vmatpush1.bf16.msra.mxu0 %v3069
      %3073 = vmatprep.subr.bf16.mxu0 0
      %3074 = vmatpush1.bf16.msra.mxu0 0
      %3075 = vmatprep.subr.bf16.mxu0 0
      %3076 = vmatpush1.bf16.msra.mxu0 0
      %3077 = vmatprep.subr.bf16.mxu0 0
      %3078 = vmatpush1.bf16.msra.mxu0 0
      %3079 = vmatprep.subr.bf16.mxu0 0
      %3080 = vmatpush1.bf16.msra.mxu0 0
      %3081 = vmatprep.subr.bf16.mxu0 0
      %3082 = vmatpush1.bf16.msra.mxu0 0
      %3083 = vmatprep.subr.bf16.mxu0 0
      %3084 = vmatpush1.bf16.msra.mxu0 0
      %3085 = vmatprep.subr.bf16.mxu0 0
      %3086 = vmatpush1.bf16.msra.mxu0 0
      %3087 = vmatprep.subr.bf16.mxu0 0
      %3088 = vmatpush1.bf16.msra.mxu0 0
      %3089 = vmatprep.subr.bf16.mxu0 0
      %3090 = vmatpush1.bf16.msra.mxu0 0
      %3091 = vmatprep.subr.bf16.mxu0 0
      %3092 = vmatpush1.bf16.msra.mxu0 0
      %3093 = vmatprep.subr.bf16.mxu0 0
      %3094 = vmatpush1.bf16.msra.mxu0 0
      %3095 = vmatprep.subr.bf16.mxu0 0
      %3096 = vmatpush1.bf16.msra.mxu0 0
      %3097 = vmatprep.subr.bf16.mxu0 0
      %3098 = vmatpush1.bf16.msra.mxu0 0
      %3099 = vmatprep.subr.bf16.mxu0 0
      %3100 = vmatpush1.bf16.msra.mxu0 0
      %3101 = vmatprep.subr.bf16.mxu0 0
      %3102 = vmatpush1.bf16.msra.mxu0 0
      %3103 = vmatprep.mubr.bf16.mxu0 0
      %3104 = vmatmul.mubr.bf16.gmra.mrb[0].mxu0 %v3020
      %v3105 = vpop.f32.mrb[0].mxu0
      %v3106 = vadd.f32 %v3011, %v3105
      %v3107 = vpop.f32.mrb[0].mxu0
      %v3108 = vpop.f32.mrb[0].mxu0
      %v3109 = vadd.f32 %v3011, %v3108
      %v3110 = vpop.f32.mrb[0].mxu0
      %3111 = vmatprep.mubr.bf16.mxu0 0
      %3112 = vmatmul.mubr.bf16.gmra.mrb[0].mxu0 %v3023
      %v3113 = vpop.f32.mrb[0].mxu0
      %v3114 = vadd.f32 %v3011, %v3113
      %v3115 = vpop.f32.mrb[0].mxu0
      %v3116 = vpop.f32.mrb[0].mxu0
      %v3117 = vadd.f32 %v3011, %v3116
      %v3118 = vpop.f32.mrb[0].mxu0
      %3119 = vmatprep.mubr.bf16.mxu0 0
      %3120 = vmatmul.mubr.bf16.gmra.mrb[0].mxu0 %v3026
      %v3121 = vpop.f32.mrb[0].mxu0
      %v3122 = vadd.f32 %v3011, %v3121
      %v3123 = vpop.f32.mrb[0].mxu0
      %v3124 = vpop.f32.mrb[0].mxu0
      %v3125 = vadd.f32 %v3011, %v3124
      %v3126 = vpop.f32.mrb[0].mxu0
      %3127 = vmatprep.mubr.bf16.mxu0 0
      %3128 = vmatmul.mubr.bf16.gmra.mrb[0].mxu0 %v3029
      %v3129 = vpop.f32.mrb[0].mxu0
      %v3130 = vadd.f32 %v3011, %v3129
      %v3131 = vpop.f32.mrb[0].mxu0
      %v3132 = vpop.f32.mrb[0].mxu0
      %v3133 = vadd.f32 %v3011, %v3132
      %v3134 = vpop.f32.mrb[0].mxu0
      %3135 = vmatprep.mubr.bf16.mxu0 0
      %3136 = vmatmul.mubr.bf16.gmra.mrb[0].mxu0 %v3032
      %v3137 = vpop.f32.mrb[0].mxu0
      %v3138 = vadd.f32 %v3011, %v3137
      %v3139 = vpop.f32.mrb[0].mxu0
      %v3140 = vpop.f32.mrb[0].mxu0
      %v3141 = vadd.f32 %v3011, %v3140
      %v3142 = vpop.f32.mrb[0].mxu0
      %3143 = vmatprep.mubr.bf16.mxu0 0
      %3144 = vmatmul.mubr.bf16.gmra.mrb[0].mxu0 %v3035
      %v3145 = vpop.f32.mrb[0].mxu0
      %v3146 = vadd.f32 %v3011, %v3145
      %v3147 = vpop.f32.mrb[0].mxu0
      %v3148 = vpop.f32.mrb[0].mxu0
      %v3149 = vadd.f32 %v3011, %v3148
      %v3150 = vpop.f32.mrb[0].mxu0
      %3151 = vmatprep.mubr.bf16.mxu0 0
      %3152 = vmatmul.mubr.bf16.gmra.mrb[0].mxu0 %v3038
      %v3153 = vpop.f32.mrb[0].mxu0
      %v3154 = vadd.f32 %v3011, %v3153
      %v3155 = vpop.f32.mrb[0].mxu0
      %v3156 = vpop.f32.mrb[0].mxu0
      %v3157 = vadd.f32 %v3011, %v3156
      %v3158 = vpop.f32.mrb[0].mxu0
      %3159 = vmatprep.mubr.bf16.mxu0 0
      %3160 = vmatmul.mubr.bf16.gmra.mrb[0].mxu0 %v3041
      %v3161 = vpop.f32.mrb[0].mxu0
      %v3162 = vadd.f32 %v3011, %v3161
      %v3163 = vpop.f32.mrb[0].mxu0
      %v3164 = vpop.f32.mrb[0].mxu0
      %v3165 = vadd.f32 %v3011, %v3164
      %v3166 = vpop.f32.mrb[0].mxu0
      %3167 = vmatprep.mubr.bf16.mxu0 0
      %3168 = vmatmul.mubr.bf16.gmra.mrb[0].mxu0 %v3044
      %v3169 = vpop.f32.mrb[0].mxu0
      %v3170 = vadd.f32 %v3011, %v3169
      %v3171 = vpop.f32.mrb[0].mxu0
      %v3172 = vpop.f32.mrb[0].mxu0
      %v3173 = vadd.f32 %v3011, %v3172
      %v3174 = vpop.f32.mrb[0].mxu0
      %3175 = vmatprep.mubr.bf16.mxu0 0
      %3176 = vmatmul.mubr.bf16.gmra.mrb[0].mxu0 %v3047
      %v3177 = vpop.f32.mrb[0].mxu0
      %v3178 = vadd.f32 %v3011, %v3177
      %v3179 = vpop.f32.mrb[0].mxu0
      %v3180 = vpop.f32.mrb[0].mxu0
      %v3181 = vadd.f32 %v3011, %v3180
      %v3182 = vpop.f32.mrb[0].mxu0
      %3183 = vmatprep.mubr.bf16.mxu0 0
      %3184 = vmatmul.mubr.bf16.gmra.mrb[0].mxu0 %v3050
      %v3185 = vpop.f32.mrb[0].mxu0
      %v3186 = vadd.f32 %v3011, %v3185
      %v3187 = vpop.f32.mrb[0].mxu0
      %v3188 = vpop.f32.mrb[0].mxu0
      %v3189 = vadd.f32 %v3011, %v3188
      %v3190 = vpop.f32.mrb[0].mxu0
      %3191 = vmatprep.mubr.bf16.mxu0 0
      %3192 = vmatmul.mubr.bf16.gmra.mrb[0].mxu0 %v3053
      %v3193 = vpop.f32.mrb[0].mxu0
      %v3194 = vadd.f32 %v3011, %v3193
      %v3195 = vpop.f32.mrb[0].mxu0
      %v3196 = vpop.f32.mrb[0].mxu0
      %v3197 = vadd.f32 %v3011, %v3196
      %v3198 = vpop.f32.mrb[0].mxu0
      %3199 = vmatprep.mubr.bf16.mxu0 0
      %3200 = vmatmul.mubr.bf16.gmra.mrb[0].mxu0 %v3056
      %v3201 = vpop.f32.mrb[0].mxu0
      %v3202 = vadd.f32 %v3011, %v3201
      %v3203 = vpop.f32.mrb[0].mxu0
      %v3204 = vpop.f32.mrb[0].mxu0
      %v3205 = vadd.f32 %v3011, %v3204
      %v3206 = vpop.f32.mrb[0].mxu0
      %3207 = vmatprep.mubr.bf16.mxu0 0
      %3208 = vmatmul.mubr.bf16.gmra.mrb[0].mxu0 %v3059
      %v3209 = vpop.f32.mrb[0].mxu0
      %v3210 = vadd.f32 %v3011, %v3209
      %v3211 = vpop.f32.mrb[0].mxu0
      %v3212 = vpop.f32.mrb[0].mxu0
      %v3213 = vadd.f32 %v3011, %v3212
      %v3214 = vpop.f32.mrb[0].mxu0
      %3215 = vmatprep.mubr.bf16.mxu0 0
      %3216 = vmatmul.mubr.bf16.gmra.mrb[0].mxu0 %v3062
      %v3217 = vpop.f32.mrb[0].mxu0
      %v3218 = vadd.f32 %v3011, %v3217
      %v3219 = vpop.f32.mrb[0].mxu0
      %v3220 = vpop.f32.mrb[0].mxu0
      %v3221 = vadd.f32 %v3011, %v3220
      %v3222 = vpop.f32.mrb[0].mxu0
      %3223 = vmatprep.mubr.bf16.mxu0 0
      %3224 = vmatmul.mubr.bf16.gmra.mrb[0].mxu0 %v3065
      %v3225 = vpop.f32.mrb[0].mxu0
      %v3226 = vadd.f32 %v3011, %v3225
      %v3227 = vpop.f32.mrb[0].mxu0
      %v3228 = vpop.f32.mrb[0].mxu0
      %v3229 = vadd.f32 %v3011, %v3228
      %v3230 = vpop.f32.mrb[0].mxu0
      %3231 = vdwg.mxu0
      %vm3232 = vcmask 23552
      %3233 = vst.msk [vmem:[%s589] sm:$0xff] %vm3232, %v3106
      %3234 = vst.msk [vmem:[%s589 + $0x8] sm:$0xff] %vm3232, %v3109
      %3235 = vst.msk [vmem:[%s589 + $0x10] sm:$0xff] %vm3232, %v3114
      %3236 = vst.msk [vmem:[%s589 + $0x18] sm:$0xff] %vm3232, %v3117
      %3237 = vst.msk [vmem:[%s589 + $0x20] sm:$0xff] %vm3232, %v3122
      %3238 = vst.msk [vmem:[%s589 + $0x28] sm:$0xff] %vm3232, %v3125
      %3239 = vst.msk [vmem:[%s589 + $0x30] sm:$0xff] %vm3232, %v3130
      %3240 = vst.msk [vmem:[%s589 + $0x38] sm:$0xff] %vm3232, %v3133
      %3241 = vst.msk [vmem:[%s589 + $0x40] sm:$0xff] %vm3232, %v3138
      %3242 = vst.msk [vmem:[%s589 + $0x48] sm:$0xff] %vm3232, %v3141
      %3243 = vst.msk [vmem:[%s589 + $0x50] sm:$0xff] %vm3232, %v3146
      %3244 = vst.msk [vmem:[%s589 + $0x58] sm:$0xff] %vm3232, %v3149
      %3245 = vst.msk [vmem:[%s589 + $0x60] sm:$0xff] %vm3232, %v3154
      %3246 = vst.msk [vmem:[%s589 + $0x68] sm:$0xff] %vm3232, %v3157
      %3247 = vst.msk [vmem:[%s589 + $0x70] sm:$0xff] %vm3232, %v3162
      %3248 = vst.msk [vmem:[%s589 + $0x78] sm:$0xff] %vm3232, %v3165
      %3249 = vst.msk [vmem:[%s589 + $0x80] sm:$0xff] %vm3232, %v3170
      %3250 = vst.msk [vmem:[%s589 + $0x88] sm:$0xff] %vm3232, %v3173
      %3251 = vst.msk [vmem:[%s589 + $0x90] sm:$0xff] %vm3232, %v3178
      %3252 = vst.msk [vmem:[%s589 + $0x98] sm:$0xff] %vm3232, %v3181
      %3253 = vst.msk [vmem:[%s589 + $0xa0] sm:$0xff] %vm3232, %v3186
      %3254 = vst.msk [vmem:[%s589 + $0xa8] sm:$0xff] %vm3232, %v3189
      %3255 = vst.msk [vmem:[%s589 + $0xb0] sm:$0xff] %vm3232, %v3194
      %3256 = vst.msk [vmem:[%s589 + $0xb8] sm:$0xff] %vm3232, %v3197
      %3257 = vst.msk [vmem:[%s589 + $0xc0] sm:$0xff] %vm3232, %v3202
      %3258 = vst.msk [vmem:[%s589 + $0xc8] sm:$0xff] %vm3232, %v3205
      %3259 = vst.msk [vmem:[%s589 + $0xd0] sm:$0xff] %vm3232, %v3210
      %3260 = vst.msk [vmem:[%s589 + $0xd8] sm:$0xff] %vm3232, %v3213
      %3261 = vst.msk [vmem:[%s589 + $0xe0] sm:$0xff] %vm3232, %v3218
      %3262 = vst.msk [vmem:[%s589 + $0xe8] sm:$0xff] %vm3232, %v3221
      %3263 = vst.msk [vmem:[%s589 + $0xf0] sm:$0xff] %vm3232, %v3226
      %3264 = vst.msk [vmem:[%s589 + $0xf8] sm:$0xff] %vm3232, %v3229
      %v3265 = vld [vmem:[%s9] sm:$0x3]
      %v3266 = vpack.c.bf16 %v3109, %v3106
      %v3267 = vpack.c.bf16 %v3117, %v3114
      %v3268 = vpack.c.bf16 %v3125, %v3122
      %v3269 = vpack.c.bf16 %v3133, %v3130
      %v3270 = vpack.c.bf16 %v3141, %v3138
      %v3271 = vpack.c.bf16 %v3149, %v3146
      %v3272 = vpack.c.bf16 %v3157, %v3154
      %v3273 = vpack.c.bf16 %v3165, %v3162
      %v3274 = vpack.c.bf16 %v3173, %v3170
      %v3275 = vpack.c.bf16 %v3181, %v3178
      %v3276 = vpack.c.bf16 %v3189, %v3186
      %v3277 = vpack.c.bf16 %v3197, %v3194
      %v3278 = vpack.c.bf16 %v3205, %v3202
      %v3279 = vpack.c.bf16 %v3213, %v3210
      %v3280 = vpack.c.bf16 %v3221, %v3218
      %v3281 = vpack.c.bf16 %v3229, %v3226
      %v3282 = vld [vmem:[%s10] sm:$0x1]
      %v3284 = vlaneseq
      %v3285 = vshrl.u32 %v3284, 7
      %v3286 = vsub.s32 0, %v3285
      %v3287 = vrot.slane %v3282, %v3286
      %v3290 = vsel %vm3232, %v3266, 0
      %v3293 = vsel %vm3232, %v3267, 0
      %v3296 = vsel %vm3232, %v3268, 0
      %v3299 = vsel %vm3232, %v3269, 0
      %v3302 = vsel %vm3232, %v3270, 0
      %v3305 = vsel %vm3232, %v3271, 0
      %v3308 = vsel %vm3232, %v3272, 0
      %v3311 = vsel %vm3232, %v3273, 0
      %v3314 = vsel %vm3232, %v3274, 0
      %v3317 = vsel %vm3232, %v3275, 0
      %v3320 = vsel %vm3232, %v3276, 0
      %v3323 = vsel %vm3232, %v3277, 0
      %v3326 = vsel %vm3232, %v3278, 0
      %v3329 = vsel %vm3232, %v3279, 0
      %v3332 = vsel %vm3232, %v3280, 0
      %v3335 = vsel %vm3232, %v3281, 0
      %vm3337 = vcmask 1040384
      %vm3338 = vcmask 1041408
      %v3339 = vsel %vm3337, 4294967295, 65535
      %v3340 = vsel %vm3338, %v3339, 0
      %v3342 = vand.u32 %v3265, %v3340
      %3344 = vmatprep.subr.bf16.mxu0 0
      %3345 = vmatpush1.bf16.msra.mxu0 %v3342
      %3346 = vmatprep.subr.bf16.mxu0 0
      %3347 = vmatpush1.bf16.msra.mxu0 0
      %3348 = vmatprep.subr.bf16.mxu0 0
      %3349 = vmatpush1.bf16.msra.mxu0 0
      %3350 = vmatprep.subr.bf16.mxu0 0
      %3351 = vmatpush1.bf16.msra.mxu0 0
      %3352 = vmatprep.subr.bf16.mxu0 0
      %3353 = vmatpush1.bf16.msra.mxu0 0
      %3354 = vmatprep.subr.bf16.mxu0 0
      %3355 = vmatpush1.bf16.msra.mxu0 0
      %3356 = vmatprep.subr.bf16.mxu0 0
      %3357 = vmatpush1.bf16.msra.mxu0 0
      %3358 = vmatprep.subr.bf16.mxu0 0
      %3359 = vmatpush1.bf16.msra.mxu0 0
      %3360 = vmatprep.subr.bf16.mxu0 0
      %3361 = vmatpush1.bf16.msra.mxu0 0
      %3362 = vmatprep.subr.bf16.mxu0 0
      %3363 = vmatpush1.bf16.msra.mxu0 0
      %3364 = vmatprep.subr.bf16.mxu0 0
      %3365 = vmatpush1.bf16.msra.mxu0 0
      %3366 = vmatprep.subr.bf16.mxu0 0
      %3367 = vmatpush1.bf16.msra.mxu0 0
      %3368 = vmatprep.subr.bf16.mxu0 0
      %3369 = vmatpush1.bf16.msra.mxu0 0
      %3370 = vmatprep.subr.bf16.mxu0 0
      %3371 = vmatpush1.bf16.msra.mxu0 0
      %3372 = vmatprep.subr.bf16.mxu0 0
      %3373 = vmatpush1.bf16.msra.mxu0 0
      %3374 = vmatprep.subr.bf16.mxu0 0
      %3375 = vmatpush1.bf16.msra.mxu0 0
      %3376 = vmatprep.mubr.bf16.mxu0 0
      %3377 = vmatmul.mubr.bf16.gmra.mrb[0].mxu0 %v3290
      %v3378 = vpop.f32.mrb[0].mxu0
      %v3379 = vadd.f32 %v3287, %v3378
      %v3380 = vpop.f32.mrb[0].mxu0
      %v3381 = vpop.f32.mrb[0].mxu0
      %v3382 = vadd.f32 %v3287, %v3381
      %v3383 = vpop.f32.mrb[0].mxu0
      %3384 = vmatprep.mubr.bf16.mxu0 0
      %3385 = vmatmul.mubr.bf16.gmra.mrb[0].mxu0 %v3293
      %v3386 = vpop.f32.mrb[0].mxu0
      %v3387 = vadd.f32 %v3287, %v3386
      %v3388 = vpop.f32.mrb[0].mxu0
      %v3389 = vpop.f32.mrb[0].mxu0
      %v3390 = vadd.f32 %v3287, %v3389
      %v3391 = vpop.f32.mrb[0].mxu0
      %3392 = vmatprep.mubr.bf16.mxu0 0
      %3393 = vmatmul.mubr.bf16.gmra.mrb[0].mxu0 %v3296
      %v3394 = vpop.f32.mrb[0].mxu0
      %v3395 = vadd.f32 %v3287, %v3394
      %v3396 = vpop.f32.mrb[0].mxu0
      %v3397 = vpop.f32.mrb[0].mxu0
      %v3398 = vadd.f32 %v3287, %v3397
      %v3399 = vpop.f32.mrb[0].mxu0
      %3400 = vmatprep.mubr.bf16.mxu0 0
      %3401 = vmatmul.mubr.bf16.gmra.mrb[0].mxu0 %v3299
      %v3402 = vpop.f32.mrb[0].mxu0
      %v3403 = vadd.f32 %v3287, %v3402
      %v3404 = vpop.f32.mrb[0].mxu0
      %v3405 = vpop.f32.mrb[0].mxu0
      %v3406 = vadd.f32 %v3287, %v3405
      %v3407 = vpop.f32.mrb[0].mxu0
      %3408 = vmatprep.mubr.bf16.mxu0 0
      %3409 = vmatmul.mubr.bf16.gmra.mrb[0].mxu0 %v3302
      %v3410 = vpop.f32.mrb[0].mxu0
      %v3411 = vadd.f32 %v3287, %v3410
      %v3412 = vpop.f32.mrb[0].mxu0
      %v3413 = vpop.f32.mrb[0].mxu0
      %v3414 = vadd.f32 %v3287, %v3413
      %v3415 = vpop.f32.mrb[0].mxu0
      %3416 = vmatprep.mubr.bf16.mxu0 0
      %3417 = vmatmul.mubr.bf16.gmra.mrb[0].mxu0 %v3305
      %v3418 = vpop.f32.mrb[0].mxu0
      %v3419 = vadd.f32 %v3287, %v3418
      %v3420 = vpop.f32.mrb[0].mxu0
      %v3421 = vpop.f32.mrb[0].mxu0
      %v3422 = vadd.f32 %v3287, %v3421
      %v3423 = vpop.f32.mrb[0].mxu0
      %3424 = vmatprep.mubr.bf16.mxu0 0
      %3425 = vmatmul.mubr.bf16.gmra.mrb[0].mxu0 %v3308
      %v3426 = vpop.f32.mrb[0].mxu0
      %v3427 = vadd.f32 %v3287, %v3426
      %v3428 = vpop.f32.mrb[0].mxu0
      %v3429 = vpop.f32.mrb[0].mxu0
      %v3430 = vadd.f32 %v3287, %v3429
      %v3431 = vpop.f32.mrb[0].mxu0
      %3432 = vmatprep.mubr.bf16.mxu0 0
      %3433 = vmatmul.mubr.bf16.gmra.mrb[0].mxu0 %v3311
      %v3434 = vpop.f32.mrb[0].mxu0
      %v3435 = vadd.f32 %v3287, %v3434
      %v3436 = vpop.f32.mrb[0].mxu0
      %v3437 = vpop.f32.mrb[0].mxu0
      %v3438 = vadd.f32 %v3287, %v3437
      %v3439 = vpop.f32.mrb[0].mxu0
      %3440 = vmatprep.mubr.bf16.mxu0 0
      %3441 = vmatmul.mubr.bf16.gmra.mrb[0].mxu0 %v3314
      %v3442 = vpop.f32.mrb[0].mxu0
      %v3443 = vadd.f32 %v3287, %v3442
      %v3444 = vpop.f32.mrb[0].mxu0
      %v3445 = vpop.f32.mrb[0].mxu0
      %v3446 = vadd.f32 %v3287, %v3445
      %v3447 = vpop.f32.mrb[0].mxu0
      %3448 = vmatprep.mubr.bf16.mxu0 0
      %3449 = vmatmul.mubr.bf16.gmra.mrb[0].mxu0 %v3317
      %v3450 = vpop.f32.mrb[0].mxu0
      %v3451 = vadd.f32 %v3287, %v3450
      %v3452 = vpop.f32.mrb[0].mxu0
      %v3453 = vpop.f32.mrb[0].mxu0
      %v3454 = vadd.f32 %v3287, %v3453
      %v3455 = vpop.f32.mrb[0].mxu0
      %3456 = vmatprep.mubr.bf16.mxu0 0
      %3457 = vmatmul.mubr.bf16.gmra.mrb[0].mxu0 %v3320
      %v3458 = vpop.f32.mrb[0].mxu0
      %v3459 = vadd.f32 %v3287, %v3458
      %v3460 = vpop.f32.mrb[0].mxu0
      %v3461 = vpop.f32.mrb[0].mxu0
      %v3462 = vadd.f32 %v3287, %v3461
      %v3463 = vpop.f32.mrb[0].mxu0
      %3464 = vmatprep.mubr.bf16.mxu0 0
      %3465 = vmatmul.mubr.bf16.gmra.mrb[0].mxu0 %v3323
      %v3466 = vpop.f32.mrb[0].mxu0
      %v3467 = vadd.f32 %v3287, %v3466
      %v3468 = vpop.f32.mrb[0].mxu0
      %v3469 = vpop.f32.mrb[0].mxu0
      %v3470 = vadd.f32 %v3287, %v3469
      %v3471 = vpop.f32.mrb[0].mxu0
      %3472 = vmatprep.mubr.bf16.mxu0 0
      %3473 = vmatmul.mubr.bf16.gmra.mrb[0].mxu0 %v3326
      %v3474 = vpop.f32.mrb[0].mxu0
      %v3475 = vadd.f32 %v3287, %v3474
      %v3476 = vpop.f32.mrb[0].mxu0
      %v3477 = vpop.f32.mrb[0].mxu0
      %v3478 = vadd.f32 %v3287, %v3477
      %v3479 = vpop.f32.mrb[0].mxu0
      %3480 = vmatprep.mubr.bf16.mxu0 0
      %3481 = vmatmul.mubr.bf16.gmra.mrb[0].mxu0 %v3329
      %v3482 = vpop.f32.mrb[0].mxu0
      %v3483 = vadd.f32 %v3287, %v3482
      %v3484 = vpop.f32.mrb[0].mxu0
      %v3485 = vpop.f32.mrb[0].mxu0
      %v3486 = vadd.f32 %v3287, %v3485
      %v3487 = vpop.f32.mrb[0].mxu0
      %3488 = vmatprep.mubr.bf16.mxu0 0
      %3489 = vmatmul.mubr.bf16.gmra.mrb[0].mxu0 %v3332
      %v3490 = vpop.f32.mrb[0].mxu0
      %v3491 = vadd.f32 %v3287, %v3490
      %v3492 = vpop.f32.mrb[0].mxu0
      %v3493 = vpop.f32.mrb[0].mxu0
      %v3494 = vadd.f32 %v3287, %v3493
      %v3495 = vpop.f32.mrb[0].mxu0
      %3496 = vmatprep.mubr.bf16.mxu0 0
      %3497 = vmatmul.mubr.bf16.gmra.mrb[0].mxu0 %v3335
      %v3498 = vpop.f32.mrb[0].mxu0
      %v3499 = vadd.f32 %v3287, %v3498
      %v3500 = vpop.f32.mrb[0].mxu0
      %v3501 = vpop.f32.mrb[0].mxu0
      %v3502 = vadd.f32 %v3287, %v3501
      %v3503 = vpop.f32.mrb[0].mxu0
      %3504 = vdwg.mxu0
      %v3505 = vtanh.pop %v3379
      %v3506 = vtanh.pop %v3382
      %v3507 = vtanh.pop %v3387
      %v3508 = vtanh.pop %v3390
      %v3509 = vtanh.pop %v3395
      %v3510 = vtanh.pop %v3398
      %v3511 = vtanh.pop %v3403
      %v3512 = vtanh.pop %v3406
      %v3513 = vtanh.pop %v3411
      %v3514 = vtanh.pop %v3414
      %v3515 = vtanh.pop %v3419
      %v3516 = vtanh.pop %v3422
      %v3517 = vtanh.pop %v3427
      %v3518 = vtanh.pop %v3430
      %v3519 = vtanh.pop %v3435
      %v3520 = vtanh.pop %v3438
      %v3521 = vtanh.pop %v3443
      %v3522 = vtanh.pop %v3446
      %v3523 = vtanh.pop %v3451
      %v3524 = vtanh.pop %v3454
      %v3525 = vtanh.pop %v3459
      %v3526 = vtanh.pop %v3462
      %v3527 = vtanh.pop %v3467
      %v3528 = vtanh.pop %v3470
      %v3529 = vtanh.pop %v3475
      %v3530 = vtanh.pop %v3478
      %v3531 = vtanh.pop %v3483
      %v3532 = vtanh.pop %v3486
      %v3533 = vtanh.pop %v3491
      %v3534 = vtanh.pop %v3494
      %v3535 = vtanh.pop %v3499
      %v3536 = vtanh.pop %v3502
      %v3537 = vld [vmem:[%s11] sm:$0xf]
      %v3538 = vld [vmem:[%s11 + $0x4] sm:$0x3]
      %v3539 = vpack.c.bf16 %v3506, %v3505
      %v3540 = vpack.c.bf16 %v3508, %v3507
      %v3541 = vpack.c.bf16 %v3510, %v3509
      %v3542 = vpack.c.bf16 %v3512, %v3511
      %v3543 = vpack.c.bf16 %v3514, %v3513
      %v3544 = vpack.c.bf16 %v3516, %v3515
      %v3545 = vpack.c.bf16 %v3518, %v3517
      %v3546 = vpack.c.bf16 %v3520, %v3519
      %v3547 = vpack.c.bf16 %v3522, %v3521
      %v3548 = vpack.c.bf16 %v3524, %v3523
      %v3549 = vpack.c.bf16 %v3526, %v3525
      %v3550 = vpack.c.bf16 %v3528, %v3527
      %v3551 = vpack.c.bf16 %v3530, %v3529
      %v3552 = vpack.c.bf16 %v3532, %v3531
      %v3553 = vpack.c.bf16 %v3534, %v3533
      %v3554 = vpack.c.bf16 %v3536, %v3535
      %v3555 = vld [vmem:[%s12] sm:$0x1]
      %v3557 = vlaneseq
      %v3558 = vshrl.u32 %v3557, 7
      %v3559 = vsub.s32 0, %v3558
      %v3560 = vrot.slane %v3555, %v3559
      %v3564 = vunpack.c.l.b16 %v3537
      %v3565 = vunpack.c.l.b16 %v3538
      %v3566 = vpack.c.b16 %v3565, %v3564
      %v3568 = vsel %vm3018, %v3539, 0
      %v3571 = vsel %vm3018, %v3540, 0
      %v3574 = vsel %vm3018, %v3541, 0
      %v3577 = vsel %vm3018, %v3542, 0
      %v3580 = vsel %vm3018, %v3543, 0
      %v3583 = vsel %vm3018, %v3544, 0
      %v3586 = vsel %vm3018, %v3545, 0
      %v3589 = vsel %vm3018, %v3546, 0
      %v3592 = vsel %vm3018, %v3547, 0
      %v3595 = vsel %vm3018, %v3548, 0
      %v3598 = vsel %vm3018, %v3549, 0
      %v3601 = vsel %vm3018, %v3550, 0
      %v3604 = vsel %vm3018, %v3551, 0
      %v3607 = vsel %vm3018, %v3552, 0
      %v3610 = vsel %vm3018, %v3553, 0
      %v3613 = vsel %vm3018, %v3554, 0
      %v3616 = vsel %vm3067, %v3566, 0
      %3618 = vmatprep.subr.bf16.mxu0 0
      %3619 = vmatpush1.bf16.msra.mxu0 %v3616
      %3620 = vmatprep.subr.bf16.mxu0 0
      %3621 = vmatpush1.bf16.msra.mxu0 0
      %3622 = vmatprep.subr.bf16.mxu0 0
      %3623 = vmatpush1.bf16.msra.mxu0 0
      %3624 = vmatprep.subr.bf16.mxu0 0
      %3625 = vmatpush1.bf16.msra.mxu0 0
      %3626 = vmatprep.subr.bf16.mxu0 0
      %3627 = vmatpush1.bf16.msra.mxu0 0
      %3628 = vmatprep.subr.bf16.mxu0 0
      %3629 = vmatpush1.bf16.msra.mxu0 0
      %3630 = vmatprep.subr.bf16.mxu0 0
      %3631 = vmatpush1.bf16.msra.mxu0 0
      %3632 = vmatprep.subr.bf16.mxu0 0
      %3633 = vmatpush1.bf16.msra.mxu0 0
      %3634 = vmatprep.subr.bf16.mxu0 0
      %3635 = vmatpush1.bf16.msra.mxu0 0
      %3636 = vmatprep.subr.bf16.mxu0 0
      %3637 = vmatpush1.bf16.msra.mxu0 0
      %3638 = vmatprep.subr.bf16.mxu0 0
      %3639 = vmatpush1.bf16.msra.mxu0 0
      %3640 = vmatprep.subr.bf16.mxu0 0
      %3641 = vmatpush1.bf16.msra.mxu0 0
      %3642 = vmatprep.subr.bf16.mxu0 0
      %3643 = vmatpush1.bf16.msra.mxu0 0
      %3644 = vmatprep.subr.bf16.mxu0 0
      %3645 = vmatpush1.bf16.msra.mxu0 0
      %3646 = vmatprep.subr.bf16.mxu0 0
      %3647 = vmatpush1.bf16.msra.mxu0 0
      %3648 = vmatprep.subr.bf16.mxu0 0
      %3649 = vmatpush1.bf16.msra.mxu0 0
      %3650 = vmatprep.mubr.bf16.mxu0 0
      %3651 = vmatmul.mubr.bf16.gmra.mrb[0].mxu0 %v3568
      %v3652 = vpop.f32.mrb[0].mxu0
      %v3653 = vadd.f32 %v3560, %v3652
      %v3654 = vpop.f32.mrb[0].mxu0
      %v3655 = vpop.f32.mrb[0].mxu0
      %v3656 = vadd.f32 %v3560, %v3655
      %v3657 = vpop.f32.mrb[0].mxu0
      %3658 = vmatprep.mubr.bf16.mxu0 0
      %3659 = vmatmul.mubr.bf16.gmra.mrb[0].mxu0 %v3571
      %v3660 = vpop.f32.mrb[0].mxu0
      %v3661 = vadd.f32 %v3560, %v3660
      %v3662 = vpop.f32.mrb[0].mxu0
      %v3663 = vpop.f32.mrb[0].mxu0
      %v3664 = vadd.f32 %v3560, %v3663
      %v3665 = vpop.f32.mrb[0].mxu0
      %3666 = vmatprep.mubr.bf16.mxu0 0
      %3667 = vmatmul.mubr.bf16.gmra.mrb[0].mxu0 %v3574
      %v3668 = vpop.f32.mrb[0].mxu0
      %v3669 = vadd.f32 %v3560, %v3668
      %v3670 = vpop.f32.mrb[0].mxu0
      %v3671 = vpop.f32.mrb[0].mxu0
      %v3672 = vadd.f32 %v3560, %v3671
      %v3673 = vpop.f32.mrb[0].mxu0
      %3674 = vmatprep.mubr.bf16.mxu0 0
      %3675 = vmatmul.mubr.bf16.gmra.mrb[0].mxu0 %v3577
      %v3676 = vpop.f32.mrb[0].mxu0
      %v3677 = vadd.f32 %v3560, %v3676
      %v3678 = vpop.f32.mrb[0].mxu0
      %v3679 = vpop.f32.mrb[0].mxu0
      %v3680 = vadd.f32 %v3560, %v3679
      %v3681 = vpop.f32.mrb[0].mxu0
      %3682 = vmatprep.mubr.bf16.mxu0 0
      %3683 = vmatmul.mubr.bf16.gmra.mrb[0].mxu0 %v3580
      %v3684 = vpop.f32.mrb[0].mxu0
      %v3685 = vadd.f32 %v3560, %v3684
      %v3686 = vpop.f32.mrb[0].mxu0
      %v3687 = vpop.f32.mrb[0].mxu0
      %v3688 = vadd.f32 %v3560, %v3687
      %v3689 = vpop.f32.mrb[0].mxu0
      %3690 = vmatprep.mubr.bf16.mxu0 0
      %3691 = vmatmul.mubr.bf16.gmra.mrb[0].mxu0 %v3583
      %v3692 = vpop.f32.mrb[0].mxu0
      %v3693 = vadd.f32 %v3560, %v3692
      %v3694 = vpop.f32.mrb[0].mxu0
      %v3695 = vpop.f32.mrb[0].mxu0
      %v3696 = vadd.f32 %v3560, %v3695
      %v3697 = vpop.f32.mrb[0].mxu0
      %3698 = vmatprep.mubr.bf16.mxu0 0
      %3699 = vmatmul.mubr.bf16.gmra.mrb[0].mxu0 %v3586
      %v3700 = vpop.f32.mrb[0].mxu0
      %v3701 = vadd.f32 %v3560, %v3700
      %v3702 = vpop.f32.mrb[0].mxu0
      %v3703 = vpop.f32.mrb[0].mxu0
      %v3704 = vadd.f32 %v3560, %v3703
      %v3705 = vpop.f32.mrb[0].mxu0
      %3706 = vmatprep.mubr.bf16.mxu0 0
      %3707 = vmatmul.mubr.bf16.gmra.mrb[0].mxu0 %v3589
      %v3708 = vpop.f32.mrb[0].mxu0
      %v3709 = vadd.f32 %v3560, %v3708
      %v3710 = vpop.f32.mrb[0].mxu0
      %v3711 = vpop.f32.mrb[0].mxu0
      %v3712 = vadd.f32 %v3560, %v3711
      %v3713 = vpop.f32.mrb[0].mxu0
      %3714 = vmatprep.mubr.bf16.mxu0 0
      %3715 = vmatmul.mubr.bf16.gmra.mrb[0].mxu0 %v3592
      %v3716 = vpop.f32.mrb[0].mxu0
      %v3717 = vadd.f32 %v3560, %v3716
      %v3718 = vpop.f32.mrb[0].mxu0
      %v3719 = vpop.f32.mrb[0].mxu0
      %v3720 = vadd.f32 %v3560, %v3719
      %v3721 = vpop.f32.mrb[0].mxu0
      %3722 = vmatprep.mubr.bf16.mxu0 0
      %3723 = vmatmul.mubr.bf16.gmra.mrb[0].mxu0 %v3595
      %v3724 = vpop.f32.mrb[0].mxu0
      %v3725 = vadd.f32 %v3560, %v3724
      %v3726 = vpop.f32.mrb[0].mxu0
      %v3727 = vpop.f32.mrb[0].mxu0
      %v3728 = vadd.f32 %v3560, %v3727
      %v3729 = vpop.f32.mrb[0].mxu0
      %3730 = vmatprep.mubr.bf16.mxu0 0
      %3731 = vmatmul.mubr.bf16.gmra.mrb[0].mxu0 %v3598
      %v3732 = vpop.f32.mrb[0].mxu0
      %v3733 = vadd.f32 %v3560, %v3732
      %v3734 = vpop.f32.mrb[0].mxu0
      %v3735 = vpop.f32.mrb[0].mxu0
      %v3736 = vadd.f32 %v3560, %v3735
      %v3737 = vpop.f32.mrb[0].mxu0
      %3738 = vmatprep.mubr.bf16.mxu0 0
      %3739 = vmatmul.mubr.bf16.gmra.mrb[0].mxu0 %v3601
      %v3740 = vpop.f32.mrb[0].mxu0
      %v3741 = vadd.f32 %v3560, %v3740
      %v3742 = vpop.f32.mrb[0].mxu0
      %v3743 = vpop.f32.mrb[0].mxu0
      %v3744 = vadd.f32 %v3560, %v3743
      %v3745 = vpop.f32.mrb[0].mxu0
      %3746 = vmatprep.mubr.bf16.mxu0 0
      %3747 = vmatmul.mubr.bf16.gmra.mrb[0].mxu0 %v3604
      %v3748 = vpop.f32.mrb[0].mxu0
      %v3749 = vadd.f32 %v3560, %v3748
      %v3750 = vpop.f32.mrb[0].mxu0
      %v3751 = vpop.f32.mrb[0].mxu0
      %v3752 = vadd.f32 %v3560, %v3751
      %v3753 = vpop.f32.mrb[0].mxu0
      %3754 = vmatprep.mubr.bf16.mxu0 0
      %3755 = vmatmul.mubr.bf16.gmra.mrb[0].mxu0 %v3607
      %v3756 = vpop.f32.mrb[0].mxu0
      %v3757 = vadd.f32 %v3560, %v3756
      %v3758 = vpop.f32.mrb[0].mxu0
      %v3759 = vpop.f32.mrb[0].mxu0
      %v3760 = vadd.f32 %v3560, %v3759
      %v3761 = vpop.f32.mrb[0].mxu0
      %3762 = vmatprep.mubr.bf16.mxu0 0
      %3763 = vmatmul.mubr.bf16.gmra.mrb[0].mxu0 %v3610
      %v3764 = vpop.f32.mrb[0].mxu0
      %v3765 = vadd.f32 %v3560, %v3764
      %v3766 = vpop.f32.mrb[0].mxu0
      %v3767 = vpop.f32.mrb[0].mxu0
      %v3768 = vadd.f32 %v3560, %v3767
      %v3769 = vpop.f32.mrb[0].mxu0
      %3770 = vmatprep.mubr.bf16.mxu0 0
      %3771 = vmatmul.mubr.bf16.gmra.mrb[0].mxu0 %v3613
      %v3772 = vpop.f32.mrb[0].mxu0
      %v3773 = vadd.f32 %v3560, %v3772
      %v3774 = vpop.f32.mrb[0].mxu0
      %v3775 = vpop.f32.mrb[0].mxu0
      %v3776 = vadd.f32 %v3560, %v3775
      %v3777 = vpop.f32.mrb[0].mxu0
      %3778 = vdwg.mxu0
      %v3779 = vtanh.pop %v3653
      %v3780 = vtanh.pop %v3656
      %v3781 = vtanh.pop %v3661
      %v3782 = vtanh.pop %v3664
      %v3783 = vtanh.pop %v3669
      %v3784 = vtanh.pop %v3672
      %v3785 = vtanh.pop %v3677
      %v3786 = vtanh.pop %v3680
      %v3787 = vtanh.pop %v3685
      %v3788 = vtanh.pop %v3688
      %v3789 = vtanh.pop %v3693
      %v3790 = vtanh.pop %v3696
      %v3791 = vtanh.pop %v3701
      %v3792 = vtanh.pop %v3704
      %v3793 = vtanh.pop %v3709
      %v3794 = vtanh.pop %v3712
      %v3795 = vtanh.pop %v3717
      %v3796 = vtanh.pop %v3720
      %v3797 = vtanh.pop %v3725
      %v3798 = vtanh.pop %v3728
      %v3799 = vtanh.pop %v3733
      %v3800 = vtanh.pop %v3736
      %v3801 = vtanh.pop %v3741
      %v3802 = vtanh.pop %v3744
      %v3803 = vtanh.pop %v3749
      %v3804 = vtanh.pop %v3752
      %v3805 = vtanh.pop %v3757
      %v3806 = vtanh.pop %v3760
      %v3807 = vtanh.pop %v3765
      %v3808 = vtanh.pop %v3768
      %v3809 = vtanh.pop %v3773
      %v3810 = vtanh.pop %v3776
      %v3811 = vld [vmem:[%s13] sm:$0xf]
      %v3812 = vld [vmem:[%s13 + $0x4] sm:$0xf]
      %v3813 = vld [vmem:[%s13 + $0x8] sm:$0xf]
      %v3814 = vld [vmem:[%s13 + $0xc] sm:$0xf]
      %v3815 = vld [vmem:[%s13 + $0x10] sm:$0xf]
      %v3816 = vld [vmem:[%s13 + $0x14] sm:$0xf]
      %v3817 = vld [vmem:[%s13 + $0x18] sm:$0xf]
      %v3818 = vld [vmem:[%s13 + $0x1c] sm:$0xf]
      %v3819 = vpack.c.bf16 %v3780, %v3779
      %v3820 = vpack.c.bf16 %v3782, %v3781
      %v3821 = vpack.c.bf16 %v3784, %v3783
      %v3822 = vpack.c.bf16 %v3786, %v3785
      %v3823 = vpack.c.bf16 %v3788, %v3787
      %v3824 = vpack.c.bf16 %v3790, %v3789
      %v3825 = vpack.c.bf16 %v3792, %v3791
      %v3826 = vpack.c.bf16 %v3794, %v3793
      %v3827 = vpack.c.bf16 %v3796, %v3795
      %v3828 = vpack.c.bf16 %v3798, %v3797
      %v3829 = vpack.c.bf16 %v3800, %v3799
      %v3830 = vpack.c.bf16 %v3802, %v3801
      %v3831 = vpack.c.bf16 %v3804, %v3803
      %v3832 = vpack.c.bf16 %v3806, %v3805
      %v3833 = vpack.c.bf16 %v3808, %v3807
      %v3834 = vpack.c.bf16 %v3810, %v3809
      %v3835 = vld [vmem:[%s14] sm:$0x1]
      %v3837 = vlaneseq
      %v3838 = vshrl.u32 %v3837, 7
      %v3839 = vsub.s32 0, %v3838
      %v3840 = vrot.slane %v3835, %v3839
      %v3850 = vunpack.c.l.b16 %v3811
      %v3851 = vunpack.c.l.b16 %v3812
      %v3852 = vunpack.c.l.b16 %v3813
      %v3853 = vunpack.c.l.b16 %v3814
      %v3854 = vunpack.c.l.b16 %v3815
      %v3855 = vunpack.c.l.b16 %v3816
      %v3856 = vunpack.c.l.b16 %v3817
      %v3857 = vunpack.c.l.b16 %v3818
      %v3858 = vpack.c.b16 %v3851, %v3850
      %v3859 = vpack.c.b16 %v3853, %v3852
      %v3860 = vpack.c.b16 %v3855, %v3854
      %v3861 = vpack.c.b16 %v3857, %v3856
      %v3867 = vsel %vm2746, %v3819, 0
      %v3870 = vsel %vm2746, %v3820, 0
      %v3873 = vsel %vm2746, %v3821, 0
      %v3876 = vsel %vm2746, %v3822, 0
      %v3879 = vsel %vm2746, %v3823, 0
      %v3882 = vsel %vm2746, %v3824, 0
      %v3885 = vsel %vm2746, %v3825, 0
      %v3888 = vsel %vm2746, %v3826, 0
      %v3891 = vsel %vm2746, %v3827, 0
      %v3894 = vsel %vm2746, %v3828, 0
      %v3897 = vsel %vm2746, %v3829, 0
      %v3900 = vsel %vm2746, %v3830, 0
      %v3903 = vsel %vm2746, %v3831, 0
      %v3906 = vsel %vm2746, %v3832, 0
      %v3909 = vsel %vm2746, %v3833, 0
      %v3912 = vsel %vm2746, %v3834, 0
      %3914 = vmatprep.subr.bf16.mxu0 0
      %3915 = vmatpush1.bf16.msra.mxu0 %v3858
      %3916 = vmatprep.subr.bf16.mxu0 0
      %3917 = vmatpush1.bf16.msra.mxu0 %v3859
      %3918 = vmatprep.subr.bf16.mxu0 0
      %3919 = vmatpush1.bf16.msra.mxu0 %v3860
      %3920 = vmatprep.subr.bf16.mxu0 0
      %3921 = vmatpush1.bf16.msra.mxu0 %v3861
      %3922 = vmatprep.subr.bf16.mxu0 0
      %3923 = vmatpush1.bf16.msra.mxu0 0
      %3924 = vmatprep.subr.bf16.mxu0 0
      %3925 = vmatpush1.bf16.msra.mxu0 0
      %3926 = vmatprep.subr.bf16.mxu0 0
      %3927 = vmatpush1.bf16.msra.mxu0 0
      %3928 = vmatprep.subr.bf16.mxu0 0
      %3929 = vmatpush1.bf16.msra.mxu0 0
      %3930 = vmatprep.subr.bf16.mxu0 0
      %3931 = vmatpush1.bf16.msra.mxu0 0
      %3932 = vmatprep.subr.bf16.mxu0 0
      %3933 = vmatpush1.bf16.msra.mxu0 0
      %3934 = vmatprep.subr.bf16.mxu0 0
      %3935 = vmatpush1.bf16.msra.mxu0 0
      %3936 = vmatprep.subr.bf16.mxu0 0
      %3937 = vmatpush1.bf16.msra.mxu0 0
      %3938 = vmatprep.subr.bf16.mxu0 0
      %3939 = vmatpush1.bf16.msra.mxu0 0
      %3940 = vmatprep.subr.bf16.mxu0 0
      %3941 = vmatpush1.bf16.msra.mxu0 0
      %3942 = vmatprep.subr.bf16.mxu0 0
      %3943 = vmatpush1.bf16.msra.mxu0 0
      %3944 = vmatprep.subr.bf16.mxu0 0
      %3945 = vmatpush1.bf16.msra.mxu0 0
      %3946 = vmatprep.mubr.bf16.mxu0 0
      %3947 = vmatmul.mubr.bf16.gmra.mrb[0].mxu0 %v3867
      %v3948 = vpop.f32.mrb[0].mxu0
      %v3949 = vadd.f32 %v3840, %v3948
      %v3950 = vpop.f32.mrb[0].mxu0
      %v3951 = vpop.f32.mrb[0].mxu0
      %v3952 = vadd.f32 %v3840, %v3951
      %v3953 = vpop.f32.mrb[0].mxu0
      %3954 = vmatprep.mubr.bf16.mxu0 0
      %3955 = vmatmul.mubr.bf16.gmra.mrb[0].mxu0 %v3870
      %v3956 = vpop.f32.mrb[0].mxu0
      %v3957 = vadd.f32 %v3840, %v3956
      %v3958 = vpop.f32.mrb[0].mxu0
      %v3959 = vpop.f32.mrb[0].mxu0
      %v3960 = vadd.f32 %v3840, %v3959
      %v3961 = vpop.f32.mrb[0].mxu0
      %3962 = vmatprep.mubr.bf16.mxu0 0
      %3963 = vmatmul.mubr.bf16.gmra.mrb[0].mxu0 %v3873
      %v3964 = vpop.f32.mrb[0].mxu0
      %v3965 = vadd.f32 %v3840, %v3964
      %v3966 = vpop.f32.mrb[0].mxu0
      %v3967 = vpop.f32.mrb[0].mxu0
      %v3968 = vadd.f32 %v3840, %v3967
      %v3969 = vpop.f32.mrb[0].mxu0
      %3970 = vmatprep.mubr.bf16.mxu0 0
      %3971 = vmatmul.mubr.bf16.gmra.mrb[0].mxu0 %v3876
      %v3972 = vpop.f32.mrb[0].mxu0
      %v3973 = vadd.f32 %v3840, %v3972
      %v3974 = vpop.f32.mrb[0].mxu0
      %v3975 = vpop.f32.mrb[0].mxu0
      %v3976 = vadd.f32 %v3840, %v3975
      %v3977 = vpop.f32.mrb[0].mxu0
      %3978 = vmatprep.mubr.bf16.mxu0 0
      %3979 = vmatmul.mubr.bf16.gmra.mrb[0].mxu0 %v3879
      %v3980 = vpop.f32.mrb[0].mxu0
      %v3981 = vadd.f32 %v3840, %v3980
      %v3982 = vpop.f32.mrb[0].mxu0
      %v3983 = vpop.f32.mrb[0].mxu0
      %v3984 = vadd.f32 %v3840, %v3983
      %v3985 = vpop.f32.mrb[0].mxu0
      %3986 = vmatprep.mubr.bf16.mxu0 0
      %3987 = vmatmul.mubr.bf16.gmra.mrb[0].mxu0 %v3882
      %v3988 = vpop.f32.mrb[0].mxu0
      %v3989 = vadd.f32 %v3840, %v3988
      %v3990 = vpop.f32.mrb[0].mxu0
      %v3991 = vpop.f32.mrb[0].mxu0
      %v3992 = vadd.f32 %v3840, %v3991
      %v3993 = vpop.f32.mrb[0].mxu0
      %3994 = vmatprep.mubr.bf16.mxu0 0
      %3995 = vmatmul.mubr.bf16.gmra.mrb[0].mxu0 %v3885
      %v3996 = vpop.f32.mrb[0].mxu0
      %v3997 = vadd.f32 %v3840, %v3996
      %v3998 = vpop.f32.mrb[0].mxu0
      %v3999 = vpop.f32.mrb[0].mxu0
      %v4000 = vadd.f32 %v3840, %v3999
      %v4001 = vpop.f32.mrb[0].mxu0
      %4002 = vmatprep.mubr.bf16.mxu0 0
      %4003 = vmatmul.mubr.bf16.gmra.mrb[0].mxu0 %v3888
      %v4004 = vpop.f32.mrb[0].mxu0
      %v4005 = vadd.f32 %v3840, %v4004
      %v4006 = vpop.f32.mrb[0].mxu0
      %v4007 = vpop.f32.mrb[0].mxu0
      %v4008 = vadd.f32 %v3840, %v4007
      %v4009 = vpop.f32.mrb[0].mxu0
      %4010 = vmatprep.mubr.bf16.mxu0 0
      %4011 = vmatmul.mubr.bf16.gmra.mrb[0].mxu0 %v3891
      %v4012 = vpop.f32.mrb[0].mxu0
      %v4013 = vadd.f32 %v3840, %v4012
      %v4014 = vpop.f32.mrb[0].mxu0
      %v4015 = vpop.f32.mrb[0].mxu0
      %v4016 = vadd.f32 %v3840, %v4015
      %v4017 = vpop.f32.mrb[0].mxu0
      %4018 = vmatprep.mubr.bf16.mxu0 0
      %4019 = vmatmul.mubr.bf16.gmra.mrb[0].mxu0 %v3894
      %v4020 = vpop.f32.mrb[0].mxu0
      %v4021 = vadd.f32 %v3840, %v4020
      %v4022 = vpop.f32.mrb[0].mxu0
      %v4023 = vpop.f32.mrb[0].mxu0
      %v4024 = vadd.f32 %v3840, %v4023
      %v4025 = vpop.f32.mrb[0].mxu0
      %4026 = vmatprep.mubr.bf16.mxu0 0
      %4027 = vmatmul.mubr.bf16.gmra.mrb[0].mxu0 %v3897
      %v4028 = vpop.f32.mrb[0].mxu0
      %v4029 = vadd.f32 %v3840, %v4028
      %v4030 = vpop.f32.mrb[0].mxu0
      %v4031 = vpop.f32.mrb[0].mxu0
      %v4032 = vadd.f32 %v3840, %v4031
      %v4033 = vpop.f32.mrb[0].mxu0
      %4034 = vmatprep.mubr.bf16.mxu0 0
      %4035 = vmatmul.mubr.bf16.gmra.mrb[0].mxu0 %v3900
      %v4036 = vpop.f32.mrb[0].mxu0
      %v4037 = vadd.f32 %v3840, %v4036
      %v4038 = vpop.f32.mrb[0].mxu0
      %v4039 = vpop.f32.mrb[0].mxu0
      %v4040 = vadd.f32 %v3840, %v4039
      %v4041 = vpop.f32.mrb[0].mxu0
      %4042 = vmatprep.mubr.bf16.mxu0 0
      %4043 = vmatmul.mubr.bf16.gmra.mrb[0].mxu0 %v3903
      %v4044 = vpop.f32.mrb[0].mxu0
      %v4045 = vadd.f32 %v3840, %v4044
      %v4046 = vpop.f32.mrb[0].mxu0
      %v4047 = vpop.f32.mrb[0].mxu0
      %v4048 = vadd.f32 %v3840, %v4047
      %v4049 = vpop.f32.mrb[0].mxu0
      %4050 = vmatprep.mubr.bf16.mxu0 0
      %4051 = vmatmul.mubr.bf16.gmra.mrb[0].mxu0 %v3906
      %v4052 = vpop.f32.mrb[0].mxu0
      %v4053 = vadd.f32 %v3840, %v4052
      %v4054 = vpop.f32.mrb[0].mxu0
      %v4055 = vpop.f32.mrb[0].mxu0
      %v4056 = vadd.f32 %v3840, %v4055
      %v4057 = vpop.f32.mrb[0].mxu0
      %4058 = vmatprep.mubr.bf16.mxu0 0
      %4059 = vmatmul.mubr.bf16.gmra.mrb[0].mxu0 %v3909
      %v4060 = vpop.f32.mrb[0].mxu0
      %v4061 = vadd.f32 %v3840, %v4060
      %v4062 = vpop.f32.mrb[0].mxu0
      %v4063 = vpop.f32.mrb[0].mxu0
      %v4064 = vadd.f32 %v3840, %v4063
      %v4065 = vpop.f32.mrb[0].mxu0
      %4066 = vmatprep.mubr.bf16.mxu0 0
      %4067 = vmatmul.mubr.bf16.gmra.mrb[0].mxu0 %v3912
      %v4068 = vpop.f32.mrb[0].mxu0
      %v4069 = vadd.f32 %v3840, %v4068
      %v4070 = vpop.f32.mrb[0].mxu0
      %v4071 = vpop.f32.mrb[0].mxu0
      %v4072 = vadd.f32 %v3840, %v4071
      %v4073 = vpop.f32.mrb[0].mxu0
      %4074 = vdwg.mxu0
      %v4075 = vtanh.pop %v3949
      %v4076 = vtanh.pop %v3952
      %v4077 = vtanh.pop %v3957
      %v4078 = vtanh.pop %v3960
      %v4079 = vtanh.pop %v3965
      %v4080 = vtanh.pop %v3968
      %v4081 = vtanh.pop %v3973
      %v4082 = vtanh.pop %v3976
      %v4083 = vtanh.pop %v3981
      %v4084 = vtanh.pop %v3984
      %v4085 = vtanh.pop %v3989
      %v4086 = vtanh.pop %v3992
      %v4087 = vtanh.pop %v3997
      %v4088 = vtanh.pop %v4000
      %v4089 = vtanh.pop %v4005
      %v4090 = vtanh.pop %v4008
      %v4091 = vtanh.pop %v4013
      %v4092 = vtanh.pop %v4016
      %v4093 = vtanh.pop %v4021
      %v4094 = vtanh.pop %v4024
      %v4095 = vtanh.pop %v4029
      %v4096 = vtanh.pop %v4032
      %v4097 = vtanh.pop %v4037
      %v4098 = vtanh.pop %v4040
      %v4099 = vtanh.pop %v4045
      %v4100 = vtanh.pop %v4048
      %v4101 = vtanh.pop %v4053
      %v4102 = vtanh.pop %v4056
      %v4103 = vtanh.pop %v4061
      %v4104 = vtanh.pop %v4064
      %v4105 = vtanh.pop %v4069
      %v4106 = vtanh.pop %v4072
      %v4107 = vld [vmem:[%s15] sm:$0xff]
      %v4108 = vld [vmem:[%s15 + $0x8] sm:$0xff]
      %v4109 = vld [vmem:[%s15 + $0x10] sm:$0xff]
      %v4110 = vld [vmem:[%s15 + $0x18] sm:$0xf]
      %v4111 = vld [vmem:[%s15 + $0x1c] sm:$0xff]
      %v4112 = vld [vmem:[%s15 + $0x24] sm:$0xff]
      %v4113 = vld [vmem:[%s15 + $0x2c] sm:$0xff]
      %v4114 = vld [vmem:[%s15 + $0x34] sm:$0xf]
      %v4115 = vld [vmem:[%s15 + $0x38] sm:$0xff]
      %v4116 = vld [vmem:[%s15 + $0x40] sm:$0xff]
      %v4117 = vld [vmem:[%s15 + $0x48] sm:$0xff]
      %v4118 = vld [vmem:[%s15 + $0x50] sm:$0xf]
      %v4119 = vld [vmem:[%s15 + $0x54] sm:$0xff]
      %v4120 = vld [vmem:[%s15 + $0x5c] sm:$0xff]
      %v4121 = vld [vmem:[%s15 + $0x64] sm:$0xff]
      %v4122 = vld [vmem:[%s15 + $0x6c] sm:$0xf]
      %v4123 = vld [vmem:[%s15 + $0x70] sm:$0xff]
      %v4124 = vld [vmem:[%s15 + $0x78] sm:$0xff]
      %v4125 = vld [vmem:[%s15 + $0x80] sm:$0xff]
      %v4126 = vld [vmem:[%s15 + $0x88] sm:$0xf]
      %v4127 = vld [vmem:[%s15 + $0x8c] sm:$0xff]
      %v4128 = vld [vmem:[%s15 + $0x94] sm:$0xff]
      %v4129 = vld [vmem:[%s15 + $0x9c] sm:$0xff]
      %v4130 = vld [vmem:[%s15 + $0xa4] sm:$0xf]
      %v4131 = vld [vmem:[%s15 + $0xa8] sm:$0xff]
      %v4132 = vld [vmem:[%s15 + $0xb0] sm:$0xff]
      %v4133 = vld [vmem:[%s15 + $0xb8] sm:$0xff]
      %v4134 = vld [vmem:[%s15 + $0xc0] sm:$0xf]
      %v4135 = vld [vmem:[%s15 + $0xc4] sm:$0xff]
      %v4136 = vld [vmem:[%s15 + $0xcc] sm:$0xff]
      %v4137 = vld [vmem:[%s15 + $0xd4] sm:$0xff]
      %v4138 = vld [vmem:[%s15 + $0xdc] sm:$0xf]
      %v4139 = vld [vmem:[%s15 + $0xe0] sm:$0xff]
      %v4140 = vld [vmem:[%s15 + $0xe8] sm:$0xff]
      %v4141 = vld [vmem:[%s15 + $0xf0] sm:$0xff]
      %v4142 = vld [vmem:[%s15 + $0xf8] sm:$0xf]
      %v4143 = vld [vmem:[%s15 + $0xfc] sm:$0xff]
      %v4144 = vld [vmem:[%s15 + $0x104] sm:$0xff]
      %v4145 = vld [vmem:[%s15 + $0x10c] sm:$0xff]
      %v4146 = vld [vmem:[%s15 + $0x114] sm:$0xf]
      %v4147 = vld [vmem:[%s15 + $0x118] sm:$0xff]
      %v4148 = vld [vmem:[%s15 + $0x120] sm:$0xff]
      %v4149 = vld [vmem:[%s15 + $0x128] sm:$0xff]
      %v4150 = vld [vmem:[%s15 + $0x130] sm:$0xf]
      %v4151 = vld [vmem:[%s15 + $0x134] sm:$0xff]
      %v4152 = vld [vmem:[%s15 + $0x13c] sm:$0xff]
      %v4153 = vld [vmem:[%s15 + $0x144] sm:$0xff]
      %v4154 = vld [vmem:[%s15 + $0x14c] sm:$0xf]
      %v4155 = vld [vmem:[%s15 + $0x150] sm:$0xff]
      %v4156 = vld [vmem:[%s15 + $0x158] sm:$0xff]
      %v4157 = vld [vmem:[%s15 + $0x160] sm:$0xff]
      %v4158 = vld [vmem:[%s15 + $0x168] sm:$0xf]
      %v4159 = vld [vmem:[%s15 + $0x16c] sm:$0xff]
      %v4160 = vld [vmem:[%s15 + $0x174] sm:$0xff]
      %v4161 = vld [vmem:[%s15 + $0x17c] sm:$0xff]
      %v4162 = vld [vmem:[%s15 + $0x184] sm:$0xf]
      %v4163 = vld [vmem:[%s15 + $0x188] sm:$0xff]
      %v4164 = vld [vmem:[%s15 + $0x190] sm:$0xff]
      %v4165 = vld [vmem:[%s15 + $0x198] sm:$0xff]
      %v4166 = vld [vmem:[%s15 + $0x1a0] sm:$0xf]
      %v4167 = vld [vmem:[%s15 + $0x1a4] sm:$0xff]
      %v4168 = vld [vmem:[%s15 + $0x1ac] sm:$0xff]
      %v4169 = vld [vmem:[%s15 + $0x1b4] sm:$0xff]
      %v4170 = vld [vmem:[%s15 + $0x1bc] sm:$0xf]
      %v4171 = vpack.c.bf16 %v4076, %v4075
      %v4172 = vpack.c.bf16 %v4078, %v4077
      %v4173 = vpack.c.bf16 %v4080, %v4079
      %v4174 = vpack.c.bf16 %v4082, %v4081
      %v4175 = vpack.c.bf16 %v4084, %v4083
      %v4176 = vpack.c.bf16 %v4086, %v4085
      %v4177 = vpack.c.bf16 %v4088, %v4087
      %v4178 = vpack.c.bf16 %v4090, %v4089
      %v4179 = vpack.c.bf16 %v4092, %v4091
      %v4180 = vpack.c.bf16 %v4094, %v4093
      %v4181 = vpack.c.bf16 %v4096, %v4095
      %v4182 = vpack.c.bf16 %v4098, %v4097
      %v4183 = vpack.c.bf16 %v4100, %v4099
      %v4184 = vpack.c.bf16 %v4102, %v4101
      %v4185 = vpack.c.bf16 %v4104, %v4103
      %v4186 = vpack.c.bf16 %v4106, %v4105
      %v4187 = vld [vmem:[%s16] sm:$0x7f]
      %v4189 = vlaneseq
      %v4190 = vshrl.u32 %v4189, 7
      %v4191 = vsub.s32 0, %v4190
      %v4192 = vrot.slane %v4187, %v4191
      %v4193 = vlaneseq
      %v4194 = vshrl.u32 %v4193, 7
      %v4195 = vsub.s32 1, %v4194
      %v4196 = vrot.slane %v4187, %v4195
      %v4197 = vlaneseq
      %v4198 = vshrl.u32 %v4197, 7
      %v4199 = vsub.s32 2, %v4198
      %v4200 = vrot.slane %v4187, %v4199
      %v4201 = vlaneseq
      %v4202 = vshrl.u32 %v4201, 7
      %v4203 = vsub.s32 3, %v4202
      %v4204 = vrot.slane %v4187, %v4203
      %v4205 = vlaneseq
      %v4206 = vshrl.u32 %v4205, 7
      %v4207 = vsub.s32 4, %v4206
      %v4208 = vrot.slane %v4187, %v4207
      %v4209 = vlaneseq
      %v4210 = vshrl.u32 %v4209, 7
      %v4211 = vsub.s32 5, %v4210
      %v4212 = vrot.slane %v4187, %v4211
      %v4213 = vlaneseq
      %v4214 = vshrl.u32 %v4213, 7
      %v4215 = vsub.s32 6, %v4214
      %v4216 = vrot.slane %v4187, %v4215
      %v4288 = vunpack.c.l.b16 %v4107
      %v4289 = vunpack.c.h.b16 %v4107
      %v4290 = vunpack.c.l.b16 %v4108
      %v4291 = vunpack.c.h.b16 %v4108
      %v4292 = vunpack.c.l.b16 %v4109
      %v4293 = vunpack.c.h.b16 %v4109
      %v4294 = vunpack.c.l.b16 %v4110
      %v4295 = vunpack.c.l.b16 %v4111
      %v4296 = vunpack.c.h.b16 %v4111
      %v4297 = vunpack.c.l.b16 %v4112
      %v4298 = vunpack.c.h.b16 %v4112
      %v4299 = vunpack.c.l.b16 %v4113
      %v4300 = vunpack.c.h.b16 %v4113
      %v4301 = vunpack.c.l.b16 %v4114
      %v4302 = vunpack.c.l.b16 %v4115
      %v4303 = vunpack.c.h.b16 %v4115
      %v4304 = vunpack.c.l.b16 %v4116
      %v4305 = vunpack.c.h.b16 %v4116
      %v4306 = vunpack.c.l.b16 %v4117
      %v4307 = vunpack.c.h.b16 %v4117
      %v4308 = vunpack.c.l.b16 %v4118
      %v4309 = vunpack.c.l.b16 %v4119
      %v4310 = vunpack.c.h.b16 %v4119
      %v4311 = vunpack.c.l.b16 %v4120
      %v4312 = vunpack.c.h.b16 %v4120
      %v4313 = vunpack.c.l.b16 %v4121
      %v4314 = vunpack.c.h.b16 %v4121
      %v4315 = vunpack.c.l.b16 %v4122
      %v4316 = vunpack.c.l.b16 %v4123
      %v4317 = vunpack.c.h.b16 %v4123
      %v4318 = vunpack.c.l.b16 %v4124
      %v4319 = vunpack.c.h.b16 %v4124
      %v4320 = vunpack.c.l.b16 %v4125
      %v4321 = vunpack.c.h.b16 %v4125
      %v4322 = vunpack.c.l.b16 %v4126
      %v4323 = vunpack.c.l.b16 %v4127
      %v4324 = vunpack.c.h.b16 %v4127
      %v4325 = vunpack.c.l.b16 %v4128
      %v4326 = vunpack.c.h.b16 %v4128
      %v4327 = vunpack.c.l.b16 %v4129
      %v4328 = vunpack.c.h.b16 %v4129
      %v4329 = vunpack.c.l.b16 %v4130
      %v4330 = vunpack.c.l.b16 %v4131
      %v4331 = vunpack.c.h.b16 %v4131
      %v4332 = vunpack.c.l.b16 %v4132
      %v4333 = vunpack.c.h.b16 %v4132
      %v4334 = vunpack.c.l.b16 %v4133
      %v4335 = vunpack.c.h.b16 %v4133
      %v4336 = vunpack.c.l.b16 %v4134
      %v4337 = vunpack.c.l.b16 %v4135
      %v4338 = vunpack.c.h.b16 %v4135
      %v4339 = vunpack.c.l.b16 %v4136
      %v4340 = vunpack.c.h.b16 %v4136
      %v4341 = vunpack.c.l.b16 %v4137
      %v4342 = vunpack.c.h.b16 %v4137
      %v4343 = vunpack.c.l.b16 %v4138
      %v4344 = vunpack.c.l.b16 %v4139
      %v4345 = vunpack.c.h.b16 %v4139
      %v4346 = vunpack.c.l.b16 %v4140
      %v4347 = vunpack.c.h.b16 %v4140
      %v4348 = vunpack.c.l.b16 %v4141
      %v4349 = vunpack.c.h.b16 %v4141
      %v4350 = vunpack.c.l.b16 %v4142
      %v4351 = vunpack.c.l.b16 %v4143
      %v4352 = vunpack.c.h.b16 %v4143
      %v4353 = vunpack.c.l.b16 %v4144
      %v4354 = vunpack.c.h.b16 %v4144
      %v4355 = vunpack.c.l.b16 %v4145
      %v4356 = vunpack.c.h.b16 %v4145
      %v4357 = vunpack.c.l.b16 %v4146
      %v4358 = vunpack.c.l.b16 %v4147
      %v4359 = vunpack.c.h.b16 %v4147
      %v4360 = vunpack.c.l.b16 %v4148
      %v4361 = vunpack.c.h.b16 %v4148
      %v4362 = vunpack.c.l.b16 %v4149
      %v4363 = vunpack.c.h.b16 %v4149
      %v4364 = vunpack.c.l.b16 %v4150
      %v4365 = vunpack.c.l.b16 %v4151
      %v4366 = vunpack.c.h.b16 %v4151
      %v4367 = vunpack.c.l.b16 %v4152
      %v4368 = vunpack.c.h.b16 %v4152
      %v4369 = vunpack.c.l.b16 %v4153
      %v4370 = vunpack.c.h.b16 %v4153
      %v4371 = vunpack.c.l.b16 %v4154
      %v4372 = vunpack.c.l.b16 %v4155
      %v4373 = vunpack.c.h.b16 %v4155
      %v4374 = vunpack.c.l.b16 %v4156
      %v4375 = vunpack.c.h.b16 %v4156
      %v4376 = vunpack.c.l.b16 %v4157
      %v4377 = vunpack.c.h.b16 %v4157
      %v4378 = vunpack.c.l.b16 %v4158
      %v4379 = vunpack.c.l.b16 %v4159
      %v4380 = vunpack.c.h.b16 %v4159
      %v4381 = vunpack.c.l.b16 %v4160
      %v4382 = vunpack.c.h.b16 %v4160
      %v4383 = vunpack.c.l.b16 %v4161
      %v4384 = vunpack.c.h.b16 %v4161
      %v4385 = vunpack.c.l.b16 %v4162
      %v4386 = vunpack.c.l.b16 %v4163
      %v4387 = vunpack.c.h.b16 %v4163
      %v4388 = vunpack.c.l.b16 %v4164
      %v4389 = vunpack.c.h.b16 %v4164
      %v4390 = vunpack.c.l.b16 %v4165
      %v4391 = vunpack.c.h.b16 %v4165
      %v4392 = vunpack.c.l.b16 %v4166
      %v4393 = vunpack.c.l.b16 %v4167
      %v4394 = vunpack.c.h.b16 %v4167
      %v4395 = vunpack.c.l.b16 %v4168
      %v4396 = vunpack.c.h.b16 %v4168
      %v4397 = vunpack.c.l.b16 %v4169
      %v4398 = vunpack.c.h.b16 %v4169
      %v4399 = vunpack.c.l.b16 %v4170
      %v4400 = vpack.c.b16 %v4295, %v4288
      %v4401 = vpack.c.b16 %v4296, %v4289
      %v4402 = vpack.c.b16 %v4297, %v4290
      %v4403 = vpack.c.b16 %v4298, %v4291
      %v4404 = vpack.c.b16 %v4299, %v4292
      %v4405 = vpack.c.b16 %v4300, %v4293
      %v4406 = vpack.c.b16 %v4301, %v4294
      %v4407 = vpack.c.b16 %v4309, %v4302
      %v4408 = vpack.c.b16 %v4310, %v4303
      %v4409 = vpack.c.b16 %v4311, %v4304
      %v4410 = vpack.c.b16 %v4312, %v4305
      %v4411 = vpack.c.b16 %v4313, %v4306
      %v4412 = vpack.c.b16 %v4314, %v4307
      %v4413 = vpack.c.b16 %v4315, %v4308
      %v4414 = vpack.c.b16 %v4323, %v4316
      %v4415 = vpack.c.b16 %v4324, %v4317
      %v4416 = vpack.c.b16 %v4325, %v4318
      %v4417 = vpack.c.b16 %v4326, %v4319
      %v4418 = vpack.c.b16 %v4327, %v4320
      %v4419 = vpack.c.b16 %v4328, %v4321
      %v4420 = vpack.c.b16 %v4329, %v4322
      %v4421 = vpack.c.b16 %v4337, %v4330
      %v4422 = vpack.c.b16 %v4338, %v4331
      %v4423 = vpack.c.b16 %v4339, %v4332
      %v4424 = vpack.c.b16 %v4340, %v4333
      %v4425 = vpack.c.b16 %v4341, %v4334
      %v4426 = vpack.c.b16 %v4342, %v4335
      %v4427 = vpack.c.b16 %v4343, %v4336
      %v4428 = vpack.c.b16 %v4351, %v4344
      %v4429 = vpack.c.b16 %v4352, %v4345
      %v4430 = vpack.c.b16 %v4353, %v4346
      %v4431 = vpack.c.b16 %v4354, %v4347
      %v4432 = vpack.c.b16 %v4355, %v4348
      %v4433 = vpack.c.b16 %v4356, %v4349
      %v4434 = vpack.c.b16 %v4357, %v4350
      %v4435 = vpack.c.b16 %v4365, %v4358
      %v4436 = vpack.c.b16 %v4366, %v4359
      %v4437 = vpack.c.b16 %v4367, %v4360
      %v4438 = vpack.c.b16 %v4368, %v4361
      %v4439 = vpack.c.b16 %v4369, %v4362
      %v4440 = vpack.c.b16 %v4370, %v4363
      %v4441 = vpack.c.b16 %v4371, %v4364
      %v4442 = vpack.c.b16 %v4379, %v4372
      %v4443 = vpack.c.b16 %v4380, %v4373
      %v4444 = vpack.c.b16 %v4381, %v4374
      %v4445 = vpack.c.b16 %v4382, %v4375
      %v4446 = vpack.c.b16 %v4383, %v4376
      %v4447 = vpack.c.b16 %v4384, %v4377
      %v4448 = vpack.c.b16 %v4385, %v4378
      %v4449 = vpack.c.b16 %v4393, %v4386
      %v4450 = vpack.c.b16 %v4394, %v4387
      %v4451 = vpack.c.b16 %v4395, %v4388
      %v4452 = vpack.c.b16 %v4396, %v4389
      %v4453 = vpack.c.b16 %v4397, %v4390
      %v4454 = vpack.c.b16 %v4398, %v4391
      %v4455 = vpack.c.b16 %v4399, %v4392
      %4512 = vmatprep.subr.bf16.mxu0 %v4401
      %4513 = vmatpush1.bf16.msra.mxu0 %v4400
      %4514 = vmatprep.subr.bf16.mxu0 %v4408
      %4515 = vmatpush1.bf16.msra.mxu0 %v4407
      %4516 = vmatprep.subr.bf16.mxu0 %v4415
      %4517 = vmatpush1.bf16.msra.mxu0 %v4414
      %4518 = vmatprep.subr.bf16.mxu0 %v4422
      %4519 = vmatpush1.bf16.msra.mxu0 %v4421
      %4520 = vmatprep.subr.bf16.mxu0 %v4429
      %4521 = vmatpush1.bf16.msra.mxu0 %v4428
      %4522 = vmatprep.subr.bf16.mxu0 %v4436
      %4523 = vmatpush1.bf16.msra.mxu0 %v4435
      %4524 = vmatprep.subr.bf16.mxu0 %v4443
      %4525 = vmatpush1.bf16.msra.mxu0 %v4442
      %4526 = vmatprep.subr.bf16.mxu0 %v4450
      %4527 = vmatpush1.bf16.msra.mxu0 %v4449
      %4528 = vmatprep.subr.bf16.mxu0 0
      %4529 = vmatpush1.bf16.msra.mxu0 0
      %4530 = vmatprep.subr.bf16.mxu0 0
      %4531 = vmatpush1.bf16.msra.mxu0 0
      %4532 = vmatprep.subr.bf16.mxu0 0
      %4533 = vmatpush1.bf16.msra.mxu0 0
      %4534 = vmatprep.subr.bf16.mxu0 0
      %4535 = vmatpush1.bf16.msra.mxu0 0
      %4536 = vmatprep.subr.bf16.mxu0 0
      %4537 = vmatpush1.bf16.msra.mxu0 0
      %4538 = vmatprep.subr.bf16.mxu0 0
      %4539 = vmatpush1.bf16.msra.mxu0 0
      %4540 = vmatprep.subr.bf16.mxu0 0
      %4541 = vmatpush1.bf16.msra.mxu0 0
      %4542 = vmatprep.subr.bf16.mxu0 0
      %4543 = vmatpush1.bf16.msra.mxu0 0
      %4544 = vmatprep.mubr.bf16.mxu0 0
      %4545 = vmatmul.mubr.bf16.gmra.mrb[0].mxu0 %v4171
      %v4546 = vpop.f32.mrb[0].mxu0
      %v4547 = vadd.f32 %v4192, %v4546
      %v4548 = vpop.f32.mrb[0].mxu0
      %v4549 = vadd.f32 %v4196, %v4548
      %v4550 = vpop.f32.mrb[0].mxu0
      %v4551 = vadd.f32 %v4192, %v4550
      %v4552 = vpop.f32.mrb[0].mxu0
      %v4553 = vadd.f32 %v4196, %v4552
      %4554 = vmatprep.mubr.bf16.mxu0 0
      %4555 = vmatmul.mubr.bf16.gmra.mrb[0].mxu0 %v4172
      %v4556 = vpop.f32.mrb[0].mxu0
      %v4557 = vadd.f32 %v4192, %v4556
      %v4558 = vpop.f32.mrb[0].mxu0
      %v4559 = vadd.f32 %v4196, %v4558
      %v4560 = vpop.f32.mrb[0].mxu0
      %v4561 = vadd.f32 %v4192, %v4560
      %v4562 = vpop.f32.mrb[0].mxu0
      %v4563 = vadd.f32 %v4196, %v4562
      %4564 = vmatprep.mubr.bf16.mxu0 0
      %4565 = vmatmul.mubr.bf16.gmra.mrb[0].mxu0 %v4173
      %v4566 = vpop.f32.mrb[0].mxu0
      %v4567 = vadd.f32 %v4192, %v4566
      %v4568 = vpop.f32.mrb[0].mxu0
      %v4569 = vadd.f32 %v4196, %v4568
      %v4570 = vpop.f32.mrb[0].mxu0
      %v4571 = vadd.f32 %v4192, %v4570
      %v4572 = vpop.f32.mrb[0].mxu0
      %v4573 = vadd.f32 %v4196, %v4572
      %4574 = vmatprep.mubr.bf16.mxu0 0
      %4575 = vmatmul.mubr.bf16.gmra.mrb[0].mxu0 %v4174
      %v4576 = vpop.f32.mrb[0].mxu0
      %v4577 = vadd.f32 %v4192, %v4576
      %v4578 = vpop.f32.mrb[0].mxu0
      %v4579 = vadd.f32 %v4196, %v4578
      %v4580 = vpop.f32.mrb[0].mxu0
      %v4581 = vadd.f32 %v4192, %v4580
      %v4582 = vpop.f32.mrb[0].mxu0
      %v4583 = vadd.f32 %v4196, %v4582
      %4584 = vmatprep.mubr.bf16.mxu0 0
      %4585 = vmatmul.mubr.bf16.gmra.mrb[0].mxu0 %v4175
      %v4586 = vpop.f32.mrb[0].mxu0
      %v4587 = vadd.f32 %v4192, %v4586
      %v4588 = vpop.f32.mrb[0].mxu0
      %v4589 = vadd.f32 %v4196, %v4588
      %v4590 = vpop.f32.mrb[0].mxu0
      %v4591 = vadd.f32 %v4192, %v4590
      %v4592 = vpop.f32.mrb[0].mxu0
      %v4593 = vadd.f32 %v4196, %v4592
      %4594 = vmatprep.mubr.bf16.mxu0 0
      %4595 = vmatmul.mubr.bf16.gmra.mrb[0].mxu0 %v4176
      %v4596 = vpop.f32.mrb[0].mxu0
      %v4597 = vadd.f32 %v4192, %v4596
      %v4598 = vpop.f32.mrb[0].mxu0
      %v4599 = vadd.f32 %v4196, %v4598
      %v4600 = vpop.f32.mrb[0].mxu0
      %v4601 = vadd.f32 %v4192, %v4600
      %v4602 = vpop.f32.mrb[0].mxu0
      %v4603 = vadd.f32 %v4196, %v4602
      %4604 = vmatprep.mubr.bf16.mxu0 0
      %4605 = vmatmul.mubr.bf16.gmra.mrb[0].mxu0 %v4177
      %v4606 = vpop.f32.mrb[0].mxu0
      %v4607 = vadd.f32 %v4192, %v4606
      %v4608 = vpop.f32.mrb[0].mxu0
      %v4609 = vadd.f32 %v4196, %v4608
      %v4610 = vpop.f32.mrb[0].mxu0
      %v4611 = vadd.f32 %v4192, %v4610
      %v4612 = vpop.f32.mrb[0].mxu0
      %v4613 = vadd.f32 %v4196, %v4612
      %4614 = vmatprep.mubr.bf16.mxu0 0
      %4615 = vmatmul.mubr.bf16.gmra.mrb[0].mxu0 %v4178
      %v4616 = vpop.f32.mrb[0].mxu0
      %v4617 = vadd.f32 %v4192, %v4616
      %v4618 = vpop.f32.mrb[0].mxu0
      %v4619 = vadd.f32 %v4196, %v4618
      %v4620 = vpop.f32.mrb[0].mxu0
      %v4621 = vadd.f32 %v4192, %v4620
      %v4622 = vpop.f32.mrb[0].mxu0
      %v4623 = vadd.f32 %v4196, %v4622
      %4624 = vmatprep.mubr.bf16.mxu0 0
      %4625 = vmatmul.mubr.bf16.gmra.mrb[0].mxu0 %v4179
      %v4626 = vpop.f32.mrb[0].mxu0
      %v4627 = vadd.f32 %v4192, %v4626
      %v4628 = vpop.f32.mrb[0].mxu0
      %v4629 = vadd.f32 %v4196, %v4628
      %v4630 = vpop.f32.mrb[0].mxu0
      %v4631 = vadd.f32 %v4192, %v4630
      %v4632 = vpop.f32.mrb[0].mxu0
      %v4633 = vadd.f32 %v4196, %v4632
      %4634 = vmatprep.mubr.bf16.mxu0 0
      %4635 = vmatmul.mubr.bf16.gmra.mrb[0].mxu0 %v4180
      %v4636 = vpop.f32.mrb[0].mxu0
      %v4637 = vadd.f32 %v4192, %v4636
      %v4638 = vpop.f32.mrb[0].mxu0
      %v4639 = vadd.f32 %v4196, %v4638
      %v4640 = vpop.f32.mrb[0].mxu0
      %v4641 = vadd.f32 %v4192, %v4640
      %v4642 = vpop.f32.mrb[0].mxu0
      %v4643 = vadd.f32 %v4196, %v4642
      %4644 = vmatprep.mubr.bf16.mxu0 0
      %4645 = vmatmul.mubr.bf16.gmra.mrb[0].mxu0 %v4181
      %v4646 = vpop.f32.mrb[0].mxu0
      %v4647 = vadd.f32 %v4192, %v4646
      %v4648 = vpop.f32.mrb[0].mxu0
      %v4649 = vadd.f32 %v4196, %v4648
      %v4650 = vpop.f32.mrb[0].mxu0
      %v4651 = vadd.f32 %v4192, %v4650
      %v4652 = vpop.f32.mrb[0].mxu0
      %v4653 = vadd.f32 %v4196, %v4652
      %4654 = vmatprep.mubr.bf16.mxu0 0
      %4655 = vmatmul.mubr.bf16.gmra.mrb[0].mxu0 %v4182
      %v4656 = vpop.f32.mrb[0].mxu0
      %v4657 = vadd.f32 %v4192, %v4656
      %v4658 = vpop.f32.mrb[0].mxu0
      %v4659 = vadd.f32 %v4196, %v4658
      %v4660 = vpop.f32.mrb[0].mxu0
      %v4661 = vadd.f32 %v4192, %v4660
      %v4662 = vpop.f32.mrb[0].mxu0
      %v4663 = vadd.f32 %v4196, %v4662
      %4664 = vmatprep.mubr.bf16.mxu0 0
      %4665 = vmatmul.mubr.bf16.gmra.mrb[0].mxu0 %v4183
      %v4666 = vpop.f32.mrb[0].mxu0
      %v4667 = vadd.f32 %v4192, %v4666
      %v4668 = vpop.f32.mrb[0].mxu0
      %v4669 = vadd.f32 %v4196, %v4668
      %v4670 = vpop.f32.mrb[0].mxu0
      %v4671 = vadd.f32 %v4192, %v4670
      %v4672 = vpop.f32.mrb[0].mxu0
      %v4673 = vadd.f32 %v4196, %v4672
      %4674 = vmatprep.mubr.bf16.mxu0 0
      %4675 = vmatmul.mubr.bf16.gmra.mrb[0].mxu0 %v4184
      %v4676 = vpop.f32.mrb[0].mxu0
      %v4677 = vadd.f32 %v4192, %v4676
      %v4678 = vpop.f32.mrb[0].mxu0
      %v4679 = vadd.f32 %v4196, %v4678
      %v4680 = vpop.f32.mrb[0].mxu0
      %v4681 = vadd.f32 %v4192, %v4680
      %v4682 = vpop.f32.mrb[0].mxu0
      %v4683 = vadd.f32 %v4196, %v4682
      %4684 = vmatprep.mubr.bf16.mxu0 0
      %4685 = vmatmul.mubr.bf16.gmra.mrb[0].mxu0 %v4185
      %v4686 = vpop.f32.mrb[0].mxu0
      %v4687 = vadd.f32 %v4192, %v4686
      %v4688 = vpop.f32.mrb[0].mxu0
      %v4689 = vadd.f32 %v4196, %v4688
      %v4690 = vpop.f32.mrb[0].mxu0
      %v4691 = vadd.f32 %v4192, %v4690
      %v4692 = vpop.f32.mrb[0].mxu0
      %v4693 = vadd.f32 %v4196, %v4692
      %4694 = vmatprep.mubr.bf16.mxu0 0
      %4695 = vmatmul.mubr.bf16.gmra.mrb[0].mxu0 %v4186
      %v4696 = vpop.f32.mrb[0].mxu0
      %v4697 = vadd.f32 %v4192, %v4696
      %v4698 = vpop.f32.mrb[0].mxu0
      %v4699 = vadd.f32 %v4196, %v4698
      %v4700 = vpop.f32.mrb[0].mxu0
      %v4701 = vadd.f32 %v4192, %v4700
      %v4702 = vpop.f32.mrb[0].mxu0
      %v4703 = vadd.f32 %v4196, %v4702
      %4704 = vdwg.mxu0
      %4705 = vmatprep.subr.bf16.mxu0 %v4403
      %4706 = vmatpush1.bf16.msra.mxu0 %v4402
      %4707 = vmatprep.subr.bf16.mxu0 %v4410
      %4708 = vmatpush1.bf16.msra.mxu0 %v4409
      %4709 = vmatprep.subr.bf16.mxu0 %v4417
      %4710 = vmatpush1.bf16.msra.mxu0 %v4416
      %4711 = vmatprep.subr.bf16.mxu0 %v4424
      %4712 = vmatpush1.bf16.msra.mxu0 %v4423
      %4713 = vmatprep.subr.bf16.mxu0 %v4431
      %4714 = vmatpush1.bf16.msra.mxu0 %v4430
      %4715 = vmatprep.subr.bf16.mxu0 %v4438
      %4716 = vmatpush1.bf16.msra.mxu0 %v4437
      %4717 = vmatprep.subr.bf16.mxu0 %v4445
      %4718 = vmatpush1.bf16.msra.mxu0 %v4444
      %4719 = vmatprep.subr.bf16.mxu0 %v4452
      %4720 = vmatpush1.bf16.msra.mxu0 %v4451
      %4721 = vmatprep.subr.bf16.mxu0 0
      %4722 = vmatpush1.bf16.msra.mxu0 0
      %4723 = vmatprep.subr.bf16.mxu0 0
      %4724 = vmatpush1.bf16.msra.mxu0 0
      %4725 = vmatprep.subr.bf16.mxu0 0
      %4726 = vmatpush1.bf16.msra.mxu0 0
      %4727 = vmatprep.subr.bf16.mxu0 0
      %4728 = vmatpush1.bf16.msra.mxu0 0
      %4729 = vmatprep.subr.bf16.mxu0 0
      %4730 = vmatpush1.bf16.msra.mxu0 0
      %4731 = vmatprep.subr.bf16.mxu0 0
      %4732 = vmatpush1.bf16.msra.mxu0 0
      %4733 = vmatprep.subr.bf16.mxu0 0
      %4734 = vmatpush1.bf16.msra.mxu0 0
      %4735 = vmatprep.subr.bf16.mxu0 0
      %4736 = vmatpush1.bf16.msra.mxu0 0
      %4737 = vmatprep.mubr.bf16.mxu0 0
      %4738 = vmatmul.mubr.bf16.gmra.mrb[0].mxu0 %v4171
      %v4739 = vpop.f32.mrb[0].mxu0
      %v4740 = vadd.f32 %v4200, %v4739
      %v4741 = vpop.f32.mrb[0].mxu0
      %v4742 = vadd.f32 %v4204, %v4741
      %v4743 = vpop.f32.mrb[0].mxu0
      %v4744 = vadd.f32 %v4200, %v4743
      %v4745 = vpop.f32.mrb[0].mxu0
      %v4746 = vadd.f32 %v4204, %v4745
      %4747 = vmatprep.mubr.bf16.mxu0 0
      %4748 = vmatmul.mubr.bf16.gmra.mrb[0].mxu0 %v4172
      %v4749 = vpop.f32.mrb[0].mxu0
      %v4750 = vadd.f32 %v4200, %v4749
      %v4751 = vpop.f32.mrb[0].mxu0
      %v4752 = vadd.f32 %v4204, %v4751
      %v4753 = vpop.f32.mrb[0].mxu0
      %v4754 = vadd.f32 %v4200, %v4753
      %v4755 = vpop.f32.mrb[0].mxu0
      %v4756 = vadd.f32 %v4204, %v4755
      %4757 = vmatprep.mubr.bf16.mxu0 0
      %4758 = vmatmul.mubr.bf16.gmra.mrb[0].mxu0 %v4173
      %v4759 = vpop.f32.mrb[0].mxu0
      %v4760 = vadd.f32 %v4200, %v4759
      %v4761 = vpop.f32.mrb[0].mxu0
      %v4762 = vadd.f32 %v4204, %v4761
      %v4763 = vpop.f32.mrb[0].mxu0
      %v4764 = vadd.f32 %v4200, %v4763
      %v4765 = vpop.f32.mrb[0].mxu0
      %v4766 = vadd.f32 %v4204, %v4765
      %4767 = vmatprep.mubr.bf16.mxu0 0
      %4768 = vmatmul.mubr.bf16.gmra.mrb[0].mxu0 %v4174
      %v4769 = vpop.f32.mrb[0].mxu0
      %v4770 = vadd.f32 %v4200, %v4769
      %v4771 = vpop.f32.mrb[0].mxu0
      %v4772 = vadd.f32 %v4204, %v4771
      %v4773 = vpop.f32.mrb[0].mxu0
      %v4774 = vadd.f32 %v4200, %v4773
      %v4775 = vpop.f32.mrb[0].mxu0
      %v4776 = vadd.f32 %v4204, %v4775
      %4777 = vmatprep.mubr.bf16.mxu0 0
      %4778 = vmatmul.mubr.bf16.gmra.mrb[0].mxu0 %v4175
      %v4779 = vpop.f32.mrb[0].mxu0
      %v4780 = vadd.f32 %v4200, %v4779
      %v4781 = vpop.f32.mrb[0].mxu0
      %v4782 = vadd.f32 %v4204, %v4781
      %v4783 = vpop.f32.mrb[0].mxu0
      %v4784 = vadd.f32 %v4200, %v4783
      %v4785 = vpop.f32.mrb[0].mxu0
      %v4786 = vadd.f32 %v4204, %v4785
      %4787 = vmatprep.mubr.bf16.mxu0 0
      %4788 = vmatmul.mubr.bf16.gmra.mrb[0].mxu0 %v4176
      %v4789 = vpop.f32.mrb[0].mxu0
      %v4790 = vadd.f32 %v4200, %v4789
      %v4791 = vpop.f32.mrb[0].mxu0
      %v4792 = vadd.f32 %v4204, %v4791
      %v4793 = vpop.f32.mrb[0].mxu0
      %v4794 = vadd.f32 %v4200, %v4793
      %v4795 = vpop.f32.mrb[0].mxu0
      %v4796 = vadd.f32 %v4204, %v4795
      %4797 = vmatprep.mubr.bf16.mxu0 0
      %4798 = vmatmul.mubr.bf16.gmra.mrb[0].mxu0 %v4177
      %v4799 = vpop.f32.mrb[0].mxu0
      %v4800 = vadd.f32 %v4200, %v4799
      %v4801 = vpop.f32.mrb[0].mxu0
      %v4802 = vadd.f32 %v4204, %v4801
      %v4803 = vpop.f32.mrb[0].mxu0
      %v4804 = vadd.f32 %v4200, %v4803
      %v4805 = vpop.f32.mrb[0].mxu0
      %v4806 = vadd.f32 %v4204, %v4805
      %4807 = vmatprep.mubr.bf16.mxu0 0
      %4808 = vmatmul.mubr.bf16.gmra.mrb[0].mxu0 %v4178
      %v4809 = vpop.f32.mrb[0].mxu0
      %v4810 = vadd.f32 %v4200, %v4809
      %v4811 = vpop.f32.mrb[0].mxu0
      %v4812 = vadd.f32 %v4204, %v4811
      %v4813 = vpop.f32.mrb[0].mxu0
      %v4814 = vadd.f32 %v4200, %v4813
      %v4815 = vpop.f32.mrb[0].mxu0
      %v4816 = vadd.f32 %v4204, %v4815
      %4817 = vmatprep.mubr.bf16.mxu0 0
      %4818 = vmatmul.mubr.bf16.gmra.mrb[0].mxu0 %v4179
      %v4819 = vpop.f32.mrb[0].mxu0
      %v4820 = vadd.f32 %v4200, %v4819
      %v4821 = vpop.f32.mrb[0].mxu0
      %v4822 = vadd.f32 %v4204, %v4821
      %v4823 = vpop.f32.mrb[0].mxu0
      %v4824 = vadd.f32 %v4200, %v4823
      %v4825 = vpop.f32.mrb[0].mxu0
      %v4826 = vadd.f32 %v4204, %v4825
      %4827 = vmatprep.mubr.bf16.mxu0 0
      %4828 = vmatmul.mubr.bf16.gmra.mrb[0].mxu0 %v4180
      %v4829 = vpop.f32.mrb[0].mxu0
      %v4830 = vadd.f32 %v4200, %v4829
      %v4831 = vpop.f32.mrb[0].mxu0
      %v4832 = vadd.f32 %v4204, %v4831
      %v4833 = vpop.f32.mrb[0].mxu0
      %v4834 = vadd.f32 %v4200, %v4833
      %v4835 = vpop.f32.mrb[0].mxu0
      %v4836 = vadd.f32 %v4204, %v4835
      %4837 = vmatprep.mubr.bf16.mxu0 0
      %4838 = vmatmul.mubr.bf16.gmra.mrb[0].mxu0 %v4181
      %v4839 = vpop.f32.mrb[0].mxu0
      %v4840 = vadd.f32 %v4200, %v4839
      %v4841 = vpop.f32.mrb[0].mxu0
      %v4842 = vadd.f32 %v4204, %v4841
      %v4843 = vpop.f32.mrb[0].mxu0
      %v4844 = vadd.f32 %v4200, %v4843
      %v4845 = vpop.f32.mrb[0].mxu0
      %v4846 = vadd.f32 %v4204, %v4845
      %4847 = vmatprep.mubr.bf16.mxu0 0
      %4848 = vmatmul.mubr.bf16.gmra.mrb[0].mxu0 %v4182
      %v4849 = vpop.f32.mrb[0].mxu0
      %v4850 = vadd.f32 %v4200, %v4849
      %v4851 = vpop.f32.mrb[0].mxu0
      %v4852 = vadd.f32 %v4204, %v4851
      %v4853 = vpop.f32.mrb[0].mxu0
      %v4854 = vadd.f32 %v4200, %v4853
      %v4855 = vpop.f32.mrb[0].mxu0
      %v4856 = vadd.f32 %v4204, %v4855
      %4857 = vmatprep.mubr.bf16.mxu0 0
      %4858 = vmatmul.mubr.bf16.gmra.mrb[0].mxu0 %v4183
      %v4859 = vpop.f32.mrb[0].mxu0
      %v4860 = vadd.f32 %v4200, %v4859
      %v4861 = vpop.f32.mrb[0].mxu0
      %v4862 = vadd.f32 %v4204, %v4861
      %v4863 = vpop.f32.mrb[0].mxu0
      %v4864 = vadd.f32 %v4200, %v4863
      %v4865 = vpop.f32.mrb[0].mxu0
      %v4866 = vadd.f32 %v4204, %v4865
      %4867 = vmatprep.mubr.bf16.mxu0 0
      %4868 = vmatmul.mubr.bf16.gmra.mrb[0].mxu0 %v4184
      %v4869 = vpop.f32.mrb[0].mxu0
      %v4870 = vadd.f32 %v4200, %v4869
      %v4871 = vpop.f32.mrb[0].mxu0
      %v4872 = vadd.f32 %v4204, %v4871
      %v4873 = vpop.f32.mrb[0].mxu0
      %v4874 = vadd.f32 %v4200, %v4873
      %v4875 = vpop.f32.mrb[0].mxu0
      %v4876 = vadd.f32 %v4204, %v4875
      %4877 = vmatprep.mubr.bf16.mxu0 0
      %4878 = vmatmul.mubr.bf16.gmra.mrb[0].mxu0 %v4185
      %v4879 = vpop.f32.mrb[0].mxu0
      %v4880 = vadd.f32 %v4200, %v4879
      %v4881 = vpop.f32.mrb[0].mxu0
      %v4882 = vadd.f32 %v4204, %v4881
      %v4883 = vpop.f32.mrb[0].mxu0
      %v4884 = vadd.f32 %v4200, %v4883
      %v4885 = vpop.f32.mrb[0].mxu0
      %v4886 = vadd.f32 %v4204, %v4885
      %4887 = vmatprep.mubr.bf16.mxu0 0
      %4888 = vmatmul.mubr.bf16.gmra.mrb[0].mxu0 %v4186
      %v4889 = vpop.f32.mrb[0].mxu0
      %v4890 = vadd.f32 %v4200, %v4889
      %v4891 = vpop.f32.mrb[0].mxu0
      %v4892 = vadd.f32 %v4204, %v4891
      %v4893 = vpop.f32.mrb[0].mxu0
      %v4894 = vadd.f32 %v4200, %v4893
      %v4895 = vpop.f32.mrb[0].mxu0
      %v4896 = vadd.f32 %v4204, %v4895
      %4897 = vdwg.mxu0
      %4898 = vmatprep.subr.bf16.mxu0 %v4405
      %4899 = vmatpush1.bf16.msra.mxu0 %v4404
      %4900 = vmatprep.subr.bf16.mxu0 %v4412
      %4901 = vmatpush1.bf16.msra.mxu0 %v4411
      %4902 = vmatprep.subr.bf16.mxu0 %v4419
      %4903 = vmatpush1.bf16.msra.mxu0 %v4418
      %4904 = vmatprep.subr.bf16.mxu0 %v4426
      %4905 = vmatpush1.bf16.msra.mxu0 %v4425
      %4906 = vmatprep.subr.bf16.mxu0 %v4433
      %4907 = vmatpush1.bf16.msra.mxu0 %v4432
      %4908 = vmatprep.subr.bf16.mxu0 %v4440
      %4909 = vmatpush1.bf16.msra.mxu0 %v4439
      %4910 = vmatprep.subr.bf16.mxu0 %v4447
      %4911 = vmatpush1.bf16.msra.mxu0 %v4446
      %4912 = vmatprep.subr.bf16.mxu0 %v4454
      %4913 = vmatpush1.bf16.msra.mxu0 %v4453
      %4914 = vmatprep.subr.bf16.mxu0 0
      %4915 = vmatpush1.bf16.msra.mxu0 0
      %4916 = vmatprep.subr.bf16.mxu0 0
      %4917 = vmatpush1.bf16.msra.mxu0 0
      %4918 = vmatprep.subr.bf16.mxu0 0
      %4919 = vmatpush1.bf16.msra.mxu0 0
      %4920 = vmatprep.subr.bf16.mxu0 0
      %4921 = vmatpush1.bf16.msra.mxu0 0
      %4922 = vmatprep.subr.bf16.mxu0 0
      %4923 = vmatpush1.bf16.msra.mxu0 0
      %4924 = vmatprep.subr.bf16.mxu0 0
      %4925 = vmatpush1.bf16.msra.mxu0 0
      %4926 = vmatprep.subr.bf16.mxu0 0
      %4927 = vmatpush1.bf16.msra.mxu0 0
      %4928 = vmatprep.subr.bf16.mxu0 0
      %4929 = vmatpush1.bf16.msra.mxu0 0
      %4930 = vmatprep.mubr.bf16.mxu0 0
      %4931 = vmatmul.mubr.bf16.gmra.mrb[0].mxu0 %v4171
      %v4932 = vpop.f32.mrb[0].mxu0
      %v4933 = vadd.f32 %v4208, %v4932
      %v4934 = vpop.f32.mrb[0].mxu0
      %v4935 = vadd.f32 %v4212, %v4934
      %v4936 = vpop.f32.mrb[0].mxu0
      %v4937 = vadd.f32 %v4208, %v4936
      %v4938 = vpop.f32.mrb[0].mxu0
      %v4939 = vadd.f32 %v4212, %v4938
      %4940 = vmatprep.mubr.bf16.mxu0 0
      %4941 = vmatmul.mubr.bf16.gmra.mrb[0].mxu0 %v4172
      %v4942 = vpop.f32.mrb[0].mxu0
      %v4943 = vadd.f32 %v4208, %v4942
      %v4944 = vpop.f32.mrb[0].mxu0
      %v4945 = vadd.f32 %v4212, %v4944
      %v4946 = vpop.f32.mrb[0].mxu0
      %v4947 = vadd.f32 %v4208, %v4946
      %v4948 = vpop.f32.mrb[0].mxu0
      %v4949 = vadd.f32 %v4212, %v4948
      %4950 = vmatprep.mubr.bf16.mxu0 0
      %4951 = vmatmul.mubr.bf16.gmra.mrb[0].mxu0 %v4173
      %v4952 = vpop.f32.mrb[0].mxu0
      %v4953 = vadd.f32 %v4208, %v4952
      %v4954 = vpop.f32.mrb[0].mxu0
      %v4955 = vadd.f32 %v4212, %v4954
      %v4956 = vpop.f32.mrb[0].mxu0
      %v4957 = vadd.f32 %v4208, %v4956
      %v4958 = vpop.f32.mrb[0].mxu0
      %v4959 = vadd.f32 %v4212, %v4958
      %4960 = vmatprep.mubr.bf16.mxu0 0
      %4961 = vmatmul.mubr.bf16.gmra.mrb[0].mxu0 %v4174
      %v4962 = vpop.f32.mrb[0].mxu0
      %v4963 = vadd.f32 %v4208, %v4962
      %v4964 = vpop.f32.mrb[0].mxu0
      %v4965 = vadd.f32 %v4212, %v4964
      %v4966 = vpop.f32.mrb[0].mxu0
      %v4967 = vadd.f32 %v4208, %v4966
      %v4968 = vpop.f32.mrb[0].mxu0
      %v4969 = vadd.f32 %v4212, %v4968
      %4970 = vmatprep.mubr.bf16.mxu0 0
      %4971 = vmatmul.mubr.bf16.gmra.mrb[0].mxu0 %v4175
      %v4972 = vpop.f32.mrb[0].mxu0
      %v4973 = vadd.f32 %v4208, %v4972
      %v4974 = vpop.f32.mrb[0].mxu0
      %v4975 = vadd.f32 %v4212, %v4974
      %v4976 = vpop.f32.mrb[0].mxu0
      %v4977 = vadd.f32 %v4208, %v4976
      %v4978 = vpop.f32.mrb[0].mxu0
      %v4979 = vadd.f32 %v4212, %v4978
      %4980 = vmatprep.mubr.bf16.mxu0 0
      %4981 = vmatmul.mubr.bf16.gmra.mrb[0].mxu0 %v4176
      %v4982 = vpop.f32.mrb[0].mxu0
      %v4983 = vadd.f32 %v4208, %v4982
      %v4984 = vpop.f32.mrb[0].mxu0
      %v4985 = vadd.f32 %v4212, %v4984
      %v4986 = vpop.f32.mrb[0].mxu0
      %v4987 = vadd.f32 %v4208, %v4986
      %v4988 = vpop.f32.mrb[0].mxu0
      %v4989 = vadd.f32 %v4212, %v4988
      %4990 = vmatprep.mubr.bf16.mxu0 0
      %4991 = vmatmul.mubr.bf16.gmra.mrb[0].mxu0 %v4177
      %v4992 = vpop.f32.mrb[0].mxu0
      %v4993 = vadd.f32 %v4208, %v4992
      %v4994 = vpop.f32.mrb[0].mxu0
      %v4995 = vadd.f32 %v4212, %v4994
      %v4996 = vpop.f32.mrb[0].mxu0
      %v4997 = vadd.f32 %v4208, %v4996
      %v4998 = vpop.f32.mrb[0].mxu0
      %v4999 = vadd.f32 %v4212, %v4998
      %5000 = vmatprep.mubr.bf16.mxu0 0
      %5001 = vmatmul.mubr.bf16.gmra.mrb[0].mxu0 %v4178
      %v5002 = vpop.f32.mrb[0].mxu0
      %v5003 = vadd.f32 %v4208, %v5002
      %v5004 = vpop.f32.mrb[0].mxu0
      %v5005 = vadd.f32 %v4212, %v5004
      %v5006 = vpop.f32.mrb[0].mxu0
      %v5007 = vadd.f32 %v4208, %v5006
      %v5008 = vpop.f32.mrb[0].mxu0
      %v5009 = vadd.f32 %v4212, %v5008
      %5010 = vmatprep.mubr.bf16.mxu0 0
      %5011 = vmatmul.mubr.bf16.gmra.mrb[0].mxu0 %v4179
      %v5012 = vpop.f32.mrb[0].mxu0
      %v5013 = vadd.f32 %v4208, %v5012
      %v5014 = vpop.f32.mrb[0].mxu0
      %v5015 = vadd.f32 %v4212, %v5014
      %v5016 = vpop.f32.mrb[0].mxu0
      %v5017 = vadd.f32 %v4208, %v5016
      %v5018 = vpop.f32.mrb[0].mxu0
      %v5019 = vadd.f32 %v4212, %v5018
      %5020 = vmatprep.mubr.bf16.mxu0 0
      %5021 = vmatmul.mubr.bf16.gmra.mrb[0].mxu0 %v4180
      %v5022 = vpop.f32.mrb[0].mxu0
      %v5023 = vadd.f32 %v4208, %v5022
      %v5024 = vpop.f32.mrb[0].mxu0
      %v5025 = vadd.f32 %v4212, %v5024
      %v5026 = vpop.f32.mrb[0].mxu0
      %v5027 = vadd.f32 %v4208, %v5026
      %v5028 = vpop.f32.mrb[0].mxu0
      %v5029 = vadd.f32 %v4212, %v5028
      %5030 = vmatprep.mubr.bf16.mxu0 0
      %5031 = vmatmul.mubr.bf16.gmra.mrb[0].mxu0 %v4181
      %v5032 = vpop.f32.mrb[0].mxu0
      %v5033 = vadd.f32 %v4208, %v5032
      %v5034 = vpop.f32.mrb[0].mxu0
      %v5035 = vadd.f32 %v4212, %v5034
      %v5036 = vpop.f32.mrb[0].mxu0
      %v5037 = vadd.f32 %v4208, %v5036
      %v5038 = vpop.f32.mrb[0].mxu0
      %v5039 = vadd.f32 %v4212, %v5038
      %5040 = vmatprep.mubr.bf16.mxu0 0
      %5041 = vmatmul.mubr.bf16.gmra.mrb[0].mxu0 %v4182
      %v5042 = vpop.f32.mrb[0].mxu0
      %v5043 = vadd.f32 %v4208, %v5042
      %v5044 = vpop.f32.mrb[0].mxu0
      %v5045 = vadd.f32 %v4212, %v5044
      %v5046 = vpop.f32.mrb[0].mxu0
      %v5047 = vadd.f32 %v4208, %v5046
      %v5048 = vpop.f32.mrb[0].mxu0
      %v5049 = vadd.f32 %v4212, %v5048
      %5050 = vmatprep.mubr.bf16.mxu0 0
      %5051 = vmatmul.mubr.bf16.gmra.mrb[0].mxu0 %v4183
      %v5052 = vpop.f32.mrb[0].mxu0
      %v5053 = vadd.f32 %v4208, %v5052
      %v5054 = vpop.f32.mrb[0].mxu0
      %v5055 = vadd.f32 %v4212, %v5054
      %v5056 = vpop.f32.mrb[0].mxu0
      %v5057 = vadd.f32 %v4208, %v5056
      %v5058 = vpop.f32.mrb[0].mxu0
      %v5059 = vadd.f32 %v4212, %v5058
      %5060 = vmatprep.mubr.bf16.mxu0 0
      %5061 = vmatmul.mubr.bf16.gmra.mrb[0].mxu0 %v4184
      %v5062 = vpop.f32.mrb[0].mxu0
      %v5063 = vadd.f32 %v4208, %v5062
      %v5064 = vpop.f32.mrb[0].mxu0
      %v5065 = vadd.f32 %v4212, %v5064
      %v5066 = vpop.f32.mrb[0].mxu0
      %v5067 = vadd.f32 %v4208, %v5066
      %v5068 = vpop.f32.mrb[0].mxu0
      %v5069 = vadd.f32 %v4212, %v5068
      %5070 = vmatprep.mubr.bf16.mxu0 0
      %5071 = vmatmul.mubr.bf16.gmra.mrb[0].mxu0 %v4185
      %v5072 = vpop.f32.mrb[0].mxu0
      %v5073 = vadd.f32 %v4208, %v5072
      %v5074 = vpop.f32.mrb[0].mxu0
      %v5075 = vadd.f32 %v4212, %v5074
      %v5076 = vpop.f32.mrb[0].mxu0
      %v5077 = vadd.f32 %v4208, %v5076
      %v5078 = vpop.f32.mrb[0].mxu0
      %v5079 = vadd.f32 %v4212, %v5078
      %5080 = vmatprep.mubr.bf16.mxu0 0
      %5081 = vmatmul.mubr.bf16.gmra.mrb[0].mxu0 %v4186
      %v5082 = vpop.f32.mrb[0].mxu0
      %v5083 = vadd.f32 %v4208, %v5082
      %v5084 = vpop.f32.mrb[0].mxu0
      %v5085 = vadd.f32 %v4212, %v5084
      %v5086 = vpop.f32.mrb[0].mxu0
      %v5087 = vadd.f32 %v4208, %v5086
      %v5088 = vpop.f32.mrb[0].mxu0
      %v5089 = vadd.f32 %v4212, %v5088
      %5090 = vdwg.mxu0
      %5091 = vmatprep.subr.bf16.mxu0 0
      %5092 = vmatpush1.bf16.msra.mxu0 %v4406
      %5093 = vmatprep.subr.bf16.mxu0 0
      %5094 = vmatpush1.bf16.msra.mxu0 %v4413
      %5095 = vmatprep.subr.bf16.mxu0 0
      %5096 = vmatpush1.bf16.msra.mxu0 %v4420
      %5097 = vmatprep.subr.bf16.mxu0 0
      %5098 = vmatpush1.bf16.msra.mxu0 %v4427
      %5099 = vmatprep.subr.bf16.mxu0 0
      %5100 = vmatpush1.bf16.msra.mxu0 %v4434
      %5101 = vmatprep.subr.bf16.mxu0 0
      %5102 = vmatpush1.bf16.msra.mxu0 %v4441
      %5103 = vmatprep.subr.bf16.mxu0 0
      %5104 = vmatpush1.bf16.msra.mxu0 %v4448
      %5105 = vmatprep.subr.bf16.mxu0 0
      %5106 = vmatpush1.bf16.msra.mxu0 %v4455
      %5107 = vmatprep.subr.bf16.mxu0 0
      %5108 = vmatpush1.bf16.msra.mxu0 0
      %5109 = vmatprep.subr.bf16.mxu0 0
      %5110 = vmatpush1.bf16.msra.mxu0 0
      %5111 = vmatprep.subr.bf16.mxu0 0
      %5112 = vmatpush1.bf16.msra.mxu0 0
      %5113 = vmatprep.subr.bf16.mxu0 0
      %5114 = vmatpush1.bf16.msra.mxu0 0
      %5115 = vmatprep.subr.bf16.mxu0 0
      %5116 = vmatpush1.bf16.msra.mxu0 0
      %5117 = vmatprep.subr.bf16.mxu0 0
      %5118 = vmatpush1.bf16.msra.mxu0 0
      %5119 = vmatprep.subr.bf16.mxu0 0
      %5120 = vmatpush1.bf16.msra.mxu0 0
      %5121 = vmatprep.subr.bf16.mxu0 0
      %5122 = vmatpush1.bf16.msra.mxu0 0
      %5123 = vmatprep.mubr.bf16.mxu0 0
      %5124 = vmatmul.mubr.bf16.gmra.mrb[0].mxu0 %v4171
      %v5125 = vpop.f32.mrb[0].mxu0
      %v5126 = vadd.f32 %v4216, %v5125
      %v5127 = vpop.f32.mrb[0].mxu0
      %v5128 = vpop.f32.mrb[0].mxu0
      %v5129 = vadd.f32 %v4216, %v5128
      %v5130 = vpop.f32.mrb[0].mxu0
      %5131 = vmatprep.mubr.bf16.mxu0 0
      %5132 = vmatmul.mubr.bf16.gmra.mrb[0].mxu0 %v4172
      %v5133 = vpop.f32.mrb[0].mxu0
      %v5134 = vadd.f32 %v4216, %v5133
      %v5135 = vpop.f32.mrb[0].mxu0
      %v5136 = vpop.f32.mrb[0].mxu0
      %v5137 = vadd.f32 %v4216, %v5136
      %v5138 = vpop.f32.mrb[0].mxu0
      %5139 = vmatprep.mubr.bf16.mxu0 0
      %5140 = vmatmul.mubr.bf16.gmra.mrb[0].mxu0 %v4173
      %v5141 = vpop.f32.mrb[0].mxu0
      %v5142 = vadd.f32 %v4216, %v5141
      %v5143 = vpop.f32.mrb[0].mxu0
      %v5144 = vpop.f32.mrb[0].mxu0
      %v5145 = vadd.f32 %v4216, %v5144
      %v5146 = vpop.f32.mrb[0].mxu0
      %5147 = vmatprep.mubr.bf16.mxu0 0
      %5148 = vmatmul.mubr.bf16.gmra.mrb[0].mxu0 %v4174
      %v5149 = vpop.f32.mrb[0].mxu0
      %v5150 = vadd.f32 %v4216, %v5149
      %v5151 = vpop.f32.mrb[0].mxu0
      %v5152 = vpop.f32.mrb[0].mxu0
      %v5153 = vadd.f32 %v4216, %v5152
      %v5154 = vpop.f32.mrb[0].mxu0
      %5155 = vmatprep.mubr.bf16.mxu0 0
      %5156 = vmatmul.mubr.bf16.gmra.mrb[0].mxu0 %v4175
      %v5157 = vpop.f32.mrb[0].mxu0
      %v5158 = vadd.f32 %v4216, %v5157
      %v5159 = vpop.f32.mrb[0].mxu0
      %v5160 = vpop.f32.mrb[0].mxu0
      %v5161 = vadd.f32 %v4216, %v5160
      %v5162 = vpop.f32.mrb[0].mxu0
      %5163 = vmatprep.mubr.bf16.mxu0 0
      %5164 = vmatmul.mubr.bf16.gmra.mrb[0].mxu0 %v4176
      %v5165 = vpop.f32.mrb[0].mxu0
      %v5166 = vadd.f32 %v4216, %v5165
      %v5167 = vpop.f32.mrb[0].mxu0
      %v5168 = vpop.f32.mrb[0].mxu0
      %v5169 = vadd.f32 %v4216, %v5168
      %v5170 = vpop.f32.mrb[0].mxu0
      %5171 = vmatprep.mubr.bf16.mxu0 0
      %5172 = vmatmul.mubr.bf16.gmra.mrb[0].mxu0 %v4177
      %v5173 = vpop.f32.mrb[0].mxu0
      %v5174 = vadd.f32 %v4216, %v5173
      %v5175 = vpop.f32.mrb[0].mxu0
      %v5176 = vpop.f32.mrb[0].mxu0
      %v5177 = vadd.f32 %v4216, %v5176
      %v5178 = vpop.f32.mrb[0].mxu0
      %5179 = vmatprep.mubr.bf16.mxu0 0
      %5180 = vmatmul.mubr.bf16.gmra.mrb[0].mxu0 %v4178
      %v5181 = vpop.f32.mrb[0].mxu0
      %v5182 = vadd.f32 %v4216, %v5181
      %v5183 = vpop.f32.mrb[0].mxu0
      %v5184 = vpop.f32.mrb[0].mxu0
      %v5185 = vadd.f32 %v4216, %v5184
      %v5186 = vpop.f32.mrb[0].mxu0
      %5187 = vmatprep.mubr.bf16.mxu0 0
      %5188 = vmatmul.mubr.bf16.gmra.mrb[0].mxu0 %v4179
      %v5189 = vpop.f32.mrb[0].mxu0
      %v5190 = vadd.f32 %v4216, %v5189
      %v5191 = vpop.f32.mrb[0].mxu0
      %v5192 = vpop.f32.mrb[0].mxu0
      %v5193 = vadd.f32 %v4216, %v5192
      %v5194 = vpop.f32.mrb[0].mxu0
      %5195 = vmatprep.mubr.bf16.mxu0 0
      %5196 = vmatmul.mubr.bf16.gmra.mrb[0].mxu0 %v4180
      %v5197 = vpop.f32.mrb[0].mxu0
      %v5198 = vadd.f32 %v4216, %v5197
      %v5199 = vpop.f32.mrb[0].mxu0
      %v5200 = vpop.f32.mrb[0].mxu0
      %v5201 = vadd.f32 %v4216, %v5200
      %v5202 = vpop.f32.mrb[0].mxu0
      %5203 = vmatprep.mubr.bf16.mxu0 0
      %5204 = vmatmul.mubr.bf16.gmra.mrb[0].mxu0 %v4181
      %v5205 = vpop.f32.mrb[0].mxu0
      %v5206 = vadd.f32 %v4216, %v5205
      %v5207 = vpop.f32.mrb[0].mxu0
      %v5208 = vpop.f32.mrb[0].mxu0
      %v5209 = vadd.f32 %v4216, %v5208
      %v5210 = vpop.f32.mrb[0].mxu0
      %5211 = vmatprep.mubr.bf16.mxu0 0
      %5212 = vmatmul.mubr.bf16.gmra.mrb[0].mxu0 %v4182
      %v5213 = vpop.f32.mrb[0].mxu0
      %v5214 = vadd.f32 %v4216, %v5213
      %v5215 = vpop.f32.mrb[0].mxu0
      %v5216 = vpop.f32.mrb[0].mxu0
      %v5217 = vadd.f32 %v4216, %v5216
      %v5218 = vpop.f32.mrb[0].mxu0
      %5219 = vmatprep.mubr.bf16.mxu0 0
      %5220 = vmatmul.mubr.bf16.gmra.mrb[0].mxu0 %v4183
      %v5221 = vpop.f32.mrb[0].mxu0
      %v5222 = vadd.f32 %v4216, %v5221
      %v5223 = vpop.f32.mrb[0].mxu0
      %v5224 = vpop.f32.mrb[0].mxu0
      %v5225 = vadd.f32 %v4216, %v5224
      %v5226 = vpop.f32.mrb[0].mxu0
      %5227 = vmatprep.mubr.bf16.mxu0 0
      %5228 = vmatmul.mubr.bf16.gmra.mrb[0].mxu0 %v4184
      %v5229 = vpop.f32.mrb[0].mxu0
      %v5230 = vadd.f32 %v4216, %v5229
      %v5231 = vpop.f32.mrb[0].mxu0
      %v5232 = vpop.f32.mrb[0].mxu0
      %v5233 = vadd.f32 %v4216, %v5232
      %v5234 = vpop.f32.mrb[0].mxu0
      %5235 = vmatprep.mubr.bf16.mxu0 0
      %5236 = vmatmul.mubr.bf16.gmra.mrb[0].mxu0 %v4185
      %v5237 = vpop.f32.mrb[0].mxu0
      %v5238 = vadd.f32 %v4216, %v5237
      %v5239 = vpop.f32.mrb[0].mxu0
      %v5240 = vpop.f32.mrb[0].mxu0
      %v5241 = vadd.f32 %v4216, %v5240
      %v5242 = vpop.f32.mrb[0].mxu0
      %5243 = vmatprep.mubr.bf16.mxu0 0
      %5244 = vmatmul.mubr.bf16.gmra.mrb[0].mxu0 %v4186
      %v5245 = vpop.f32.mrb[0].mxu0
      %v5246 = vadd.f32 %v4216, %v5245
      %v5247 = vpop.f32.mrb[0].mxu0
      %v5248 = vpop.f32.mrb[0].mxu0
      %v5249 = vadd.f32 %v4216, %v5248
      %v5250 = vpop.f32.mrb[0].mxu0
      %5251 = vdwg.mxu0
      %v5252 = vmul.f32 %v4547, 0.5
      %v5253 = vmul.f32 %v4549, 0.5
      %v5254 = vmul.f32 %v4740, 0.5
      %v5255 = vmul.f32 %v4742, 0.5
      %v5256 = vmul.f32 %v4933, 0.5
      %v5257 = vmul.f32 %v4935, 0.5
      %v5258 = vmul.f32 %v5126, 0.5
      %v5259 = vmul.f32 %v4551, 0.5
      %v5260 = vmul.f32 %v4553, 0.5
      %v5261 = vmul.f32 %v4744, 0.5
      %v5262 = vmul.f32 %v4746, 0.5
      %v5263 = vmul.f32 %v4937, 0.5
      %v5264 = vmul.f32 %v4939, 0.5
      %v5265 = vmul.f32 %v5129, 0.5
      %v5266 = vmul.f32 %v4557, 0.5
      %v5267 = vmul.f32 %v4559, 0.5
      %v5268 = vmul.f32 %v4750, 0.5
      %v5269 = vmul.f32 %v4752, 0.5
      %v5270 = vmul.f32 %v4943, 0.5
      %v5271 = vmul.f32 %v4945, 0.5
      %v5272 = vmul.f32 %v5134, 0.5
      %v5273 = vmul.f32 %v4561, 0.5
      %v5274 = vmul.f32 %v4563, 0.5
      %v5275 = vmul.f32 %v4754, 0.5
      %v5276 = vmul.f32 %v4756, 0.5
      %v5277 = vmul.f32 %v4947, 0.5
      %v5278 = vmul.f32 %v4949, 0.5
      %v5279 = vmul.f32 %v5137, 0.5
      %v5280 = vmul.f32 %v4567, 0.5
      %v5281 = vmul.f32 %v4569, 0.5
      %v5282 = vmul.f32 %v4760, 0.5
      %v5283 = vmul.f32 %v4762, 0.5
      %v5284 = vmul.f32 %v4953, 0.5
      %v5285 = vmul.f32 %v4955, 0.5
      %v5286 = vmul.f32 %v5142, 0.5
      %v5287 = vmul.f32 %v4571, 0.5
      %v5288 = vmul.f32 %v4573, 0.5
      %v5289 = vmul.f32 %v4764, 0.5
      %v5290 = vmul.f32 %v4766, 0.5
      %v5291 = vmul.f32 %v4957, 0.5
      %v5292 = vmul.f32 %v4959, 0.5
      %v5293 = vmul.f32 %v5145, 0.5
      %v5294 = vmul.f32 %v4577, 0.5
      %v5295 = vmul.f32 %v4579, 0.5
      %v5296 = vmul.f32 %v4770, 0.5
      %v5297 = vmul.f32 %v4772, 0.5
      %v5298 = vmul.f32 %v4963, 0.5
      %v5299 = vmul.f32 %v4965, 0.5
      %v5300 = vmul.f32 %v5150, 0.5
      %v5301 = vmul.f32 %v4581, 0.5
      %v5302 = vmul.f32 %v4583, 0.5
      %v5303 = vmul.f32 %v4774, 0.5
      %v5304 = vmul.f32 %v4776, 0.5
      %v5305 = vmul.f32 %v4967, 0.5
      %v5306 = vmul.f32 %v4969, 0.5
      %v5307 = vmul.f32 %v5153, 0.5
      %v5308 = vmul.f32 %v4587, 0.5
      %v5309 = vmul.f32 %v4589, 0.5
      %v5310 = vmul.f32 %v4780, 0.5
      %v5311 = vmul.f32 %v4782, 0.5
      %v5312 = vmul.f32 %v4973, 0.5
      %v5313 = vmul.f32 %v4975, 0.5
      %v5314 = vmul.f32 %v5158, 0.5
      %v5315 = vmul.f32 %v4591, 0.5
      %v5316 = vmul.f32 %v4593, 0.5
      %v5317 = vmul.f32 %v4784, 0.5
      %v5318 = vmul.f32 %v4786, 0.5
      %v5319 = vmul.f32 %v4977, 0.5
      %v5320 = vmul.f32 %v4979, 0.5
      %v5321 = vmul.f32 %v5161, 0.5
      %v5322 = vmul.f32 %v4597, 0.5
      %v5323 = vmul.f32 %v4599, 0.5
      %v5324 = vmul.f32 %v4790, 0.5
      %v5325 = vmul.f32 %v4792, 0.5
      %v5326 = vmul.f32 %v4983, 0.5
      %v5327 = vmul.f32 %v4985, 0.5
      %v5328 = vmul.f32 %v5166, 0.5
      %v5329 = vmul.f32 %v4601, 0.5
      %v5330 = vmul.f32 %v4603, 0.5
      %v5331 = vmul.f32 %v4794, 0.5
      %v5332 = vmul.f32 %v4796, 0.5
      %v5333 = vmul.f32 %v4987, 0.5
      %v5334 = vmul.f32 %v4989, 0.5
      %v5335 = vmul.f32 %v5169, 0.5
      %v5336 = vmul.f32 %v4607, 0.5
      %v5337 = vmul.f32 %v4609, 0.5
      %v5338 = vmul.f32 %v4800, 0.5
      %v5339 = vmul.f32 %v4802, 0.5
      %v5340 = vmul.f32 %v4993, 0.5
      %v5341 = vmul.f32 %v4995, 0.5
      %v5342 = vmul.f32 %v5174, 0.5
      %v5343 = vmul.f32 %v4611, 0.5
      %v5344 = vmul.f32 %v4613, 0.5
      %v5345 = vmul.f32 %v4804, 0.5
      %v5346 = vmul.f32 %v4806, 0.5
      %v5347 = vmul.f32 %v4997, 0.5
      %v5348 = vmul.f32 %v4999, 0.5
      %v5349 = vmul.f32 %v5177, 0.5
      %v5350 = vmul.f32 %v4617, 0.5
      %v5351 = vmul.f32 %v4619, 0.5
      %v5352 = vmul.f32 %v4810, 0.5
      %v5353 = vmul.f32 %v4812, 0.5
      %v5354 = vmul.f32 %v5003, 0.5
      %v5355 = vmul.f32 %v5005, 0.5
      %v5356 = vmul.f32 %v5182, 0.5
      %v5357 = vmul.f32 %v4621, 0.5
      %v5358 = vmul.f32 %v4623, 0.5
      %v5359 = vmul.f32 %v4814, 0.5
      %v5360 = vmul.f32 %v4816, 0.5
      %v5361 = vmul.f32 %v5007, 0.5
      %v5362 = vmul.f32 %v5009, 0.5
      %v5363 = vmul.f32 %v5185, 0.5
      %v5364 = vmul.f32 %v4627, 0.5
      %v5365 = vmul.f32 %v4629, 0.5
      %v5366 = vmul.f32 %v4820, 0.5
      %v5367 = vmul.f32 %v4822, 0.5
      %v5368 = vmul.f32 %v5013, 0.5
      %v5369 = vmul.f32 %v5015, 0.5
      %v5370 = vmul.f32 %v5190, 0.5
      %v5371 = vmul.f32 %v4631, 0.5
      %v5372 = vmul.f32 %v4633, 0.5
      %v5373 = vmul.f32 %v4824, 0.5
      %v5374 = vmul.f32 %v4826, 0.5
      %v5375 = vmul.f32 %v5017, 0.5
      %v5376 = vmul.f32 %v5019, 0.5
      %v5377 = vmul.f32 %v5193, 0.5
      %v5378 = vmul.f32 %v4637, 0.5
      %v5379 = vmul.f32 %v4639, 0.5
      %v5380 = vmul.f32 %v4830, 0.5
      %v5381 = vmul.f32 %v4832, 0.5
      %v5382 = vmul.f32 %v5023, 0.5
      %v5383 = vmul.f32 %v5025, 0.5
      %v5384 = vmul.f32 %v5198, 0.5
      %v5385 = vmul.f32 %v4641, 0.5
      %v5386 = vmul.f32 %v4643, 0.5
      %v5387 = vmul.f32 %v4834, 0.5
      %v5388 = vmul.f32 %v4836, 0.5
      %v5389 = vmul.f32 %v5027, 0.5
      %v5390 = vmul.f32 %v5029, 0.5
      %v5391 = vmul.f32 %v5201, 0.5
      %v5392 = vmul.f32 %v4647, 0.5
      %v5393 = vmul.f32 %v4649, 0.5
      %v5394 = vmul.f32 %v4840, 0.5
      %v5395 = vmul.f32 %v4842, 0.5
      %v5396 = vmul.f32 %v5033, 0.5
      %v5397 = vmul.f32 %v5035, 0.5
      %v5398 = vmul.f32 %v5206, 0.5
      %v5399 = vmul.f32 %v4651, 0.5
      %v5400 = vmul.f32 %v4653, 0.5
      %v5401 = vmul.f32 %v4844, 0.5
      %v5402 = vmul.f32 %v4846, 0.5
      %v5403 = vmul.f32 %v5037, 0.5
      %v5404 = vmul.f32 %v5039, 0.5
      %v5405 = vmul.f32 %v5209, 0.5
      %v5406 = vmul.f32 %v4657, 0.5
      %v5407 = vmul.f32 %v4659, 0.5
      %v5408 = vmul.f32 %v4850, 0.5
      %v5409 = vmul.f32 %v4852, 0.5
      %v5410 = vmul.f32 %v5043, 0.5
      %v5411 = vmul.f32 %v5045, 0.5
      %v5412 = vmul.f32 %v5214, 0.5
      %v5413 = vmul.f32 %v4661, 0.5
      %v5414 = vmul.f32 %v4663, 0.5
      %v5415 = vmul.f32 %v4854, 0.5
      %v5416 = vmul.f32 %v4856, 0.5
      %v5417 = vmul.f32 %v5047, 0.5
      %v5418 = vmul.f32 %v5049, 0.5
      %v5419 = vmul.f32 %v5217, 0.5
      %v5420 = vmul.f32 %v4667, 0.5
      %v5421 = vmul.f32 %v4669, 0.5
      %v5422 = vmul.f32 %v4860, 0.5
      %v5423 = vmul.f32 %v4862, 0.5
      %v5424 = vmul.f32 %v5053, 0.5
      %v5425 = vmul.f32 %v5055, 0.5
      %v5426 = vmul.f32 %v5222, 0.5
      %v5427 = vmul.f32 %v4671, 0.5
      %v5428 = vmul.f32 %v4673, 0.5
      %v5429 = vmul.f32 %v4864, 0.5
      %v5430 = vmul.f32 %v4866, 0.5
      %v5431 = vmul.f32 %v5057, 0.5
      %v5432 = vmul.f32 %v5059, 0.5
      %v5433 = vmul.f32 %v5225, 0.5
      %v5434 = vmul.f32 %v4677, 0.5
      %v5435 = vmul.f32 %v4679, 0.5
      %v5436 = vmul.f32 %v4870, 0.5
      %v5437 = vmul.f32 %v4872, 0.5
      %v5438 = vmul.f32 %v5063, 0.5
      %v5439 = vmul.f32 %v5065, 0.5
      %v5440 = vmul.f32 %v5230, 0.5
      %v5441 = vmul.f32 %v4681, 0.5
      %v5442 = vmul.f32 %v4683, 0.5
      %v5443 = vmul.f32 %v4874, 0.5
      %v5444 = vmul.f32 %v4876, 0.5
      %v5445 = vmul.f32 %v5067, 0.5
      %v5446 = vmul.f32 %v5069, 0.5
      %v5447 = vmul.f32 %v5233, 0.5
      %v5448 = vmul.f32 %v4687, 0.5
      %v5449 = vmul.f32 %v4689, 0.5
      %v5450 = vmul.f32 %v4880, 0.5
      %v5451 = vmul.f32 %v4882, 0.5
      %v5452 = vmul.f32 %v5073, 0.5
      %v5453 = vmul.f32 %v5075, 0.5
      %v5454 = vmul.f32 %v5238, 0.5
      %v5455 = vmul.f32 %v4691, 0.5
      %v5456 = vmul.f32 %v4693, 0.5
      %v5457 = vmul.f32 %v4884, 0.5
      %v5458 = vmul.f32 %v4886, 0.5
      %v5459 = vmul.f32 %v5077, 0.5
      %v5460 = vmul.f32 %v5079, 0.5
      %v5461 = vmul.f32 %v5241, 0.5
      %v5462 = vmul.f32 %v4697, 0.5
      %v5463 = vmul.f32 %v4699, 0.5
      %v5464 = vmul.f32 %v4890, 0.5
      %v5465 = vmul.f32 %v4892, 0.5
      %v5466 = vmul.f32 %v5083, 0.5
      %v5467 = vmul.f32 %v5085, 0.5
      %v5468 = vmul.f32 %v5246, 0.5
      %v5469 = vmul.f32 %v4701, 0.5
      %v5470 = vmul.f32 %v4703, 0.5
      %v5471 = vmul.f32 %v4894, 0.5
      %v5472 = vmul.f32 %v4896, 0.5
      %v5473 = vmul.f32 %v5087, 0.5
      %v5474 = vmul.f32 %v5089, 0.5
      %v5475 = vmul.f32 %v5249, 0.5
      %v5476 = vtanh.pop %v5252
      %v5477 = vtanh.pop %v5253
      %v5478 = vtanh.pop %v5254
      %v5479 = vtanh.pop %v5255
      %v5480 = vtanh.pop %v5256
      %v5481 = vtanh.pop %v5257
      %v5482 = vtanh.pop %v5258
      %v5483 = vtanh.pop %v5259
      %v5484 = vtanh.pop %v5260
      %v5485 = vtanh.pop %v5261
      %v5486 = vtanh.pop %v5262
      %v5487 = vtanh.pop %v5263
      %v5488 = vtanh.pop %v5264
      %v5489 = vtanh.pop %v5265
      %v5490 = vtanh.pop %v5266
      %v5491 = vtanh.pop %v5267
      %v5492 = vtanh.pop %v5268
      %v5493 = vtanh.pop %v5269
      %v5494 = vtanh.pop %v5270
      %v5495 = vtanh.pop %v5271
      %v5496 = vtanh.pop %v5272
      %v5497 = vtanh.pop %v5273
      %v5498 = vtanh.pop %v5274
      %v5499 = vtanh.pop %v5275
      %v5500 = vtanh.pop %v5276
      %v5501 = vtanh.pop %v5277
      %v5502 = vtanh.pop %v5278
      %v5503 = vtanh.pop %v5279
      %v5504 = vtanh.pop %v5280
      %v5505 = vtanh.pop %v5281
      %v5506 = vtanh.pop %v5282
      %v5507 = vtanh.pop %v5283
      %v5508 = vtanh.pop %v5284
      %v5509 = vtanh.pop %v5285
      %v5510 = vtanh.pop %v5286
      %v5511 = vtanh.pop %v5287
      %v5512 = vtanh.pop %v5288
      %v5513 = vtanh.pop %v5289
      %v5514 = vtanh.pop %v5290
      %v5515 = vtanh.pop %v5291
      %v5516 = vtanh.pop %v5292
      %v5517 = vtanh.pop %v5293
      %v5518 = vtanh.pop %v5294
      %v5519 = vtanh.pop %v5295
      %v5520 = vtanh.pop %v5296
      %v5521 = vtanh.pop %v5297
      %v5522 = vtanh.pop %v5298
      %v5523 = vtanh.pop %v5299
      %v5524 = vtanh.pop %v5300
      %v5525 = vtanh.pop %v5301
      %v5526 = vtanh.pop %v5302
      %v5527 = vtanh.pop %v5303
      %v5528 = vtanh.pop %v5304
      %v5529 = vtanh.pop %v5305
      %v5530 = vtanh.pop %v5306
      %v5531 = vtanh.pop %v5307
      %v5532 = vtanh.pop %v5308
      %v5533 = vtanh.pop %v5309
      %v5534 = vtanh.pop %v5310
      %v5535 = vtanh.pop %v5311
      %v5536 = vtanh.pop %v5312
      %v5537 = vtanh.pop %v5313
      %v5538 = vtanh.pop %v5314
      %v5539 = vtanh.pop %v5315
      %v5540 = vtanh.pop %v5316
      %v5541 = vtanh.pop %v5317
      %v5542 = vtanh.pop %v5318
      %v5543 = vtanh.pop %v5319
      %v5544 = vtanh.pop %v5320
      %v5545 = vtanh.pop %v5321
      %v5546 = vtanh.pop %v5322
      %v5547 = vtanh.pop %v5323
      %v5548 = vtanh.pop %v5324
      %v5549 = vtanh.pop %v5325
      %v5550 = vtanh.pop %v5326
      %v5551 = vtanh.pop %v5327
      %v5552 = vtanh.pop %v5328
      %v5553 = vtanh.pop %v5329
      %v5554 = vtanh.pop %v5330
      %v5555 = vtanh.pop %v5331
      %v5556 = vtanh.pop %v5332
      %v5557 = vtanh.pop %v5333
      %v5558 = vtanh.pop %v5334
      %v5559 = vtanh.pop %v5335
      %v5560 = vtanh.pop %v5336
      %v5561 = vtanh.pop %v5337
      %v5562 = vtanh.pop %v5338
      %v5563 = vtanh.pop %v5339
      %v5564 = vtanh.pop %v5340
      %v5565 = vtanh.pop %v5341
      %v5566 = vtanh.pop %v5342
      %v5567 = vtanh.pop %v5343
      %v5568 = vtanh.pop %v5344
      %v5569 = vtanh.pop %v5345
      %v5570 = vtanh.pop %v5346
      %v5571 = vtanh.pop %v5347
      %v5572 = vtanh.pop %v5348
      %v5573 = vtanh.pop %v5349
      %v5574 = vtanh.pop %v5350
      %v5575 = vtanh.pop %v5351
      %v5576 = vtanh.pop %v5352
      %v5577 = vtanh.pop %v5353
      %v5578 = vtanh.pop %v5354
      %v5579 = vtanh.pop %v5355
      %v5580 = vtanh.pop %v5356
      %v5581 = vtanh.pop %v5357
      %v5582 = vtanh.pop %v5358
      %v5583 = vtanh.pop %v5359
      %v5584 = vtanh.pop %v5360
      %v5585 = vtanh.pop %v5361
      %v5586 = vtanh.pop %v5362
      %v5587 = vtanh.pop %v5363
      %v5588 = vtanh.pop %v5364
      %v5589 = vtanh.pop %v5365
      %v5590 = vtanh.pop %v5366
      %v5591 = vtanh.pop %v5367
      %v5592 = vtanh.pop %v5368
      %v5593 = vtanh.pop %v5369
      %v5594 = vtanh.pop %v5370
      %v5595 = vtanh.pop %v5371
      %v5596 = vtanh.pop %v5372
      %v5597 = vtanh.pop %v5373
      %v5598 = vtanh.pop %v5374
      %v5599 = vtanh.pop %v5375
      %v5600 = vtanh.pop %v5376
      %v5601 = vtanh.pop %v5377
      %v5602 = vtanh.pop %v5378
      %v5603 = vtanh.pop %v5379
      %v5604 = vtanh.pop %v5380
      %v5605 = vtanh.pop %v5381
      %v5606 = vtanh.pop %v5382
      %v5607 = vtanh.pop %v5383
      %v5608 = vtanh.pop %v5384
      %v5609 = vtanh.pop %v5385
      %v5610 = vtanh.pop %v5386
      %v5611 = vtanh.pop %v5387
      %v5612 = vtanh.pop %v5388
      %v5613 = vtanh.pop %v5389
      %v5614 = vtanh.pop %v5390
      %v5615 = vtanh.pop %v5391
      %v5616 = vtanh.pop %v5392
      %v5617 = vtanh.pop %v5393
      %v5618 = vtanh.pop %v5394
      %v5619 = vtanh.pop %v5395
      %v5620 = vtanh.pop %v5396
      %v5621 = vtanh.pop %v5397
      %v5622 = vtanh.pop %v5398
      %v5623 = vtanh.pop %v5399
      %v5624 = vtanh.pop %v5400
      %v5625 = vtanh.pop %v5401
      %v5626 = vtanh.pop %v5402
      %v5627 = vtanh.pop %v5403
      %v5628 = vtanh.pop %v5404
      %v5629 = vtanh.pop %v5405
      %v5630 = vtanh.pop %v5406
      %v5631 = vtanh.pop %v5407
      %v5632 = vtanh.pop %v5408
      %v5633 = vtanh.pop %v5409
      %v5634 = vtanh.pop %v5410
      %v5635 = vtanh.pop %v5411
      %v5636 = vtanh.pop %v5412
      %v5637 = vtanh.pop %v5413
      %v5638 = vtanh.pop %v5414
      %v5639 = vtanh.pop %v5415
      %v5640 = vtanh.pop %v5416
      %v5641 = vtanh.pop %v5417
      %v5642 = vtanh.pop %v5418
      %v5643 = vtanh.pop %v5419
      %v5644 = vtanh.pop %v5420
      %v5645 = vtanh.pop %v5421
      %v5646 = vtanh.pop %v5422
      %v5647 = vtanh.pop %v5423
      %v5648 = vtanh.pop %v5424
      %v5649 = vtanh.pop %v5425
      %v5650 = vtanh.pop %v5426
      %v5651 = vtanh.pop %v5427
      %v5652 = vtanh.pop %v5428
      %v5653 = vtanh.pop %v5429
      %v5654 = vtanh.pop %v5430
      %v5655 = vtanh.pop %v5431
      %v5656 = vtanh.pop %v5432
      %v5657 = vtanh.pop %v5433
      %v5658 = vtanh.pop %v5434
      %v5659 = vtanh.pop %v5435
      %v5660 = vtanh.pop %v5436
      %v5661 = vtanh.pop %v5437
      %v5662 = vtanh.pop %v5438
      %v5663 = vtanh.pop %v5439
      %v5664 = vtanh.pop %v5440
      %v5665 = vtanh.pop %v5441
      %v5666 = vtanh.pop %v5442
      %v5667 = vtanh.pop %v5443
      %v5668 = vtanh.pop %v5444
      %v5669 = vtanh.pop %v5445
      %v5670 = vtanh.pop %v5446
      %v5671 = vtanh.pop %v5447
      %v5672 = vtanh.pop %v5448
      %v5673 = vtanh.pop %v5449
      %v5674 = vtanh.pop %v5450
      %v5675 = vtanh.pop %v5451
      %v5676 = vtanh.pop %v5452
      %v5677 = vtanh.pop %v5453
      %v5678 = vtanh.pop %v5454
      %v5679 = vtanh.pop %v5455
      %v5680 = vtanh.pop %v5456
      %v5681 = vtanh.pop %v5457
      %v5682 = vtanh.pop %v5458
      %v5683 = vtanh.pop %v5459
      %v5684 = vtanh.pop %v5460
      %v5685 = vtanh.pop %v5461
      %v5686 = vtanh.pop %v5462
      %v5687 = vtanh.pop %v5463
      %v5688 = vtanh.pop %v5464
      %v5689 = vtanh.pop %v5465
      %v5690 = vtanh.pop %v5466
      %v5691 = vtanh.pop %v5467
      %v5692 = vtanh.pop %v5468
      %v5693 = vtanh.pop %v5469
      %v5694 = vtanh.pop %v5470
      %v5695 = vtanh.pop %v5471
      %v5696 = vtanh.pop %v5472
      %v5697 = vtanh.pop %v5473
      %v5698 = vtanh.pop %v5474
      %v5699 = vtanh.pop %v5475
      %v5700 = vmul.f32 %v5476, 0.5
      %v5701 = vmul.f32 %v5477, 0.5
      %v5702 = vmul.f32 %v5478, 0.5
      %v5703 = vmul.f32 %v5479, 0.5
      %v5704 = vmul.f32 %v5480, 0.5
      %v5705 = vmul.f32 %v5481, 0.5
      %v5706 = vmul.f32 %v5482, 0.5
      %v5707 = vmul.f32 %v5483, 0.5
      %v5708 = vmul.f32 %v5484, 0.5
      %v5709 = vmul.f32 %v5485, 0.5
      %v5710 = vmul.f32 %v5486, 0.5
      %v5711 = vmul.f32 %v5487, 0.5
      %v5712 = vmul.f32 %v5488, 0.5
      %v5713 = vmul.f32 %v5489, 0.5
      %v5714 = vmul.f32 %v5490, 0.5
      %v5715 = vmul.f32 %v5491, 0.5
      %v5716 = vmul.f32 %v5492, 0.5
      %v5717 = vmul.f32 %v5493, 0.5
      %v5718 = vmul.f32 %v5494, 0.5
      %v5719 = vmul.f32 %v5495, 0.5
      %v5720 = vmul.f32 %v5496, 0.5
      %v5721 = vmul.f32 %v5497, 0.5
      %v5722 = vmul.f32 %v5498, 0.5
      %v5723 = vmul.f32 %v5499, 0.5
      %v5724 = vmul.f32 %v5500, 0.5
      %v5725 = vmul.f32 %v5501, 0.5
      %v5726 = vmul.f32 %v5502, 0.5
      %v5727 = vmul.f32 %v5503, 0.5
      %v5728 = vmul.f32 %v5504, 0.5
      %v5729 = vmul.f32 %v5505, 0.5
      %v5730 = vmul.f32 %v5506, 0.5
      %v5731 = vmul.f32 %v5507, 0.5
      %v5732 = vmul.f32 %v5508, 0.5
      %v5733 = vmul.f32 %v5509, 0.5
      %v5734 = vmul.f32 %v5510, 0.5
      %v5735 = vmul.f32 %v5511, 0.5
      %v5736 = vmul.f32 %v5512, 0.5
      %v5737 = vmul.f32 %v5513, 0.5
      %v5738 = vmul.f32 %v5514, 0.5
      %v5739 = vmul.f32 %v5515, 0.5
      %v5740 = vmul.f32 %v5516, 0.5
      %v5741 = vmul.f32 %v5517, 0.5
      %v5742 = vmul.f32 %v5518, 0.5
      %v5743 = vmul.f32 %v5519, 0.5
      %v5744 = vmul.f32 %v5520, 0.5
      %v5745 = vmul.f32 %v5521, 0.5
      %v5746 = vmul.f32 %v5522, 0.5
      %v5747 = vmul.f32 %v5523, 0.5
      %v5748 = vmul.f32 %v5524, 0.5
      %v5749 = vmul.f32 %v5525, 0.5
      %v5750 = vmul.f32 %v5526, 0.5
      %v5751 = vmul.f32 %v5527, 0.5
      %v5752 = vmul.f32 %v5528, 0.5
      %v5753 = vmul.f32 %v5529, 0.5
      %v5754 = vmul.f32 %v5530, 0.5
      %v5755 = vmul.f32 %v5531, 0.5
      %v5756 = vmul.f32 %v5532, 0.5
      %v5757 = vmul.f32 %v5533, 0.5
      %v5758 = vmul.f32 %v5534, 0.5
      %v5759 = vmul.f32 %v5535, 0.5
      %v5760 = vmul.f32 %v5536, 0.5
      %v5761 = vmul.f32 %v5537, 0.5
      %v5762 = vmul.f32 %v5538, 0.5
      %v5763 = vmul.f32 %v5539, 0.5
      %v5764 = vmul.f32 %v5540, 0.5
      %v5765 = vmul.f32 %v5541, 0.5
      %v5766 = vmul.f32 %v5542, 0.5
      %v5767 = vmul.f32 %v5543, 0.5
      %v5768 = vmul.f32 %v5544, 0.5
      %v5769 = vmul.f32 %v5545, 0.5
      %v5770 = vmul.f32 %v5546, 0.5
      %v5771 = vmul.f32 %v5547, 0.5
      %v5772 = vmul.f32 %v5548, 0.5
      %v5773 = vmul.f32 %v5549, 0.5
      %v5774 = vmul.f32 %v5550, 0.5
      %v5775 = vmul.f32 %v5551, 0.5
      %v5776 = vmul.f32 %v5552, 0.5
      %v5777 = vmul.f32 %v5553, 0.5
      %v5778 = vmul.f32 %v5554, 0.5
      %v5779 = vmul.f32 %v5555, 0.5
      %v5780 = vmul.f32 %v5556, 0.5
      %v5781 = vmul.f32 %v5557, 0.5
      %v5782 = vmul.f32 %v5558, 0.5
      %v5783 = vmul.f32 %v5559, 0.5
      %v5784 = vmul.f32 %v5560, 0.5
      %v5785 = vmul.f32 %v5561, 0.5
      %v5786 = vmul.f32 %v5562, 0.5
      %v5787 = vmul.f32 %v5563, 0.5
      %v5788 = vmul.f32 %v5564, 0.5
      %v5789 = vmul.f32 %v5565, 0.5
      %v5790 = vmul.f32 %v5566, 0.5
      %v5791 = vmul.f32 %v5567, 0.5
      %v5792 = vmul.f32 %v5568, 0.5
      %v5793 = vmul.f32 %v5569, 0.5
      %v5794 = vmul.f32 %v5570, 0.5
      %v5795 = vmul.f32 %v5571, 0.5
      %v5796 = vmul.f32 %v5572, 0.5
      %v5797 = vmul.f32 %v5573, 0.5
      %v5798 = vmul.f32 %v5574, 0.5
      %v5799 = vmul.f32 %v5575, 0.5
      %v5800 = vmul.f32 %v5576, 0.5
      %v5801 = vmul.f32 %v5577, 0.5
      %v5802 = vmul.f32 %v5578, 0.5
      %v5803 = vmul.f32 %v5579, 0.5
      %v5804 = vmul.f32 %v5580, 0.5
      %v5805 = vmul.f32 %v5581, 0.5
      %v5806 = vmul.f32 %v5582, 0.5
      %v5807 = vmul.f32 %v5583, 0.5
      %v5808 = vmul.f32 %v5584, 0.5
      %v5809 = vmul.f32 %v5585, 0.5
      %v5810 = vmul.f32 %v5586, 0.5
      %v5811 = vmul.f32 %v5587, 0.5
      %v5812 = vmul.f32 %v5588, 0.5
      %v5813 = vmul.f32 %v5589, 0.5
      %v5814 = vmul.f32 %v5590, 0.5
      %v5815 = vmul.f32 %v5591, 0.5
      %v5816 = vmul.f32 %v5592, 0.5
      %v5817 = vmul.f32 %v5593, 0.5
      %v5818 = vmul.f32 %v5594, 0.5
      %v5819 = vmul.f32 %v5595, 0.5
      %v5820 = vmul.f32 %v5596, 0.5
      %v5821 = vmul.f32 %v5597, 0.5
      %v5822 = vmul.f32 %v5598, 0.5
      %v5823 = vmul.f32 %v5599, 0.5
      %v5824 = vmul.f32 %v5600, 0.5
      %v5825 = vmul.f32 %v5601, 0.5
      %v5826 = vmul.f32 %v5602, 0.5
      %v5827 = vmul.f32 %v5603, 0.5
      %v5828 = vmul.f32 %v5604, 0.5
      %v5829 = vmul.f32 %v5605, 0.5
      %v5830 = vmul.f32 %v5606, 0.5
      %v5831 = vmul.f32 %v5607, 0.5
      %v5832 = vmul.f32 %v5608, 0.5
      %v5833 = vmul.f32 %v5609, 0.5
      %v5834 = vmul.f32 %v5610, 0.5
      %v5835 = vmul.f32 %v5611, 0.5
      %v5836 = vmul.f32 %v5612, 0.5
      %v5837 = vmul.f32 %v5613, 0.5
      %v5838 = vmul.f32 %v5614, 0.5
      %v5839 = vmul.f32 %v5615, 0.5
      %v5840 = vmul.f32 %v5616, 0.5
      %v5841 = vmul.f32 %v5617, 0.5
      %v5842 = vmul.f32 %v5618, 0.5
      %v5843 = vmul.f32 %v5619, 0.5
      %v5844 = vmul.f32 %v5620, 0.5
      %v5845 = vmul.f32 %v5621, 0.5
      %v5846 = vmul.f32 %v5622, 0.5
      %v5847 = vmul.f32 %v5623, 0.5
      %v5848 = vmul.f32 %v5624, 0.5
      %v5849 = vmul.f32 %v5625, 0.5
      %v5850 = vmul.f32 %v5626, 0.5
      %v5851 = vmul.f32 %v5627, 0.5
      %v5852 = vmul.f32 %v5628, 0.5
      %v5853 = vmul.f32 %v5629, 0.5
      %v5854 = vmul.f32 %v5630, 0.5
      %v5855 = vmul.f32 %v5631, 0.5
      %v5856 = vmul.f32 %v5632, 0.5
      %v5857 = vmul.f32 %v5633, 0.5
      %v5858 = vmul.f32 %v5634, 0.5
      %v5859 = vmul.f32 %v5635, 0.5
      %v5860 = vmul.f32 %v5636, 0.5
      %v5861 = vmul.f32 %v5637, 0.5
      %v5862 = vmul.f32 %v5638, 0.5
      %v5863 = vmul.f32 %v5639, 0.5
      %v5864 = vmul.f32 %v5640, 0.5
      %v5865 = vmul.f32 %v5641, 0.5
      %v5866 = vmul.f32 %v5642, 0.5
      %v5867 = vmul.f32 %v5643, 0.5
      %v5868 = vmul.f32 %v5644, 0.5
      %v5869 = vmul.f32 %v5645, 0.5
      %v5870 = vmul.f32 %v5646, 0.5
      %v5871 = vmul.f32 %v5647, 0.5
      %v5872 = vmul.f32 %v5648, 0.5
      %v5873 = vmul.f32 %v5649, 0.5
      %v5874 = vmul.f32 %v5650, 0.5
      %v5875 = vmul.f32 %v5651, 0.5
      %v5876 = vmul.f32 %v5652, 0.5
      %v5877 = vmul.f32 %v5653, 0.5
      %v5878 = vmul.f32 %v5654, 0.5
      %v5879 = vmul.f32 %v5655, 0.5
      %v5880 = vmul.f32 %v5656, 0.5
      %v5881 = vmul.f32 %v5657, 0.5
      %v5882 = vmul.f32 %v5658, 0.5
      %v5883 = vmul.f32 %v5659, 0.5
      %v5884 = vmul.f32 %v5660, 0.5
      %v5885 = vmul.f32 %v5661, 0.5
      %v5886 = vmul.f32 %v5662, 0.5
      %v5887 = vmul.f32 %v5663, 0.5
      %v5888 = vmul.f32 %v5664, 0.5
      %v5889 = vmul.f32 %v5665, 0.5
      %v5890 = vmul.f32 %v5666, 0.5
      %v5891 = vmul.f32 %v5667, 0.5
      %v5892 = vmul.f32 %v5668, 0.5
      %v5893 = vmul.f32 %v5669, 0.5
      %v5894 = vmul.f32 %v5670, 0.5
      %v5895 = vmul.f32 %v5671, 0.5
      %v5896 = vmul.f32 %v5672, 0.5
      %v5897 = vmul.f32 %v5673, 0.5
      %v5898 = vmul.f32 %v5674, 0.5
      %v5899 = vmul.f32 %v5675, 0.5
      %v5900 = vmul.f32 %v5676, 0.5
      %v5901 = vmul.f32 %v5677, 0.5
      %v5902 = vmul.f32 %v5678, 0.5
      %v5903 = vmul.f32 %v5679, 0.5
      %v5904 = vmul.f32 %v5680, 0.5
      %v5905 = vmul.f32 %v5681, 0.5
      %v5906 = vmul.f32 %v5682, 0.5
      %v5907 = vmul.f32 %v5683, 0.5
      %v5908 = vmul.f32 %v5684, 0.5
      %v5909 = vmul.f32 %v5685, 0.5
      %v5910 = vmul.f32 %v5686, 0.5
      %v5911 = vmul.f32 %v5687, 0.5
      %v5912 = vmul.f32 %v5688, 0.5
      %v5913 = vmul.f32 %v5689, 0.5
      %v5914 = vmul.f32 %v5690, 0.5
      %v5915 = vmul.f32 %v5691, 0.5
      %v5916 = vmul.f32 %v5692, 0.5
      %v5917 = vmul.f32 %v5693, 0.5
      %v5918 = vmul.f32 %v5694, 0.5
      %v5919 = vmul.f32 %v5695, 0.5
      %v5920 = vmul.f32 %v5696, 0.5
      %v5921 = vmul.f32 %v5697, 0.5
      %v5922 = vmul.f32 %v5698, 0.5
      %v5923 = vmul.f32 %v5699, 0.5
      %v5924 = vadd.f32 %v5700, 0.5
      %v5925 = vadd.f32 %v5701, 0.5
      %v5926 = vadd.f32 %v5702, 0.5
      %v5927 = vadd.f32 %v5703, 0.5
      %v5928 = vadd.f32 %v5704, 0.5
      %v5929 = vadd.f32 %v5705, 0.5
      %v5930 = vadd.f32 %v5706, 0.5
      %v5931 = vadd.f32 %v5707, 0.5
      %v5932 = vadd.f32 %v5708, 0.5
      %v5933 = vadd.f32 %v5709, 0.5
      %v5934 = vadd.f32 %v5710, 0.5
      %v5935 = vadd.f32 %v5711, 0.5
      %v5936 = vadd.f32 %v5712, 0.5
      %v5937 = vadd.f32 %v5713, 0.5
      %v5938 = vadd.f32 %v5714, 0.5
      %v5939 = vadd.f32 %v5715, 0.5
      %v5940 = vadd.f32 %v5716, 0.5
      %v5941 = vadd.f32 %v5717, 0.5
      %v5942 = vadd.f32 %v5718, 0.5
      %v5943 = vadd.f32 %v5719, 0.5
      %v5944 = vadd.f32 %v5720, 0.5
      %v5945 = vadd.f32 %v5721, 0.5
      %v5946 = vadd.f32 %v5722, 0.5
      %v5947 = vadd.f32 %v5723, 0.5
      %v5948 = vadd.f32 %v5724, 0.5
      %v5949 = vadd.f32 %v5725, 0.5
      %v5950 = vadd.f32 %v5726, 0.5
      %v5951 = vadd.f32 %v5727, 0.5
      %v5952 = vadd.f32 %v5728, 0.5
      %v5953 = vadd.f32 %v5729, 0.5
      %v5954 = vadd.f32 %v5730, 0.5
      %v5955 = vadd.f32 %v5731, 0.5
      %v5956 = vadd.f32 %v5732, 0.5
      %v5957 = vadd.f32 %v5733, 0.5
      %v5958 = vadd.f32 %v5734, 0.5
      %v5959 = vadd.f32 %v5735, 0.5
      %v5960 = vadd.f32 %v5736, 0.5
      %v5961 = vadd.f32 %v5737, 0.5
      %v5962 = vadd.f32 %v5738, 0.5
      %v5963 = vadd.f32 %v5739, 0.5
      %v5964 = vadd.f32 %v5740, 0.5
      %v5965 = vadd.f32 %v5741, 0.5
      %v5966 = vadd.f32 %v5742, 0.5
      %v5967 = vadd.f32 %v5743, 0.5
      %v5968 = vadd.f32 %v5744, 0.5
      %v5969 = vadd.f32 %v5745, 0.5
      %v5970 = vadd.f32 %v5746, 0.5
      %v5971 = vadd.f32 %v5747, 0.5
      %v5972 = vadd.f32 %v5748, 0.5
      %v5973 = vadd.f32 %v5749, 0.5
      %v5974 = vadd.f32 %v5750, 0.5
      %v5975 = vadd.f32 %v5751, 0.5
      %v5976 = vadd.f32 %v5752, 0.5
      %v5977 = vadd.f32 %v5753, 0.5
      %v5978 = vadd.f32 %v5754, 0.5
      %v5979 = vadd.f32 %v5755, 0.5
      %v5980 = vadd.f32 %v5756, 0.5
      %v5981 = vadd.f32 %v5757, 0.5
      %v5982 = vadd.f32 %v5758, 0.5
      %v5983 = vadd.f32 %v5759, 0.5
      %v5984 = vadd.f32 %v5760, 0.5
      %v5985 = vadd.f32 %v5761, 0.5
      %v5986 = vadd.f32 %v5762, 0.5
      %v5987 = vadd.f32 %v5763, 0.5
      %v5988 = vadd.f32 %v5764, 0.5
      %v5989 = vadd.f32 %v5765, 0.5
      %v5990 = vadd.f32 %v5766, 0.5
      %v5991 = vadd.f32 %v5767, 0.5
      %v5992 = vadd.f32 %v5768, 0.5
      %v5993 = vadd.f32 %v5769, 0.5
      %v5994 = vadd.f32 %v5770, 0.5
      %v5995 = vadd.f32 %v5771, 0.5
      %v5996 = vadd.f32 %v5772, 0.5
      %v5997 = vadd.f32 %v5773, 0.5
      %v5998 = vadd.f32 %v5774, 0.5
      %v5999 = vadd.f32 %v5775, 0.5
      %v6000 = vadd.f32 %v5776, 0.5
      %v6001 = vadd.f32 %v5777, 0.5
      %v6002 = vadd.f32 %v5778, 0.5
      %v6003 = vadd.f32 %v5779, 0.5
      %v6004 = vadd.f32 %v5780, 0.5
      %v6005 = vadd.f32 %v5781, 0.5
      %v6006 = vadd.f32 %v5782, 0.5
      %v6007 = vadd.f32 %v5783, 0.5
      %v6008 = vadd.f32 %v5784, 0.5
      %v6009 = vadd.f32 %v5785, 0.5
      %v6010 = vadd.f32 %v5786, 0.5
      %v6011 = vadd.f32 %v5787, 0.5
      %v6012 = vadd.f32 %v5788, 0.5
      %v6013 = vadd.f32 %v5789, 0.5
      %v6014 = vadd.f32 %v5790, 0.5
      %v6015 = vadd.f32 %v5791, 0.5
      %v6016 = vadd.f32 %v5792, 0.5
      %v6017 = vadd.f32 %v5793, 0.5
      %v6018 = vadd.f32 %v5794, 0.5
      %v6019 = vadd.f32 %v5795, 0.5
      %v6020 = vadd.f32 %v5796, 0.5
      %v6021 = vadd.f32 %v5797, 0.5
      %v6022 = vadd.f32 %v5798, 0.5
      %v6023 = vadd.f32 %v5799, 0.5
      %v6024 = vadd.f32 %v5800, 0.5
      %v6025 = vadd.f32 %v5801, 0.5
      %v6026 = vadd.f32 %v5802, 0.5
      %v6027 = vadd.f32 %v5803, 0.5
      %v6028 = vadd.f32 %v5804, 0.5
      %v6029 = vadd.f32 %v5805, 0.5
      %v6030 = vadd.f32 %v5806, 0.5
      %v6031 = vadd.f32 %v5807, 0.5
      %v6032 = vadd.f32 %v5808, 0.5
      %v6033 = vadd.f32 %v5809, 0.5
      %v6034 = vadd.f32 %v5810, 0.5
      %v6035 = vadd.f32 %v5811, 0.5
      %v6036 = vadd.f32 %v5812, 0.5
      %v6037 = vadd.f32 %v5813, 0.5
      %v6038 = vadd.f32 %v5814, 0.5
      %v6039 = vadd.f32 %v5815, 0.5
      %v6040 = vadd.f32 %v5816, 0.5
      %v6041 = vadd.f32 %v5817, 0.5
      %v6042 = vadd.f32 %v5818, 0.5
      %v6043 = vadd.f32 %v5819, 0.5
      %v6044 = vadd.f32 %v5820, 0.5
      %v6045 = vadd.f32 %v5821, 0.5
      %v6046 = vadd.f32 %v5822, 0.5
      %v6047 = vadd.f32 %v5823, 0.5
      %v6048 = vadd.f32 %v5824, 0.5
      %v6049 = vadd.f32 %v5825, 0.5
      %v6050 = vadd.f32 %v5826, 0.5
      %v6051 = vadd.f32 %v5827, 0.5
      %v6052 = vadd.f32 %v5828, 0.5
      %v6053 = vadd.f32 %v5829, 0.5
      %v6054 = vadd.f32 %v5830, 0.5
      %v6055 = vadd.f32 %v5831, 0.5
      %v6056 = vadd.f32 %v5832, 0.5
      %v6057 = vadd.f32 %v5833, 0.5
      %v6058 = vadd.f32 %v5834, 0.5
      %v6059 = vadd.f32 %v5835, 0.5
      %v6060 = vadd.f32 %v5836, 0.5
      %v6061 = vadd.f32 %v5837, 0.5
      %v6062 = vadd.f32 %v5838, 0.5
      %v6063 = vadd.f32 %v5839, 0.5
      %v6064 = vadd.f32 %v5840, 0.5
      %v6065 = vadd.f32 %v5841, 0.5
      %v6066 = vadd.f32 %v5842, 0.5
      %v6067 = vadd.f32 %v5843, 0.5
      %v6068 = vadd.f32 %v5844, 0.5
      %v6069 = vadd.f32 %v5845, 0.5
      %v6070 = vadd.f32 %v5846, 0.5
      %v6071 = vadd.f32 %v5847, 0.5
      %v6072 = vadd.f32 %v5848, 0.5
      %v6073 = vadd.f32 %v5849, 0.5
      %v6074 = vadd.f32 %v5850, 0.5
      %v6075 = vadd.f32 %v5851, 0.5
      %v6076 = vadd.f32 %v5852, 0.5
      %v6077 = vadd.f32 %v5853, 0.5
      %v6078 = vadd.f32 %v5854, 0.5
      %v6079 = vadd.f32 %v5855, 0.5
      %v6080 = vadd.f32 %v5856, 0.5
      %v6081 = vadd.f32 %v5857, 0.5
      %v6082 = vadd.f32 %v5858, 0.5
      %v6083 = vadd.f32 %v5859, 0.5
      %v6084 = vadd.f32 %v5860, 0.5
      %v6085 = vadd.f32 %v5861, 0.5
      %v6086 = vadd.f32 %v5862, 0.5
      %v6087 = vadd.f32 %v5863, 0.5
      %v6088 = vadd.f32 %v5864, 0.5
      %v6089 = vadd.f32 %v5865, 0.5
      %v6090 = vadd.f32 %v5866, 0.5
      %v6091 = vadd.f32 %v5867, 0.5
      %v6092 = vadd.f32 %v5868, 0.5
      %v6093 = vadd.f32 %v5869, 0.5
      %v6094 = vadd.f32 %v5870, 0.5
      %v6095 = vadd.f32 %v5871, 0.5
      %v6096 = vadd.f32 %v5872, 0.5
      %v6097 = vadd.f32 %v5873, 0.5
      %v6098 = vadd.f32 %v5874, 0.5
      %v6099 = vadd.f32 %v5875, 0.5
      %v6100 = vadd.f32 %v5876, 0.5
      %v6101 = vadd.f32 %v5877, 0.5
      %v6102 = vadd.f32 %v5878, 0.5
      %v6103 = vadd.f32 %v5879, 0.5
      %v6104 = vadd.f32 %v5880, 0.5
      %v6105 = vadd.f32 %v5881, 0.5
      %v6106 = vadd.f32 %v5882, 0.5
      %v6107 = vadd.f32 %v5883, 0.5
      %v6108 = vadd.f32 %v5884, 0.5
      %v6109 = vadd.f32 %v5885, 0.5
      %v6110 = vadd.f32 %v5886, 0.5
      %v6111 = vadd.f32 %v5887, 0.5
      %v6112 = vadd.f32 %v5888, 0.5
      %v6113 = vadd.f32 %v5889, 0.5
      %v6114 = vadd.f32 %v5890, 0.5
      %v6115 = vadd.f32 %v5891, 0.5
      %v6116 = vadd.f32 %v5892, 0.5
      %v6117 = vadd.f32 %v5893, 0.5
      %v6118 = vadd.f32 %v5894, 0.5
      %v6119 = vadd.f32 %v5895, 0.5
      %v6120 = vadd.f32 %v5896, 0.5
      %v6121 = vadd.f32 %v5897, 0.5
      %v6122 = vadd.f32 %v5898, 0.5
      %v6123 = vadd.f32 %v5899, 0.5
      %v6124 = vadd.f32 %v5900, 0.5
      %v6125 = vadd.f32 %v5901, 0.5
      %v6126 = vadd.f32 %v5902, 0.5
      %v6127 = vadd.f32 %v5903, 0.5
      %v6128 = vadd.f32 %v5904, 0.5
      %v6129 = vadd.f32 %v5905, 0.5
      %v6130 = vadd.f32 %v5906, 0.5
      %v6131 = vadd.f32 %v5907, 0.5
      %v6132 = vadd.f32 %v5908, 0.5
      %v6133 = vadd.f32 %v5909, 0.5
      %v6134 = vadd.f32 %v5910, 0.5
      %v6135 = vadd.f32 %v5911, 0.5
      %v6136 = vadd.f32 %v5912, 0.5
      %v6137 = vadd.f32 %v5913, 0.5
      %v6138 = vadd.f32 %v5914, 0.5
      %v6139 = vadd.f32 %v5915, 0.5
      %v6140 = vadd.f32 %v5916, 0.5
      %v6141 = vadd.f32 %v5917, 0.5
      %v6142 = vadd.f32 %v5918, 0.5
      %v6143 = vadd.f32 %v5919, 0.5
      %v6144 = vadd.f32 %v5920, 0.5
      %v6145 = vadd.f32 %v5921, 0.5
      %v6146 = vadd.f32 %v5922, 0.5
      %v6147 = vadd.f32 %v5923, 0.5
      %v6148 = vpack.c.bf16 %v5931, %v5924
      %v6149 = vpack.c.bf16 %v5932, %v5925
      %v6150 = vpack.c.bf16 %v5933, %v5926
      %v6151 = vpack.c.bf16 %v5934, %v5927
      %v6152 = vpack.c.bf16 %v5935, %v5928
      %v6153 = vpack.c.bf16 %v5936, %v5929
      %v6154 = vpack.c.bf16 %v5937, %v5930
      %v6155 = vpack.c.bf16 %v5945, %v5938
      %v6156 = vpack.c.bf16 %v5946, %v5939
      %v6157 = vpack.c.bf16 %v5947, %v5940
      %v6158 = vpack.c.bf16 %v5948, %v5941
      %v6159 = vpack.c.bf16 %v5949, %v5942
      %v6160 = vpack.c.bf16 %v5950, %v5943
      %v6161 = vpack.c.bf16 %v5951, %v5944
      %v6162 = vpack.c.bf16 %v5959, %v5952
      %v6163 = vpack.c.bf16 %v5960, %v5953
      %v6164 = vpack.c.bf16 %v5961, %v5954
      %v6165 = vpack.c.bf16 %v5962, %v5955
      %v6166 = vpack.c.bf16 %v5963, %v5956
      %v6167 = vpack.c.bf16 %v5964, %v5957
      %v6168 = vpack.c.bf16 %v5965, %v5958
      %v6169 = vpack.c.bf16 %v5973, %v5966
      %v6170 = vpack.c.bf16 %v5974, %v5967
      %v6171 = vpack.c.bf16 %v5975, %v5968
      %v6172 = vpack.c.bf16 %v5976, %v5969
      %v6173 = vpack.c.bf16 %v5977, %v5970
      %v6174 = vpack.c.bf16 %v5978, %v5971
      %v6175 = vpack.c.bf16 %v5979, %v5972
      %v6176 = vpack.c.bf16 %v5987, %v5980
      %v6177 = vpack.c.bf16 %v5988, %v5981
      %v6178 = vpack.c.bf16 %v5989, %v5982
      %v6179 = vpack.c.bf16 %v5990, %v5983
      %v6180 = vpack.c.bf16 %v5991, %v5984
      %v6181 = vpack.c.bf16 %v5992, %v5985
      %v6182 = vpack.c.bf16 %v5993, %v5986
      %v6183 = vpack.c.bf16 %v6001, %v5994
      %v6184 = vpack.c.bf16 %v6002, %v5995
      %v6185 = vpack.c.bf16 %v6003, %v5996
      %v6186 = vpack.c.bf16 %v6004, %v5997
      %v6187 = vpack.c.bf16 %v6005, %v5998
      %v6188 = vpack.c.bf16 %v6006, %v5999
      %v6189 = vpack.c.bf16 %v6007, %v6000
      %v6190 = vpack.c.bf16 %v6015, %v6008
      %v6191 = vpack.c.bf16 %v6016, %v6009
      %v6192 = vpack.c.bf16 %v6017, %v6010
      %v6193 = vpack.c.bf16 %v6018, %v6011
      %v6194 = vpack.c.bf16 %v6019, %v6012
      %v6195 = vpack.c.bf16 %v6020, %v6013
      %v6196 = vpack.c.bf16 %v6021, %v6014
      %v6197 = vpack.c.bf16 %v6029, %v6022
      %v6198 = vpack.c.bf16 %v6030, %v6023
      %v6199 = vpack.c.bf16 %v6031, %v6024
      %v6200 = vpack.c.bf16 %v6032, %v6025
      %v6201 = vpack.c.bf16 %v6033, %v6026
      %v6202 = vpack.c.bf16 %v6034, %v6027
      %v6203 = vpack.c.bf16 %v6035, %v6028
      %v6204 = vpack.c.bf16 %v6043, %v6036
      %v6205 = vpack.c.bf16 %v6044, %v6037
      %v6206 = vpack.c.bf16 %v6045, %v6038
      %v6207 = vpack.c.bf16 %v6046, %v6039
      %v6208 = vpack.c.bf16 %v6047, %v6040
      %v6209 = vpack.c.bf16 %v6048, %v6041
      %v6210 = vpack.c.bf16 %v6049, %v6042
      %v6211 = vpack.c.bf16 %v6057, %v6050
      %v6212 = vpack.c.bf16 %v6058, %v6051
      %v6213 = vpack.c.bf16 %v6059, %v6052
      %v6214 = vpack.c.bf16 %v6060, %v6053
      %v6215 = vpack.c.bf16 %v6061, %v6054
      %v6216 = vpack.c.bf16 %v6062, %v6055
      %v6217 = vpack.c.bf16 %v6063, %v6056
      %v6218 = vpack.c.bf16 %v6071, %v6064
      %v6219 = vpack.c.bf16 %v6072, %v6065
      %v6220 = vpack.c.bf16 %v6073, %v6066
      %v6221 = vpack.c.bf16 %v6074, %v6067
      %v6222 = vpack.c.bf16 %v6075, %v6068
      %v6223 = vpack.c.bf16 %v6076, %v6069
      %v6224 = vpack.c.bf16 %v6077, %v6070
      %v6225 = vpack.c.bf16 %v6085, %v6078
      %v6226 = vpack.c.bf16 %v6086, %v6079
      %v6227 = vpack.c.bf16 %v6087, %v6080
      %v6228 = vpack.c.bf16 %v6088, %v6081
      %v6229 = vpack.c.bf16 %v6089, %v6082
      %v6230 = vpack.c.bf16 %v6090, %v6083
      %v6231 = vpack.c.bf16 %v6091, %v6084
      %v6232 = vpack.c.bf16 %v6099, %v6092
      %v6233 = vpack.c.bf16 %v6100, %v6093
      %v6234 = vpack.c.bf16 %v6101, %v6094
      %v6235 = vpack.c.bf16 %v6102, %v6095
      %v6236 = vpack.c.bf16 %v6103, %v6096
      %v6237 = vpack.c.bf16 %v6104, %v6097
      %v6238 = vpack.c.bf16 %v6105, %v6098
      %v6239 = vpack.c.bf16 %v6113, %v6106
      %v6240 = vpack.c.bf16 %v6114, %v6107
      %v6241 = vpack.c.bf16 %v6115, %v6108
      %v6242 = vpack.c.bf16 %v6116, %v6109
      %v6243 = vpack.c.bf16 %v6117, %v6110
      %v6244 = vpack.c.bf16 %v6118, %v6111
      %v6245 = vpack.c.bf16 %v6119, %v6112
      %v6246 = vpack.c.bf16 %v6127, %v6120
      %v6247 = vpack.c.bf16 %v6128, %v6121
      %v6248 = vpack.c.bf16 %v6129, %v6122
      %v6249 = vpack.c.bf16 %v6130, %v6123
      %v6250 = vpack.c.bf16 %v6131, %v6124
      %v6251 = vpack.c.bf16 %v6132, %v6125
      %v6252 = vpack.c.bf16 %v6133, %v6126
      %v6253 = vpack.c.bf16 %v6141, %v6134
      %v6254 = vpack.c.bf16 %v6142, %v6135
      %v6255 = vpack.c.bf16 %v6143, %v6136
      %v6256 = vpack.c.bf16 %v6144, %v6137
      %v6257 = vpack.c.bf16 %v6145, %v6138
      %v6258 = vpack.c.bf16 %v6146, %v6139
      %v6259 = vpack.c.bf16 %v6147, %v6140
      %v6372 = vunpack.c.l.b16 %v6148
      %v6373 = vunpack.c.l.b16 %v6149
      %v6374 = vunpack.c.l.b16 %v6150
      %v6375 = vunpack.c.l.b16 %v6151
      %v6376 = vunpack.c.l.b16 %v6152
      %v6377 = vunpack.c.l.b16 %v6153
      %v6378 = vunpack.c.l.b16 %v6154
      %v6379 = vunpack.c.h.b16 %v6148
      %v6380 = vunpack.c.h.b16 %v6149
      %v6381 = vunpack.c.h.b16 %v6150
      %v6382 = vunpack.c.h.b16 %v6151
      %v6383 = vunpack.c.h.b16 %v6152
      %v6384 = vunpack.c.h.b16 %v6153
      %v6385 = vunpack.c.h.b16 %v6154
      %v6386 = vunpack.c.l.b16 %v6155
      %v6387 = vunpack.c.l.b16 %v6156
      %v6388 = vunpack.c.l.b16 %v6157
      %v6389 = vunpack.c.l.b16 %v6158
      %v6390 = vunpack.c.l.b16 %v6159
      %v6391 = vunpack.c.l.b16 %v6160
      %v6392 = vunpack.c.l.b16 %v6161
      %v6393 = vunpack.c.h.b16 %v6155
      %v6394 = vunpack.c.h.b16 %v6156
      %v6395 = vunpack.c.h.b16 %v6157
      %v6396 = vunpack.c.h.b16 %v6158
      %v6397 = vunpack.c.h.b16 %v6159
      %v6398 = vunpack.c.h.b16 %v6160
      %v6399 = vunpack.c.h.b16 %v6161
      %v6400 = vunpack.c.l.b16 %v6162
      %v6401 = vunpack.c.l.b16 %v6163
      %v6402 = vunpack.c.l.b16 %v6164
      %v6403 = vunpack.c.l.b16 %v6165
      %v6404 = vunpack.c.l.b16 %v6166
      %v6405 = vunpack.c.l.b16 %v6167
      %v6406 = vunpack.c.l.b16 %v6168
      %v6407 = vunpack.c.h.b16 %v6162
      %v6408 = vunpack.c.h.b16 %v6163
      %v6409 = vunpack.c.h.b16 %v6164
      %v6410 = vunpack.c.h.b16 %v6165
      %v6411 = vunpack.c.h.b16 %v6166
      %v6412 = vunpack.c.h.b16 %v6167
      %v6413 = vunpack.c.h.b16 %v6168
      %v6414 = vunpack.c.l.b16 %v6169
      %v6415 = vunpack.c.l.b16 %v6170
      %v6416 = vunpack.c.l.b16 %v6171
      %v6417 = vunpack.c.l.b16 %v6172
      %v6418 = vunpack.c.l.b16 %v6173
      %v6419 = vunpack.c.l.b16 %v6174
      %v6420 = vunpack.c.l.b16 %v6175
      %v6421 = vunpack.c.h.b16 %v6169
      %v6422 = vunpack.c.h.b16 %v6170
      %v6423 = vunpack.c.h.b16 %v6171
      %v6424 = vunpack.c.h.b16 %v6172
      %v6425 = vunpack.c.h.b16 %v6173
      %v6426 = vunpack.c.h.b16 %v6174
      %v6427 = vunpack.c.h.b16 %v6175
      %v6428 = vunpack.c.l.b16 %v6176
      %v6429 = vunpack.c.l.b16 %v6177
      %v6430 = vunpack.c.l.b16 %v6178
      %v6431 = vunpack.c.l.b16 %v6179
      %v6432 = vunpack.c.l.b16 %v6180
      %v6433 = vunpack.c.l.b16 %v6181
      %v6434 = vunpack.c.l.b16 %v6182
      %v6435 = vunpack.c.h.b16 %v6176
      %v6436 = vunpack.c.h.b16 %v6177
      %v6437 = vunpack.c.h.b16 %v6178
      %v6438 = vunpack.c.h.b16 %v6179
      %v6439 = vunpack.c.h.b16 %v6180
      %v6440 = vunpack.c.h.b16 %v6181
      %v6441 = vunpack.c.h.b16 %v6182
      %v6442 = vunpack.c.l.b16 %v6183
      %v6443 = vunpack.c.l.b16 %v6184
      %v6444 = vunpack.c.l.b16 %v6185
      %v6445 = vunpack.c.l.b16 %v6186
      %v6446 = vunpack.c.l.b16 %v6187
      %v6447 = vunpack.c.l.b16 %v6188
      %v6448 = vunpack.c.l.b16 %v6189
      %v6449 = vunpack.c.h.b16 %v6183
      %v6450 = vunpack.c.h.b16 %v6184
      %v6451 = vunpack.c.h.b16 %v6185
      %v6452 = vunpack.c.h.b16 %v6186
      %v6453 = vunpack.c.h.b16 %v6187
      %v6454 = vunpack.c.h.b16 %v6188
      %v6455 = vunpack.c.h.b16 %v6189
      %v6456 = vunpack.c.l.b16 %v6190
      %v6457 = vunpack.c.l.b16 %v6191
      %v6458 = vunpack.c.l.b16 %v6192
      %v6459 = vunpack.c.l.b16 %v6193
      %v6460 = vunpack.c.l.b16 %v6194
      %v6461 = vunpack.c.l.b16 %v6195
      %v6462 = vunpack.c.l.b16 %v6196
      %v6463 = vunpack.c.h.b16 %v6190
      %v6464 = vunpack.c.h.b16 %v6191
      %v6465 = vunpack.c.h.b16 %v6192
      %v6466 = vunpack.c.h.b16 %v6193
      %v6467 = vunpack.c.h.b16 %v6194
      %v6468 = vunpack.c.h.b16 %v6195
      %v6469 = vunpack.c.h.b16 %v6196
      %v6470 = vunpack.c.l.b16 %v6197
      %v6471 = vunpack.c.l.b16 %v6198
      %v6472 = vunpack.c.l.b16 %v6199
      %v6473 = vunpack.c.l.b16 %v6200
      %v6474 = vunpack.c.l.b16 %v6201
      %v6475 = vunpack.c.l.b16 %v6202
      %v6476 = vunpack.c.l.b16 %v6203
      %v6477 = vunpack.c.h.b16 %v6197
      %v6478 = vunpack.c.h.b16 %v6198
      %v6479 = vunpack.c.h.b16 %v6199
      %v6480 = vunpack.c.h.b16 %v6200
      %v6481 = vunpack.c.h.b16 %v6201
      %v6482 = vunpack.c.h.b16 %v6202
      %v6483 = vunpack.c.h.b16 %v6203
      %v6484 = vunpack.c.l.b16 %v6204
      %v6485 = vunpack.c.l.b16 %v6205
      %v6486 = vunpack.c.l.b16 %v6206
      %v6487 = vunpack.c.l.b16 %v6207
      %v6488 = vunpack.c.l.b16 %v6208
      %v6489 = vunpack.c.l.b16 %v6209
      %v6490 = vunpack.c.l.b16 %v6210
      %v6491 = vunpack.c.h.b16 %v6204
      %v6492 = vunpack.c.h.b16 %v6205
      %v6493 = vunpack.c.h.b16 %v6206
      %v6494 = vunpack.c.h.b16 %v6207
      %v6495 = vunpack.c.h.b16 %v6208
      %v6496 = vunpack.c.h.b16 %v6209
      %v6497 = vunpack.c.h.b16 %v6210
      %v6498 = vunpack.c.l.b16 %v6211
      %v6499 = vunpack.c.l.b16 %v6212
      %v6500 = vunpack.c.l.b16 %v6213
      %v6501 = vunpack.c.l.b16 %v6214
      %v6502 = vunpack.c.l.b16 %v6215
      %v6503 = vunpack.c.l.b16 %v6216
      %v6504 = vunpack.c.l.b16 %v6217
      %v6505 = vunpack.c.h.b16 %v6211
      %v6506 = vunpack.c.h.b16 %v6212
      %v6507 = vunpack.c.h.b16 %v6213
      %v6508 = vunpack.c.h.b16 %v6214
      %v6509 = vunpack.c.h.b16 %v6215
      %v6510 = vunpack.c.h.b16 %v6216
      %v6511 = vunpack.c.h.b16 %v6217
      %v6512 = vunpack.c.l.b16 %v6218
      %v6513 = vunpack.c.l.b16 %v6219
      %v6514 = vunpack.c.l.b16 %v6220
      %v6515 = vunpack.c.l.b16 %v6221
      %v6516 = vunpack.c.l.b16 %v6222
      %v6517 = vunpack.c.l.b16 %v6223
      %v6518 = vunpack.c.l.b16 %v6224
      %v6519 = vunpack.c.h.b16 %v6218
      %v6520 = vunpack.c.h.b16 %v6219
      %v6521 = vunpack.c.h.b16 %v6220
      %v6522 = vunpack.c.h.b16 %v6221
      %v6523 = vunpack.c.h.b16 %v6222
      %v6524 = vunpack.c.h.b16 %v6223
      %v6525 = vunpack.c.h.b16 %v6224
      %v6526 = vunpack.c.l.b16 %v6225
      %v6527 = vunpack.c.l.b16 %v6226
      %v6528 = vunpack.c.l.b16 %v6227
      %v6529 = vunpack.c.l.b16 %v6228
      %v6530 = vunpack.c.l.b16 %v6229
      %v6531 = vunpack.c.l.b16 %v6230
      %v6532 = vunpack.c.l.b16 %v6231
      %v6533 = vunpack.c.h.b16 %v6225
      %v6534 = vunpack.c.h.b16 %v6226
      %v6535 = vunpack.c.h.b16 %v6227
      %v6536 = vunpack.c.h.b16 %v6228
      %v6537 = vunpack.c.h.b16 %v6229
      %v6538 = vunpack.c.h.b16 %v6230
      %v6539 = vunpack.c.h.b16 %v6231
      %v6540 = vunpack.c.l.b16 %v6232
      %v6541 = vunpack.c.l.b16 %v6233
      %v6542 = vunpack.c.l.b16 %v6234
      %v6543 = vunpack.c.l.b16 %v6235
      %v6544 = vunpack.c.l.b16 %v6236
      %v6545 = vunpack.c.l.b16 %v6237
      %v6546 = vunpack.c.l.b16 %v6238
      %v6547 = vunpack.c.h.b16 %v6232
      %v6548 = vunpack.c.h.b16 %v6233
      %v6549 = vunpack.c.h.b16 %v6234
      %v6550 = vunpack.c.h.b16 %v6235
      %v6551 = vunpack.c.h.b16 %v6236
      %v6552 = vunpack.c.h.b16 %v6237
      %v6553 = vunpack.c.h.b16 %v6238
      %v6554 = vunpack.c.l.b16 %v6239
      %v6555 = vunpack.c.l.b16 %v6240
      %v6556 = vunpack.c.l.b16 %v6241
      %v6557 = vunpack.c.l.b16 %v6242
      %v6558 = vunpack.c.l.b16 %v6243
      %v6559 = vunpack.c.l.b16 %v6244
      %v6560 = vunpack.c.l.b16 %v6245
      %v6561 = vunpack.c.h.b16 %v6239
      %v6562 = vunpack.c.h.b16 %v6240
      %v6563 = vunpack.c.h.b16 %v6241
      %v6564 = vunpack.c.h.b16 %v6242
      %v6565 = vunpack.c.h.b16 %v6243
      %v6566 = vunpack.c.h.b16 %v6244
      %v6567 = vunpack.c.h.b16 %v6245
      %v6568 = vunpack.c.l.b16 %v6246
      %v6569 = vunpack.c.l.b16 %v6247
      %v6570 = vunpack.c.l.b16 %v6248
      %v6571 = vunpack.c.l.b16 %v6249
      %v6572 = vunpack.c.l.b16 %v6250
      %v6573 = vunpack.c.l.b16 %v6251
      %v6574 = vunpack.c.l.b16 %v6252
      %v6575 = vunpack.c.h.b16 %v6246
      %v6576 = vunpack.c.h.b16 %v6247
      %v6577 = vunpack.c.h.b16 %v6248
      %v6578 = vunpack.c.h.b16 %v6249
      %v6579 = vunpack.c.h.b16 %v6250
      %v6580 = vunpack.c.h.b16 %v6251
      %v6581 = vunpack.c.h.b16 %v6252
      %v6582 = vunpack.c.l.b16 %v6253
      %v6583 = vunpack.c.l.b16 %v6254
      %v6584 = vunpack.c.l.b16 %v6255
      %v6585 = vunpack.c.l.b16 %v6256
      %v6586 = vunpack.c.l.b16 %v6257
      %v6587 = vunpack.c.l.b16 %v6258
      %v6588 = vunpack.c.l.b16 %v6259
      %v6589 = vunpack.c.h.b16 %v6253
      %v6590 = vunpack.c.h.b16 %v6254
      %v6591 = vunpack.c.h.b16 %v6255
      %v6592 = vunpack.c.h.b16 %v6256
      %v6593 = vunpack.c.h.b16 %v6257
      %v6594 = vunpack.c.h.b16 %v6258
      %v6595 = vunpack.c.h.b16 %v6259
      %v6596 = vpack.c.b16 %v6373, %v6372
      %v6597 = vpack.c.b16 %v6375, %v6374
      %v6598 = vpack.c.b16 %v6377, %v6376
      %v6599 = vpack.c.b16 %v6378, %v6378
      %v6600 = vpack.c.b16 %v6380, %v6379
      %v6601 = vpack.c.b16 %v6382, %v6381
      %v6602 = vpack.c.b16 %v6384, %v6383
      %v6603 = vpack.c.b16 %v6385, %v6385
      %v6604 = vpack.c.b16 %v6387, %v6386
      %v6605 = vpack.c.b16 %v6389, %v6388
      %v6606 = vpack.c.b16 %v6391, %v6390
      %v6607 = vpack.c.b16 %v6392, %v6392
      %v6608 = vpack.c.b16 %v6394, %v6393
      %v6609 = vpack.c.b16 %v6396, %v6395
      %v6610 = vpack.c.b16 %v6398, %v6397
      %v6611 = vpack.c.b16 %v6399, %v6399
      %v6612 = vpack.c.b16 %v6401, %v6400
      %v6613 = vpack.c.b16 %v6403, %v6402
      %v6614 = vpack.c.b16 %v6405, %v6404
      %v6615 = vpack.c.b16 %v6406, %v6406
      %v6616 = vpack.c.b16 %v6408, %v6407
      %v6617 = vpack.c.b16 %v6410, %v6409
      %v6618 = vpack.c.b16 %v6412, %v6411
      %v6619 = vpack.c.b16 %v6413, %v6413
      %v6620 = vpack.c.b16 %v6415, %v6414
      %v6621 = vpack.c.b16 %v6417, %v6416
      %v6622 = vpack.c.b16 %v6419, %v6418
      %v6623 = vpack.c.b16 %v6420, %v6420
      %v6624 = vpack.c.b16 %v6422, %v6421
      %v6625 = vpack.c.b16 %v6424, %v6423
      %v6626 = vpack.c.b16 %v6426, %v6425
      %v6627 = vpack.c.b16 %v6427, %v6427
      %v6628 = vpack.c.b16 %v6429, %v6428
      %v6629 = vpack.c.b16 %v6431, %v6430
      %v6630 = vpack.c.b16 %v6433, %v6432
      %v6631 = vpack.c.b16 %v6434, %v6434
      %v6632 = vpack.c.b16 %v6436, %v6435
      %v6633 = vpack.c.b16 %v6438, %v6437
      %v6634 = vpack.c.b16 %v6440, %v6439
      %v6635 = vpack.c.b16 %v6441, %v6441
      %v6636 = vpack.c.b16 %v6443, %v6442
      %v6637 = vpack.c.b16 %v6445, %v6444
      %v6638 = vpack.c.b16 %v6447, %v6446
      %v6639 = vpack.c.b16 %v6448, %v6448
      %v6640 = vpack.c.b16 %v6450, %v6449
      %v6641 = vpack.c.b16 %v6452, %v6451
      %v6642 = vpack.c.b16 %v6454, %v6453
      %v6643 = vpack.c.b16 %v6455, %v6455
      %v6644 = vpack.c.b16 %v6457, %v6456
      %v6645 = vpack.c.b16 %v6459, %v6458
      %v6646 = vpack.c.b16 %v6461, %v6460
      %v6647 = vpack.c.b16 %v6462, %v6462
      %v6648 = vpack.c.b16 %v6464, %v6463
      %v6649 = vpack.c.b16 %v6466, %v6465
      %v6650 = vpack.c.b16 %v6468, %v6467
      %v6651 = vpack.c.b16 %v6469, %v6469
      %v6652 = vpack.c.b16 %v6471, %v6470
      %v6653 = vpack.c.b16 %v6473, %v6472
      %v6654 = vpack.c.b16 %v6475, %v6474
      %v6655 = vpack.c.b16 %v6476, %v6476
      %v6656 = vpack.c.b16 %v6478, %v6477
      %v6657 = vpack.c.b16 %v6480, %v6479
      %v6658 = vpack.c.b16 %v6482, %v6481
      %v6659 = vpack.c.b16 %v6483, %v6483
      %v6660 = vpack.c.b16 %v6485, %v6484
      %v6661 = vpack.c.b16 %v6487, %v6486
      %v6662 = vpack.c.b16 %v6489, %v6488
      %v6663 = vpack.c.b16 %v6490, %v6490
      %v6664 = vpack.c.b16 %v6492, %v6491
      %v6665 = vpack.c.b16 %v6494, %v6493
      %v6666 = vpack.c.b16 %v6496, %v6495
      %v6667 = vpack.c.b16 %v6497, %v6497
      %v6668 = vpack.c.b16 %v6499, %v6498
      %v6669 = vpack.c.b16 %v6501, %v6500
      %v6670 = vpack.c.b16 %v6503, %v6502
      %v6671 = vpack.c.b16 %v6504, %v6504
      %v6672 = vpack.c.b16 %v6506, %v6505
      %v6673 = vpack.c.b16 %v6508, %v6507
      %v6674 = vpack.c.b16 %v6510, %v6509
      %v6675 = vpack.c.b16 %v6511, %v6511
      %v6676 = vpack.c.b16 %v6513, %v6512
      %v6677 = vpack.c.b16 %v6515, %v6514
      %v6678 = vpack.c.b16 %v6517, %v6516
      %v6679 = vpack.c.b16 %v6518, %v6518
      %v6680 = vpack.c.b16 %v6520, %v6519
      %v6681 = vpack.c.b16 %v6522, %v6521
      %v6682 = vpack.c.b16 %v6524, %v6523
      %v6683 = vpack.c.b16 %v6525, %v6525
      %v6684 = vpack.c.b16 %v6527, %v6526
      %v6685 = vpack.c.b16 %v6529, %v6528
      %v6686 = vpack.c.b16 %v6531, %v6530
      %v6687 = vpack.c.b16 %v6532, %v6532
      %v6688 = vpack.c.b16 %v6534, %v6533
      %v6689 = vpack.c.b16 %v6536, %v6535
      %v6690 = vpack.c.b16 %v6538, %v6537
      %v6691 = vpack.c.b16 %v6539, %v6539
      %v6692 = vpack.c.b16 %v6541, %v6540
      %v6693 = vpack.c.b16 %v6543, %v6542
      %v6694 = vpack.c.b16 %v6545, %v6544
      %v6695 = vpack.c.b16 %v6546, %v6546
      %v6696 = vpack.c.b16 %v6548, %v6547
      %v6697 = vpack.c.b16 %v6550, %v6549
      %v6698 = vpack.c.b16 %v6552, %v6551
      %v6699 = vpack.c.b16 %v6553, %v6553
      %v6700 = vpack.c.b16 %v6555, %v6554
      %v6701 = vpack.c.b16 %v6557, %v6556
      %v6702 = vpack.c.b16 %v6559, %v6558
      %v6703 = vpack.c.b16 %v6560, %v6560
      %v6704 = vpack.c.b16 %v6562, %v6561
      %v6705 = vpack.c.b16 %v6564, %v6563
      %v6706 = vpack.c.b16 %v6566, %v6565
      %v6707 = vpack.c.b16 %v6567, %v6567
      %v6708 = vpack.c.b16 %v6569, %v6568
      %v6709 = vpack.c.b16 %v6571, %v6570
      %v6710 = vpack.c.b16 %v6573, %v6572
      %v6711 = vpack.c.b16 %v6574, %v6574
      %v6712 = vpack.c.b16 %v6576, %v6575
      %v6713 = vpack.c.b16 %v6578, %v6577
      %v6714 = vpack.c.b16 %v6580, %v6579
      %v6715 = vpack.c.b16 %v6581, %v6581
      %v6716 = vpack.c.b16 %v6583, %v6582
      %v6717 = vpack.c.b16 %v6585, %v6584
      %v6718 = vpack.c.b16 %v6587, %v6586
      %v6719 = vpack.c.b16 %v6588, %v6588
      %v6720 = vpack.c.b16 %v6590, %v6589
      %v6721 = vpack.c.b16 %v6592, %v6591
      %v6722 = vpack.c.b16 %v6594, %v6593
      %v6723 = vpack.c.b16 %v6595, %v6595
      %6852 = vst [vmem:[%s596] sm:$0xff] %v6596
      %6853 = vst [vmem:[%s596 + $0x8] sm:$0xff] %v6597
      %6854 = vst [vmem:[%s596 + $0x10] sm:$0xff] %v6598
      %vm6855 = vcmask 125952
      %6856 = vst.msk [vmem:[%s596 + $0x18] sm:$0xf] %vm6855, %v6599
      %6857 = vst [vmem:[%s596 + $0x1c] sm:$0xff] %v6600
      %6858 = vst [vmem:[%s596 + $0x24] sm:$0xff] %v6601
      %6859 = vst [vmem:[%s596 + $0x2c] sm:$0xff] %v6602
      %6860 = vst.msk [vmem:[%s596 + $0x34] sm:$0xf] %vm6855, %v6603
      %6861 = vst [vmem:[%s596 + $0x38] sm:$0xff] %v6604
      %6862 = vst [vmem:[%s596 + $0x40] sm:$0xff] %v6605
      %6863 = vst [vmem:[%s596 + $0x48] sm:$0xff] %v6606
      %6864 = vst.msk [vmem:[%s596 + $0x50] sm:$0xf] %vm6855, %v6607
      %6865 = vst [vmem:[%s596 + $0x54] sm:$0xff] %v6608
      %6866 = vst [vmem:[%s596 + $0x5c] sm:$0xff] %v6609
      %6867 = vst [vmem:[%s596 + $0x64] sm:$0xff] %v6610
      %6868 = vst.msk [vmem:[%s596 + $0x6c] sm:$0xf] %vm6855, %v6611
      %6869 = vst [vmem:[%s596 + $0x70] sm:$0xff] %v6612
      %6870 = vst [vmem:[%s596 + $0x78] sm:$0xff] %v6613
      %6871 = vst [vmem:[%s596 + $0x80] sm:$0xff] %v6614
      %6872 = vst.msk [vmem:[%s596 + $0x88] sm:$0xf] %vm6855, %v6615
      %6873 = vst [vmem:[%s596 + $0x8c] sm:$0xff] %v6616
      %6874 = vst [vmem:[%s596 + $0x94] sm:$0xff] %v6617
      %6875 = vst [vmem:[%s596 + $0x9c] sm:$0xff] %v6618
      %6876 = vst.msk [vmem:[%s596 + $0xa4] sm:$0xf] %vm6855, %v6619
      %6877 = vst [vmem:[%s596 + $0xa8] sm:$0xff] %v6620
      %6878 = vst [vmem:[%s596 + $0xb0] sm:$0xff] %v6621
      %6879 = vst [vmem:[%s596 + $0xb8] sm:$0xff] %v6622
      %6880 = vst.msk [vmem:[%s596 + $0xc0] sm:$0xf] %vm6855, %v6623
      %6881 = vst [vmem:[%s596 + $0xc4] sm:$0xff] %v6624
      %6882 = vst [vmem:[%s596 + $0xcc] sm:$0xff] %v6625
      %6883 = vst [vmem:[%s596 + $0xd4] sm:$0xff] %v6626
      %6884 = vst.msk [vmem:[%s596 + $0xdc] sm:$0xf] %vm6855, %v6627
      %6885 = vst [vmem:[%s596 + $0xe0] sm:$0xff] %v6628
      %6886 = vst [vmem:[%s596 + $0xe8] sm:$0xff] %v6629
      %6887 = vst [vmem:[%s596 + $0xf0] sm:$0xff] %v6630
      %6888 = vst.msk [vmem:[%s596 + $0xf8] sm:$0xf] %vm6855, %v6631
      %6889 = vst [vmem:[%s596 + $0xfc] sm:$0xff] %v6632
      %6890 = vst [vmem:[%s596 + $0x104] sm:$0xff] %v6633
      %6891 = vst [vmem:[%s596 + $0x10c] sm:$0xff] %v6634
      %6892 = vst.msk [vmem:[%s596 + $0x114] sm:$0xf] %vm6855, %v6635
      %6893 = vst [vmem:[%s596 + $0x118] sm:$0xff] %v6636
      %6894 = vst [vmem:[%s596 + $0x120] sm:$0xff] %v6637
      %6895 = vst [vmem:[%s596 + $0x128] sm:$0xff] %v6638
      %6896 = vst.msk [vmem:[%s596 + $0x130] sm:$0xf] %vm6855, %v6639
      %6897 = vst [vmem:[%s596 + $0x134] sm:$0xff] %v6640
      %6898 = vst [vmem:[%s596 + $0x13c] sm:$0xff] %v6641
      %6899 = vst [vmem:[%s596 + $0x144] sm:$0xff] %v6642
      %6900 = vst.msk [vmem:[%s596 + $0x14c] sm:$0xf] %vm6855, %v6643
      %6901 = vst [vmem:[%s596 + $0x150] sm:$0xff] %v6644
      %6902 = vst [vmem:[%s596 + $0x158] sm:$0xff] %v6645
      %6903 = vst [vmem:[%s596 + $0x160] sm:$0xff] %v6646
      %6904 = vst.msk [vmem:[%s596 + $0x168] sm:$0xf] %vm6855, %v6647
      %6905 = vst [vmem:[%s596 + $0x16c] sm:$0xff] %v6648
      %6906 = vst [vmem:[%s596 + $0x174] sm:$0xff] %v6649
      %6907 = vst [vmem:[%s596 + $0x17c] sm:$0xff] %v6650
      %6908 = vst.msk [vmem:[%s596 + $0x184] sm:$0xf] %vm6855, %v6651
      %6909 = vst [vmem:[%s596 + $0x188] sm:$0xff] %v6652
      %6910 = vst [vmem:[%s596 + $0x190] sm:$0xff] %v6653
      %6911 = vst [vmem:[%s596 + $0x198] sm:$0xff] %v6654
      %6912 = vst.msk [vmem:[%s596 + $0x1a0] sm:$0xf] %vm6855, %v6655
      %6913 = vst [vmem:[%s596 + $0x1a4] sm:$0xff] %v6656
      %6914 = vst [vmem:[%s596 + $0x1ac] sm:$0xff] %v6657
      %6915 = vst [vmem:[%s596 + $0x1b4] sm:$0xff] %v6658
      %6916 = vst.msk [vmem:[%s596 + $0x1bc] sm:$0xf] %vm6855, %v6659
      %6917 = vst [vmem:[%s596 + $0x1c0] sm:$0xff] %v6660
      %6918 = vst [vmem:[%s596 + $0x1c8] sm:$0xff] %v6661
      %6919 = vst [vmem:[%s596 + $0x1d0] sm:$0xff] %v6662
      %6920 = vst.msk [vmem:[%s596 + $0x1d8] sm:$0xf] %vm6855, %v6663
      %6921 = vst [vmem:[%s596 + $0x1dc] sm:$0xff] %v6664
      %6922 = vst [vmem:[%s596 + $0x1e4] sm:$0xff] %v6665
      %6923 = vst [vmem:[%s596 + $0x1ec] sm:$0xff] %v6666
      %6924 = vst.msk [vmem:[%s596 + $0x1f4] sm:$0xf] %vm6855, %v6667
      %6925 = vst [vmem:[%s596 + $0x1f8] sm:$0xff] %v6668
      %6926 = vst [vmem:[%s596 + $0x200] sm:$0xff] %v6669
      %6927 = vst [vmem:[%s596 + $0x208] sm:$0xff] %v6670
      %6928 = vst.msk [vmem:[%s596 + $0x210] sm:$0xf] %vm6855, %v6671
      %6929 = vst [vmem:[%s596 + $0x214] sm:$0xff] %v6672
      %6930 = vst [vmem:[%s596 + $0x21c] sm:$0xff] %v6673
      %6931 = vst [vmem:[%s596 + $0x224] sm:$0xff] %v6674
      %6932 = vst.msk [vmem:[%s596 + $0x22c] sm:$0xf] %vm6855, %v6675
      %6933 = vst [vmem:[%s596 + $0x230] sm:$0xff] %v6676
      %6934 = vst [vmem:[%s596 + $0x238] sm:$0xff] %v6677
      %6935 = vst [vmem:[%s596 + $0x240] sm:$0xff] %v6678
      %6936 = vst.msk [vmem:[%s596 + $0x248] sm:$0xf] %vm6855, %v6679
      %6937 = vst [vmem:[%s596 + $0x24c] sm:$0xff] %v6680
      %6938 = vst [vmem:[%s596 + $0x254] sm:$0xff] %v6681
      %6939 = vst [vmem:[%s596 + $0x25c] sm:$0xff] %v6682
      %6940 = vst.msk [vmem:[%s596 + $0x264] sm:$0xf] %vm6855, %v6683
      %6941 = vst [vmem:[%s596 + $0x268] sm:$0xff] %v6684
      %6942 = vst [vmem:[%s596 + $0x270] sm:$0xff] %v6685
      %6943 = vst [vmem:[%s596 + $0x278] sm:$0xff] %v6686
      %6944 = vst.msk [vmem:[%s596 + $0x280] sm:$0xf] %vm6855, %v6687
      %6945 = vst [vmem:[%s596 + $0x284] sm:$0xff] %v6688
      %6946 = vst [vmem:[%s596 + $0x28c] sm:$0xff] %v6689
      %6947 = vst [vmem:[%s596 + $0x294] sm:$0xff] %v6690
      %6948 = vst.msk [vmem:[%s596 + $0x29c] sm:$0xf] %vm6855, %v6691
      %6949 = vst [vmem:[%s596 + $0x2a0] sm:$0xff] %v6692
      %6950 = vst [vmem:[%s596 + $0x2a8] sm:$0xff] %v6693
      %6951 = vst [vmem:[%s596 + $0x2b0] sm:$0xff] %v6694
      %6952 = vst.msk [vmem:[%s596 + $0x2b8] sm:$0xf] %vm6855, %v6695
      %6953 = vst [vmem:[%s596 + $0x2bc] sm:$0xff] %v6696
      %6954 = vst [vmem:[%s596 + $0x2c4] sm:$0xff] %v6697
      %6955 = vst [vmem:[%s596 + $0x2cc] sm:$0xff] %v6698
      %6956 = vst.msk [vmem:[%s596 + $0x2d4] sm:$0xf] %vm6855, %v6699
      %6957 = vst [vmem:[%s596 + $0x2d8] sm:$0xff] %v6700
      %6958 = vst [vmem:[%s596 + $0x2e0] sm:$0xff] %v6701
      %6959 = vst [vmem:[%s596 + $0x2e8] sm:$0xff] %v6702
      %6960 = vst.msk [vmem:[%s596 + $0x2f0] sm:$0xf] %vm6855, %v6703
      %6961 = vst [vmem:[%s596 + $0x2f4] sm:$0xff] %v6704
      %6962 = vst [vmem:[%s596 + $0x2fc] sm:$0xff] %v6705
      %6963 = vst [vmem:[%s596 + $0x304] sm:$0xff] %v6706
      %6964 = vst.msk [vmem:[%s596 + $0x30c] sm:$0xf] %vm6855, %v6707
      %6965 = vst [vmem:[%s596 + $0x310] sm:$0xff] %v6708
      %6966 = vst [vmem:[%s596 + $0x318] sm:$0xff] %v6709
      %6967 = vst [vmem:[%s596 + $0x320] sm:$0xff] %v6710
      %6968 = vst.msk [vmem:[%s596 + $0x328] sm:$0xf] %vm6855, %v6711
      %6969 = vst [vmem:[%s596 + $0x32c] sm:$0xff] %v6712
      %6970 = vst [vmem:[%s596 + $0x334] sm:$0xff] %v6713
      %6971 = vst [vmem:[%s596 + $0x33c] sm:$0xff] %v6714
      %6972 = vst.msk [vmem:[%s596 + $0x344] sm:$0xf] %vm6855, %v6715
      %6973 = vst [vmem:[%s596 + $0x348] sm:$0xff] %v6716
      %6974 = vst [vmem:[%s596 + $0x350] sm:$0xff] %v6717
      %6975 = vst [vmem:[%s596 + $0x358] sm:$0xff] %v6718
      %6976 = vst.msk [vmem:[%s596 + $0x360] sm:$0xf] %vm6855, %v6719
      %6977 = vst [vmem:[%s596 + $0x364] sm:$0xff] %v6720
      %6978 = vst [vmem:[%s596 + $0x36c] sm:$0xff] %v6721
      %6979 = vst [vmem:[%s596 + $0x374] sm:$0xff] %v6722
      %6980 = vst.msk [vmem:[%s596 + $0x37c] sm:$0xf] %vm6855, %v6723
      %s6981 = smul.u32 32, %s30
      %p6982 = scmp.lt.s32.totalorder %s6981, 127
      %s6983 = scalar_select %p6982, %s6981, 127
      %s6984 = smul.addr %s6983, 8
      %s6985 = scalar_lea.vmem %s17, %s6984
      %s6986 = smul.u32 32, %s30
      %p6987 = scmp.lt.s32.totalorder %s6986, 127
      %s6988 = scalar_select %p6987, %s6986, 127
      %s6989 = smul.addr %s6988, 7
      %s6990 = smul.addr %s6989, 4
      %s6991 = scalar_lea.vmem %s18, %s6990
      // Predicated region
      $region89: #{autoencoder_forward.1} parent=87 // pred_check
        %p6992 = pneg %p410
      $region90: #{autoencoder_forward.1} parent=87 // pred_check_branch
        %6994 = sbr.rel (%p6992) target = $region92
      $region91: #{autoencoder_forward.1} parent=87 // pred_region
        %s6995 = smul.u32 32, %s30
      $region92: #{autoencoder_forward.1} parent=87 // pred_fallthru
        _
      // Predicated region
      $region93: #{autoencoder_forward.1} parent=87 // pred_check
        %p6996 = pneg %p436
      $region94: #{autoencoder_forward.1} parent=87 // pred_check_branch
        %6998 = sbr.rel (%p6996) target = $region96
      $region95: #{autoencoder_forward.1} parent=87 // pred_region
        %s6999 = smul.u32 32, %s30
      $region96: #{autoencoder_forward.1} parent=87 // pred_fallthru
        _
    $region88: #{autoencoder_forward.1} parent=5 // pred_fallthru
      _
    %p7000 = scmp.le.s32.totalorder 2, %s25
    // Predicated region
    $region97: #{autoencoder_forward.1} parent=5 // pred_check
      %p7001 = pneg %p7000
    $region98: #{autoencoder_forward.1} parent=5 // pred_check_branch
      %7003 = sbr.rel (%p7001) target = $region100
    $region99: #{autoencoder_forward.1} parent=5 // pred_region
      %s7004 = ssub.s32 %s25, 2
      // Predicated region
      $region101: #{autoencoder_forward.1} parent=99 // pred_check
        %p7005 = pneg %p416
      $region102: #{autoencoder_forward.1} parent=99 // pred_check_branch
        %7007 = sbr.rel (%p7005) target = $region104
      $region103: #{autoencoder_forward.1} parent=99 // pred_region
        %s7008 = smul.u32 32, %s31
        %p7009 = scmp.lt.s32.totalorder %s7008, 127
        %s7010 = scalar_select %p7009, %s7008, 127
        %s7011 = smul.addr %s7010, 8
        %s7012 = scalar_lea.vmem %s17, %s7011
      $region104: #{autoencoder_forward.1} parent=99 // pred_fallthru
        _
      // Predicated region
      $region105: #{autoencoder_forward.1} parent=99 // pred_check
        %p7013 = pneg %p442
      $region106: #{autoencoder_forward.1} parent=99 // pred_check_branch
        %7015 = sbr.rel (%p7013) target = $region108
      $region107: #{autoencoder_forward.1} parent=99 // pred_region
        %s7016 = smul.u32 32, %s31
        %p7017 = scmp.lt.s32.totalorder %s7016, 127
        %s7018 = scalar_select %p7017, %s7016, 127
        %s7019 = smul.addr %s7018, 7
        %s7020 = smul.addr %s7019, 4
        %s7021 = scalar_lea.vmem %s18, %s7020
      $region108: #{autoencoder_forward.1} parent=99 // pred_fallthru
        _
    $region100: #{autoencoder_forward.1} parent=5 // pred_fallthru
      _
  $region6: #{autoencoder_forward.1} parent=0 // loop_footer
    %s29 = sadd.s32 1, %s25
  $region7: #{autoencoder_forward.1} parent=0 // loop_footer_branch
    %24 = sbr.rel target = $region3
  $region8: #{autoencoder_forward.1} parent=0 // loop_exit
    _

</llo_original>
